<compile_context>
chip_gen: v7x
topology: tpu7x:2x2x1
jax: 0.10.0
libtpu: 0.0.40
codegen_flags: <defaults>
</compile_context>

<pallas_src>
import functools

import jax
import jax.numpy as jnp
from jax.experimental import pallas as pl
from jax.experimental.pallas import tpu as pltpu  # noqa: F401  (TPU backend)

# ---------------- small synthetic BART-like config (lane-dense dims) -------
VOCAB = 128               # padded to the 128-lane width (real BART: 50265)
D_MODEL = 128             # lane-dense hidden size (real BART-base: 768)
N_HEADS = 4
HEAD_DIM = D_MODEL // N_HEADS
FFN_DIM = 256
MAX_POS = 64
PAD_ID = 1
DECODER_START_ID = 2      # BART uses eos as decoder_start_token_id
POS_OFFSET = 2            # BartLearnedPositionalEmbedding offset
LN_EPS = 1e-5

LOGITS = "logits"
ENCODER_OUT = "encoder_out"


# ---------------- in-kernel helpers (traced inside the fused kernels) ------
def _layernorm(x, g, b):
    mu = jnp.mean(x, axis=-1, keepdims=True)
    var = jnp.mean(jnp.square(x - mu), axis=-1, keepdims=True)
    return (x - mu) * jax.lax.rsqrt(var + LN_EPS) * g + b


def _attention(q, k, v, batch, seq_q, seq_k, causal):
    """q: (batch*seq_q, D), k/v: (batch*seq_k, D) -> (batch*seq_q, D).

    Heads stay merged along the lane axis; the per-(batch, head) score /
    softmax / context matmuls (B*H = 8 tiny dots) are statically unrolled
    inside the single fused kernel, so there is no per-head grid step and no
    HBM round trip for the attention intermediates.
    """
    scale = jnp.float32(1.0 / (HEAD_DIM ** 0.5))
    if causal:
        rows = jax.lax.broadcasted_iota(jnp.int32, (seq_q, seq_k), 0)
        cols = jax.lax.broadcasted_iota(jnp.int32, (seq_q, seq_k), 1)
        neg = jnp.where(rows >= cols, 0.0, -1e9).astype(jnp.float32)
    out_rows = []
    for b in range(batch):
        head_ctx = []
        for h in range(N_HEADS):
            c0 = h * HEAD_DIM
            qs = q[b * seq_q:(b + 1) * seq_q, c0:c0 + HEAD_DIM] * scale
            ks = k[b * seq_k:(b + 1) * seq_k, c0:c0 + HEAD_DIM]
            vs = v[b * seq_k:(b + 1) * seq_k, c0:c0 + HEAD_DIM]
            # q @ k^T expressed via dot_general contracting dims (no k.T).
            s = jax.lax.dot_general(qs, ks, (((1,), (1,)), ((), ())),
                                    preferred_element_type=jnp.float32)
            if causal:
                s = s + neg
            s = s - jnp.max(s, axis=-1, keepdims=True)
            p = jnp.exp(s)
            p = p * pl.reciprocal(jnp.sum(p, axis=-1, keepdims=True),
                                  approx=True)
            head_ctx.append(jnp.dot(p, vs, preferred_element_type=jnp.float32))
        out_rows.append(jnp.concatenate(head_ctx, axis=1))
    return jnp.concatenate(out_rows, axis=0)


# ---------------- fused Pallas kernels --------------------------------------
def _encoder_kernel(x_ref, lne_g_ref, lne_b_ref,
                    wqkv_ref, bqkv_ref, wo_ref, bo_ref,
                    ln1_g_ref, ln1_b_ref,
                    wf1_ref, bf1_ref, wf2_ref, bf2_ref,
                    ln2_g_ref, ln2_b_ref,
                    o_ref, *, batch, seq):
    # BART layernorm_embedding fused into the layer prologue.
    x = _layernorm(x_ref[...], lne_g_ref[...], lne_b_ref[...])

    # Fused Q/K/V projection: one (M, D) x (D, 3D) matmul.
    qkv = (jnp.dot(x, wqkv_ref[...], preferred_element_type=jnp.float32)
           + bqkv_ref[...])
    q = qkv[:, :D_MODEL]
    k = qkv[:, D_MODEL:2 * D_MODEL]
    v = qkv[:, 2 * D_MODEL:]
    # No pad mask: the PyTorch module calls bart(input_ids=...) with
    # attention_mask=None, so HF BART applies no padding mask either.
    ctx = _attention(q, k, v, batch, seq, seq, causal=False)
    attn = (jnp.dot(ctx, wo_ref[...], preferred_element_type=jnp.float32)
            + bo_ref[...])
    h = _layernorm(x + attn, ln1_g_ref[...], ln1_b_ref[...])

    # Feed-forward.
    f = (jnp.dot(h, wf1_ref[...], preferred_element_type=jnp.float32)
         + bf1_ref[...])
    # TODO(synk): BART uses exact erf GELU; erf has no Mosaic lowering, so the
    # tanh approximation is used here.
    f = jax.nn.gelu(f)
    f = (jnp.dot(f, wf2_ref[...], preferred_element_type=jnp.float32)
         + bf2_ref[...])
    o_ref[...] = _layernorm(h + f, ln2_g_ref[...], ln2_b_ref[...]
                            ).astype(o_ref.dtype)


def _decoder_kernel(x_ref, enc_ref, lne_g_ref, lne_b_ref,
                    sa_wqkv_ref, sa_bqkv_ref, sa_wo_ref, sa_bo_ref,
                    ln1_g_ref, ln1_b_ref,
                    ca_wq_ref, ca_bq_ref, ca_wkv_ref, ca_bkv_ref,
                    ca_wo_ref, ca_bo_ref,
                    ln2_g_ref, ln2_b_ref,
                    wf1_ref, bf1_ref, wf2_ref, bf2_ref,
                    ln3_g_ref, ln3_b_ref,
                    emb_ref, lm_bias_ref,
                    o_ref, *, batch, seq_q, seq_k):
    x = _layernorm(x_ref[...], lne_g_ref[...], lne_b_ref[...])
    enc_h = enc_ref[...]

    # Causal self-attention (mask built in-kernel via iota, no HBM input).
    qkv = (jnp.dot(x, sa_wqkv_ref[...], preferred_element_type=jnp.float32)
           + sa_bqkv_ref[...])
    q = qkv[:, :D_MODEL]
    k = qkv[:, D_MODEL:2 * D_MODEL]
    v = qkv[:, 2 * D_MODEL:]
    ctx = _attention(q, k, v, batch, seq_q, seq_q, causal=True)
    attn = (jnp.dot(ctx, sa_wo_ref[...], preferred_element_type=jnp.float32)
            + sa_bo_ref[...])
    h = _layernorm(x + attn, ln1_g_ref[...], ln1_b_ref[...])

    # Cross-attention over the encoder output (fused K/V projection).
    q = (jnp.dot(h, ca_wq_ref[...], preferred_element_type=jnp.float32)
         + ca_bq_ref[...])
    kv = (jnp.dot(enc_h, ca_wkv_ref[...], preferred_element_type=jnp.float32)
          + ca_bkv_ref[...])
    k = kv[:, :D_MODEL]
    v = kv[:, D_MODEL:]
    ctx = _attention(q, k, v, batch, seq_q, seq_k, causal=False)
    attn = (jnp.dot(ctx, ca_wo_ref[...], preferred_element_type=jnp.float32)
            + ca_bo_ref[...])
    h = _layernorm(h + attn, ln2_g_ref[...], ln2_b_ref[...])

    # Feed-forward.
    f = (jnp.dot(h, wf1_ref[...], preferred_element_type=jnp.float32)
         + bf1_ref[...])
    f = jax.nn.gelu(f)  # TODO(synk): exact erf GELU (see encoder kernel note)
    f = (jnp.dot(f, wf2_ref[...], preferred_element_type=jnp.float32)
         + bf2_ref[...])
    h = _layernorm(h + f, ln3_g_ref[...], ln3_b_ref[...])

    # Tied LM head: h @ embed_tokens^T with the transpose folded into the
    # dot_general contracting dims (no materialized transpose).
    logits = jax.lax.dot_general(h, emb_ref[...], (((1,), (1,)), ((), ())),
                                 preferred_element_type=jnp.float32)
    o_ref[...] = (logits + lm_bias_ref[...]).astype(o_ref.dtype)


# ---------------- plain-JAX glue --------------------------------------------
def shift_tokens_right(labels, pad_id, start_id):
    shifted = jnp.roll(labels, 1, axis=1)
    shifted = shifted.at[:, 0].set(start_id)
    return jnp.where(shifted == -100, pad_id, shifted)


def _embed(tok_emb, pos_emb, ids):
    B, S = ids.shape
    h = jnp.take(tok_emb, ids, axis=0) + pos_emb[POS_OFFSET:POS_OFFSET + S]
    return h.reshape(B * S, D_MODEL)


def verbalization_forward(params, conversation_ids, answer_ids):
    B, Se = conversation_ids.shape

    # ---- encoder: one fused pallas_call (emb-LN + self-attn + FFN) --------
    enc_in = _embed(params["embed_tokens"], params["enc"]["pos"],
                    conversation_ids)
    ep = params["enc"]["layers"][0]
    enc_flat = pl.pallas_call(
        functools.partial(_encoder_kernel, batch=B, seq=Se),
        out_shape=jax.ShapeDtypeStruct((B * Se, D_MODEL), jnp.float32),
    )(enc_in, params["enc"]["lne_g"], params["enc"]["lne_b"],
      ep["wqkv"], ep["bqkv"], ep["wo"], ep["bo"],
      ep["ln1_g"], ep["ln1_b"],
      ep["wf1"], ep["bf1"], ep["wf2"], ep["bf2"],
      ep["ln2_g"], ep["ln2_b"])

    # ---- decoder + tied LM head: one fused pallas_call ---------------------
    dec_ids = shift_tokens_right(answer_ids, PAD_ID, DECODER_START_ID)
    Sd = dec_ids.shape[1]
    dec_in = _embed(params["embed_tokens"], params["dec"]["pos"], dec_ids)
    dp = params["dec"]["layers"][0]
    logits = pl.pallas_call(
        functools.partial(_decoder_kernel, batch=B, seq_q=Sd, seq_k=Se),
        out_shape=jax.ShapeDtypeStruct((B * Sd, VOCAB), jnp.float32),
    )(dec_in, enc_flat, params["dec"]["lne_g"], params["dec"]["lne_b"],
      dp["sa_wqkv"], dp["sa_bqkv"], dp["sa_wo"], dp["sa_bo"],
      dp["ln1_g"], dp["ln1_b"],
      dp["ca_wq"], dp["ca_bq"], dp["ca_wkv"], dp["ca_bkv"],
      dp["ca_wo"], dp["ca_bo"],
      dp["ln2_g"], dp["ln2_b"],
      dp["wf1"], dp["bf1"], dp["wf2"], dp["bf2"],
      dp["ln3_g"], dp["ln3_b"],
      params["embed_tokens"], params["final_logits_bias"])

    # Deeper stacks would simply chain one fused kernel per layer.
    return {LOGITS: logits, ENCODER_OUT: enc_flat.reshape(B, Se, D_MODEL)}
    # TODO(synk): .predict() (autoregressive generate) is not implemented.


# ---------------- deterministic parameter init -------------------------------
def init_params(key):
    keys = iter(jax.random.split(key, 64))

    def nrm(shape):
        return 0.02 * jax.random.normal(next(keys), shape, jnp.float32)

    def ones(shape):
        return jnp.ones(shape, jnp.float32)

    def zeros(shape):
        return jnp.zeros(shape, jnp.float32)

    def enc_layer():
        return {
            "wqkv": nrm((D_MODEL, 3 * D_MODEL)), "bqkv": zeros((1, 3 * D_MODEL)),
            "wo": nrm((D_MODEL, D_MODEL)), "bo": zeros((1, D_MODEL)),
            "ln1_g": ones((1, D_MODEL)), "ln1_b": zeros((1, D_MODEL)),
            "wf1": nrm((D_MODEL, FFN_DIM)), "bf1": zeros((1, FFN_DIM)),
            "wf2": nrm((FFN_DIM, D_MODEL)), "bf2": zeros((1, D_MODEL)),
            "ln2_g": ones((1, D_MODEL)), "ln2_b": zeros((1, D_MODEL)),
        }

    def dec_layer():
        return {
            "sa_wqkv": nrm((D_MODEL, 3 * D_MODEL)),
            "sa_bqkv": zeros((1, 3 * D_MODEL)),
            "sa_wo": nrm((D_MODEL, D_MODEL)), "sa_bo": zeros((1, D_MODEL)),
            "ln1_g": ones((1, D_MODEL)), "ln1_b": zeros((1, D_MODEL)),
            "ca_wq": nrm((D_MODEL, D_MODEL)), "ca_bq": zeros((1, D_MODEL)),
            "ca_wkv": nrm((D_MODEL, 2 * D_MODEL)),
            "ca_bkv": zeros((1, 2 * D_MODEL)),
            "ca_wo": nrm((D_MODEL, D_MODEL)), "ca_bo": zeros((1, D_MODEL)),
            "ln2_g": ones((1, D_MODEL)), "ln2_b": zeros((1, D_MODEL)),
            "wf1": nrm((D_MODEL, FFN_DIM)), "bf1": zeros((1, FFN_DIM)),
            "wf2": nrm((FFN_DIM, D_MODEL)), "bf2": zeros((1, D_MODEL)),
            "ln3_g": ones((1, D_MODEL)), "ln3_b": zeros((1, D_MODEL)),
        }

    return {
        "embed_tokens": nrm((VOCAB, D_MODEL)),
        "final_logits_bias": zeros((1, VOCAB)),
        "enc": {"pos": nrm((MAX_POS + POS_OFFSET, D_MODEL)),
                "lne_g": ones((1, D_MODEL)), "lne_b": zeros((1, D_MODEL)),
                "layers": [enc_layer()]},
        "dec": {"pos": nrm((MAX_POS + POS_OFFSET, D_MODEL)),
                "lne_g": ones((1, D_MODEL)), "lne_b": zeros((1, D_MODEL)),
                "layers": [dec_layer()]},
    }


if __name__ == "__main__":
    key = jax.random.PRNGKey(0)
    kp, kc, ka = jax.random.split(key, 3)
    params = init_params(kp)

    B, S = 2, 8
    conversation_ids = jax.random.randint(kc, (B, S), 3, VOCAB, dtype=jnp.int32)
    answer_ids = jax.random.randint(ka, (B, S), 3, VOCAB, dtype=jnp.int32)

    fwd = jax.jit(verbalization_forward)
    out = fwd(params, conversation_ids, answer_ids)
    jax.block_until_ready(out)

    assert out[LOGITS].shape == (B * S, VOCAB)
    assert out[ENCODER_OUT].shape == (B, S, D_MODEL)
    assert bool(jnp.all(jnp.isfinite(out[LOGITS])))
    assert bool(jnp.all(jnp.isfinite(out[ENCODER_OUT])))
    print("KERNEL_OK")
</pallas_src>

<mosaic_0001>
module attributes {stable_mosaic.version = 11 : i64} {
  func.func @_encoder_kernel(%arg0: memref<16x128xf32, #tpu.memory_space<vmem>>, %arg1: memref<1x128xf32, #tpu.memory_space<vmem>>, %arg2: memref<1x128xf32, #tpu.memory_space<vmem>>, %arg3: memref<128x384xf32, #tpu.memory_space<vmem>>, %arg4: memref<1x384xf32, #tpu.memory_space<vmem>>, %arg5: memref<128x128xf32, #tpu.memory_space<vmem>>, %arg6: memref<1x128xf32, #tpu.memory_space<vmem>>, %arg7: memref<1x128xf32, #tpu.memory_space<vmem>>, %arg8: memref<1x128xf32, #tpu.memory_space<vmem>>, %arg9: memref<128x256xf32, #tpu.memory_space<vmem>>, %arg10: memref<1x256xf32, #tpu.memory_space<vmem>>, %arg11: memref<256x128xf32, #tpu.memory_space<vmem>>, %arg12: memref<1x128xf32, #tpu.memory_space<vmem>>, %arg13: memref<1x128xf32, #tpu.memory_space<vmem>>, %arg14: memref<1x128xf32, #tpu.memory_space<vmem>>, %arg15: memref<16x128xf32, #tpu.memory_space<vmem>>) attributes {dimension_semantics = [], scalar_prefetch = 0 : i64, scratch_operands = 0 : i64, tpu.core_type = #tpu.core_type<tc>} {
    %c0 = arith.constant 0 : index
    %c0_0 = arith.constant 0 : index
    %0 = vector.load %arg0[%c0, %c0_0] : memref<16x128xf32, #tpu.memory_space<vmem>>, vector<16x128xf32>
    %c0_1 = arith.constant 0 : index
    %c0_2 = arith.constant 0 : index
    %1 = vector.load %arg1[%c0_1, %c0_2] : memref<1x128xf32, #tpu.memory_space<vmem>>, vector<1x128xf32>
    %c0_3 = arith.constant 0 : index
    %c0_4 = arith.constant 0 : index
    %2 = vector.load %arg2[%c0_3, %c0_4] : memref<1x128xf32, #tpu.memory_space<vmem>>, vector<1x128xf32>
    %cst = arith.constant dense<0.000000e+00> : vector<16xf32>
    %3 = vector.multi_reduction <add>, %0, %cst [1] : vector<16x128xf32> to vector<16xf32>
    %4 = vector.shape_cast %3 : vector<16xf32> to vector<16x1xf32>
    %cst_5 = arith.constant 1.280000e+02 : f32
    %5 = vector.broadcast %cst_5 : f32 to vector<16x1xf32>
    %6 = arith.divf %4, %5 : vector<16x1xf32>
    %7 = vector.broadcast %6 : vector<16x1xf32> to vector<16x128xf32>
    %8 = arith.subf %0, %7 : vector<16x128xf32>
    %9 = arith.mulf %8, %8 : vector<16x128xf32>
    %cst_6 = arith.constant dense<0.000000e+00> : vector<16xf32>
    %10 = vector.multi_reduction <add>, %9, %cst_6 [1] : vector<16x128xf32> to vector<16xf32>
    %11 = vector.shape_cast %10 : vector<16xf32> to vector<16x1xf32>
    %cst_7 = arith.constant 1.280000e+02 : f32
    %12 = vector.broadcast %cst_7 : f32 to vector<16x1xf32>
    %13 = arith.divf %11, %12 : vector<16x1xf32>
    %14 = vector.broadcast %6 : vector<16x1xf32> to vector<16x128xf32>
    %15 = arith.subf %0, %14 : vector<16x128xf32>
    %cst_8 = arith.constant 9.99999974E-6 : f32
    %16 = vector.broadcast %cst_8 : f32 to vector<16x1xf32>
    %17 = arith.addf %13, %16 : vector<16x1xf32>
    %18 = math.rsqrt %17 : vector<16x1xf32>
    %19 = vector.broadcast %18 : vector<16x1xf32> to vector<16x128xf32>
    %20 = arith.mulf %15, %19 : vector<16x128xf32>
    %21 = vector.broadcast %1 : vector<1x128xf32> to vector<16x128xf32>
    %22 = arith.mulf %20, %21 : vector<16x128xf32>
    %23 = vector.broadcast %2 : vector<1x128xf32> to vector<16x128xf32>
    %24 = arith.addf %22, %23 : vector<16x128xf32>
    %c0_9 = arith.constant 0 : index
    %c0_10 = arith.constant 0 : index
    %25 = vector.load %arg3[%c0_9, %c0_10] : memref<128x384xf32, #tpu.memory_space<vmem>>, vector<128x384xf32>
    %cst_11 = arith.constant dense<0.000000e+00> : vector<16x384xf32>
    %26 = tpu.matmul %24, %25, %cst_11 {dimension_numbers = #tpu.dot_dimension_numbers<[1], [0], [0], [1], [0, 0, 1, 1], [], []>} : vector<16x128xf32>, vector<128x384xf32>, vector<16x384xf32> -> vector<16x384xf32>
    %c0_12 = arith.constant 0 : index
    %c0_13 = arith.constant 0 : index
    %27 = vector.load %arg4[%c0_12, %c0_13] : memref<1x384xf32, #tpu.memory_space<vmem>>, vector<1x384xf32>
    %28 = vector.broadcast %27 : vector<1x384xf32> to vector<16x384xf32>
    %29 = arith.addf %26, %28 : vector<16x384xf32>
    %30 = vector.extract_strided_slice %29 {offsets = [0, 0], sizes = [16, 128], strides = [1, 1]} : vector<16x384xf32> to vector<16x128xf32>
    %31 = vector.extract_strided_slice %29 {offsets = [0, 128], sizes = [16, 128], strides = [1, 1]} : vector<16x384xf32> to vector<16x128xf32>
    %32 = vector.extract_strided_slice %29 {offsets = [0, 256], sizes = [16, 128], strides = [1, 1]} : vector<16x384xf32> to vector<16x128xf32>
    %33 = vector.extract_strided_slice %30 {offsets = [0, 0], sizes = [8, 32], strides = [1, 1]} : vector<16x128xf32> to vector<8x32xf32>
    %cst_14 = arith.constant 0.176776692 : f32
    %34 = vector.broadcast %cst_14 : f32 to vector<8x32xf32>
    %35 = arith.mulf %33, %34 : vector<8x32xf32>
    %36 = vector.extract_strided_slice %31 {offsets = [0, 0], sizes = [8, 32], strides = [1, 1]} : vector<16x128xf32> to vector<8x32xf32>
    %37 = vector.extract_strided_slice %32 {offsets = [0, 0], sizes = [8, 32], strides = [1, 1]} : vector<16x128xf32> to vector<8x32xf32>
    %cst_15 = arith.constant dense<0.000000e+00> : vector<8x8xf32>
    %38 = tpu.matmul %35, %36, %cst_15 {dimension_numbers = #tpu.dot_dimension_numbers<[1], [1], [0], [0], [0, 0, 1, 0], [], []>} : vector<8x32xf32>, vector<8x32xf32>, vector<8x8xf32> -> vector<8x8xf32>
    %cst_16 = arith.constant dense<0xFF800000> : vector<8xf32>
    %39 = vector.multi_reduction <maximumf>, %38, %cst_16 [1] : vector<8x8xf32> to vector<8xf32>
    %40 = vector.shape_cast %39 : vector<8xf32> to vector<8x1xf32>
    %41 = vector.broadcast %40 : vector<8x1xf32> to vector<8x8xf32>
    %42 = arith.subf %38, %41 : vector<8x8xf32>
    %43 = math.exp %42 : vector<8x8xf32>
    %cst_17 = arith.constant dense<0.000000e+00> : vector<8xf32>
    %44 = vector.multi_reduction <add>, %43, %cst_17 [1] : vector<8x8xf32> to vector<8xf32>
    %45 = vector.shape_cast %44 : vector<8xf32> to vector<8x1xf32>
    %46 = tpu.reciprocal %45 {approx = true} : vector<8x1xf32> -> vector<8x1xf32>
    %47 = vector.broadcast %46 : vector<8x1xf32> to vector<8x8xf32>
    %48 = arith.mulf %43, %47 : vector<8x8xf32>
    %cst_18 = arith.constant dense<0.000000e+00> : vector<8x32xf32>
    %49 = tpu.matmul %48, %37, %cst_18 {dimension_numbers = #tpu.dot_dimension_numbers<[1], [0], [0], [1], [0, 0, 1, 1], [], []>} : vector<8x8xf32>, vector<8x32xf32>, vector<8x32xf32> -> vector<8x32xf32>
    %50 = vector.extract_strided_slice %30 {offsets = [0, 32], sizes = [8, 32], strides = [1, 1]} : vector<16x128xf32> to vector<8x32xf32>
    %cst_19 = arith.constant 0.176776692 : f32
    %51 = vector.broadcast %cst_19 : f32 to vector<8x32xf32>
    %52 = arith.mulf %50, %51 : vector<8x32xf32>
    %53 = vector.extract_strided_slice %31 {offsets = [0, 32], sizes = [8, 32], strides = [1, 1]} : vector<16x128xf32> to vector<8x32xf32>
    %54 = vector.extract_strided_slice %32 {offsets = [0, 32], sizes = [8, 32], strides = [1, 1]} : vector<16x128xf32> to vector<8x32xf32>
    %cst_20 = arith.constant dense<0.000000e+00> : vector<8x8xf32>
    %55 = tpu.matmul %52, %53, %cst_20 {dimension_numbers = #tpu.dot_dimension_numbers<[1], [1], [0], [0], [0, 0, 1, 0], [], []>} : vector<8x32xf32>, vector<8x32xf32>, vector<8x8xf32> -> vector<8x8xf32>
    %cst_21 = arith.constant dense<0xFF800000> : vector<8xf32>
    %56 = vector.multi_reduction <maximumf>, %55, %cst_21 [1] : vector<8x8xf32> to vector<8xf32>
    %57 = vector.shape_cast %56 : vector<8xf32> to vector<8x1xf32>
    %58 = vector.broadcast %57 : vector<8x1xf32> to vector<8x8xf32>
    %59 = arith.subf %55, %58 : vector<8x8xf32>
    %60 = math.exp %59 : vector<8x8xf32>
    %cst_22 = arith.constant dense<0.000000e+00> : vector<8xf32>
    %61 = vector.multi_reduction <add>, %60, %cst_22 [1] : vector<8x8xf32> to vector<8xf32>
    %62 = vector.shape_cast %61 : vector<8xf32> to vector<8x1xf32>
    %63 = tpu.reciprocal %62 {approx = true} : vector<8x1xf32> -> vector<8x1xf32>
    %64 = vector.broadcast %63 : vector<8x1xf32> to vector<8x8xf32>
    %65 = arith.mulf %60, %64 : vector<8x8xf32>
    %cst_23 = arith.constant dense<0.000000e+00> : vector<8x32xf32>
    %66 = tpu.matmul %65, %54, %cst_23 {dimension_numbers = #tpu.dot_dimension_numbers<[1], [0], [0], [1], [0, 0, 1, 1], [], []>} : vector<8x8xf32>, vector<8x32xf32>, vector<8x32xf32> -> vector<8x32xf32>
    %67 = vector.extract_strided_slice %30 {offsets = [0, 64], sizes = [8, 32], strides = [1, 1]} : vector<16x128xf32> to vector<8x32xf32>
    %cst_24 = arith.constant 0.176776692 : f32
    %68 = vector.broadcast %cst_24 : f32 to vector<8x32xf32>
    %69 = arith.mulf %67, %68 : vector<8x32xf32>
    %70 = vector.extract_strided_slice %31 {offsets = [0, 64], sizes = [8, 32], strides = [1, 1]} : vector<16x128xf32> to vector<8x32xf32>
    %71 = vector.extract_strided_slice %32 {offsets = [0, 64], sizes = [8, 32], strides = [1, 1]} : vector<16x128xf32> to vector<8x32xf32>
    %cst_25 = arith.constant dense<0.000000e+00> : vector<8x8xf32>
    %72 = tpu.matmul %69, %70, %cst_25 {dimension_numbers = #tpu.dot_dimension_numbers<[1], [1], [0], [0], [0, 0, 1, 0], [], []>} : vector<8x32xf32>, vector<8x32xf32>, vector<8x8xf32> -> vector<8x8xf32>
    %cst_26 = arith.constant dense<0xFF800000> : vector<8xf32>
    %73 = vector.multi_reduction <maximumf>, %72, %cst_26 [1] : vector<8x8xf32> to vector<8xf32>
    %74 = vector.shape_cast %73 : vector<8xf32> to vector<8x1xf32>
    %75 = vector.broadcast %74 : vector<8x1xf32> to vector<8x8xf32>
    %76 = arith.subf %72, %75 : vector<8x8xf32>
    %77 = math.exp %76 : vector<8x8xf32>
    %cst_27 = arith.constant dense<0.000000e+00> : vector<8xf32>
    %78 = vector.multi_reduction <add>, %77, %cst_27 [1] : vector<8x8xf32> to vector<8xf32>
    %79 = vector.shape_cast %78 : vector<8xf32> to vector<8x1xf32>
    %80 = tpu.reciprocal %79 {approx = true} : vector<8x1xf32> -> vector<8x1xf32>
    %81 = vector.broadcast %80 : vector<8x1xf32> to vector<8x8xf32>
    %82 = arith.mulf %77, %81 : vector<8x8xf32>
    %cst_28 = arith.constant dense<0.000000e+00> : vector<8x32xf32>
    %83 = tpu.matmul %82, %71, %cst_28 {dimension_numbers = #tpu.dot_dimension_numbers<[1], [0], [0], [1], [0, 0, 1, 1], [], []>} : vector<8x8xf32>, vector<8x32xf32>, vector<8x32xf32> -> vector<8x32xf32>
    %84 = vector.extract_strided_slice %30 {offsets = [0, 96], sizes = [8, 32], strides = [1, 1]} : vector<16x128xf32> to vector<8x32xf32>
    %cst_29 = arith.constant 0.176776692 : f32
    %85 = vector.broadcast %cst_29 : f32 to vector<8x32xf32>
    %86 = arith.mulf %84, %85 : vector<8x32xf32>
    %87 = vector.extract_strided_slice %31 {offsets = [0, 96], sizes = [8, 32], strides = [1, 1]} : vector<16x128xf32> to vector<8x32xf32>
    %88 = vector.extract_strided_slice %32 {offsets = [0, 96], sizes = [8, 32], strides = [1, 1]} : vector<16x128xf32> to vector<8x32xf32>
    %cst_30 = arith.constant dense<0.000000e+00> : vector<8x8xf32>
    %89 = tpu.matmul %86, %87, %cst_30 {dimension_numbers = #tpu.dot_dimension_numbers<[1], [1], [0], [0], [0, 0, 1, 0], [], []>} : vector<8x32xf32>, vector<8x32xf32>, vector<8x8xf32> -> vector<8x8xf32>
    %cst_31 = arith.constant dense<0xFF800000> : vector<8xf32>
    %90 = vector.multi_reduction <maximumf>, %89, %cst_31 [1] : vector<8x8xf32> to vector<8xf32>
    %91 = vector.shape_cast %90 : vector<8xf32> to vector<8x1xf32>
    %92 = vector.broadcast %91 : vector<8x1xf32> to vector<8x8xf32>
    %93 = arith.subf %89, %92 : vector<8x8xf32>
    %94 = math.exp %93 : vector<8x8xf32>
    %cst_32 = arith.constant dense<0.000000e+00> : vector<8xf32>
    %95 = vector.multi_reduction <add>, %94, %cst_32 [1] : vector<8x8xf32> to vector<8xf32>
    %96 = vector.shape_cast %95 : vector<8xf32> to vector<8x1xf32>
    %97 = tpu.reciprocal %96 {approx = true} : vector<8x1xf32> -> vector<8x1xf32>
    %98 = vector.broadcast %97 : vector<8x1xf32> to vector<8x8xf32>
    %99 = arith.mulf %94, %98 : vector<8x8xf32>
    %cst_33 = arith.constant dense<0.000000e+00> : vector<8x32xf32>
    %100 = tpu.matmul %99, %88, %cst_33 {dimension_numbers = #tpu.dot_dimension_numbers<[1], [0], [0], [1], [0, 0, 1, 1], [], []>} : vector<8x8xf32>, vector<8x32xf32>, vector<8x32xf32> -> vector<8x32xf32>
    %101 = tpu.concatenate %49, %66, %83, %100 in 1 : vector<8x32xf32>, vector<8x32xf32>, vector<8x32xf32>, vector<8x32xf32> -> vector<8x128xf32>
    %102 = vector.extract_strided_slice %30 {offsets = [8, 0], sizes = [8, 32], strides = [1, 1]} : vector<16x128xf32> to vector<8x32xf32>
    %cst_34 = arith.constant 0.176776692 : f32
    %103 = vector.broadcast %cst_34 : f32 to vector<8x32xf32>
    %104 = arith.mulf %102, %103 : vector<8x32xf32>
    %105 = vector.extract_strided_slice %31 {offsets = [8, 0], sizes = [8, 32], strides = [1, 1]} : vector<16x128xf32> to vector<8x32xf32>
    %106 = vector.extract_strided_slice %32 {offsets = [8, 0], sizes = [8, 32], strides = [1, 1]} : vector<16x128xf32> to vector<8x32xf32>
    %cst_35 = arith.constant dense<0.000000e+00> : vector<8x8xf32>
    %107 = tpu.matmul %104, %105, %cst_35 {dimension_numbers = #tpu.dot_dimension_numbers<[1], [1], [0], [0], [0, 0, 1, 0], [], []>} : vector<8x32xf32>, vector<8x32xf32>, vector<8x8xf32> -> vector<8x8xf32>
    %cst_36 = arith.constant dense<0xFF800000> : vector<8xf32>
    %108 = vector.multi_reduction <maximumf>, %107, %cst_36 [1] : vector<8x8xf32> to vector<8xf32>
    %109 = vector.shape_cast %108 : vector<8xf32> to vector<8x1xf32>
    %110 = vector.broadcast %109 : vector<8x1xf32> to vector<8x8xf32>
    %111 = arith.subf %107, %110 : vector<8x8xf32>
    %112 = math.exp %111 : vector<8x8xf32>
    %cst_37 = arith.constant dense<0.000000e+00> : vector<8xf32>
    %113 = vector.multi_reduction <add>, %112, %cst_37 [1] : vector<8x8xf32> to vector<8xf32>
    %114 = vector.shape_cast %113 : vector<8xf32> to vector<8x1xf32>
    %115 = tpu.reciprocal %114 {approx = true} : vector<8x1xf32> -> vector<8x1xf32>
    %116 = vector.broadcast %115 : vector<8x1xf32> to vector<8x8xf32>
    %117 = arith.mulf %112, %116 : vector<8x8xf32>
    %cst_38 = arith.constant dense<0.000000e+00> : vector<8x32xf32>
    %118 = tpu.matmul %117, %106, %cst_38 {dimension_numbers = #tpu.dot_dimension_numbers<[1], [0], [0], [1], [0, 0, 1, 1], [], []>} : vector<8x8xf32>, vector<8x32xf32>, vector<8x32xf32> -> vector<8x32xf32>
    %119 = vector.extract_strided_slice %30 {offsets = [8, 32], sizes = [8, 32], strides = [1, 1]} : vector<16x128xf32> to vector<8x32xf32>
    %cst_39 = arith.constant 0.176776692 : f32
    %120 = vector.broadcast %cst_39 : f32 to vector<8x32xf32>
    %121 = arith.mulf %119, %120 : vector<8x32xf32>
    %122 = vector.extract_strided_slice %31 {offsets = [8, 32], sizes = [8, 32], strides = [1, 1]} : vector<16x128xf32> to vector<8x32xf32>
    %123 = vector.extract_strided_slice %32 {offsets = [8, 32], sizes = [8, 32], strides = [1, 1]} : vector<16x128xf32> to vector<8x32xf32>
    %cst_40 = arith.constant dense<0.000000e+00> : vector<8x8xf32>
    %124 = tpu.matmul %121, %122, %cst_40 {dimension_numbers = #tpu.dot_dimension_numbers<[1], [1], [0], [0], [0, 0, 1, 0], [], []>} : vector<8x32xf32>, vector<8x32xf32>, vector<8x8xf32> -> vector<8x8xf32>
    %cst_41 = arith.constant dense<0xFF800000> : vector<8xf32>
    %125 = vector.multi_reduction <maximumf>, %124, %cst_41 [1] : vector<8x8xf32> to vector<8xf32>
    %126 = vector.shape_cast %125 : vector<8xf32> to vector<8x1xf32>
    %127 = vector.broadcast %126 : vector<8x1xf32> to vector<8x8xf32>
    %128 = arith.subf %124, %127 : vector<8x8xf32>
    %129 = math.exp %128 : vector<8x8xf32>
    %cst_42 = arith.constant dense<0.000000e+00> : vector<8xf32>
    %130 = vector.multi_reduction <add>, %129, %cst_42 [1] : vector<8x8xf32> to vector<8xf32>
    %131 = vector.shape_cast %130 : vector<8xf32> to vector<8x1xf32>
    %132 = tpu.reciprocal %131 {approx = true} : vector<8x1xf32> -> vector<8x1xf32>
    %133 = vector.broadcast %132 : vector<8x1xf32> to vector<8x8xf32>
    %134 = arith.mulf %129, %133 : vector<8x8xf32>
    %cst_43 = arith.constant dense<0.000000e+00> : vector<8x32xf32>
    %135 = tpu.matmul %134, %123, %cst_43 {dimension_numbers = #tpu.dot_dimension_numbers<[1], [0], [0], [1], [0, 0, 1, 1], [], []>} : vector<8x8xf32>, vector<8x32xf32>, vector<8x32xf32> -> vector<8x32xf32>
    %136 = vector.extract_strided_slice %30 {offsets = [8, 64], sizes = [8, 32], strides = [1, 1]} : vector<16x128xf32> to vector<8x32xf32>
    %cst_44 = arith.constant 0.176776692 : f32
    %137 = vector.broadcast %cst_44 : f32 to vector<8x32xf32>
    %138 = arith.mulf %136, %137 : vector<8x32xf32>
    %139 = vector.extract_strided_slice %31 {offsets = [8, 64], sizes = [8, 32], strides = [1, 1]} : vector<16x128xf32> to vector<8x32xf32>
    %140 = vector.extract_strided_slice %32 {offsets = [8, 64], sizes = [8, 32], strides = [1, 1]} : vector<16x128xf32> to vector<8x32xf32>
    %cst_45 = arith.constant dense<0.000000e+00> : vector<8x8xf32>
    %141 = tpu.matmul %138, %139, %cst_45 {dimension_numbers = #tpu.dot_dimension_numbers<[1], [1], [0], [0], [0, 0, 1, 0], [], []>} : vector<8x32xf32>, vector<8x32xf32>, vector<8x8xf32> -> vector<8x8xf32>
    %cst_46 = arith.constant dense<0xFF800000> : vector<8xf32>
    %142 = vector.multi_reduction <maximumf>, %141, %cst_46 [1] : vector<8x8xf32> to vector<8xf32>
    %143 = vector.shape_cast %142 : vector<8xf32> to vector<8x1xf32>
    %144 = vector.broadcast %143 : vector<8x1xf32> to vector<8x8xf32>
    %145 = arith.subf %141, %144 : vector<8x8xf32>
    %146 = math.exp %145 : vector<8x8xf32>
    %cst_47 = arith.constant dense<0.000000e+00> : vector<8xf32>
    %147 = vector.multi_reduction <add>, %146, %cst_47 [1] : vector<8x8xf32> to vector<8xf32>
    %148 = vector.shape_cast %147 : vector<8xf32> to vector<8x1xf32>
    %149 = tpu.reciprocal %148 {approx = true} : vector<8x1xf32> -> vector<8x1xf32>
    %150 = vector.broadcast %149 : vector<8x1xf32> to vector<8x8xf32>
    %151 = arith.mulf %146, %150 : vector<8x8xf32>
    %cst_48 = arith.constant dense<0.000000e+00> : vector<8x32xf32>
    %152 = tpu.matmul %151, %140, %cst_48 {dimension_numbers = #tpu.dot_dimension_numbers<[1], [0], [0], [1], [0, 0, 1, 1], [], []>} : vector<8x8xf32>, vector<8x32xf32>, vector<8x32xf32> -> vector<8x32xf32>
    %153 = vector.extract_strided_slice %30 {offsets = [8, 96], sizes = [8, 32], strides = [1, 1]} : vector<16x128xf32> to vector<8x32xf32>
    %cst_49 = arith.constant 0.176776692 : f32
    %154 = vector.broadcast %cst_49 : f32 to vector<8x32xf32>
    %155 = arith.mulf %153, %154 : vector<8x32xf32>
    %156 = vector.extract_strided_slice %31 {offsets = [8, 96], sizes = [8, 32], strides = [1, 1]} : vector<16x128xf32> to vector<8x32xf32>
    %157 = vector.extract_strided_slice %32 {offsets = [8, 96], sizes = [8, 32], strides = [1, 1]} : vector<16x128xf32> to vector<8x32xf32>
    %cst_50 = arith.constant dense<0.000000e+00> : vector<8x8xf32>
    %158 = tpu.matmul %155, %156, %cst_50 {dimension_numbers = #tpu.dot_dimension_numbers<[1], [1], [0], [0], [0, 0, 1, 0], [], []>} : vector<8x32xf32>, vector<8x32xf32>, vector<8x8xf32> -> vector<8x8xf32>
    %cst_51 = arith.constant dense<0xFF800000> : vector<8xf32>
    %159 = vector.multi_reduction <maximumf>, %158, %cst_51 [1] : vector<8x8xf32> to vector<8xf32>
    %160 = vector.shape_cast %159 : vector<8xf32> to vector<8x1xf32>
    %161 = vector.broadcast %160 : vector<8x1xf32> to vector<8x8xf32>
    %162 = arith.subf %158, %161 : vector<8x8xf32>
    %163 = math.exp %162 : vector<8x8xf32>
    %cst_52 = arith.constant dense<0.000000e+00> : vector<8xf32>
    %164 = vector.multi_reduction <add>, %163, %cst_52 [1] : vector<8x8xf32> to vector<8xf32>
    %165 = vector.shape_cast %164 : vector<8xf32> to vector<8x1xf32>
    %166 = tpu.reciprocal %165 {approx = true} : vector<8x1xf32> -> vector<8x1xf32>
    %167 = vector.broadcast %166 : vector<8x1xf32> to vector<8x8xf32>
    %168 = arith.mulf %163, %167 : vector<8x8xf32>
    %cst_53 = arith.constant dense<0.000000e+00> : vector<8x32xf32>
    %169 = tpu.matmul %168, %157, %cst_53 {dimension_numbers = #tpu.dot_dimension_numbers<[1], [0], [0], [1], [0, 0, 1, 1], [], []>} : vector<8x8xf32>, vector<8x32xf32>, vector<8x32xf32> -> vector<8x32xf32>
    %170 = tpu.concatenate %118, %135, %152, %169 in 1 : vector<8x32xf32>, vector<8x32xf32>, vector<8x32xf32>, vector<8x32xf32> -> vector<8x128xf32>
    %171 = tpu.concatenate %101, %170 in 0 : vector<8x128xf32>, vector<8x128xf32> -> vector<16x128xf32>
    %c0_54 = arith.constant 0 : index
    %c0_55 = arith.constant 0 : index
    %172 = vector.load %arg5[%c0_54, %c0_55] : memref<128x128xf32, #tpu.memory_space<vmem>>, vector<128x128xf32>
    %cst_56 = arith.constant dense<0.000000e+00> : vector<16x128xf32>
    %173 = tpu.matmul %171, %172, %cst_56 {dimension_numbers = #tpu.dot_dimension_numbers<[1], [0], [0], [1], [0, 0, 1, 1], [], []>} : vector<16x128xf32>, vector<128x128xf32>, vector<16x128xf32> -> vector<16x128xf32>
    %c0_57 = arith.constant 0 : index
    %c0_58 = arith.constant 0 : index
    %174 = vector.load %arg6[%c0_57, %c0_58] : memref<1x128xf32, #tpu.memory_space<vmem>>, vector<1x128xf32>
    %175 = vector.broadcast %174 : vector<1x128xf32> to vector<16x128xf32>
    %176 = arith.addf %173, %175 : vector<16x128xf32>
    %177 = arith.addf %24, %176 : vector<16x128xf32>
    %c0_59 = arith.constant 0 : index
    %c0_60 = arith.constant 0 : index
    %178 = vector.load %arg7[%c0_59, %c0_60] : memref<1x128xf32, #tpu.memory_space<vmem>>, vector<1x128xf32>
    %c0_61 = arith.constant 0 : index
    %c0_62 = arith.constant 0 : index
    %179 = vector.load %arg8[%c0_61, %c0_62] : memref<1x128xf32, #tpu.memory_space<vmem>>, vector<1x128xf32>
    %cst_63 = arith.constant dense<0.000000e+00> : vector<16xf32>
    %180 = vector.multi_reduction <add>, %177, %cst_63 [1] : vector<16x128xf32> to vector<16xf32>
    %181 = vector.shape_cast %180 : vector<16xf32> to vector<16x1xf32>
    %cst_64 = arith.constant 1.280000e+02 : f32
    %182 = vector.broadcast %cst_64 : f32 to vector<16x1xf32>
    %183 = arith.divf %181, %182 : vector<16x1xf32>
    %184 = vector.broadcast %183 : vector<16x1xf32> to vector<16x128xf32>
    %185 = arith.subf %177, %184 : vector<16x128xf32>
    %186 = arith.mulf %185, %185 : vector<16x128xf32>
    %cst_65 = arith.constant dense<0.000000e+00> : vector<16xf32>
    %187 = vector.multi_reduction <add>, %186, %cst_65 [1] : vector<16x128xf32> to vector<16xf32>
    %188 = vector.shape_cast %187 : vector<16xf32> to vector<16x1xf32>
    %cst_66 = arith.constant 1.280000e+02 : f32
    %189 = vector.broadcast %cst_66 : f32 to vector<16x1xf32>
    %190 = arith.divf %188, %189 : vector<16x1xf32>
    %191 = vector.broadcast %183 : vector<16x1xf32> to vector<16x128xf32>
    %192 = arith.subf %177, %191 : vector<16x128xf32>
    %cst_67 = arith.constant 9.99999974E-6 : f32
    %193 = vector.broadcast %cst_67 : f32 to vector<16x1xf32>
    %194 = arith.addf %190, %193 : vector<16x1xf32>
    %195 = math.rsqrt %194 : vector<16x1xf32>
    %196 = vector.broadcast %195 : vector<16x1xf32> to vector<16x128xf32>
    %197 = arith.mulf %192, %196 : vector<16x128xf32>
    %198 = vector.broadcast %178 : vector<1x128xf32> to vector<16x128xf32>
    %199 = arith.mulf %197, %198 : vector<16x128xf32>
    %200 = vector.broadcast %179 : vector<1x128xf32> to vector<16x128xf32>
    %201 = arith.addf %199, %200 : vector<16x128xf32>
    %c0_68 = arith.constant 0 : index
    %c0_69 = arith.constant 0 : index
    %202 = vector.load %arg9[%c0_68, %c0_69] : memref<128x256xf32, #tpu.memory_space<vmem>>, vector<128x256xf32>
    %cst_70 = arith.constant dense<0.000000e+00> : vector<16x256xf32>
    %203 = tpu.matmul %201, %202, %cst_70 {dimension_numbers = #tpu.dot_dimension_numbers<[1], [0], [0], [1], [0, 0, 1, 1], [], []>} : vector<16x128xf32>, vector<128x256xf32>, vector<16x256xf32> -> vector<16x256xf32>
    %c0_71 = arith.constant 0 : index
    %c0_72 = arith.constant 0 : index
    %204 = vector.load %arg10[%c0_71, %c0_72] : memref<1x256xf32, #tpu.memory_space<vmem>>, vector<1x256xf32>
    %205 = vector.broadcast %204 : vector<1x256xf32> to vector<16x256xf32>
    %206 = arith.addf %203, %205 : vector<16x256xf32>
    %207 = arith.mulf %206, %206 : vector<16x256xf32>
    %208 = arith.mulf %206, %207 : vector<16x256xf32>
    %cst_73 = arith.constant 4.471500e-02 : f32
    %209 = vector.broadcast %cst_73 : f32 to vector<16x256xf32>
    %210 = arith.mulf %209, %208 : vector<16x256xf32>
    %211 = arith.addf %206, %210 : vector<16x256xf32>
    %cst_74 = arith.constant 0.797884583 : f32
    %212 = vector.broadcast %cst_74 : f32 to vector<16x256xf32>
    %213 = arith.mulf %212, %211 : vector<16x256xf32>
    %214 = math.tanh %213 : vector<16x256xf32>
    %cst_75 = arith.constant 1.000000e+00 : f32
    %215 = vector.broadcast %cst_75 : f32 to vector<16x256xf32>
    %216 = arith.addf %215, %214 : vector<16x256xf32>
    %cst_76 = arith.constant 5.000000e-01 : f32
    %217 = vector.broadcast %cst_76 : f32 to vector<16x256xf32>
    %218 = arith.mulf %217, %216 : vector<16x256xf32>
    %219 = arith.mulf %206, %218 : vector<16x256xf32>
    %c0_77 = arith.constant 0 : index
    %c0_78 = arith.constant 0 : index
    %220 = vector.load %arg11[%c0_77, %c0_78] : memref<256x128xf32, #tpu.memory_space<vmem>>, vector<256x128xf32>
    %cst_79 = arith.constant dense<0.000000e+00> : vector<16x128xf32>
    %221 = tpu.matmul %219, %220, %cst_79 {dimension_numbers = #tpu.dot_dimension_numbers<[1], [0], [0], [1], [0, 0, 1, 1], [], []>} : vector<16x256xf32>, vector<256x128xf32>, vector<16x128xf32> -> vector<16x128xf32>
    %c0_80 = arith.constant 0 : index
    %c0_81 = arith.constant 0 : index
    %222 = vector.load %arg12[%c0_80, %c0_81] : memref<1x128xf32, #tpu.memory_space<vmem>>, vector<1x128xf32>
    %223 = vector.broadcast %222 : vector<1x128xf32> to vector<16x128xf32>
    %224 = arith.addf %221, %223 : vector<16x128xf32>
    %225 = arith.addf %201, %224 : vector<16x128xf32>
    %c0_82 = arith.constant 0 : index
    %c0_83 = arith.constant 0 : index
    %226 = vector.load %arg13[%c0_82, %c0_83] : memref<1x128xf32, #tpu.memory_space<vmem>>, vector<1x128xf32>
    %c0_84 = arith.constant 0 : index
    %c0_85 = arith.constant 0 : index
    %227 = vector.load %arg14[%c0_84, %c0_85] : memref<1x128xf32, #tpu.memory_space<vmem>>, vector<1x128xf32>
    %cst_86 = arith.constant dense<0.000000e+00> : vector<16xf32>
    %228 = vector.multi_reduction <add>, %225, %cst_86 [1] : vector<16x128xf32> to vector<16xf32>
    %229 = vector.shape_cast %228 : vector<16xf32> to vector<16x1xf32>
    %cst_87 = arith.constant 1.280000e+02 : f32
    %230 = vector.broadcast %cst_87 : f32 to vector<16x1xf32>
    %231 = arith.divf %229, %230 : vector<16x1xf32>
    %232 = vector.broadcast %231 : vector<16x1xf32> to vector<16x128xf32>
    %233 = arith.subf %225, %232 : vector<16x128xf32>
    %234 = arith.mulf %233, %233 : vector<16x128xf32>
    %cst_88 = arith.constant dense<0.000000e+00> : vector<16xf32>
    %235 = vector.multi_reduction <add>, %234, %cst_88 [1] : vector<16x128xf32> to vector<16xf32>
    %236 = vector.shape_cast %235 : vector<16xf32> to vector<16x1xf32>
    %cst_89 = arith.constant 1.280000e+02 : f32
    %237 = vector.broadcast %cst_89 : f32 to vector<16x1xf32>
    %238 = arith.divf %236, %237 : vector<16x1xf32>
    %239 = vector.broadcast %231 : vector<16x1xf32> to vector<16x128xf32>
    %240 = arith.subf %225, %239 : vector<16x128xf32>
    %cst_90 = arith.constant 9.99999974E-6 : f32
    %241 = vector.broadcast %cst_90 : f32 to vector<16x1xf32>
    %242 = arith.addf %238, %241 : vector<16x1xf32>
    %243 = math.rsqrt %242 : vector<16x1xf32>
    %244 = vector.broadcast %243 : vector<16x1xf32> to vector<16x128xf32>
    %245 = arith.mulf %240, %244 : vector<16x128xf32>
    %246 = vector.broadcast %226 : vector<1x128xf32> to vector<16x128xf32>
    %247 = arith.mulf %245, %246 : vector<16x128xf32>
    %248 = vector.broadcast %227 : vector<1x128xf32> to vector<16x128xf32>
    %249 = arith.addf %247, %248 : vector<16x128xf32>
    %c0_91 = arith.constant 0 : index
    %c0_92 = arith.constant 0 : index
    %250 = vector.load %arg15[%c0_91, %c0_92] : memref<16x128xf32, #tpu.memory_space<vmem>>, vector<16x128xf32>
    tpu.vector_store %arg15[%c0_91, %c0_92], %249 {strides = array<i32>} : memref<16x128xf32, #tpu.memory_space<vmem>>, vector<16x128xf32>,
    return
  }
}

module attributes {stable_mosaic.version = 11 : i64} {
  func.func @_decoder_kernel(%arg0: memref<16x128xf32, #tpu.memory_space<vmem>>, %arg1: memref<16x128xf32, #tpu.memory_space<vmem>>, %arg2: memref<1x128xf32, #tpu.memory_space<vmem>>, %arg3: memref<1x128xf32, #tpu.memory_space<vmem>>, %arg4: memref<128x384xf32, #tpu.memory_space<vmem>>, %arg5: memref<1x384xf32, #tpu.memory_space<vmem>>, %arg6: memref<128x128xf32, #tpu.memory_space<vmem>>, %arg7: memref<1x128xf32, #tpu.memory_space<vmem>>, %arg8: memref<1x128xf32, #tpu.memory_space<vmem>>, %arg9: memref<1x128xf32, #tpu.memory_space<vmem>>, %arg10: memref<128x128xf32, #tpu.memory_space<vmem>>, %arg11: memref<1x128xf32, #tpu.memory_space<vmem>>, %arg12: memref<128x256xf32, #tpu.memory_space<vmem>>, %arg13: memref<1x256xf32, #tpu.memory_space<vmem>>, %arg14: memref<128x128xf32, #tpu.memory_space<vmem>>, %arg15: memref<1x128xf32, #tpu.memory_space<vmem>>, %arg16: memref<1x128xf32, #tpu.memory_space<vmem>>, %arg17: memref<1x128xf32, #tpu.memory_space<vmem>>, %arg18: memref<128x256xf32, #tpu.memory_space<vmem>>, %arg19: memref<1x256xf32, #tpu.memory_space<vmem>>, %arg20: memref<256x128xf32, #tpu.memory_space<vmem>>, %arg21: memref<1x128xf32, #tpu.memory_space<vmem>>, %arg22: memref<1x128xf32, #tpu.memory_space<vmem>>, %arg23: memref<1x128xf32, #tpu.memory_space<vmem>>, %arg24: memref<128x128xf32, #tpu.memory_space<vmem>>, %arg25: memref<1x128xf32, #tpu.memory_space<vmem>>, %arg26: memref<16x128xf32, #tpu.memory_space<vmem>>) attributes {dimension_semantics = [], scalar_prefetch = 0 : i64, scratch_operands = 0 : i64, tpu.core_type = #tpu.core_type<tc>} {
    %c0 = arith.constant 0 : index
    %c0_0 = arith.constant 0 : index
    %0 = vector.load %arg0[%c0, %c0_0] : memref<16x128xf32, #tpu.memory_space<vmem>>, vector<16x128xf32>
    %c0_1 = arith.constant 0 : index
    %c0_2 = arith.constant 0 : index
    %1 = vector.load %arg2[%c0_1, %c0_2] : memref<1x128xf32, #tpu.memory_space<vmem>>, vector<1x128xf32>
    %c0_3 = arith.constant 0 : index
    %c0_4 = arith.constant 0 : index
    %2 = vector.load %arg3[%c0_3, %c0_4] : memref<1x128xf32, #tpu.memory_space<vmem>>, vector<1x128xf32>
    %cst = arith.constant dense<0.000000e+00> : vector<16xf32>
    %3 = vector.multi_reduction <add>, %0, %cst [1] : vector<16x128xf32> to vector<16xf32>
    %4 = vector.shape_cast %3 : vector<16xf32> to vector<16x1xf32>
    %cst_5 = arith.constant 1.280000e+02 : f32
    %5 = vector.broadcast %cst_5 : f32 to vector<16x1xf32>
    %6 = arith.divf %4, %5 : vector<16x1xf32>
    %7 = vector.broadcast %6 : vector<16x1xf32> to vector<16x128xf32>
    %8 = arith.subf %0, %7 : vector<16x128xf32>
    %9 = arith.mulf %8, %8 : vector<16x128xf32>
    %cst_6 = arith.constant dense<0.000000e+00> : vector<16xf32>
    %10 = vector.multi_reduction <add>, %9, %cst_6 [1] : vector<16x128xf32> to vector<16xf32>
    %11 = vector.shape_cast %10 : vector<16xf32> to vector<16x1xf32>
    %cst_7 = arith.constant 1.280000e+02 : f32
    %12 = vector.broadcast %cst_7 : f32 to vector<16x1xf32>
    %13 = arith.divf %11, %12 : vector<16x1xf32>
    %14 = vector.broadcast %6 : vector<16x1xf32> to vector<16x128xf32>
    %15 = arith.subf %0, %14 : vector<16x128xf32>
    %cst_8 = arith.constant 9.99999974E-6 : f32
    %16 = vector.broadcast %cst_8 : f32 to vector<16x1xf32>
    %17 = arith.addf %13, %16 : vector<16x1xf32>
    %18 = math.rsqrt %17 : vector<16x1xf32>
    %19 = vector.broadcast %18 : vector<16x1xf32> to vector<16x128xf32>
    %20 = arith.mulf %15, %19 : vector<16x128xf32>
    %21 = vector.broadcast %1 : vector<1x128xf32> to vector<16x128xf32>
    %22 = arith.mulf %20, %21 : vector<16x128xf32>
    %23 = vector.broadcast %2 : vector<1x128xf32> to vector<16x128xf32>
    %24 = arith.addf %22, %23 : vector<16x128xf32>
    %c0_9 = arith.constant 0 : index
    %c0_10 = arith.constant 0 : index
    %25 = vector.load %arg1[%c0_9, %c0_10] : memref<16x128xf32, #tpu.memory_space<vmem>>, vector<16x128xf32>
    %c0_11 = arith.constant 0 : index
    %c0_12 = arith.constant 0 : index
    %26 = vector.load %arg4[%c0_11, %c0_12] : memref<128x384xf32, #tpu.memory_space<vmem>>, vector<128x384xf32>
    %cst_13 = arith.constant dense<0.000000e+00> : vector<16x384xf32>
    %27 = tpu.matmul %24, %26, %cst_13 {dimension_numbers = #tpu.dot_dimension_numbers<[1], [0], [0], [1], [0, 0, 1, 1], [], []>} : vector<16x128xf32>, vector<128x384xf32>, vector<16x384xf32> -> vector<16x384xf32>
    %c0_14 = arith.constant 0 : index
    %c0_15 = arith.constant 0 : index
    %28 = vector.load %arg5[%c0_14, %c0_15] : memref<1x384xf32, #tpu.memory_space<vmem>>, vector<1x384xf32>
    %29 = vector.broadcast %28 : vector<1x384xf32> to vector<16x384xf32>
    %30 = arith.addf %27, %29 : vector<16x384xf32>
    %31 = vector.extract_strided_slice %30 {offsets = [0, 0], sizes = [16, 128], strides = [1, 1]} : vector<16x384xf32> to vector<16x128xf32>
    %32 = vector.extract_strided_slice %30 {offsets = [0, 128], sizes = [16, 128], strides = [1, 1]} : vector<16x384xf32> to vector<16x128xf32>
    %33 = vector.extract_strided_slice %30 {offsets = [0, 256], sizes = [16, 128], strides = [1, 1]} : vector<16x384xf32> to vector<16x128xf32>
    %34 = tpu.iota {dimensions = array<i32: 0>} : vector<8x8xi32>
    %35 = tpu.iota {dimensions = array<i32: 1>} : vector<8x8xi32>
    %36 = arith.cmpi sge, %34, %35 : vector<8x8xi32>
    %cst_16 = arith.constant 0.000000e+00 : f32
    %cst_17 = arith.constant -1.000000e+09 : f32
    %37 = vector.broadcast %cst_16 : f32 to vector<8x8xf32>
    %38 = vector.broadcast %cst_17 : f32 to vector<8x8xf32>
    %39 = arith.select %36, %37, %38 : vector<8x8xi1>, vector<8x8xf32>
    %40 = vector.extract_strided_slice %31 {offsets = [0, 0], sizes = [8, 32], strides = [1, 1]} : vector<16x128xf32> to vector<8x32xf32>
    %cst_18 = arith.constant 0.176776692 : f32
    %41 = vector.broadcast %cst_18 : f32 to vector<8x32xf32>
    %42 = arith.mulf %40, %41 : vector<8x32xf32>
    %43 = vector.extract_strided_slice %32 {offsets = [0, 0], sizes = [8, 32], strides = [1, 1]} : vector<16x128xf32> to vector<8x32xf32>
    %44 = vector.extract_strided_slice %33 {offsets = [0, 0], sizes = [8, 32], strides = [1, 1]} : vector<16x128xf32> to vector<8x32xf32>
    %cst_19 = arith.constant dense<0.000000e+00> : vector<8x8xf32>
    %45 = tpu.matmul %42, %43, %cst_19 {dimension_numbers = #tpu.dot_dimension_numbers<[1], [1], [0], [0], [0, 0, 1, 0], [], []>} : vector<8x32xf32>, vector<8x32xf32>, vector<8x8xf32> -> vector<8x8xf32>
    %46 = arith.addf %45, %39 : vector<8x8xf32>
    %cst_20 = arith.constant dense<0xFF800000> : vector<8xf32>
    %47 = vector.multi_reduction <maximumf>, %46, %cst_20 [1] : vector<8x8xf32> to vector<8xf32>
    %48 = vector.shape_cast %47 : vector<8xf32> to vector<8x1xf32>
    %49 = vector.broadcast %48 : vector<8x1xf32> to vector<8x8xf32>
    %50 = arith.subf %46, %49 : vector<8x8xf32>
    %51 = math.exp %50 : vector<8x8xf32>
    %cst_21 = arith.constant dense<0.000000e+00> : vector<8xf32>
    %52 = vector.multi_reduction <add>, %51, %cst_21 [1] : vector<8x8xf32> to vector<8xf32>
    %53 = vector.shape_cast %52 : vector<8xf32> to vector<8x1xf32>
    %54 = tpu.reciprocal %53 {approx = true} : vector<8x1xf32> -> vector<8x1xf32>
    %55 = vector.broadcast %54 : vector<8x1xf32> to vector<8x8xf32>
    %56 = arith.mulf %51, %55 : vector<8x8xf32>
    %cst_22 = arith.constant dense<0.000000e+00> : vector<8x32xf32>
    %57 = tpu.matmul %56, %44, %cst_22 {dimension_numbers = #tpu.dot_dimension_numbers<[1], [0], [0], [1], [0, 0, 1, 1], [], []>} : vector<8x8xf32>, vector<8x32xf32>, vector<8x32xf32> -> vector<8x32xf32>
    %58 = vector.extract_strided_slice %31 {offsets = [0, 32], sizes = [8, 32], strides = [1, 1]} : vector<16x128xf32> to vector<8x32xf32>
    %cst_23 = arith.constant 0.176776692 : f32
    %59 = vector.broadcast %cst_23 : f32 to vector<8x32xf32>
    %60 = arith.mulf %58, %59 : vector<8x32xf32>
    %61 = vector.extract_strided_slice %32 {offsets = [0, 32], sizes = [8, 32], strides = [1, 1]} : vector<16x128xf32> to vector<8x32xf32>
    %62 = vector.extract_strided_slice %33 {offsets = [0, 32], sizes = [8, 32], strides = [1, 1]} : vector<16x128xf32> to vector<8x32xf32>
    %cst_24 = arith.constant dense<0.000000e+00> : vector<8x8xf32>
    %63 = tpu.matmul %60, %61, %cst_24 {dimension_numbers = #tpu.dot_dimension_numbers<[1], [1], [0], [0], [0, 0, 1, 0], [], []>} : vector<8x32xf32>, vector<8x32xf32>, vector<8x8xf32> -> vector<8x8xf32>
    %64 = arith.addf %63, %39 : vector<8x8xf32>
    %cst_25 = arith.constant dense<0xFF800000> : vector<8xf32>
    %65 = vector.multi_reduction <maximumf>, %64, %cst_25 [1] : vector<8x8xf32> to vector<8xf32>
    %66 = vector.shape_cast %65 : vector<8xf32> to vector<8x1xf32>
    %67 = vector.broadcast %66 : vector<8x1xf32> to vector<8x8xf32>
    %68 = arith.subf %64, %67 : vector<8x8xf32>
    %69 = math.exp %68 : vector<8x8xf32>
    %cst_26 = arith.constant dense<0.000000e+00> : vector<8xf32>
    %70 = vector.multi_reduction <add>, %69, %cst_26 [1] : vector<8x8xf32> to vector<8xf32>
    %71 = vector.shape_cast %70 : vector<8xf32> to vector<8x1xf32>
    %72 = tpu.reciprocal %71 {approx = true} : vector<8x1xf32> -> vector<8x1xf32>
    %73 = vector.broadcast %72 : vector<8x1xf32> to vector<8x8xf32>
    %74 = arith.mulf %69, %73 : vector<8x8xf32>
    %cst_27 = arith.constant dense<0.000000e+00> : vector<8x32xf32>
    %75 = tpu.matmul %74, %62, %cst_27 {dimension_numbers = #tpu.dot_dimension_numbers<[1], [0], [0], [1], [0, 0, 1, 1], [], []>} : vector<8x8xf32>, vector<8x32xf32>, vector<8x32xf32> -> vector<8x32xf32>
    %76 = vector.extract_strided_slice %31 {offsets = [0, 64], sizes = [8, 32], strides = [1, 1]} : vector<16x128xf32> to vector<8x32xf32>
    %cst_28 = arith.constant 0.176776692 : f32
    %77 = vector.broadcast %cst_28 : f32 to vector<8x32xf32>
    %78 = arith.mulf %76, %77 : vector<8x32xf32>
    %79 = vector.extract_strided_slice %32 {offsets = [0, 64], sizes = [8, 32], strides = [1, 1]} : vector<16x128xf32> to vector<8x32xf32>
    %80 = vector.extract_strided_slice %33 {offsets = [0, 64], sizes = [8, 32], strides = [1, 1]} : vector<16x128xf32> to vector<8x32xf32>
    %cst_29 = arith.constant dense<0.000000e+00> : vector<8x8xf32>
    %81 = tpu.matmul %78, %79, %cst_29 {dimension_numbers = #tpu.dot_dimension_numbers<[1], [1], [0], [0], [0, 0, 1, 0], [], []>} : vector<8x32xf32>, vector<8x32xf32>, vector<8x8xf32> -> vector<8x8xf32>
    %82 = arith.addf %81, %39 : vector<8x8xf32>
    %cst_30 = arith.constant dense<0xFF800000> : vector<8xf32>
    %83 = vector.multi_reduction <maximumf>, %82, %cst_30 [1] : vector<8x8xf32> to vector<8xf32>
    %84 = vector.shape_cast %83 : vector<8xf32> to vector<8x1xf32>
    %85 = vector.broadcast %84 : vector<8x1xf32> to vector<8x8xf32>
    %86 = arith.subf %82, %85 : vector<8x8xf32>
    %87 = math.exp %86 : vector<8x8xf32>
    %cst_31 = arith.constant dense<0.000000e+00> : vector<8xf32>
    %88 = vector.multi_reduction <add>, %87, %cst_31 [1] : vector<8x8xf32> to vector<8xf32>
    %89 = vector.shape_cast %88 : vector<8xf32> to vector<8x1xf32>
    %90 = tpu.reciprocal %89 {approx = true} : vector<8x1xf32> -> vector<8x1xf32>
    %91 = vector.broadcast %90 : vector<8x1xf32> to vector<8x8xf32>
    %92 = arith.mulf %87, %91 : vector<8x8xf32>
    %cst_32 = arith.constant dense<0.000000e+00> : vector<8x32xf32>
    %93 = tpu.matmul %92, %80, %cst_32 {dimension_numbers = #tpu.dot_dimension_numbers<[1], [0], [0], [1], [0, 0, 1, 1], [], []>} : vector<8x8xf32>, vector<8x32xf32>, vector<8x32xf32> -> vector<8x32xf32>
    %94 = vector.extract_strided_slice %31 {offsets = [0, 96], sizes = [8, 32], strides = [1, 1]} : vector<16x128xf32> to vector<8x32xf32>
    %cst_33 = arith.constant 0.176776692 : f32
    %95 = vector.broadcast %cst_33 : f32 to vector<8x32xf32>
    %96 = arith.mulf %94, %95 : vector<8x32xf32>
    %97 = vector.extract_strided_slice %32 {offsets = [0, 96], sizes = [8, 32], strides = [1, 1]} : vector<16x128xf32> to vector<8x32xf32>
    %98 = vector.extract_strided_slice %33 {offsets = [0, 96], sizes = [8, 32], strides = [1, 1]} : vector<16x128xf32> to vector<8x32xf32>
    %cst_34 = arith.constant dense<0.000000e+00> : vector<8x8xf32>
    %99 = tpu.matmul %96, %97, %cst_34 {dimension_numbers = #tpu.dot_dimension_numbers<[1], [1], [0], [0], [0, 0, 1, 0], [], []>} : vector<8x32xf32>, vector<8x32xf32>, vector<8x8xf32> -> vector<8x8xf32>
    %100 = arith.addf %99, %39 : vector<8x8xf32>
    %cst_35 = arith.constant dense<0xFF800000> : vector<8xf32>
    %101 = vector.multi_reduction <maximumf>, %100, %cst_35 [1] : vector<8x8xf32> to vector<8xf32>
    %102 = vector.shape_cast %101 : vector<8xf32> to vector<8x1xf32>
    %103 = vector.broadcast %102 : vector<8x1xf32> to vector<8x8xf32>
    %104 = arith.subf %100, %103 : vector<8x8xf32>
    %105 = math.exp %104 : vector<8x8xf32>
    %cst_36 = arith.constant dense<0.000000e+00> : vector<8xf32>
    %106 = vector.multi_reduction <add>, %105, %cst_36 [1] : vector<8x8xf32> to vector<8xf32>
    %107 = vector.shape_cast %106 : vector<8xf32> to vector<8x1xf32>
    %108 = tpu.reciprocal %107 {approx = true} : vector<8x1xf32> -> vector<8x1xf32>
    %109 = vector.broadcast %108 : vector<8x1xf32> to vector<8x8xf32>
    %110 = arith.mulf %105, %109 : vector<8x8xf32>
    %cst_37 = arith.constant dense<0.000000e+00> : vector<8x32xf32>
    %111 = tpu.matmul %110, %98, %cst_37 {dimension_numbers = #tpu.dot_dimension_numbers<[1], [0], [0], [1], [0, 0, 1, 1], [], []>} : vector<8x8xf32>, vector<8x32xf32>, vector<8x32xf32> -> vector<8x32xf32>
    %112 = tpu.concatenate %57, %75, %93, %111 in 1 : vector<8x32xf32>, vector<8x32xf32>, vector<8x32xf32>, vector<8x32xf32> -> vector<8x128xf32>
    %113 = vector.extract_strided_slice %31 {offsets = [8, 0], sizes = [8, 32], strides = [1, 1]} : vector<16x128xf32> to vector<8x32xf32>
    %cst_38 = arith.constant 0.176776692 : f32
    %114 = vector.broadcast %cst_38 : f32 to vector<8x32xf32>
    %115 = arith.mulf %113, %114 : vector<8x32xf32>
    %116 = vector.extract_strided_slice %32 {offsets = [8, 0], sizes = [8, 32], strides = [1, 1]} : vector<16x128xf32> to vector<8x32xf32>
    %117 = vector.extract_strided_slice %33 {offsets = [8, 0], sizes = [8, 32], strides = [1, 1]} : vector<16x128xf32> to vector<8x32xf32>
    %cst_39 = arith.constant dense<0.000000e+00> : vector<8x8xf32>
    %118 = tpu.matmul %115, %116, %cst_39 {dimension_numbers = #tpu.dot_dimension_numbers<[1], [1], [0], [0], [0, 0, 1, 0], [], []>} : vector<8x32xf32>, vector<8x32xf32>, vector<8x8xf32> -> vector<8x8xf32>
    %119 = arith.addf %118, %39 : vector<8x8xf32>
    %cst_40 = arith.constant dense<0xFF800000> : vector<8xf32>
    %120 = vector.multi_reduction <maximumf>, %119, %cst_40 [1] : vector<8x8xf32> to vector<8xf32>
    %121 = vector.shape_cast %120 : vector<8xf32> to vector<8x1xf32>
    %122 = vector.broadcast %121 : vector<8x1xf32> to vector<8x8xf32>
    %123 = arith.subf %119, %122 : vector<8x8xf32>
    %124 = math.exp %123 : vector<8x8xf32>
    %cst_41 = arith.constant dense<0.000000e+00> : vector<8xf32>
    %125 = vector.multi_reduction <add>, %124, %cst_41 [1] : vector<8x8xf32> to vector<8xf32>
    %126 = vector.shape_cast %125 : vector<8xf32> to vector<8x1xf32>
    %127 = tpu.reciprocal %126 {approx = true} : vector<8x1xf32> -> vector<8x1xf32>
    %128 = vector.broadcast %127 : vector<8x1xf32> to vector<8x8xf32>
    %129 = arith.mulf %124, %128 : vector<8x8xf32>
    %cst_42 = arith.constant dense<0.000000e+00> : vector<8x32xf32>
    %130 = tpu.matmul %129, %117, %cst_42 {dimension_numbers = #tpu.dot_dimension_numbers<[1], [0], [0], [1], [0, 0, 1, 1], [], []>} : vector<8x8xf32>, vector<8x32xf32>, vector<8x32xf32> -> vector<8x32xf32>
    %131 = vector.extract_strided_slice %31 {offsets = [8, 32], sizes = [8, 32], strides = [1, 1]} : vector<16x128xf32> to vector<8x32xf32>
    %cst_43 = arith.constant 0.176776692 : f32
    %132 = vector.broadcast %cst_43 : f32 to vector<8x32xf32>
    %133 = arith.mulf %131, %132 : vector<8x32xf32>
    %134 = vector.extract_strided_slice %32 {offsets = [8, 32], sizes = [8, 32], strides = [1, 1]} : vector<16x128xf32> to vector<8x32xf32>
    %135 = vector.extract_strided_slice %33 {offsets = [8, 32], sizes = [8, 32], strides = [1, 1]} : vector<16x128xf32> to vector<8x32xf32>
    %cst_44 = arith.constant dense<0.000000e+00> : vector<8x8xf32>
    %136 = tpu.matmul %133, %134, %cst_44 {dimension_numbers = #tpu.dot_dimension_numbers<[1], [1], [0], [0], [0, 0, 1, 0], [], []>} : vector<8x32xf32>, vector<8x32xf32>, vector<8x8xf32> -> vector<8x8xf32>
    %137 = arith.addf %136, %39 : vector<8x8xf32>
    %cst_45 = arith.constant dense<0xFF800000> : vector<8xf32>
    %138 = vector.multi_reduction <maximumf>, %137, %cst_45 [1] : vector<8x8xf32> to vector<8xf32>
    %139 = vector.shape_cast %138 : vector<8xf32> to vector<8x1xf32>
    %140 = vector.broadcast %139 : vector<8x1xf32> to vector<8x8xf32>
    %141 = arith.subf %137, %140 : vector<8x8xf32>
    %142 = math.exp %141 : vector<8x8xf32>
    %cst_46 = arith.constant dense<0.000000e+00> : vector<8xf32>
    %143 = vector.multi_reduction <add>, %142, %cst_46 [1] : vector<8x8xf32> to vector<8xf32>
    %144 = vector.shape_cast %143 : vector<8xf32> to vector<8x1xf32>
    %145 = tpu.reciprocal %144 {approx = true} : vector<8x1xf32> -> vector<8x1xf32>
    %146 = vector.broadcast %145 : vector<8x1xf32> to vector<8x8xf32>
    %147 = arith.mulf %142, %146 : vector<8x8xf32>
    %cst_47 = arith.constant dense<0.000000e+00> : vector<8x32xf32>
    %148 = tpu.matmul %147, %135, %cst_47 {dimension_numbers = #tpu.dot_dimension_numbers<[1], [0], [0], [1], [0, 0, 1, 1], [], []>} : vector<8x8xf32>, vector<8x32xf32>, vector<8x32xf32> -> vector<8x32xf32>
    %149 = vector.extract_strided_slice %31 {offsets = [8, 64], sizes = [8, 32], strides = [1, 1]} : vector<16x128xf32> to vector<8x32xf32>
    %cst_48 = arith.constant 0.176776692 : f32
    %150 = vector.broadcast %cst_48 : f32 to vector<8x32xf32>
    %151 = arith.mulf %149, %150 : vector<8x32xf32>
    %152 = vector.extract_strided_slice %32 {offsets = [8, 64], sizes = [8, 32], strides = [1, 1]} : vector<16x128xf32> to vector<8x32xf32>
    %153 = vector.extract_strided_slice %33 {offsets = [8, 64], sizes = [8, 32], strides = [1, 1]} : vector<16x128xf32> to vector<8x32xf32>
    %cst_49 = arith.constant dense<0.000000e+00> : vector<8x8xf32>
    %154 = tpu.matmul %151, %152, %cst_49 {dimension_numbers = #tpu.dot_dimension_numbers<[1], [1], [0], [0], [0, 0, 1, 0], [], []>} : vector<8x32xf32>, vector<8x32xf32>, vector<8x8xf32> -> vector<8x8xf32>
    %155 = arith.addf %154, %39 : vector<8x8xf32>
    %cst_50 = arith.constant dense<0xFF800000> : vector<8xf32>
    %156 = vector.multi_reduction <maximumf>, %155, %cst_50 [1] : vector<8x8xf32> to vector<8xf32>
    %157 = vector.shape_cast %156 : vector<8xf32> to vector<8x1xf32>
    %158 = vector.broadcast %157 : vector<8x1xf32> to vector<8x8xf32>
    %159 = arith.subf %155, %158 : vector<8x8xf32>
    %160 = math.exp %159 : vector<8x8xf32>
    %cst_51 = arith.constant dense<0.000000e+00> : vector<8xf32>
    %161 = vector.multi_reduction <add>, %160, %cst_51 [1] : vector<8x8xf32> to vector<8xf32>
    %162 = vector.shape_cast %161 : vector<8xf32> to vector<8x1xf32>
    %163 = tpu.reciprocal %162 {approx = true} : vector<8x1xf32> -> vector<8x1xf32>
    %164 = vector.broadcast %163 : vector<8x1xf32> to vector<8x8xf32>
    %165 = arith.mulf %160, %164 : vector<8x8xf32>
    %cst_52 = arith.constant dense<0.000000e+00> : vector<8x32xf32>
    %166 = tpu.matmul %165, %153, %cst_52 {dimension_numbers = #tpu.dot_dimension_numbers<[1], [0], [0], [1], [0, 0, 1, 1], [], []>} : vector<8x8xf32>, vector<8x32xf32>, vector<8x32xf32> -> vector<8x32xf32>
    %167 = vector.extract_strided_slice %31 {offsets = [8, 96], sizes = [8, 32], strides = [1, 1]} : vector<16x128xf32> to vector<8x32xf32>
    %cst_53 = arith.constant 0.176776692 : f32
    %168 = vector.broadcast %cst_53 : f32 to vector<8x32xf32>
    %169 = arith.mulf %167, %168 : vector<8x32xf32>
    %170 = vector.extract_strided_slice %32 {offsets = [8, 96], sizes = [8, 32], strides = [1, 1]} : vector<16x128xf32> to vector<8x32xf32>
    %171 = vector.extract_strided_slice %33 {offsets = [8, 96], sizes = [8, 32], strides = [1, 1]} : vector<16x128xf32> to vector<8x32xf32>
    %cst_54 = arith.constant dense<0.000000e+00> : vector<8x8xf32>
    %172 = tpu.matmul %169, %170, %cst_54 {dimension_numbers = #tpu.dot_dimension_numbers<[1], [1], [0], [0], [0, 0, 1, 0], [], []>} : vector<8x32xf32>, vector<8x32xf32>, vector<8x8xf32> -> vector<8x8xf32>
    %173 = arith.addf %172, %39 : vector<8x8xf32>
    %cst_55 = arith.constant dense<0xFF800000> : vector<8xf32>
    %174 = vector.multi_reduction <maximumf>, %173, %cst_55 [1] : vector<8x8xf32> to vector<8xf32>
    %175 = vector.shape_cast %174 : vector<8xf32> to vector<8x1xf32>
    %176 = vector.broadcast %175 : vector<8x1xf32> to vector<8x8xf32>
    %177 = arith.subf %173, %176 : vector<8x8xf32>
    %178 = math.exp %177 : vector<8x8xf32>
    %cst_56 = arith.constant dense<0.000000e+00> : vector<8xf32>
    %179 = vector.multi_reduction <add>, %178, %cst_56 [1] : vector<8x8xf32> to vector<8xf32>
    %180 = vector.shape_cast %179 : vector<8xf32> to vector<8x1xf32>
    %181 = tpu.reciprocal %180 {approx = true} : vector<8x1xf32> -> vector<8x1xf32>
    %182 = vector.broadcast %181 : vector<8x1xf32> to vector<8x8xf32>
    %183 = arith.mulf %178, %182 : vector<8x8xf32>
    %cst_57 = arith.constant dense<0.000000e+00> : vector<8x32xf32>
    %184 = tpu.matmul %183, %171, %cst_57 {dimension_numbers = #tpu.dot_dimension_numbers<[1], [0], [0], [1], [0, 0, 1, 1], [], []>} : vector<8x8xf32>, vector<8x32xf32>, vector<8x32xf32> -> vector<8x32xf32>
    %185 = tpu.concatenate %130, %148, %166, %184 in 1 : vector<8x32xf32>, vector<8x32xf32>, vector<8x32xf32>, vector<8x32xf32> -> vector<8x128xf32>
    %186 = tpu.concatenate %112, %185 in 0 : vector<8x128xf32>, vector<8x128xf32> -> vector<16x128xf32>
    %c0_58 = arith.constant 0 : index
    %c0_59 = arith.constant 0 : index
    %187 = vector.load %arg6[%c0_58, %c0_59] : memref<128x128xf32, #tpu.memory_space<vmem>>, vector<128x128xf32>
    %cst_60 = arith.constant dense<0.000000e+00> : vector<16x128xf32>
    %188 = tpu.matmul %186, %187, %cst_60 {dimension_numbers = #tpu.dot_dimension_numbers<[1], [0], [0], [1], [0, 0, 1, 1], [], []>} : vector<16x128xf32>, vector<128x128xf32>, vector<16x128xf32> -> vector<16x128xf32>
    %c0_61 = arith.constant 0 : index
    %c0_62 = arith.constant 0 : index
    %189 = vector.load %arg7[%c0_61, %c0_62] : memref<1x128xf32, #tpu.memory_space<vmem>>, vector<1x128xf32>
    %190 = vector.broadcast %189 : vector<1x128xf32> to vector<16x128xf32>
    %191 = arith.addf %188, %190 : vector<16x128xf32>
    %192 = arith.addf %24, %191 : vector<16x128xf32>
    %c0_63 = arith.constant 0 : index
    %c0_64 = arith.constant 0 : index
    %193 = vector.load %arg8[%c0_63, %c0_64] : memref<1x128xf32, #tpu.memory_space<vmem>>, vector<1x128xf32>
    %c0_65 = arith.constant 0 : index
    %c0_66 = arith.constant 0 : index
    %194 = vector.load %arg9[%c0_65, %c0_66] : memref<1x128xf32, #tpu.memory_space<vmem>>, vector<1x128xf32>
    %cst_67 = arith.constant dense<0.000000e+00> : vector<16xf32>
    %195 = vector.multi_reduction <add>, %192, %cst_67 [1] : vector<16x128xf32> to vector<16xf32>
    %196 = vector.shape_cast %195 : vector<16xf32> to vector<16x1xf32>
    %cst_68 = arith.constant 1.280000e+02 : f32
    %197 = vector.broadcast %cst_68 : f32 to vector<16x1xf32>
    %198 = arith.divf %196, %197 : vector<16x1xf32>
    %199 = vector.broadcast %198 : vector<16x1xf32> to vector<16x128xf32>
    %200 = arith.subf %192, %199 : vector<16x128xf32>
    %201 = arith.mulf %200, %200 : vector<16x128xf32>
    %cst_69 = arith.constant dense<0.000000e+00> : vector<16xf32>
    %202 = vector.multi_reduction <add>, %201, %cst_69 [1] : vector<16x128xf32> to vector<16xf32>
    %203 = vector.shape_cast %202 : vector<16xf32> to vector<16x1xf32>
    %cst_70 = arith.constant 1.280000e+02 : f32
    %204 = vector.broadcast %cst_70 : f32 to vector<16x1xf32>
    %205 = arith.divf %203, %204 : vector<16x1xf32>
    %206 = vector.broadcast %198 : vector<16x1xf32> to vector<16x128xf32>
    %207 = arith.subf %192, %206 : vector<16x128xf32>
    %cst_71 = arith.constant 9.99999974E-6 : f32
    %208 = vector.broadcast %cst_71 : f32 to vector<16x1xf32>
    %209 = arith.addf %205, %208 : vector<16x1xf32>
    %210 = math.rsqrt %209 : vector<16x1xf32>
    %211 = vector.broadcast %210 : vector<16x1xf32> to vector<16x128xf32>
    %212 = arith.mulf %207, %211 : vector<16x128xf32>
    %213 = vector.broadcast %193 : vector<1x128xf32> to vector<16x128xf32>
    %214 = arith.mulf %212, %213 : vector<16x128xf32>
    %215 = vector.broadcast %194 : vector<1x128xf32> to vector<16x128xf32>
    %216 = arith.addf %214, %215 : vector<16x128xf32>
    %c0_72 = arith.constant 0 : index
    %c0_73 = arith.constant 0 : index
    %217 = vector.load %arg10[%c0_72, %c0_73] : memref<128x128xf32, #tpu.memory_space<vmem>>, vector<128x128xf32>
    %cst_74 = arith.constant dense<0.000000e+00> : vector<16x128xf32>
    %218 = tpu.matmul %216, %217, %cst_74 {dimension_numbers = #tpu.dot_dimension_numbers<[1], [0], [0], [1], [0, 0, 1, 1], [], []>} : vector<16x128xf32>, vector<128x128xf32>, vector<16x128xf32> -> vector<16x128xf32>
    %c0_75 = arith.constant 0 : index
    %c0_76 = arith.constant 0 : index
    %219 = vector.load %arg11[%c0_75, %c0_76] : memref<1x128xf32, #tpu.memory_space<vmem>>, vector<1x128xf32>
    %220 = vector.broadcast %219 : vector<1x128xf32> to vector<16x128xf32>
    %221 = arith.addf %218, %220 : vector<16x128xf32>
    %c0_77 = arith.constant 0 : index
    %c0_78 = arith.constant 0 : index
    %222 = vector.load %arg12[%c0_77, %c0_78] : memref<128x256xf32, #tpu.memory_space<vmem>>, vector<128x256xf32>
    %cst_79 = arith.constant dense<0.000000e+00> : vector<16x256xf32>
    %223 = tpu.matmul %25, %222, %cst_79 {dimension_numbers = #tpu.dot_dimension_numbers<[1], [0], [0], [1], [0, 0, 1, 1], [], []>} : vector<16x128xf32>, vector<128x256xf32>, vector<16x256xf32> -> vector<16x256xf32>
    %c0_80 = arith.constant 0 : index
    %c0_81 = arith.constant 0 : index
    %224 = vector.load %arg13[%c0_80, %c0_81] : memref<1x256xf32, #tpu.memory_space<vmem>>, vector<1x256xf32>
    %225 = vector.broadcast %224 : vector<1x256xf32> to vector<16x256xf32>
    %226 = arith.addf %223, %225 : vector<16x256xf32>
    %227 = vector.extract_strided_slice %226 {offsets = [0, 0], sizes = [16, 128], strides = [1, 1]} : vector<16x256xf32> to vector<16x128xf32>
    %228 = vector.extract_strided_slice %226 {offsets = [0, 128], sizes = [16, 128], strides = [1, 1]} : vector<16x256xf32> to vector<16x128xf32>
    %229 = vector.extract_strided_slice %221 {offsets = [0, 0], sizes = [8, 32], strides = [1, 1]} : vector<16x128xf32> to vector<8x32xf32>
    %cst_82 = arith.constant 0.176776692 : f32
    %230 = vector.broadcast %cst_82 : f32 to vector<8x32xf32>
    %231 = arith.mulf %229, %230 : vector<8x32xf32>
    %232 = vector.extract_strided_slice %227 {offsets = [0, 0], sizes = [8, 32], strides = [1, 1]} : vector<16x128xf32> to vector<8x32xf32>
    %233 = vector.extract_strided_slice %228 {offsets = [0, 0], sizes = [8, 32], strides = [1, 1]} : vector<16x128xf32> to vector<8x32xf32>
    %cst_83 = arith.constant dense<0.000000e+00> : vector<8x8xf32>
    %234 = tpu.matmul %231, %232, %cst_83 {dimension_numbers = #tpu.dot_dimension_numbers<[1], [1], [0], [0], [0, 0, 1, 0], [], []>} : vector<8x32xf32>, vector<8x32xf32>, vector<8x8xf32> -> vector<8x8xf32>
    %cst_84 = arith.constant dense<0xFF800000> : vector<8xf32>
    %235 = vector.multi_reduction <maximumf>, %234, %cst_84 [1] : vector<8x8xf32> to vector<8xf32>
    %236 = vector.shape_cast %235 : vector<8xf32> to vector<8x1xf32>
    %237 = vector.broadcast %236 : vector<8x1xf32> to vector<8x8xf32>
    %238 = arith.subf %234, %237 : vector<8x8xf32>
    %239 = math.exp %238 : vector<8x8xf32>
    %cst_85 = arith.constant dense<0.000000e+00> : vector<8xf32>
    %240 = vector.multi_reduction <add>, %239, %cst_85 [1] : vector<8x8xf32> to vector<8xf32>
    %241 = vector.shape_cast %240 : vector<8xf32> to vector<8x1xf32>
    %242 = tpu.reciprocal %241 {approx = true} : vector<8x1xf32> -> vector<8x1xf32>
    %243 = vector.broadcast %242 : vector<8x1xf32> to vector<8x8xf32>
    %244 = arith.mulf %239, %243 : vector<8x8xf32>
    %cst_86 = arith.constant dense<0.000000e+00> : vector<8x32xf32>
    %245 = tpu.matmul %244, %233, %cst_86 {dimension_numbers = #tpu.dot_dimension_numbers<[1], [0], [0], [1], [0, 0, 1, 1], [], []>} : vector<8x8xf32>, vector<8x32xf32>, vector<8x32xf32> -> vector<8x32xf32>
    %246 = vector.extract_strided_slice %221 {offsets = [0, 32], sizes = [8, 32], strides = [1, 1]} : vector<16x128xf32> to vector<8x32xf32>
    %cst_87 = arith.constant 0.176776692 : f32
    %247 = vector.broadcast %cst_87 : f32 to vector<8x32xf32>
    %248 = arith.mulf %246, %247 : vector<8x32xf32>
    %249 = vector.extract_strided_slice %227 {offsets = [0, 32], sizes = [8, 32], strides = [1, 1]} : vector<16x128xf32> to vector<8x32xf32>
    %250 = vector.extract_strided_slice %228 {offsets = [0, 32], sizes = [8, 32], strides = [1, 1]} : vector<16x128xf32> to vector<8x32xf32>
    %cst_88 = arith.constant dense<0.000000e+00> : vector<8x8xf32>
    %251 = tpu.matmul %248, %249, %cst_88 {dimension_numbers = #tpu.dot_dimension_numbers<[1], [1], [0], [0], [0, 0, 1, 0], [], []>} : vector<8x32xf32>, vector<8x32xf32>, vector<8x8xf32> -> vector<8x8xf32>
    %cst_89 = arith.constant dense<0xFF800000> : vector<8xf32>
    %252 = vector.multi_reduction <maximumf>, %251, %cst_89 [1] : vector<8x8xf32> to vector<8xf32>
    %253 = vector.shape_cast %252 : vector<8xf32> to vector<8x1xf32>
    %254 = vector.broadcast %253 : vector<8x1xf32> to vector<8x8xf32>
    %255 = arith.subf %251, %254 : vector<8x8xf32>
    %256 = math.exp %255 : vector<8x8xf32>
    %cst_90 = arith.constant dense<0.000000e+00> : vector<8xf32>
    %257 = vector.multi_reduction <add>, %256, %cst_90 [1] : vector<8x8xf32> to vector<8xf32>
    %258 = vector.shape_cast %257 : vector<8xf32> to vector<8x1xf32>
    %259 = tpu.reciprocal %258 {approx = true} : vector<8x1xf32> -> vector<8x1xf32>
    %260 = vector.broadcast %259 : vector<8x1xf32> to vector<8x8xf32>
    %261 = arith.mulf %256, %260 : vector<8x8xf32>
    %cst_91 = arith.constant dense<0.000000e+00> : vector<8x32xf32>
    %262 = tpu.matmul %261, %250, %cst_91 {dimension_numbers = #tpu.dot_dimension_numbers<[1], [0], [0], [1], [0, 0, 1, 1], [], []>} : vector<8x8xf32>, vector<8x32xf32>, vector<8x32xf32> -> vector<8x32xf32>
    %263 = vector.extract_strided_slice %221 {offsets = [0, 64], sizes = [8, 32], strides = [1, 1]} : vector<16x128xf32> to vector<8x32xf32>
    %cst_92 = arith.constant 0.176776692 : f32
    %264 = vector.broadcast %cst_92 : f32 to vector<8x32xf32>
    %265 = arith.mulf %263, %264 : vector<8x32xf32>
    %266 = vector.extract_strided_slice %227 {offsets = [0, 64], sizes = [8, 32], strides = [1, 1]} : vector<16x128xf32> to vector<8x32xf32>
    %267 = vector.extract_strided_slice %228 {offsets = [0, 64], sizes = [8, 32], strides = [1, 1]} : vector<16x128xf32> to vector<8x32xf32>
    %cst_93 = arith.constant dense<0.000000e+00> : vector<8x8xf32>
    %268 = tpu.matmul %265, %266, %cst_93 {dimension_numbers = #tpu.dot_dimension_numbers<[1], [1], [0], [0], [0, 0, 1, 0], [], []>} : vector<8x32xf32>, vector<8x32xf32>, vector<8x8xf32> -> vector<8x8xf32>
    %cst_94 = arith.constant dense<0xFF800000> : vector<8xf32>
    %269 = vector.multi_reduction <maximumf>, %268, %cst_94 [1] : vector<8x8xf32> to vector<8xf32>
    %270 = vector.shape_cast %269 : vector<8xf32> to vector<8x1xf32>
    %271 = vector.broadcast %270 : vector<8x1xf32> to vector<8x8xf32>
    %272 = arith.subf %268, %271 : vector<8x8xf32>
    %273 = math.exp %272 : vector<8x8xf32>
    %cst_95 = arith.constant dense<0.000000e+00> : vector<8xf32>
    %274 = vector.multi_reduction <add>, %273, %cst_95 [1] : vector<8x8xf32> to vector<8xf32>
    %275 = vector.shape_cast %274 : vector<8xf32> to vector<8x1xf32>
    %276 = tpu.reciprocal %275 {approx = true} : vector<8x1xf32> -> vector<8x1xf32>
    %277 = vector.broadcast %276 : vector<8x1xf32> to vector<8x8xf32>
    %278 = arith.mulf %273, %277 : vector<8x8xf32>
    %cst_96 = arith.constant dense<0.000000e+00> : vector<8x32xf32>
    %279 = tpu.matmul %278, %267, %cst_96 {dimension_numbers = #tpu.dot_dimension_numbers<[1], [0], [0], [1], [0, 0, 1, 1], [], []>} : vector<8x8xf32>, vector<8x32xf32>, vector<8x32xf32> -> vector<8x32xf32>
    %280 = vector.extract_strided_slice %221 {offsets = [0, 96], sizes = [8, 32], strides = [1, 1]} : vector<16x128xf32> to vector<8x32xf32>
    %cst_97 = arith.constant 0.176776692 : f32
    %281 = vector.broadcast %cst_97 : f32 to vector<8x32xf32>
    %282 = arith.mulf %280, %281 : vector<8x32xf32>
    %283 = vector.extract_strided_slice %227 {offsets = [0, 96], sizes = [8, 32], strides = [1, 1]} : vector<16x128xf32> to vector<8x32xf32>
    %284 = vector.extract_strided_slice %228 {offsets = [0, 96], sizes = [8, 32], strides = [1, 1]} : vector<16x128xf32> to vector<8x32xf32>
    %cst_98 = arith.constant dense<0.000000e+00> : vector<8x8xf32>
    %285 = tpu.matmul %282, %283, %cst_98 {dimension_numbers = #tpu.dot_dimension_numbers<[1], [1], [0], [0], [0, 0, 1, 0], [], []>} : vector<8x32xf32>, vector<8x32xf32>, vector<8x8xf32> -> vector<8x8xf32>
    %cst_99 = arith.constant dense<0xFF800000> : vector<8xf32>
    %286 = vector.multi_reduction <maximumf>, %285, %cst_99 [1] : vector<8x8xf32> to vector<8xf32>
    %287 = vector.shape_cast %286 : vector<8xf32> to vector<8x1xf32>
    %288 = vector.broadcast %287 : vector<8x1xf32> to vector<8x8xf32>
    %289 = arith.subf %285, %288 : vector<8x8xf32>
    %290 = math.exp %289 : vector<8x8xf32>
    %cst_100 = arith.constant dense<0.000000e+00> : vector<8xf32>
    %291 = vector.multi_reduction <add>, %290, %cst_100 [1] : vector<8x8xf32> to vector<8xf32>
    %292 = vector.shape_cast %291 : vector<8xf32> to vector<8x1xf32>
    %293 = tpu.reciprocal %292 {approx = true} : vector<8x1xf32> -> vector<8x1xf32>
    %294 = vector.broadcast %293 : vector<8x1xf32> to vector<8x8xf32>
    %295 = arith.mulf %290, %294 : vector<8x8xf32>
    %cst_101 = arith.constant dense<0.000000e+00> : vector<8x32xf32>
    %296 = tpu.matmul %295, %284, %cst_101 {dimension_numbers = #tpu.dot_dimension_numbers<[1], [0], [0], [1], [0, 0, 1, 1], [], []>} : vector<8x8xf32>, vector<8x32xf32>, vector<8x32xf32> -> vector<8x32xf32>
    %297 = tpu.concatenate %245, %262, %279, %296 in 1 : vector<8x32xf32>, vector<8x32xf32>, vector<8x32xf32>, vector<8x32xf32> -> vector<8x128xf32>
    %298 = vector.extract_strided_slice %221 {offsets = [8, 0], sizes = [8, 32], strides = [1, 1]} : vector<16x128xf32> to vector<8x32xf32>
    %cst_102 = arith.constant 0.176776692 : f32
    %299 = vector.broadcast %cst_102 : f32 to vector<8x32xf32>
    %300 = arith.mulf %298, %299 : vector<8x32xf32>
    %301 = vector.extract_strided_slice %227 {offsets = [8, 0], sizes = [8, 32], strides = [1, 1]} : vector<16x128xf32> to vector<8x32xf32>
    %302 = vector.extract_strided_slice %228 {offsets = [8, 0], sizes = [8, 32], strides = [1, 1]} : vector<16x128xf32> to vector<8x32xf32>
    %cst_103 = arith.constant dense<0.000000e+00> : vector<8x8xf32>
    %303 = tpu.matmul %300, %301, %cst_103 {dimension_numbers = #tpu.dot_dimension_numbers<[1], [1], [0], [0], [0, 0, 1, 0], [], []>} : vector<8x32xf32>, vector<8x32xf32>, vector<8x8xf32> -> vector<8x8xf32>
    %cst_104 = arith.constant dense<0xFF800000> : vector<8xf32>
    %304 = vector.multi_reduction <maximumf>, %303, %cst_104 [1] : vector<8x8xf32> to vector<8xf32>
    %305 = vector.shape_cast %304 : vector<8xf32> to vector<8x1xf32>
    %306 = vector.broadcast %305 : vector<8x1xf32> to vector<8x8xf32>
    %307 = arith.subf %303, %306 : vector<8x8xf32>
    %308 = math.exp %307 : vector<8x8xf32>
    %cst_105 = arith.constant dense<0.000000e+00> : vector<8xf32>
    %309 = vector.multi_reduction <add>, %308, %cst_105 [1] : vector<8x8xf32> to vector<8xf32>
    %310 = vector.shape_cast %309 : vector<8xf32> to vector<8x1xf32>
    %311 = tpu.reciprocal %310 {approx = true} : vector<8x1xf32> -> vector<8x1xf32>
    %312 = vector.broadcast %311 : vector<8x1xf32> to vector<8x8xf32>
    %313 = arith.mulf %308, %312 : vector<8x8xf32>
    %cst_106 = arith.constant dense<0.000000e+00> : vector<8x32xf32>
    %314 = tpu.matmul %313, %302, %cst_106 {dimension_numbers = #tpu.dot_dimension_numbers<[1], [0], [0], [1], [0, 0, 1, 1], [], []>} : vector<8x8xf32>, vector<8x32xf32>, vector<8x32xf32> -> vector<8x32xf32>
    %315 = vector.extract_strided_slice %221 {offsets = [8, 32], sizes = [8, 32], strides = [1, 1]} : vector<16x128xf32> to vector<8x32xf32>
    %cst_107 = arith.constant 0.176776692 : f32
    %316 = vector.broadcast %cst_107 : f32 to vector<8x32xf32>
    %317 = arith.mulf %315, %316 : vector<8x32xf32>
    %318 = vector.extract_strided_slice %227 {offsets = [8, 32], sizes = [8, 32], strides = [1, 1]} : vector<16x128xf32> to vector<8x32xf32>
    %319 = vector.extract_strided_slice %228 {offsets = [8, 32], sizes = [8, 32], strides = [1, 1]} : vector<16x128xf32> to vector<8x32xf32>
    %cst_108 = arith.constant dense<0.000000e+00> : vector<8x8xf32>
    %320 = tpu.matmul %317, %318, %cst_108 {dimension_numbers = #tpu.dot_dimension_numbers<[1], [1], [0], [0], [0, 0, 1, 0], [], []>} : vector<8x32xf32>, vector<8x32xf32>, vector<8x8xf32> -> vector<8x8xf32>
    %cst_109 = arith.constant dense<0xFF800000> : vector<8xf32>
    %321 = vector.multi_reduction <maximumf>, %320, %cst_109 [1] : vector<8x8xf32> to vector<8xf32>
    %322 = vector.shape_cast %321 : vector<8xf32> to vector<8x1xf32>
    %323 = vector.broadcast %322 : vector<8x1xf32> to vector<8x8xf32>
    %324 = arith.subf %320, %323 : vector<8x8xf32>
    %325 = math.exp %324 : vector<8x8xf32>
    %cst_110 = arith.constant dense<0.000000e+00> : vector<8xf32>
    %326 = vector.multi_reduction <add>, %325, %cst_110 [1] : vector<8x8xf32> to vector<8xf32>
    %327 = vector.shape_cast %326 : vector<8xf32> to vector<8x1xf32>
    %328 = tpu.reciprocal %327 {approx = true} : vector<8x1xf32> -> vector<8x1xf32>
    %329 = vector.broadcast %328 : vector<8x1xf32> to vector<8x8xf32>
    %330 = arith.mulf %325, %329 : vector<8x8xf32>
    %cst_111 = arith.constant dense<0.000000e+00> : vector<8x32xf32>
    %331 = tpu.matmul %330, %319, %cst_111 {dimension_numbers = #tpu.dot_dimension_numbers<[1], [0], [0], [1], [0, 0, 1, 1], [], []>} : vector<8x8xf32>, vector<8x32xf32>, vector<8x32xf32> -> vector<8x32xf32>
    %332 = vector.extract_strided_slice %221 {offsets = [8, 64], sizes = [8, 32], strides = [1, 1]} : vector<16x128xf32> to vector<8x32xf32>
    %cst_112 = arith.constant 0.176776692 : f32
    %333 = vector.broadcast %cst_112 : f32 to vector<8x32xf32>
    %334 = arith.mulf %332, %333 : vector<8x32xf32>
    %335 = vector.extract_strided_slice %227 {offsets = [8, 64], sizes = [8, 32], strides = [1, 1]} : vector<16x128xf32> to vector<8x32xf32>
    %336 = vector.extract_strided_slice %228 {offsets = [8, 64], sizes = [8, 32], strides = [1, 1]} : vector<16x128xf32> to vector<8x32xf32>
    %cst_113 = arith.constant dense<0.000000e+00> : vector<8x8xf32>
    %337 = tpu.matmul %334, %335, %cst_113 {dimension_numbers = #tpu.dot_dimension_numbers<[1], [1], [0], [0], [0, 0, 1, 0], [], []>} : vector<8x32xf32>, vector<8x32xf32>, vector<8x8xf32> -> vector<8x8xf32>
    %cst_114 = arith.constant dense<0xFF800000> : vector<8xf32>
    %338 = vector.multi_reduction <maximumf>, %337, %cst_114 [1] : vector<8x8xf32> to vector<8xf32>
    %339 = vector.shape_cast %338 : vector<8xf32> to vector<8x1xf32>
    %340 = vector.broadcast %339 : vector<8x1xf32> to vector<8x8xf32>
    %341 = arith.subf %337, %340 : vector<8x8xf32>
    %342 = math.exp %341 : vector<8x8xf32>
    %cst_115 = arith.constant dense<0.000000e+00> : vector<8xf32>
    %343 = vector.multi_reduction <add>, %342, %cst_115 [1] : vector<8x8xf32> to vector<8xf32>
    %344 = vector.shape_cast %343 : vector<8xf32> to vector<8x1xf32>
    %345 = tpu.reciprocal %344 {approx = true} : vector<8x1xf32> -> vector<8x1xf32>
    %346 = vector.broadcast %345 : vector<8x1xf32> to vector<8x8xf32>
    %347 = arith.mulf %342, %346 : vector<8x8xf32>
    %cst_116 = arith.constant dense<0.000000e+00> : vector<8x32xf32>
    %348 = tpu.matmul %347, %336, %cst_116 {dimension_numbers = #tpu.dot_dimension_numbers<[1], [0], [0], [1], [0, 0, 1, 1], [], []>} : vector<8x8xf32>, vector<8x32xf32>, vector<8x32xf32> -> vector<8x32xf32>
    %349 = vector.extract_strided_slice %221 {offsets = [8, 96], sizes = [8, 32], strides = [1, 1]} : vector<16x128xf32> to vector<8x32xf32>
    %cst_117 = arith.constant 0.176776692 : f32
    %350 = vector.broadcast %cst_117 : f32 to vector<8x32xf32>
    %351 = arith.mulf %349, %350 : vector<8x32xf32>
    %352 = vector.extract_strided_slice %227 {offsets = [8, 96], sizes = [8, 32], strides = [1, 1]} : vector<16x128xf32> to vector<8x32xf32>
    %353 = vector.extract_strided_slice %228 {offsets = [8, 96], sizes = [8, 32], strides = [1, 1]} : vector<16x128xf32> to vector<8x32xf32>
    %cst_118 = arith.constant dense<0.000000e+00> : vector<8x8xf32>
    %354 = tpu.matmul %351, %352, %cst_118 {dimension_numbers = #tpu.dot_dimension_numbers<[1], [1], [0], [0], [0, 0, 1, 0], [], []>} : vector<8x32xf32>, vector<8x32xf32>, vector<8x8xf32> -> vector<8x8xf32>
    %cst_119 = arith.constant dense<0xFF800000> : vector<8xf32>
    %355 = vector.multi_reduction <maximumf>, %354, %cst_119 [1] : vector<8x8xf32> to vector<8xf32>
    %356 = vector.shape_cast %355 : vector<8xf32> to vector<8x1xf32>
    %357 = vector.broadcast %356 : vector<8x1xf32> to vector<8x8xf32>
    %358 = arith.subf %354, %357 : vector<8x8xf32>
    %359 = math.exp %358 : vector<8x8xf32>
    %cst_120 = arith.constant dense<0.000000e+00> : vector<8xf32>
    %360 = vector.multi_reduction <add>, %359, %cst_120 [1] : vector<8x8xf32> to vector<8xf32>
    %361 = vector.shape_cast %360 : vector<8xf32> to vector<8x1xf32>
    %362 = tpu.reciprocal %361 {approx = true} : vector<8x1xf32> -> vector<8x1xf32>
    %363 = vector.broadcast %362 : vector<8x1xf32> to vector<8x8xf32>
    %364 = arith.mulf %359, %363 : vector<8x8xf32>
    %cst_121 = arith.constant dense<0.000000e+00> : vector<8x32xf32>
    %365 = tpu.matmul %364, %353, %cst_121 {dimension_numbers = #tpu.dot_dimension_numbers<[1], [0], [0], [1], [0, 0, 1, 1], [], []>} : vector<8x8xf32>, vector<8x32xf32>, vector<8x32xf32> -> vector<8x32xf32>
    %366 = tpu.concatenate %314, %331, %348, %365 in 1 : vector<8x32xf32>, vector<8x32xf32>, vector<8x32xf32>, vector<8x32xf32> -> vector<8x128xf32>
    %367 = tpu.concatenate %297, %366 in 0 : vector<8x128xf32>, vector<8x128xf32> -> vector<16x128xf32>
    %c0_122 = arith.constant 0 : index
    %c0_123 = arith.constant 0 : index
    %368 = vector.load %arg14[%c0_122, %c0_123] : memref<128x128xf32, #tpu.memory_space<vmem>>, vector<128x128xf32>
    %cst_124 = arith.constant dense<0.000000e+00> : vector<16x128xf32>
    %369 = tpu.matmul %367, %368, %cst_124 {dimension_numbers = #tpu.dot_dimension_numbers<[1], [0], [0], [1], [0, 0, 1, 1], [], []>} : vector<16x128xf32>, vector<128x128xf32>, vector<16x128xf32> -> vector<16x128xf32>
    %c0_125 = arith.constant 0 : index
    %c0_126 = arith.constant 0 : index
    %370 = vector.load %arg15[%c0_125, %c0_126] : memref<1x128xf32, #tpu.memory_space<vmem>>, vector<1x128xf32>
    %371 = vector.broadcast %370 : vector<1x128xf32> to vector<16x128xf32>
    %372 = arith.addf %369, %371 : vector<16x128xf32>
    %373 = arith.addf %216, %372 : vector<16x128xf32>
    %c0_127 = arith.constant 0 : index
    %c0_128 = arith.constant 0 : index
    %374 = vector.load %arg16[%c0_127, %c0_128] : memref<1x128xf32, #tpu.memory_space<vmem>>, vector<1x128xf32>
    %c0_129 = arith.constant 0 : index
    %c0_130 = arith.constant 0 : index
    %375 = vector.load %arg17[%c0_129, %c0_130] : memref<1x128xf32, #tpu.memory_space<vmem>>, vector<1x128xf32>
    %cst_131 = arith.constant dense<0.000000e+00> : vector<16xf32>
    %376 = vector.multi_reduction <add>, %373, %cst_131 [1] : vector<16x128xf32> to vector<16xf32>
    %377 = vector.shape_cast %376 : vector<16xf32> to vector<16x1xf32>
    %cst_132 = arith.constant 1.280000e+02 : f32
    %378 = vector.broadcast %cst_132 : f32 to vector<16x1xf32>
    %379 = arith.divf %377, %378 : vector<16x1xf32>
    %380 = vector.broadcast %379 : vector<16x1xf32> to vector<16x128xf32>
    %381 = arith.subf %373, %380 : vector<16x128xf32>
    %382 = arith.mulf %381, %381 : vector<16x128xf32>
    %cst_133 = arith.constant dense<0.000000e+00> : vector<16xf32>
    %383 = vector.multi_reduction <add>, %382, %cst_133 [1] : vector<16x128xf32> to vector<16xf32>
    %384 = vector.shape_cast %383 : vector<16xf32> to vector<16x1xf32>
    %cst_134 = arith.constant 1.280000e+02 : f32
    %385 = vector.broadcast %cst_134 : f32 to vector<16x1xf32>
    %386 = arith.divf %384, %385 : vector<16x1xf32>
    %387 = vector.broadcast %379 : vector<16x1xf32> to vector<16x128xf32>
    %388 = arith.subf %373, %387 : vector<16x128xf32>
    %cst_135 = arith.constant 9.99999974E-6 : f32
    %389 = vector.broadcast %cst_135 : f32 to vector<16x1xf32>
    %390 = arith.addf %386, %389 : vector<16x1xf32>
    %391 = math.rsqrt %390 : vector<16x1xf32>
    %392 = vector.broadcast %391 : vector<16x1xf32> to vector<16x128xf32>
    %393 = arith.mulf %388, %392 : vector<16x128xf32>
    %394 = vector.broadcast %374 : vector<1x128xf32> to vector<16x128xf32>
    %395 = arith.mulf %393, %394 : vector<16x128xf32>
    %396 = vector.broadcast %375 : vector<1x128xf32> to vector<16x128xf32>
    %397 = arith.addf %395, %396 : vector<16x128xf32>
    %c0_136 = arith.constant 0 : index
    %c0_137 = arith.constant 0 : index
    %398 = vector.load %arg18[%c0_136, %c0_137] : memref<128x256xf32, #tpu.memory_space<vmem>>, vector<128x256xf32>
    %cst_138 = arith.constant dense<0.000000e+00> : vector<16x256xf32>
    %399 = tpu.matmul %397, %398, %cst_138 {dimension_numbers = #tpu.dot_dimension_numbers<[1], [0], [0], [1], [0, 0, 1, 1], [], []>} : vector<16x128xf32>, vector<128x256xf32>, vector<16x256xf32> -> vector<16x256xf32>
    %c0_139 = arith.constant 0 : index
    %c0_140 = arith.constant 0 : index
    %400 = vector.load %arg19[%c0_139, %c0_140] : memref<1x256xf32, #tpu.memory_space<vmem>>, vector<1x256xf32>
    %401 = vector.broadcast %400 : vector<1x256xf32> to vector<16x256xf32>
    %402 = arith.addf %399, %401 : vector<16x256xf32>
    %403 = arith.mulf %402, %402 : vector<16x256xf32>
    %404 = arith.mulf %402, %403 : vector<16x256xf32>
    %cst_141 = arith.constant 4.471500e-02 : f32
    %405 = vector.broadcast %cst_141 : f32 to vector<16x256xf32>
    %406 = arith.mulf %405, %404 : vector<16x256xf32>
    %407 = arith.addf %402, %406 : vector<16x256xf32>
    %cst_142 = arith.constant 0.797884583 : f32
    %408 = vector.broadcast %cst_142 : f32 to vector<16x256xf32>
    %409 = arith.mulf %408, %407 : vector<16x256xf32>
    %410 = math.tanh %409 : vector<16x256xf32>
    %cst_143 = arith.constant 1.000000e+00 : f32
    %411 = vector.broadcast %cst_143 : f32 to vector<16x256xf32>
    %412 = arith.addf %411, %410 : vector<16x256xf32>
    %cst_144 = arith.constant 5.000000e-01 : f32
    %413 = vector.broadcast %cst_144 : f32 to vector<16x256xf32>
    %414 = arith.mulf %413, %412 : vector<16x256xf32>
    %415 = arith.mulf %402, %414 : vector<16x256xf32>
    %c0_145 = arith.constant 0 : index
    %c0_146 = arith.constant 0 : index
    %416 = vector.load %arg20[%c0_145, %c0_146] : memref<256x128xf32, #tpu.memory_space<vmem>>, vector<256x128xf32>
    %cst_147 = arith.constant dense<0.000000e+00> : vector<16x128xf32>
    %417 = tpu.matmul %415, %416, %cst_147 {dimension_numbers = #tpu.dot_dimension_numbers<[1], [0], [0], [1], [0, 0, 1, 1], [], []>} : vector<16x256xf32>, vector<256x128xf32>, vector<16x128xf32> -> vector<16x128xf32>
    %c0_148 = arith.constant 0 : index
    %c0_149 = arith.constant 0 : index
    %418 = vector.load %arg21[%c0_148, %c0_149] : memref<1x128xf32, #tpu.memory_space<vmem>>, vector<1x128xf32>
    %419 = vector.broadcast %418 : vector<1x128xf32> to vector<16x128xf32>
    %420 = arith.addf %417, %419 : vector<16x128xf32>
    %421 = arith.addf %397, %420 : vector<16x128xf32>
    %c0_150 = arith.constant 0 : index
    %c0_151 = arith.constant 0 : index
    %422 = vector.load %arg22[%c0_150, %c0_151] : memref<1x128xf32, #tpu.memory_space<vmem>>, vector<1x128xf32>
    %c0_152 = arith.constant 0 : index
    %c0_153 = arith.constant 0 : index
    %423 = vector.load %arg23[%c0_152, %c0_153] : memref<1x128xf32, #tpu.memory_space<vmem>>, vector<1x128xf32>
    %cst_154 = arith.constant dense<0.000000e+00> : vector<16xf32>
    %424 = vector.multi_reduction <add>, %421, %cst_154 [1] : vector<16x128xf32> to vector<16xf32>
    %425 = vector.shape_cast %424 : vector<16xf32> to vector<16x1xf32>
    %cst_155 = arith.constant 1.280000e+02 : f32
    %426 = vector.broadcast %cst_155 : f32 to vector<16x1xf32>
    %427 = arith.divf %425, %426 : vector<16x1xf32>
    %428 = vector.broadcast %427 : vector<16x1xf32> to vector<16x128xf32>
    %429 = arith.subf %421, %428 : vector<16x128xf32>
    %430 = arith.mulf %429, %429 : vector<16x128xf32>
    %cst_156 = arith.constant dense<0.000000e+00> : vector<16xf32>
    %431 = vector.multi_reduction <add>, %430, %cst_156 [1] : vector<16x128xf32> to vector<16xf32>
    %432 = vector.shape_cast %431 : vector<16xf32> to vector<16x1xf32>
    %cst_157 = arith.constant 1.280000e+02 : f32
    %433 = vector.broadcast %cst_157 : f32 to vector<16x1xf32>
    %434 = arith.divf %432, %433 : vector<16x1xf32>
    %435 = vector.broadcast %427 : vector<16x1xf32> to vector<16x128xf32>
    %436 = arith.subf %421, %435 : vector<16x128xf32>
    %cst_158 = arith.constant 9.99999974E-6 : f32
    %437 = vector.broadcast %cst_158 : f32 to vector<16x1xf32>
    %438 = arith.addf %434, %437 : vector<16x1xf32>
    %439 = math.rsqrt %438 : vector<16x1xf32>
    %440 = vector.broadcast %439 : vector<16x1xf32> to vector<16x128xf32>
    %441 = arith.mulf %436, %440 : vector<16x128xf32>
    %442 = vector.broadcast %422 : vector<1x128xf32> to vector<16x128xf32>
    %443 = arith.mulf %441, %442 : vector<16x128xf32>
    %444 = vector.broadcast %423 : vector<1x128xf32> to vector<16x128xf32>
    %445 = arith.addf %443, %444 : vector<16x128xf32>
    %c0_159 = arith.constant 0 : index
    %c0_160 = arith.constant 0 : index
    %446 = vector.load %arg24[%c0_159, %c0_160] : memref<128x128xf32, #tpu.memory_space<vmem>>, vector<128x128xf32>
    %cst_161 = arith.constant dense<0.000000e+00> : vector<16x128xf32>
    %447 = tpu.matmul %445, %446, %cst_161 {dimension_numbers = #tpu.dot_dimension_numbers<[1], [1], [0], [0], [0, 0, 1, 0], [], []>} : vector<16x128xf32>, vector<128x128xf32>, vector<16x128xf32> -> vector<16x128xf32>
    %c0_162 = arith.constant 0 : index
    %c0_163 = arith.constant 0 : index
    %448 = vector.load %arg25[%c0_162, %c0_163] : memref<1x128xf32, #tpu.memory_space<vmem>>, vector<1x128xf32>
    %449 = vector.broadcast %448 : vector<1x128xf32> to vector<16x128xf32>
    %450 = arith.addf %447, %449 : vector<16x128xf32>
    %c0_164 = arith.constant 0 : index
    %c0_165 = arith.constant 0 : index
    %451 = vector.load %arg26[%c0_164, %c0_165] : memref<16x128xf32, #tpu.memory_space<vmem>>, vector<16x128xf32>
    tpu.vector_store %arg26[%c0_164, %c0_165], %450 {strides = array<i32>} : memref<16x128xf32, #tpu.memory_space<vmem>>, vector<16x128xf32>,
    return
  }
}

</mosaic_0001>

<llo_original>
// kernel: verbalization_forward.2
$region0: #{verbalization_forward.2}
  #allocation0 [shape = 'u32[]', space=smem, size = 0x4, offset = 0x4, fixed_abs, tag = 'smem constant byte address 0x4 - core index']
  #allocation1 [shape = 'u32[144,128]{1,0:T(1,128)}', space=vmem, size = 0x12000, scoped, tag = 'internal scratch']
  %s0 = inlined_call_operand.vmem [shape: f32[16,128], index: 0, kind: input, shape index: {}]
  %s1 = inlined_call_operand.vmem [shape: f32[1,128], index: 1, kind: input, shape index: {}]
  %s2 = inlined_call_operand.vmem [shape: f32[1,128], index: 2, kind: input, shape index: {}]
  %s3 = inlined_call_operand.vmem [shape: f32[128,384], index: 3, kind: input, shape index: {}]
  %s4 = inlined_call_operand.vmem [shape: f32[1,384], index: 4, kind: input, shape index: {}]
  %s5 = inlined_call_operand.hbm [shape: f32[128,128], index: 5, kind: input, shape index: {}]
  %s6 = inlined_call_operand.vmem [shape: f32[1,128], index: 6, kind: input, shape index: {}]
  %s7 = inlined_call_operand.vmem [shape: f32[1,128], index: 7, kind: input, shape index: {}]
  %s8 = inlined_call_operand.vmem [shape: f32[1,128], index: 8, kind: input, shape index: {}]
  %s9 = inlined_call_operand.hbm [shape: f32[128,256], index: 9, kind: input, shape index: {}]
  %s10 = inlined_call_operand.vmem [shape: f32[1,256], index: 10, kind: input, shape index: {}]
  %s11 = inlined_call_operand.hbm [shape: f32[256,128], index: 11, kind: input, shape index: {}]
  %s12 = inlined_call_operand.vmem [shape: f32[1,128], index: 12, kind: input, shape index: {}]
  %s13 = inlined_call_operand.vmem [shape: f32[1,128], index: 13, kind: input, shape index: {}]
  %s14 = inlined_call_operand.vmem [shape: f32[1,128], index: 14, kind: input, shape index: {}]
  %s15 = inlined_call_operand.vmem [shape: f32[16,128], index: 15, kind: output, shape index: {}]
  %s16 = sld [smem:[#allocation0]]
  $region82: #{verbalization_forward.2} parent=0
    _
  %s18 = ssub.s32 1, %s16
  %s19 = scalar_select 0, %s18, %s16
  $region1: #{verbalization_forward.2} parent=0
    #allocation2 [shape = 'u8[65536]{0}', space=vmem, size = 0x10000, scoped, tag = 'input window, operand 5, single buffered']
    #allocation3 [shape = 's32[1]{0}', space=sflag, size = 0x4, scoped, tag = 'scoped memory for verbalization_forward.2']
    #allocation4 [shape = 'u8[131072]{0}', space=vmem, size = 0x20000, scoped, tag = 'input window, operand 9, single buffered']
    #allocation5 [shape = 's32[1]{0}', space=sflag, size = 0x4, scoped, tag = 'scoped memory for verbalization_forward.2']
    #allocation6 [shape = 'u8[131072]{0}', space=vmem, size = 0x20000, scoped, tag = 'input window, operand 11, single buffered']
    %20 = vsyncpa [#allocation3], 0
    %21 = vsyncpa [#allocation5], 0
    // Predicated region
    $region2: #{verbalization_forward.2} parent=1 // pred_check
      _
    $region3: #{verbalization_forward.2} parent=1 // pred_check_branch
      %23 = sbr.rel (0) target = $region5
    $region4: #{verbalization_forward.2} parent=1 // pred_region
      _
    $region5: #{verbalization_forward.2} parent=1 // pred_fallthru
      _
    // Predicated region
    $region6: #{verbalization_forward.2} parent=1 // pred_check
      _
    $region7: #{verbalization_forward.2} parent=1 // pred_check_branch
      %25 = sbr.rel (0) target = $region9
    $region8: #{verbalization_forward.2} parent=1 // pred_region
      _
    $region9: #{verbalization_forward.2} parent=1 // pred_fallthru
      _
    // Predicated region
    $region10: #{verbalization_forward.2} parent=1 // pred_check
      _
    $region11: #{verbalization_forward.2} parent=1 // pred_check_branch
      %27 = sbr.rel (0) target = $region13
    $region12: #{verbalization_forward.2} parent=1 // pred_region
      _
    $region13: #{verbalization_forward.2} parent=1 // pred_fallthru
      _
    // Predicated region
    $region14: #{verbalization_forward.2} parent=1 // pred_check
      _
    $region15: #{verbalization_forward.2} parent=1 // pred_check_branch
      %29 = sbr.rel (0) target = $region17
    $region16: #{verbalization_forward.2} parent=1 // pred_region
      _
    $region17: #{verbalization_forward.2} parent=1 // pred_fallthru
      _
    // Predicated region
    $region18: #{verbalization_forward.2} parent=1 // pred_check
      _
    $region19: #{verbalization_forward.2} parent=1 // pred_check_branch
      %31 = sbr.rel (0) target = $region21
    $region20: #{verbalization_forward.2} parent=1 // pred_region
      _
    $region21: #{verbalization_forward.2} parent=1 // pred_fallthru
      _
    // Predicated region
    $region22: #{verbalization_forward.2} parent=1 // pred_check
      _
    $region23: #{verbalization_forward.2} parent=1 // pred_check_branch
      %33 = sbr.rel (0) target = $region25
    $region24: #{verbalization_forward.2} parent=1 // pred_region
      %s35 = ssub.s32 2048, 2048
      %36 = vsyncadd [#allocation3], %s35
      %s37 = sshll.u32 [#allocation2], 4
      %s38 = int_to_ptr.vmem [resolvable:$true] %s37
      %43 = dma.hbm_to_vmem [thread:$0]  %s5, 2048, %s38, [#allocation3], 128, 128, 8
    $region25: #{verbalization_forward.2} parent=1 // pred_fallthru
      _
    // Predicated region
    $region26: #{verbalization_forward.2} parent=1 // pred_check
      _
    $region27: #{verbalization_forward.2} parent=1 // pred_check_branch
      %45 = sbr.rel (0) target = $region29
    $region28: #{verbalization_forward.2} parent=1 // pred_region
      _
    $region29: #{verbalization_forward.2} parent=1 // pred_fallthru
      _
    // Predicated region
    $region30: #{verbalization_forward.2} parent=1 // pred_check
      _
    $region31: #{verbalization_forward.2} parent=1 // pred_check_branch
      %47 = sbr.rel (0) target = $region33
    $region32: #{verbalization_forward.2} parent=1 // pred_region
      _
    $region33: #{verbalization_forward.2} parent=1 // pred_fallthru
      _
    // Predicated region
    $region34: #{verbalization_forward.2} parent=1 // pred_check
      _
    $region35: #{verbalization_forward.2} parent=1 // pred_check_branch
      %49 = sbr.rel (0) target = $region37
    $region36: #{verbalization_forward.2} parent=1 // pred_region
      _
    $region37: #{verbalization_forward.2} parent=1 // pred_fallthru
      _
    // Predicated region
    $region38: #{verbalization_forward.2} parent=1 // pred_check
      _
    $region39: #{verbalization_forward.2} parent=1 // pred_check_branch
      %51 = sbr.rel (0) target = $region41
    $region40: #{verbalization_forward.2} parent=1 // pred_region
      %s53 = ssub.s32 4096, 4096
      %54 = vsyncadd [#allocation5], %s53
      %s55 = sshll.u32 [#allocation4], 4
      %s56 = int_to_ptr.vmem [resolvable:$true] %s55
      %61 = dma.hbm_to_vmem [thread:$0]  %s9, 4096, %s56, [#allocation5], 256, 256, 16
    $region41: #{verbalization_forward.2} parent=1 // pred_fallthru
      _
    // Predicated region
    $region42: #{verbalization_forward.2} parent=1 // pred_check
      _
    $region43: #{verbalization_forward.2} parent=1 // pred_check_branch
      %63 = sbr.rel (0) target = $region45
    $region44: #{verbalization_forward.2} parent=1 // pred_region
      _
    $region45: #{verbalization_forward.2} parent=1 // pred_fallthru
      _
    // Predicated region
    $region46: #{verbalization_forward.2} parent=1 // pred_check
      _
    $region47: #{verbalization_forward.2} parent=1 // pred_check_branch
      %65 = sbr.rel (0) target = $region49
    $region48: #{verbalization_forward.2} parent=1 // pred_region
      %s67 = ssub.s32 4096, 4096
      %68 = vsyncadd [#allocation5], %s67
      %s69 = sshll.u32 [#allocation6], 4
      %s70 = int_to_ptr.vmem [resolvable:$true] %s69
      %75 = dma.hbm_to_vmem [thread:$0]  %s11, 4096, %s70, [#allocation5], 128, 128, 8
    $region49: #{verbalization_forward.2} parent=1 // pred_fallthru
      _
    // Predicated region
    $region50: #{verbalization_forward.2} parent=1 // pred_check
      _
    $region51: #{verbalization_forward.2} parent=1 // pred_check_branch
      %77 = sbr.rel (0) target = $region53
    $region52: #{verbalization_forward.2} parent=1 // pred_region
      _
    $region53: #{verbalization_forward.2} parent=1 // pred_fallthru
      _
    // Predicated region
    $region54: #{verbalization_forward.2} parent=1 // pred_check
      _
    $region55: #{verbalization_forward.2} parent=1 // pred_check_branch
      %79 = sbr.rel (0) target = $region57
    $region56: #{verbalization_forward.2} parent=1 // pred_region
      _
    $region57: #{verbalization_forward.2} parent=1 // pred_fallthru
      _
    // Predicated region
    $region58: #{verbalization_forward.2} parent=1 // pred_check
      _
    $region59: #{verbalization_forward.2} parent=1 // pred_check_branch
      %81 = sbr.rel (0) target = $region61
    $region60: #{verbalization_forward.2} parent=1 // pred_region
      _
    $region61: #{verbalization_forward.2} parent=1 // pred_fallthru
      _
    // Predicated region
    $region62: #{verbalization_forward.2} parent=1 // pred_check
      _
    $region63: #{verbalization_forward.2} parent=1 // pred_check_branch
      %83 = sbr.rel (0) target = $region65
    $region64: #{verbalization_forward.2} parent=1 // pred_region
      %84 = dma.done [#allocation3], 2048
    $region65: #{verbalization_forward.2} parent=1 // pred_fallthru
      _
    // Predicated region
    $region66: #{verbalization_forward.2} parent=1 // pred_check
      _
    $region67: #{verbalization_forward.2} parent=1 // pred_check_branch
      %86 = sbr.rel (0) target = $region69
    $region68: #{verbalization_forward.2} parent=1 // pred_region
      %87 = dma.done [#allocation5], 4096
    $region69: #{verbalization_forward.2} parent=1 // pred_fallthru
      _
    // Predicated region
    $region70: #{verbalization_forward.2} parent=1 // pred_check
      _
    $region71: #{verbalization_forward.2} parent=1 // pred_check_branch
      %89 = sbr.rel (0) target = $region73
    $region72: #{verbalization_forward.2} parent=1 // pred_region
      %90 = dma.done [#allocation5], 4096
    $region73: #{verbalization_forward.2} parent=1 // pred_fallthru
      _
    %v91 = vld [vmem:[%s0] sm:$0xff]
    %v92 = vld [vmem:[%s0 + $0x8] sm:$0xff]
    %v93 = vld [vmem:[%s1] sm:$0x1]
    %v94 = vld [vmem:[%s2] sm:$0x1]
    %95 = vadd.xlane.f32.xlu0 %v91
    %v96 = vpop.xlane.xlu0 %95
    %97 = vadd.xlane.f32.xlu0 %v92
    %v98 = vpop.xlane.xlu0 %97
    %v99 = vrcp.pop 128.0
    %v100 = vmul.f32 %v96, %v99
    %v101 = vmul.f32 %v98, %v99
    %v102 = vsub.f32 %v91, %v100
    %v103 = vsub.f32 %v92, %v101
    %v104 = vmul.f32 %v102, %v102
    %v105 = vmul.f32 %v103, %v103
    %106 = vadd.xlane.f32.xlu0 %v104
    %v107 = vpop.xlane.xlu0 %106
    %108 = vadd.xlane.f32.xlu0 %v105
    %v109 = vpop.xlane.xlu0 %108
    %v110 = vmul.f32 %v107, %v99
    %v111 = vmul.f32 %v109, %v99
    %v112 = vadd.f32 %v110, 1e-05
    %v113 = vadd.f32 %v111, 1e-05
    %v114 = vrsqrt.pop %v112
    %v115 = vrsqrt.pop %v113
    %v116 = vmul.f32 %v102, %v114
    %v117 = vmul.f32 %v103, %v115
    %v119 = vlaneseq
    %v120 = vshrl.u32 %v119, 7
    %v121 = vsub.s32 0, %v120
    %v122 = vrot.slane %v93, %v121
    %v124 = vmul.f32 %v116, %v122
    %v125 = vmul.f32 %v117, %v122
    %v127 = vlaneseq
    %v128 = vshrl.u32 %v127, 7
    %v129 = vsub.s32 0, %v128
    %v130 = vrot.slane %v94, %v129
    %v132 = vadd.f32 %v124, %v130
    %v133 = vadd.f32 %v125, %v130
    %v134 = vld [vmem:[%s3] sm:$0xff]
    %v135 = vld [vmem:[%s3 + $0x8] sm:$0xff]
    %v136 = vld [vmem:[%s3 + $0x10] sm:$0xff]
    %v137 = vld [vmem:[%s3 + $0x18] sm:$0xff]
    %v138 = vld [vmem:[%s3 + $0x20] sm:$0xff]
    %v139 = vld [vmem:[%s3 + $0x28] sm:$0xff]
    %v140 = vld [vmem:[%s3 + $0x30] sm:$0xff]
    %v141 = vld [vmem:[%s3 + $0x38] sm:$0xff]
    %v142 = vld [vmem:[%s3 + $0x40] sm:$0xff]
    %v143 = vld [vmem:[%s3 + $0x48] sm:$0xff]
    %v144 = vld [vmem:[%s3 + $0x50] sm:$0xff]
    %v145 = vld [vmem:[%s3 + $0x58] sm:$0xff]
    %v146 = vld [vmem:[%s3 + $0x60] sm:$0xff]
    %v147 = vld [vmem:[%s3 + $0x68] sm:$0xff]
    %v148 = vld [vmem:[%s3 + $0x70] sm:$0xff]
    %v149 = vld [vmem:[%s3 + $0x78] sm:$0xff]
    %v150 = vld [vmem:[%s3 + $0x80] sm:$0xff]
    %v151 = vld [vmem:[%s3 + $0x88] sm:$0xff]
    %v152 = vld [vmem:[%s3 + $0x90] sm:$0xff]
    %v153 = vld [vmem:[%s3 + $0x98] sm:$0xff]
    %v154 = vld [vmem:[%s3 + $0xa0] sm:$0xff]
    %v155 = vld [vmem:[%s3 + $0xa8] sm:$0xff]
    %v156 = vld [vmem:[%s3 + $0xb0] sm:$0xff]
    %v157 = vld [vmem:[%s3 + $0xb8] sm:$0xff]
    %v158 = vld [vmem:[%s3 + $0xc0] sm:$0xff]
    %v159 = vld [vmem:[%s3 + $0xc8] sm:$0xff]
    %v160 = vld [vmem:[%s3 + $0xd0] sm:$0xff]
    %v161 = vld [vmem:[%s3 + $0xd8] sm:$0xff]
    %v162 = vld [vmem:[%s3 + $0xe0] sm:$0xff]
    %v163 = vld [vmem:[%s3 + $0xe8] sm:$0xff]
    %v164 = vld [vmem:[%s3 + $0xf0] sm:$0xff]
    %v165 = vld [vmem:[%s3 + $0xf8] sm:$0xff]
    %v166 = vld [vmem:[%s3 + $0x100] sm:$0xff]
    %v167 = vld [vmem:[%s3 + $0x108] sm:$0xff]
    %v168 = vld [vmem:[%s3 + $0x110] sm:$0xff]
    %v169 = vld [vmem:[%s3 + $0x118] sm:$0xff]
    %v170 = vld [vmem:[%s3 + $0x120] sm:$0xff]
    %v171 = vld [vmem:[%s3 + $0x128] sm:$0xff]
    %v172 = vld [vmem:[%s3 + $0x130] sm:$0xff]
    %v173 = vld [vmem:[%s3 + $0x138] sm:$0xff]
    %v174 = vld [vmem:[%s3 + $0x140] sm:$0xff]
    %v175 = vld [vmem:[%s3 + $0x148] sm:$0xff]
    %v176 = vld [vmem:[%s3 + $0x150] sm:$0xff]
    %v177 = vld [vmem:[%s3 + $0x158] sm:$0xff]
    %v178 = vld [vmem:[%s3 + $0x160] sm:$0xff]
    %v179 = vld [vmem:[%s3 + $0x168] sm:$0xff]
    %v180 = vld [vmem:[%s3 + $0x170] sm:$0xff]
    %v181 = vld [vmem:[%s3 + $0x178] sm:$0xff]
    %v182 = vld [vmem:[%s4] sm:$0x7]
    %v184 = vlaneseq
    %v185 = vshrl.u32 %v184, 7
    %v186 = vsub.s32 0, %v185
    %v187 = vrot.slane %v182, %v186
    %v188 = vlaneseq
    %v189 = vshrl.u32 %v188, 7
    %v190 = vsub.s32 1, %v189
    %v191 = vrot.slane %v182, %v190
    %v192 = vlaneseq
    %v193 = vshrl.u32 %v192, 7
    %v194 = vsub.s32 2, %v193
    %v195 = vrot.slane %v182, %v194
    %199 = vmatprep.subr.mxu0 %v135
    %200 = vmatpush1.msra.mxu0 %v134
    %201 = vmatprep.subr.mxu0 %v138
    %202 = vmatpush1.msra.mxu0 %v137
    %203 = vmatprep.subr.mxu0 %v141
    %204 = vmatpush1.msra.mxu0 %v140
    %205 = vmatprep.subr.mxu0 %v144
    %206 = vmatpush1.msra.mxu0 %v143
    %207 = vmatprep.subr.mxu0 %v147
    %208 = vmatpush1.msra.mxu0 %v146
    %209 = vmatprep.subr.mxu0 %v150
    %210 = vmatpush1.msra.mxu0 %v149
    %211 = vmatprep.subr.mxu0 %v153
    %212 = vmatpush1.msra.mxu0 %v152
    %213 = vmatprep.subr.mxu0 %v156
    %214 = vmatpush1.msra.mxu0 %v155
    %215 = vmatprep.subr.mxu0 %v159
    %216 = vmatpush1.msra.mxu0 %v158
    %217 = vmatprep.subr.mxu0 %v162
    %218 = vmatpush1.msra.mxu0 %v161
    %219 = vmatprep.subr.mxu0 %v165
    %220 = vmatpush1.msra.mxu0 %v164
    %221 = vmatprep.subr.mxu0 %v168
    %222 = vmatpush1.msra.mxu0 %v167
    %223 = vmatprep.subr.mxu0 %v171
    %224 = vmatpush1.msra.mxu0 %v170
    %225 = vmatprep.subr.mxu0 %v174
    %226 = vmatpush1.msra.mxu0 %v173
    %227 = vmatprep.subr.mxu0 %v177
    %228 = vmatpush1.msra.mxu0 %v176
    %229 = vmatprep.subr.mxu0 %v180
    %230 = vmatpush1.msra.mxu0 %v179
    %231 = vmatprep.subr.mxu0 0.0
    %232 = vmatpush1.msra.mxu0 0.0
    %233 = vmatprep.subr.mxu0 0.0
    %234 = vmatpush1.msra.mxu0 0.0
    %235 = vmatprep.subr.mxu0 0.0
    %236 = vmatpush1.msra.mxu0 0.0
    %237 = vmatprep.subr.mxu0 0.0
    %238 = vmatpush1.msra.mxu0 0.0
    %239 = vmatprep.subr.mxu0 0.0
    %240 = vmatpush1.msra.mxu0 0.0
    %241 = vmatprep.subr.mxu0 0.0
    %242 = vmatpush1.msra.mxu0 0.0
    %243 = vmatprep.subr.mxu0 0.0
    %244 = vmatpush1.msra.mxu0 0.0
    %245 = vmatprep.subr.mxu0 0.0
    %246 = vmatpush1.msra.mxu0 0.0
    %247 = vmatprep.subr.mxu0 0.0
    %248 = vmatpush1.msra.mxu0 0.0
    %249 = vmatprep.subr.mxu0 0.0
    %250 = vmatpush1.msra.mxu0 0.0
    %251 = vmatprep.subr.mxu0 0.0
    %252 = vmatpush1.msra.mxu0 0.0
    %253 = vmatprep.subr.mxu0 0.0
    %254 = vmatpush1.msra.mxu0 0.0
    %255 = vmatprep.subr.mxu0 0.0
    %256 = vmatpush1.msra.mxu0 0.0
    %257 = vmatprep.subr.mxu0 0.0
    %258 = vmatpush1.msra.mxu0 0.0
    %259 = vmatprep.subr.mxu0 0.0
    %260 = vmatpush1.msra.mxu0 0.0
    %261 = vmatprep.subr.mxu0 0.0
    %262 = vmatpush1.msra.mxu0 0.0
    %263 = vmatprep.mubr.f32.mxu0 0.0
    %264 = vmatmul.mubr.f32.gmra.mrb[0].mxu0 %v132
    %v265 = vpop.f32.mrb[0].mxu0
    %v266 = vadd.f32 %v187, %v265
    %v267 = vpop.f32.mrb[0].mxu0
    %v268 = vadd.f32 %v191, %v267
    %269 = vmatprep.mubr.f32.mxu0 0.0
    %270 = vmatmul.mubr.f32.gmra.mrb[0].mxu0 %v133
    %v271 = vpop.f32.mrb[0].mxu0
    %v272 = vadd.f32 %v187, %v271
    %v273 = vpop.f32.mrb[0].mxu0
    %v274 = vadd.f32 %v191, %v273
    %275 = vdwg.mxu0
    %276 = vmatprep.subr.mxu0 0.0
    %277 = vmatpush1.msra.mxu0 %v136
    %278 = vmatprep.subr.mxu0 0.0
    %279 = vmatpush1.msra.mxu0 %v139
    %280 = vmatprep.subr.mxu0 0.0
    %281 = vmatpush1.msra.mxu0 %v142
    %282 = vmatprep.subr.mxu0 0.0
    %283 = vmatpush1.msra.mxu0 %v145
    %284 = vmatprep.subr.mxu0 0.0
    %285 = vmatpush1.msra.mxu0 %v148
    %286 = vmatprep.subr.mxu0 0.0
    %287 = vmatpush1.msra.mxu0 %v151
    %288 = vmatprep.subr.mxu0 0.0
    %289 = vmatpush1.msra.mxu0 %v154
    %290 = vmatprep.subr.mxu0 0.0
    %291 = vmatpush1.msra.mxu0 %v157
    %292 = vmatprep.subr.mxu0 0.0
    %293 = vmatpush1.msra.mxu0 %v160
    %294 = vmatprep.subr.mxu0 0.0
    %295 = vmatpush1.msra.mxu0 %v163
    %296 = vmatprep.subr.mxu0 0.0
    %297 = vmatpush1.msra.mxu0 %v166
    %298 = vmatprep.subr.mxu0 0.0
    %299 = vmatpush1.msra.mxu0 %v169
    %300 = vmatprep.subr.mxu0 0.0
    %301 = vmatpush1.msra.mxu0 %v172
    %302 = vmatprep.subr.mxu0 0.0
    %303 = vmatpush1.msra.mxu0 %v175
    %304 = vmatprep.subr.mxu0 0.0
    %305 = vmatpush1.msra.mxu0 %v178
    %306 = vmatprep.subr.mxu0 0.0
    %307 = vmatpush1.msra.mxu0 %v181
    %308 = vmatprep.subr.mxu0 0.0
    %309 = vmatpush1.msra.mxu0 0.0
    %310 = vmatprep.subr.mxu0 0.0
    %311 = vmatpush1.msra.mxu0 0.0
    %312 = vmatprep.subr.mxu0 0.0
    %313 = vmatpush1.msra.mxu0 0.0
    %314 = vmatprep.subr.mxu0 0.0
    %315 = vmatpush1.msra.mxu0 0.0
    %316 = vmatprep.subr.mxu0 0.0
    %317 = vmatpush1.msra.mxu0 0.0
    %318 = vmatprep.subr.mxu0 0.0
    %319 = vmatpush1.msra.mxu0 0.0
    %320 = vmatprep.subr.mxu0 0.0
    %321 = vmatpush1.msra.mxu0 0.0
    %322 = vmatprep.subr.mxu0 0.0
    %323 = vmatpush1.msra.mxu0 0.0
    %324 = vmatprep.subr.mxu0 0.0
    %325 = vmatpush1.msra.mxu0 0.0
    %326 = vmatprep.subr.mxu0 0.0
    %327 = vmatpush1.msra.mxu0 0.0
    %328 = vmatprep.subr.mxu0 0.0
    %329 = vmatpush1.msra.mxu0 0.0
    %330 = vmatprep.subr.mxu0 0.0
    %331 = vmatpush1.msra.mxu0 0.0
    %332 = vmatprep.subr.mxu0 0.0
    %333 = vmatpush1.msra.mxu0 0.0
    %334 = vmatprep.subr.mxu0 0.0
    %335 = vmatpush1.msra.mxu0 0.0
    %336 = vmatprep.subr.mxu0 0.0
    %337 = vmatpush1.msra.mxu0 0.0
    %338 = vmatprep.subr.mxu0 0.0
    %339 = vmatpush1.msra.mxu0 0.0
    %340 = vmatprep.mubr.f32.mxu0 0.0
    %341 = vmatmul.mubr.f32.gmra.mrb[0].mxu0 %v132
    %v342 = vpop.f32.mrb[0].mxu0
    %v343 = vadd.f32 %v195, %v342
    %v344 = vpop.f32.mrb[0].mxu0
    %345 = vmatprep.mubr.f32.mxu0 0.0
    %346 = vmatmul.mubr.f32.gmra.mrb[0].mxu0 %v133
    %v347 = vpop.f32.mrb[0].mxu0
    %v348 = vadd.f32 %v195, %v347
    %v349 = vpop.f32.mrb[0].mxu0
    %350 = vdwg.mxu0
    %v351 = vmul.f32 %v266, 0.17677669
    %vm352 = vcmask 261120
    %v354 = vsel %vm352, %v351, 0
    %v357 = vsel %vm352, %v268, 0
    %359 = vmatprep.subr.mxu0 0.0
    %360 = vmatpush1.xpose.msra.mxu0 %v357
    %361 = vmatprep.subr.mxu0 0.0
    %362 = vmatpush1.xpose.msra.mxu0 0.0
    %363 = vmatprep.subr.mxu0 0.0
    %364 = vmatpush1.xpose.msra.mxu0 0.0
    %365 = vmatprep.subr.mxu0 0.0
    %366 = vmatpush1.xpose.msra.mxu0 0.0
    %367 = vmatprep.subr.mxu0 0.0
    %368 = vmatpush1.xpose.msra.mxu0 0.0
    %369 = vmatprep.subr.mxu0 0.0
    %370 = vmatpush1.xpose.msra.mxu0 0.0
    %371 = vmatprep.subr.mxu0 0.0
    %372 = vmatpush1.xpose.msra.mxu0 0.0
    %373 = vmatprep.subr.mxu0 0.0
    %374 = vmatpush1.xpose.msra.mxu0 0.0
    %375 = vmatprep.subr.mxu0 0.0
    %376 = vmatpush1.xpose.msra.mxu0 0.0
    %377 = vmatprep.subr.mxu0 0.0
    %378 = vmatpush1.xpose.msra.mxu0 0.0
    %379 = vmatprep.subr.mxu0 0.0
    %380 = vmatpush1.xpose.msra.mxu0 0.0
    %381 = vmatprep.subr.mxu0 0.0
    %382 = vmatpush1.xpose.msra.mxu0 0.0
    %383 = vmatprep.subr.mxu0 0.0
    %384 = vmatpush1.xpose.msra.mxu0 0.0
    %385 = vmatprep.subr.mxu0 0.0
    %386 = vmatpush1.xpose.msra.mxu0 0.0
    %387 = vmatprep.subr.mxu0 0.0
    %388 = vmatpush1.xpose.msra.mxu0 0.0
    %389 = vmatprep.subr.mxu0 0.0
    %390 = vmatpush1.xpose.msra.mxu0 0.0
    %391 = vmatprep.subr.mxu0 0.0
    %392 = vmatpush1.xpose.msra.mxu0 0.0
    %393 = vmatprep.subr.mxu0 0.0
    %394 = vmatpush1.xpose.msra.mxu0 0.0
    %395 = vmatprep.subr.mxu0 0.0
    %396 = vmatpush1.xpose.msra.mxu0 0.0
    %397 = vmatprep.subr.mxu0 0.0
    %398 = vmatpush1.xpose.msra.mxu0 0.0
    %399 = vmatprep.subr.mxu0 0.0
    %400 = vmatpush1.xpose.msra.mxu0 0.0
    %401 = vmatprep.subr.mxu0 0.0
    %402 = vmatpush1.xpose.msra.mxu0 0.0
    %403 = vmatprep.subr.mxu0 0.0
    %404 = vmatpush1.xpose.msra.mxu0 0.0
    %405 = vmatprep.subr.mxu0 0.0
    %406 = vmatpush1.xpose.msra.mxu0 0.0
    %407 = vmatprep.subr.mxu0 0.0
    %408 = vmatpush1.xpose.msra.mxu0 0.0
    %409 = vmatprep.subr.mxu0 0.0
    %410 = vmatpush1.xpose.msra.mxu0 0.0
    %411 = vmatprep.subr.mxu0 0.0
    %412 = vmatpush1.xpose.msra.mxu0 0.0
    %413 = vmatprep.subr.mxu0 0.0
    %414 = vmatpush1.xpose.msra.mxu0 0.0
    %415 = vmatprep.subr.mxu0 0.0
    %416 = vmatpush1.xpose.msra.mxu0 0.0
    %417 = vmatprep.subr.mxu0 0.0
    %418 = vmatpush1.xpose.msra.mxu0 0.0
    %419 = vmatprep.subr.mxu0 0.0
    %420 = vmatpush1.xpose.msra.mxu0 0.0
    %421 = vmatprep.subr.mxu0 0.0
    %422 = vmatpush1.xpose.msra.mxu0 0.0
    %423 = vmatprep.mubr.f32.mxu0 0.0
    %424 = vmatmul.mubr.f32.gmra.mrb[0].mxu0 %v354
    %v425 = vpop.f32.mrb[0].mxu0
    %v426 = vadd.f32 0.0, %v425
    %v427 = vpop.f32.mrb[0].mxu0
    %428 = vdwg.mxu0
    %vm429 = vcmask 64512
    %v430 = vsel %vm429, %v426, -inf
    %431 = vmax.xlane.f32.xlu0 %v430
    %v432 = vpop.xlane.xlu0 %431
    %v433 = vsub.f32 %v426, %v432
    %v434 = vmul.f32 %v433, 1.442695
    %v435 = vpow.pop %v434
    %v436 = vsel %vm429, %v435, 0.0
    %437 = vadd.xlane.f32.xlu0 %v436
    %v438 = vpop.xlane.xlu0 %437
    %v439 = vrcp.pop %v438
    %v440 = vmul.f32 %v435, %v439
    %v442 = vsel %vm429, %v440, 0
    %444 = vmatprep.subr.mxu0 0.0
    %445 = vmatpush1.msra.mxu0 %v343
    %446 = vmatprep.subr.mxu0 0.0
    %447 = vmatpush1.msra.mxu0 0.0
    %448 = vmatprep.subr.mxu0 0.0
    %449 = vmatpush1.msra.mxu0 0.0
    %450 = vmatprep.subr.mxu0 0.0
    %451 = vmatpush1.msra.mxu0 0.0
    %452 = vmatprep.subr.mxu0 0.0
    %453 = vmatpush1.msra.mxu0 0.0
    %454 = vmatprep.subr.mxu0 0.0
    %455 = vmatpush1.msra.mxu0 0.0
    %456 = vmatprep.subr.mxu0 0.0
    %457 = vmatpush1.msra.mxu0 0.0
    %458 = vmatprep.subr.mxu0 0.0
    %459 = vmatpush1.msra.mxu0 0.0
    %460 = vmatprep.subr.mxu0 0.0
    %461 = vmatpush1.msra.mxu0 0.0
    %462 = vmatprep.subr.mxu0 0.0
    %463 = vmatpush1.msra.mxu0 0.0
    %464 = vmatprep.subr.mxu0 0.0
    %465 = vmatpush1.msra.mxu0 0.0
    %466 = vmatprep.subr.mxu0 0.0
    %467 = vmatpush1.msra.mxu0 0.0
    %468 = vmatprep.subr.mxu0 0.0
    %469 = vmatpush1.msra.mxu0 0.0
    %470 = vmatprep.subr.mxu0 0.0
    %471 = vmatpush1.msra.mxu0 0.0
    %472 = vmatprep.subr.mxu0 0.0
    %473 = vmatpush1.msra.mxu0 0.0
    %474 = vmatprep.subr.mxu0 0.0
    %475 = vmatpush1.msra.mxu0 0.0
    %476 = vmatprep.subr.mxu0 0.0
    %477 = vmatpush1.msra.mxu0 0.0
    %478 = vmatprep.subr.mxu0 0.0
    %479 = vmatpush1.msra.mxu0 0.0
    %480 = vmatprep.subr.mxu0 0.0
    %481 = vmatpush1.msra.mxu0 0.0
    %482 = vmatprep.subr.mxu0 0.0
    %483 = vmatpush1.msra.mxu0 0.0
    %484 = vmatprep.subr.mxu0 0.0
    %485 = vmatpush1.msra.mxu0 0.0
    %486 = vmatprep.subr.mxu0 0.0
    %487 = vmatpush1.msra.mxu0 0.0
    %488 = vmatprep.subr.mxu0 0.0
    %489 = vmatpush1.msra.mxu0 0.0
    %490 = vmatprep.subr.mxu0 0.0
    %491 = vmatpush1.msra.mxu0 0.0
    %492 = vmatprep.subr.mxu0 0.0
    %493 = vmatpush1.msra.mxu0 0.0
    %494 = vmatprep.subr.mxu0 0.0
    %495 = vmatpush1.msra.mxu0 0.0
    %496 = vmatprep.subr.mxu0 0.0
    %497 = vmatpush1.msra.mxu0 0.0
    %498 = vmatprep.subr.mxu0 0.0
    %499 = vmatpush1.msra.mxu0 0.0
    %500 = vmatprep.subr.mxu0 0.0
    %501 = vmatpush1.msra.mxu0 0.0
    %502 = vmatprep.subr.mxu0 0.0
    %503 = vmatpush1.msra.mxu0 0.0
    %504 = vmatprep.subr.mxu0 0.0
    %505 = vmatpush1.msra.mxu0 0.0
    %506 = vmatprep.subr.mxu0 0.0
    %507 = vmatpush1.msra.mxu0 0.0
    %508 = vmatprep.mubr.f32.mxu0 0.0
    %509 = vmatmul.mubr.f32.gmra.mrb[0].mxu0 %v442
    %v510 = vpop.f32.mrb[0].mxu0
    %v511 = vadd.f32 0.0, %v510
    %v512 = vpop.f32.mrb[0].mxu0
    %513 = vdwg.mxu0
    %514 = vrot.lane.b32.xlu0 %v351, 96
    %v515 = vpop.permute.xlu0 %514
    %516 = vrot.lane.b32.xlu0 %v268, 96
    %v517 = vpop.permute.xlu0 %516
    %v518 = vsel %vm352, %v515, 0
    %v520 = vsel %vm352, %v517, 0
    %522 = vmatprep.subr.mxu0 0.0
    %523 = vmatpush1.xpose.msra.mxu0 %v520
    %524 = vmatprep.subr.mxu0 0.0
    %525 = vmatpush1.xpose.msra.mxu0 0.0
    %526 = vmatprep.subr.mxu0 0.0
    %527 = vmatpush1.xpose.msra.mxu0 0.0
    %528 = vmatprep.subr.mxu0 0.0
    %529 = vmatpush1.xpose.msra.mxu0 0.0
    %530 = vmatprep.subr.mxu0 0.0
    %531 = vmatpush1.xpose.msra.mxu0 0.0
    %532 = vmatprep.subr.mxu0 0.0
    %533 = vmatpush1.xpose.msra.mxu0 0.0
    %534 = vmatprep.subr.mxu0 0.0
    %535 = vmatpush1.xpose.msra.mxu0 0.0
    %536 = vmatprep.subr.mxu0 0.0
    %537 = vmatpush1.xpose.msra.mxu0 0.0
    %538 = vmatprep.subr.mxu0 0.0
    %539 = vmatpush1.xpose.msra.mxu0 0.0
    %540 = vmatprep.subr.mxu0 0.0
    %541 = vmatpush1.xpose.msra.mxu0 0.0
    %542 = vmatprep.subr.mxu0 0.0
    %543 = vmatpush1.xpose.msra.mxu0 0.0
    %544 = vmatprep.subr.mxu0 0.0
    %545 = vmatpush1.xpose.msra.mxu0 0.0
    %546 = vmatprep.subr.mxu0 0.0
    %547 = vmatpush1.xpose.msra.mxu0 0.0
    %548 = vmatprep.subr.mxu0 0.0
    %549 = vmatpush1.xpose.msra.mxu0 0.0
    %550 = vmatprep.subr.mxu0 0.0
    %551 = vmatpush1.xpose.msra.mxu0 0.0
    %552 = vmatprep.subr.mxu0 0.0
    %553 = vmatpush1.xpose.msra.mxu0 0.0
    %554 = vmatprep.subr.mxu0 0.0
    %555 = vmatpush1.xpose.msra.mxu0 0.0
    %556 = vmatprep.subr.mxu0 0.0
    %557 = vmatpush1.xpose.msra.mxu0 0.0
    %558 = vmatprep.subr.mxu0 0.0
    %559 = vmatpush1.xpose.msra.mxu0 0.0
    %560 = vmatprep.subr.mxu0 0.0
    %561 = vmatpush1.xpose.msra.mxu0 0.0
    %562 = vmatprep.subr.mxu0 0.0
    %563 = vmatpush1.xpose.msra.mxu0 0.0
    %564 = vmatprep.subr.mxu0 0.0
    %565 = vmatpush1.xpose.msra.mxu0 0.0
    %566 = vmatprep.subr.mxu0 0.0
    %567 = vmatpush1.xpose.msra.mxu0 0.0
    %568 = vmatprep.subr.mxu0 0.0
    %569 = vmatpush1.xpose.msra.mxu0 0.0
    %570 = vmatprep.subr.mxu0 0.0
    %571 = vmatpush1.xpose.msra.mxu0 0.0
    %572 = vmatprep.subr.mxu0 0.0
    %573 = vmatpush1.xpose.msra.mxu0 0.0
    %574 = vmatprep.subr.mxu0 0.0
    %575 = vmatpush1.xpose.msra.mxu0 0.0
    %576 = vmatprep.subr.mxu0 0.0
    %577 = vmatpush1.xpose.msra.mxu0 0.0
    %578 = vmatprep.subr.mxu0 0.0
    %579 = vmatpush1.xpose.msra.mxu0 0.0
    %580 = vmatprep.subr.mxu0 0.0
    %581 = vmatpush1.xpose.msra.mxu0 0.0
    %582 = vmatprep.subr.mxu0 0.0
    %583 = vmatpush1.xpose.msra.mxu0 0.0
    %584 = vmatprep.subr.mxu0 0.0
    %585 = vmatpush1.xpose.msra.mxu0 0.0
    %586 = vmatprep.mubr.f32.mxu0 0.0
    %587 = vmatmul.mubr.f32.gmra.mrb[0].mxu0 %v518
    %v588 = vpop.f32.mrb[0].mxu0
    %v589 = vadd.f32 0.0, %v588
    %v590 = vpop.f32.mrb[0].mxu0
    %591 = vdwg.mxu0
    %v592 = vsel %vm429, %v589, -inf
    %593 = vmax.xlane.f32.xlu0 %v592
    %v594 = vpop.xlane.xlu0 %593
    %v595 = vsub.f32 %v589, %v594
    %v596 = vmul.f32 %v595, 1.442695
    %v597 = vpow.pop %v596
    %v598 = vsel %vm429, %v597, 0.0
    %599 = vadd.xlane.f32.xlu0 %v598
    %v600 = vpop.xlane.xlu0 %599
    %v601 = vrcp.pop %v600
    %v602 = vmul.f32 %v597, %v601
    %604 = vrot.lane.b32.xlu0 %v343, 96
    %v605 = vpop.permute.xlu0 %604
    %v608 = vsel %vm429, %v602, 0
    %610 = vmatprep.subr.mxu0 0.0
    %611 = vmatpush1.msra.mxu0 %v605
    %612 = vmatprep.subr.mxu0 0.0
    %613 = vmatpush1.msra.mxu0 0.0
    %614 = vmatprep.subr.mxu0 0.0
    %615 = vmatpush1.msra.mxu0 0.0
    %616 = vmatprep.subr.mxu0 0.0
    %617 = vmatpush1.msra.mxu0 0.0
    %618 = vmatprep.subr.mxu0 0.0
    %619 = vmatpush1.msra.mxu0 0.0
    %620 = vmatprep.subr.mxu0 0.0
    %621 = vmatpush1.msra.mxu0 0.0
    %622 = vmatprep.subr.mxu0 0.0
    %623 = vmatpush1.msra.mxu0 0.0
    %624 = vmatprep.subr.mxu0 0.0
    %625 = vmatpush1.msra.mxu0 0.0
    %626 = vmatprep.subr.mxu0 0.0
    %627 = vmatpush1.msra.mxu0 0.0
    %628 = vmatprep.subr.mxu0 0.0
    %629 = vmatpush1.msra.mxu0 0.0
    %630 = vmatprep.subr.mxu0 0.0
    %631 = vmatpush1.msra.mxu0 0.0
    %632 = vmatprep.subr.mxu0 0.0
    %633 = vmatpush1.msra.mxu0 0.0
    %634 = vmatprep.subr.mxu0 0.0
    %635 = vmatpush1.msra.mxu0 0.0
    %636 = vmatprep.subr.mxu0 0.0
    %637 = vmatpush1.msra.mxu0 0.0
    %638 = vmatprep.subr.mxu0 0.0
    %639 = vmatpush1.msra.mxu0 0.0
    %640 = vmatprep.subr.mxu0 0.0
    %641 = vmatpush1.msra.mxu0 0.0
    %642 = vmatprep.subr.mxu0 0.0
    %643 = vmatpush1.msra.mxu0 0.0
    %644 = vmatprep.subr.mxu0 0.0
    %645 = vmatpush1.msra.mxu0 0.0
    %646 = vmatprep.subr.mxu0 0.0
    %647 = vmatpush1.msra.mxu0 0.0
    %648 = vmatprep.subr.mxu0 0.0
    %649 = vmatpush1.msra.mxu0 0.0
    %650 = vmatprep.subr.mxu0 0.0
    %651 = vmatpush1.msra.mxu0 0.0
    %652 = vmatprep.subr.mxu0 0.0
    %653 = vmatpush1.msra.mxu0 0.0
    %654 = vmatprep.subr.mxu0 0.0
    %655 = vmatpush1.msra.mxu0 0.0
    %656 = vmatprep.subr.mxu0 0.0
    %657 = vmatpush1.msra.mxu0 0.0
    %658 = vmatprep.subr.mxu0 0.0
    %659 = vmatpush1.msra.mxu0 0.0
    %660 = vmatprep.subr.mxu0 0.0
    %661 = vmatpush1.msra.mxu0 0.0
    %662 = vmatprep.subr.mxu0 0.0
    %663 = vmatpush1.msra.mxu0 0.0
    %664 = vmatprep.subr.mxu0 0.0
    %665 = vmatpush1.msra.mxu0 0.0
    %666 = vmatprep.subr.mxu0 0.0
    %667 = vmatpush1.msra.mxu0 0.0
    %668 = vmatprep.subr.mxu0 0.0
    %669 = vmatpush1.msra.mxu0 0.0
    %670 = vmatprep.subr.mxu0 0.0
    %671 = vmatpush1.msra.mxu0 0.0
    %672 = vmatprep.subr.mxu0 0.0
    %673 = vmatpush1.msra.mxu0 0.0
    %674 = vmatprep.mubr.f32.mxu0 0.0
    %675 = vmatmul.mubr.f32.gmra.mrb[0].mxu0 %v608
    %v676 = vpop.f32.mrb[0].mxu0
    %v677 = vadd.f32 0.0, %v676
    %v678 = vpop.f32.mrb[0].mxu0
    %679 = vdwg.mxu0
    %680 = vrot.lane.b32.xlu0 %v351, 64
    %v681 = vpop.permute.xlu0 %680
    %682 = vrot.lane.b32.xlu0 %v268, 64
    %v683 = vpop.permute.xlu0 %682
    %v684 = vsel %vm352, %v681, 0
    %v686 = vsel %vm352, %v683, 0
    %688 = vmatprep.subr.mxu0 0.0
    %689 = vmatpush1.xpose.msra.mxu0 %v686
    %690 = vmatprep.subr.mxu0 0.0
    %691 = vmatpush1.xpose.msra.mxu0 0.0
    %692 = vmatprep.subr.mxu0 0.0
    %693 = vmatpush1.xpose.msra.mxu0 0.0
    %694 = vmatprep.subr.mxu0 0.0
    %695 = vmatpush1.xpose.msra.mxu0 0.0
    %696 = vmatprep.subr.mxu0 0.0
    %697 = vmatpush1.xpose.msra.mxu0 0.0
    %698 = vmatprep.subr.mxu0 0.0
    %699 = vmatpush1.xpose.msra.mxu0 0.0
    %700 = vmatprep.subr.mxu0 0.0
    %701 = vmatpush1.xpose.msra.mxu0 0.0
    %702 = vmatprep.subr.mxu0 0.0
    %703 = vmatpush1.xpose.msra.mxu0 0.0
    %704 = vmatprep.subr.mxu0 0.0
    %705 = vmatpush1.xpose.msra.mxu0 0.0
    %706 = vmatprep.subr.mxu0 0.0
    %707 = vmatpush1.xpose.msra.mxu0 0.0
    %708 = vmatprep.subr.mxu0 0.0
    %709 = vmatpush1.xpose.msra.mxu0 0.0
    %710 = vmatprep.subr.mxu0 0.0
    %711 = vmatpush1.xpose.msra.mxu0 0.0
    %712 = vmatprep.subr.mxu0 0.0
    %713 = vmatpush1.xpose.msra.mxu0 0.0
    %714 = vmatprep.subr.mxu0 0.0
    %715 = vmatpush1.xpose.msra.mxu0 0.0
    %716 = vmatprep.subr.mxu0 0.0
    %717 = vmatpush1.xpose.msra.mxu0 0.0
    %718 = vmatprep.subr.mxu0 0.0
    %719 = vmatpush1.xpose.msra.mxu0 0.0
    %720 = vmatprep.subr.mxu0 0.0
    %721 = vmatpush1.xpose.msra.mxu0 0.0
    %722 = vmatprep.subr.mxu0 0.0
    %723 = vmatpush1.xpose.msra.mxu0 0.0
    %724 = vmatprep.subr.mxu0 0.0
    %725 = vmatpush1.xpose.msra.mxu0 0.0
    %726 = vmatprep.subr.mxu0 0.0
    %727 = vmatpush1.xpose.msra.mxu0 0.0
    %728 = vmatprep.subr.mxu0 0.0
    %729 = vmatpush1.xpose.msra.mxu0 0.0
    %730 = vmatprep.subr.mxu0 0.0
    %731 = vmatpush1.xpose.msra.mxu0 0.0
    %732 = vmatprep.subr.mxu0 0.0
    %733 = vmatpush1.xpose.msra.mxu0 0.0
    %734 = vmatprep.subr.mxu0 0.0
    %735 = vmatpush1.xpose.msra.mxu0 0.0
    %736 = vmatprep.subr.mxu0 0.0
    %737 = vmatpush1.xpose.msra.mxu0 0.0
    %738 = vmatprep.subr.mxu0 0.0
    %739 = vmatpush1.xpose.msra.mxu0 0.0
    %740 = vmatprep.subr.mxu0 0.0
    %741 = vmatpush1.xpose.msra.mxu0 0.0
    %742 = vmatprep.subr.mxu0 0.0
    %743 = vmatpush1.xpose.msra.mxu0 0.0
    %744 = vmatprep.subr.mxu0 0.0
    %745 = vmatpush1.xpose.msra.mxu0 0.0
    %746 = vmatprep.subr.mxu0 0.0
    %747 = vmatpush1.xpose.msra.mxu0 0.0
    %748 = vmatprep.subr.mxu0 0.0
    %749 = vmatpush1.xpose.msra.mxu0 0.0
    %750 = vmatprep.subr.mxu0 0.0
    %751 = vmatpush1.xpose.msra.mxu0 0.0
    %752 = vmatprep.mubr.f32.mxu0 0.0
    %753 = vmatmul.mubr.f32.gmra.mrb[0].mxu0 %v684
    %v754 = vpop.f32.mrb[0].mxu0
    %v755 = vadd.f32 0.0, %v754
    %v756 = vpop.f32.mrb[0].mxu0
    %757 = vdwg.mxu0
    %v758 = vsel %vm429, %v755, -inf
    %759 = vmax.xlane.f32.xlu0 %v758
    %v760 = vpop.xlane.xlu0 %759
    %v761 = vsub.f32 %v755, %v760
    %v762 = vmul.f32 %v761, 1.442695
    %v763 = vpow.pop %v762
    %v764 = vsel %vm429, %v763, 0.0
    %765 = vadd.xlane.f32.xlu0 %v764
    %v766 = vpop.xlane.xlu0 %765
    %v767 = vrcp.pop %v766
    %v768 = vmul.f32 %v763, %v767
    %769 = vrot.lane.b32.xlu0 %v343, 64
    %v770 = vpop.permute.xlu0 %769
    %v773 = vsel %vm429, %v768, 0
    %775 = vmatprep.subr.mxu0 0.0
    %776 = vmatpush1.msra.mxu0 %v770
    %777 = vmatprep.subr.mxu0 0.0
    %778 = vmatpush1.msra.mxu0 0.0
    %779 = vmatprep.subr.mxu0 0.0
    %780 = vmatpush1.msra.mxu0 0.0
    %781 = vmatprep.subr.mxu0 0.0
    %782 = vmatpush1.msra.mxu0 0.0
    %783 = vmatprep.subr.mxu0 0.0
    %784 = vmatpush1.msra.mxu0 0.0
    %785 = vmatprep.subr.mxu0 0.0
    %786 = vmatpush1.msra.mxu0 0.0
    %787 = vmatprep.subr.mxu0 0.0
    %788 = vmatpush1.msra.mxu0 0.0
    %789 = vmatprep.subr.mxu0 0.0
    %790 = vmatpush1.msra.mxu0 0.0
    %791 = vmatprep.subr.mxu0 0.0
    %792 = vmatpush1.msra.mxu0 0.0
    %793 = vmatprep.subr.mxu0 0.0
    %794 = vmatpush1.msra.mxu0 0.0
    %795 = vmatprep.subr.mxu0 0.0
    %796 = vmatpush1.msra.mxu0 0.0
    %797 = vmatprep.subr.mxu0 0.0
    %798 = vmatpush1.msra.mxu0 0.0
    %799 = vmatprep.subr.mxu0 0.0
    %800 = vmatpush1.msra.mxu0 0.0
    %801 = vmatprep.subr.mxu0 0.0
    %802 = vmatpush1.msra.mxu0 0.0
    %803 = vmatprep.subr.mxu0 0.0
    %804 = vmatpush1.msra.mxu0 0.0
    %805 = vmatprep.subr.mxu0 0.0
    %806 = vmatpush1.msra.mxu0 0.0
    %807 = vmatprep.subr.mxu0 0.0
    %808 = vmatpush1.msra.mxu0 0.0
    %809 = vmatprep.subr.mxu0 0.0
    %810 = vmatpush1.msra.mxu0 0.0
    %811 = vmatprep.subr.mxu0 0.0
    %812 = vmatpush1.msra.mxu0 0.0
    %813 = vmatprep.subr.mxu0 0.0
    %814 = vmatpush1.msra.mxu0 0.0
    %815 = vmatprep.subr.mxu0 0.0
    %816 = vmatpush1.msra.mxu0 0.0
    %817 = vmatprep.subr.mxu0 0.0
    %818 = vmatpush1.msra.mxu0 0.0
    %819 = vmatprep.subr.mxu0 0.0
    %820 = vmatpush1.msra.mxu0 0.0
    %821 = vmatprep.subr.mxu0 0.0
    %822 = vmatpush1.msra.mxu0 0.0
    %823 = vmatprep.subr.mxu0 0.0
    %824 = vmatpush1.msra.mxu0 0.0
    %825 = vmatprep.subr.mxu0 0.0
    %826 = vmatpush1.msra.mxu0 0.0
    %827 = vmatprep.subr.mxu0 0.0
    %828 = vmatpush1.msra.mxu0 0.0
    %829 = vmatprep.subr.mxu0 0.0
    %830 = vmatpush1.msra.mxu0 0.0
    %831 = vmatprep.subr.mxu0 0.0
    %832 = vmatpush1.msra.mxu0 0.0
    %833 = vmatprep.subr.mxu0 0.0
    %834 = vmatpush1.msra.mxu0 0.0
    %835 = vmatprep.subr.mxu0 0.0
    %836 = vmatpush1.msra.mxu0 0.0
    %837 = vmatprep.subr.mxu0 0.0
    %838 = vmatpush1.msra.mxu0 0.0
    %839 = vmatprep.mubr.f32.mxu0 0.0
    %840 = vmatmul.mubr.f32.gmra.mrb[0].mxu0 %v773
    %v841 = vpop.f32.mrb[0].mxu0
    %v842 = vadd.f32 0.0, %v841
    %v843 = vpop.f32.mrb[0].mxu0
    %844 = vdwg.mxu0
    %845 = vrot.lane.b32.xlu0 %v351, 32
    %v846 = vpop.permute.xlu0 %845
    %847 = vrot.lane.b32.xlu0 %v268, 32
    %v848 = vpop.permute.xlu0 %847
    %v849 = vsel %vm352, %v846, 0
    %v851 = vsel %vm352, %v848, 0
    %853 = vmatprep.subr.mxu0 0.0
    %854 = vmatpush1.xpose.msra.mxu0 %v851
    %855 = vmatprep.subr.mxu0 0.0
    %856 = vmatpush1.xpose.msra.mxu0 0.0
    %857 = vmatprep.subr.mxu0 0.0
    %858 = vmatpush1.xpose.msra.mxu0 0.0
    %859 = vmatprep.subr.mxu0 0.0
    %860 = vmatpush1.xpose.msra.mxu0 0.0
    %861 = vmatprep.subr.mxu0 0.0
    %862 = vmatpush1.xpose.msra.mxu0 0.0
    %863 = vmatprep.subr.mxu0 0.0
    %864 = vmatpush1.xpose.msra.mxu0 0.0
    %865 = vmatprep.subr.mxu0 0.0
    %866 = vmatpush1.xpose.msra.mxu0 0.0
    %867 = vmatprep.subr.mxu0 0.0
    %868 = vmatpush1.xpose.msra.mxu0 0.0
    %869 = vmatprep.subr.mxu0 0.0
    %870 = vmatpush1.xpose.msra.mxu0 0.0
    %871 = vmatprep.subr.mxu0 0.0
    %872 = vmatpush1.xpose.msra.mxu0 0.0
    %873 = vmatprep.subr.mxu0 0.0
    %874 = vmatpush1.xpose.msra.mxu0 0.0
    %875 = vmatprep.subr.mxu0 0.0
    %876 = vmatpush1.xpose.msra.mxu0 0.0
    %877 = vmatprep.subr.mxu0 0.0
    %878 = vmatpush1.xpose.msra.mxu0 0.0
    %879 = vmatprep.subr.mxu0 0.0
    %880 = vmatpush1.xpose.msra.mxu0 0.0
    %881 = vmatprep.subr.mxu0 0.0
    %882 = vmatpush1.xpose.msra.mxu0 0.0
    %883 = vmatprep.subr.mxu0 0.0
    %884 = vmatpush1.xpose.msra.mxu0 0.0
    %885 = vmatprep.subr.mxu0 0.0
    %886 = vmatpush1.xpose.msra.mxu0 0.0
    %887 = vmatprep.subr.mxu0 0.0
    %888 = vmatpush1.xpose.msra.mxu0 0.0
    %889 = vmatprep.subr.mxu0 0.0
    %890 = vmatpush1.xpose.msra.mxu0 0.0
    %891 = vmatprep.subr.mxu0 0.0
    %892 = vmatpush1.xpose.msra.mxu0 0.0
    %893 = vmatprep.subr.mxu0 0.0
    %894 = vmatpush1.xpose.msra.mxu0 0.0
    %895 = vmatprep.subr.mxu0 0.0
    %896 = vmatpush1.xpose.msra.mxu0 0.0
    %897 = vmatprep.subr.mxu0 0.0
    %898 = vmatpush1.xpose.msra.mxu0 0.0
    %899 = vmatprep.subr.mxu0 0.0
    %900 = vmatpush1.xpose.msra.mxu0 0.0
    %901 = vmatprep.subr.mxu0 0.0
    %902 = vmatpush1.xpose.msra.mxu0 0.0
    %903 = vmatprep.subr.mxu0 0.0
    %904 = vmatpush1.xpose.msra.mxu0 0.0
    %905 = vmatprep.subr.mxu0 0.0
    %906 = vmatpush1.xpose.msra.mxu0 0.0
    %907 = vmatprep.subr.mxu0 0.0
    %908 = vmatpush1.xpose.msra.mxu0 0.0
    %909 = vmatprep.subr.mxu0 0.0
    %910 = vmatpush1.xpose.msra.mxu0 0.0
    %911 = vmatprep.subr.mxu0 0.0
    %912 = vmatpush1.xpose.msra.mxu0 0.0
    %913 = vmatprep.subr.mxu0 0.0
    %914 = vmatpush1.xpose.msra.mxu0 0.0
    %915 = vmatprep.subr.mxu0 0.0
    %916 = vmatpush1.xpose.msra.mxu0 0.0
    %917 = vmatprep.mubr.f32.mxu0 0.0
    %918 = vmatmul.mubr.f32.gmra.mrb[0].mxu0 %v849
    %v919 = vpop.f32.mrb[0].mxu0
    %v920 = vadd.f32 0.0, %v919
    %v921 = vpop.f32.mrb[0].mxu0
    %922 = vdwg.mxu0
    %v923 = vsel %vm429, %v920, -inf
    %924 = vmax.xlane.f32.xlu0 %v923
    %v925 = vpop.xlane.xlu0 %924
    %v926 = vsub.f32 %v920, %v925
    %v927 = vmul.f32 %v926, 1.442695
    %v928 = vpow.pop %v927
    %v929 = vsel %vm429, %v928, 0.0
    %930 = vadd.xlane.f32.xlu0 %v929
    %v931 = vpop.xlane.xlu0 %930
    %v932 = vrcp.pop %v931
    %v933 = vmul.f32 %v928, %v932
    %934 = vrot.lane.b32.xlu0 %v343, 32
    %v935 = vpop.permute.xlu0 %934
    %v938 = vsel %vm429, %v933, 0
    %940 = vmatprep.subr.mxu0 0.0
    %941 = vmatpush1.msra.mxu0 %v935
    %942 = vmatprep.subr.mxu0 0.0
    %943 = vmatpush1.msra.mxu0 0.0
    %944 = vmatprep.subr.mxu0 0.0
    %945 = vmatpush1.msra.mxu0 0.0
    %946 = vmatprep.subr.mxu0 0.0
    %947 = vmatpush1.msra.mxu0 0.0
    %948 = vmatprep.subr.mxu0 0.0
    %949 = vmatpush1.msra.mxu0 0.0
    %950 = vmatprep.subr.mxu0 0.0
    %951 = vmatpush1.msra.mxu0 0.0
    %952 = vmatprep.subr.mxu0 0.0
    %953 = vmatpush1.msra.mxu0 0.0
    %954 = vmatprep.subr.mxu0 0.0
    %955 = vmatpush1.msra.mxu0 0.0
    %956 = vmatprep.subr.mxu0 0.0
    %957 = vmatpush1.msra.mxu0 0.0
    %958 = vmatprep.subr.mxu0 0.0
    %959 = vmatpush1.msra.mxu0 0.0
    %960 = vmatprep.subr.mxu0 0.0
    %961 = vmatpush1.msra.mxu0 0.0
    %962 = vmatprep.subr.mxu0 0.0
    %963 = vmatpush1.msra.mxu0 0.0
    %964 = vmatprep.subr.mxu0 0.0
    %965 = vmatpush1.msra.mxu0 0.0
    %966 = vmatprep.subr.mxu0 0.0
    %967 = vmatpush1.msra.mxu0 0.0
    %968 = vmatprep.subr.mxu0 0.0
    %969 = vmatpush1.msra.mxu0 0.0
    %970 = vmatprep.subr.mxu0 0.0
    %971 = vmatpush1.msra.mxu0 0.0
    %972 = vmatprep.subr.mxu0 0.0
    %973 = vmatpush1.msra.mxu0 0.0
    %974 = vmatprep.subr.mxu0 0.0
    %975 = vmatpush1.msra.mxu0 0.0
    %976 = vmatprep.subr.mxu0 0.0
    %977 = vmatpush1.msra.mxu0 0.0
    %978 = vmatprep.subr.mxu0 0.0
    %979 = vmatpush1.msra.mxu0 0.0
    %980 = vmatprep.subr.mxu0 0.0
    %981 = vmatpush1.msra.mxu0 0.0
    %982 = vmatprep.subr.mxu0 0.0
    %983 = vmatpush1.msra.mxu0 0.0
    %984 = vmatprep.subr.mxu0 0.0
    %985 = vmatpush1.msra.mxu0 0.0
    %986 = vmatprep.subr.mxu0 0.0
    %987 = vmatpush1.msra.mxu0 0.0
    %988 = vmatprep.subr.mxu0 0.0
    %989 = vmatpush1.msra.mxu0 0.0
    %990 = vmatprep.subr.mxu0 0.0
    %991 = vmatpush1.msra.mxu0 0.0
    %992 = vmatprep.subr.mxu0 0.0
    %993 = vmatpush1.msra.mxu0 0.0
    %994 = vmatprep.subr.mxu0 0.0
    %995 = vmatpush1.msra.mxu0 0.0
    %996 = vmatprep.subr.mxu0 0.0
    %997 = vmatpush1.msra.mxu0 0.0
    %998 = vmatprep.subr.mxu0 0.0
    %999 = vmatpush1.msra.mxu0 0.0
    %1000 = vmatprep.subr.mxu0 0.0
    %1001 = vmatpush1.msra.mxu0 0.0
    %1002 = vmatprep.subr.mxu0 0.0
    %1003 = vmatpush1.msra.mxu0 0.0
    %1004 = vmatprep.mubr.f32.mxu0 0.0
    %1005 = vmatmul.mubr.f32.gmra.mrb[0].mxu0 %v938
    %v1006 = vpop.f32.mrb[0].mxu0
    %v1007 = vadd.f32 0.0, %v1006
    %v1008 = vpop.f32.mrb[0].mxu0
    %1009 = vdwg.mxu0
    %1011 = vrot.lane.b32.xlu0 %v677, 32
    %v1012 = vpop.permute.xlu0 %1011
    %1015 = vrot.lane.b32.xlu0 %v842, 64
    %v1016 = vpop.permute.xlu0 %1015
    %1019 = vrot.lane.b32.xlu0 %v1007, 96
    %v1020 = vpop.permute.xlu0 %1019
    %v1022 = vsel %vm352, %v511, %v1012
    %vm1023 = vcmask 523264
    %v1024 = vsel %vm1023, %v1022, %v1016
    %vm1025 = vcmask 785408
    %v1026 = vsel %vm1025, %v1024, %v1020
    %v1027 = vmul.f32 %v272, 0.17677669
    %v1029 = vsel %vm352, %v1027, 0
    %v1032 = vsel %vm352, %v274, 0
    %1034 = vmatprep.subr.mxu0 0.0
    %1035 = vmatpush1.xpose.msra.mxu0 %v1032
    %1036 = vmatprep.subr.mxu0 0.0
    %1037 = vmatpush1.xpose.msra.mxu0 0.0
    %1038 = vmatprep.subr.mxu0 0.0
    %1039 = vmatpush1.xpose.msra.mxu0 0.0
    %1040 = vmatprep.subr.mxu0 0.0
    %1041 = vmatpush1.xpose.msra.mxu0 0.0
    %1042 = vmatprep.subr.mxu0 0.0
    %1043 = vmatpush1.xpose.msra.mxu0 0.0
    %1044 = vmatprep.subr.mxu0 0.0
    %1045 = vmatpush1.xpose.msra.mxu0 0.0
    %1046 = vmatprep.subr.mxu0 0.0
    %1047 = vmatpush1.xpose.msra.mxu0 0.0
    %1048 = vmatprep.subr.mxu0 0.0
    %1049 = vmatpush1.xpose.msra.mxu0 0.0
    %1050 = vmatprep.subr.mxu0 0.0
    %1051 = vmatpush1.xpose.msra.mxu0 0.0
    %1052 = vmatprep.subr.mxu0 0.0
    %1053 = vmatpush1.xpose.msra.mxu0 0.0
    %1054 = vmatprep.subr.mxu0 0.0
    %1055 = vmatpush1.xpose.msra.mxu0 0.0
    %1056 = vmatprep.subr.mxu0 0.0
    %1057 = vmatpush1.xpose.msra.mxu0 0.0
    %1058 = vmatprep.subr.mxu0 0.0
    %1059 = vmatpush1.xpose.msra.mxu0 0.0
    %1060 = vmatprep.subr.mxu0 0.0
    %1061 = vmatpush1.xpose.msra.mxu0 0.0
    %1062 = vmatprep.subr.mxu0 0.0
    %1063 = vmatpush1.xpose.msra.mxu0 0.0
    %1064 = vmatprep.subr.mxu0 0.0
    %1065 = vmatpush1.xpose.msra.mxu0 0.0
    %1066 = vmatprep.subr.mxu0 0.0
    %1067 = vmatpush1.xpose.msra.mxu0 0.0
    %1068 = vmatprep.subr.mxu0 0.0
    %1069 = vmatpush1.xpose.msra.mxu0 0.0
    %1070 = vmatprep.subr.mxu0 0.0
    %1071 = vmatpush1.xpose.msra.mxu0 0.0
    %1072 = vmatprep.subr.mxu0 0.0
    %1073 = vmatpush1.xpose.msra.mxu0 0.0
    %1074 = vmatprep.subr.mxu0 0.0
    %1075 = vmatpush1.xpose.msra.mxu0 0.0
    %1076 = vmatprep.subr.mxu0 0.0
    %1077 = vmatpush1.xpose.msra.mxu0 0.0
    %1078 = vmatprep.subr.mxu0 0.0
    %1079 = vmatpush1.xpose.msra.mxu0 0.0
    %1080 = vmatprep.subr.mxu0 0.0
    %1081 = vmatpush1.xpose.msra.mxu0 0.0
    %1082 = vmatprep.subr.mxu0 0.0
    %1083 = vmatpush1.xpose.msra.mxu0 0.0
    %1084 = vmatprep.subr.mxu0 0.0
    %1085 = vmatpush1.xpose.msra.mxu0 0.0
    %1086 = vmatprep.subr.mxu0 0.0
    %1087 = vmatpush1.xpose.msra.mxu0 0.0
    %1088 = vmatprep.subr.mxu0 0.0
    %1089 = vmatpush1.xpose.msra.mxu0 0.0
    %1090 = vmatprep.subr.mxu0 0.0
    %1091 = vmatpush1.xpose.msra.mxu0 0.0
    %1092 = vmatprep.subr.mxu0 0.0
    %1093 = vmatpush1.xpose.msra.mxu0 0.0
    %1094 = vmatprep.subr.mxu0 0.0
    %1095 = vmatpush1.xpose.msra.mxu0 0.0
    %1096 = vmatprep.subr.mxu0 0.0
    %1097 = vmatpush1.xpose.msra.mxu0 0.0
    %1098 = vmatprep.mubr.f32.mxu0 0.0
    %1099 = vmatmul.mubr.f32.gmra.mrb[0].mxu0 %v1029
    %v1100 = vpop.f32.mrb[0].mxu0
    %v1101 = vadd.f32 0.0, %v1100
    %v1102 = vpop.f32.mrb[0].mxu0
    %1103 = vdwg.mxu0
    %v1104 = vsel %vm429, %v1101, -inf
    %1105 = vmax.xlane.f32.xlu0 %v1104
    %v1106 = vpop.xlane.xlu0 %1105
    %v1107 = vsub.f32 %v1101, %v1106
    %v1108 = vmul.f32 %v1107, 1.442695
    %v1109 = vpow.pop %v1108
    %v1110 = vsel %vm429, %v1109, 0.0
    %1111 = vadd.xlane.f32.xlu0 %v1110
    %v1112 = vpop.xlane.xlu0 %1111
    %v1113 = vrcp.pop %v1112
    %v1114 = vmul.f32 %v1109, %v1113
    %v1116 = vsel %vm429, %v1114, 0
    %1118 = vmatprep.subr.mxu0 0.0
    %1119 = vmatpush1.msra.mxu0 %v348
    %1120 = vmatprep.subr.mxu0 0.0
    %1121 = vmatpush1.msra.mxu0 0.0
    %1122 = vmatprep.subr.mxu0 0.0
    %1123 = vmatpush1.msra.mxu0 0.0
    %1124 = vmatprep.subr.mxu0 0.0
    %1125 = vmatpush1.msra.mxu0 0.0
    %1126 = vmatprep.subr.mxu0 0.0
    %1127 = vmatpush1.msra.mxu0 0.0
    %1128 = vmatprep.subr.mxu0 0.0
    %1129 = vmatpush1.msra.mxu0 0.0
    %1130 = vmatprep.subr.mxu0 0.0
    %1131 = vmatpush1.msra.mxu0 0.0
    %1132 = vmatprep.subr.mxu0 0.0
    %1133 = vmatpush1.msra.mxu0 0.0
    %1134 = vmatprep.subr.mxu0 0.0
    %1135 = vmatpush1.msra.mxu0 0.0
    %1136 = vmatprep.subr.mxu0 0.0
    %1137 = vmatpush1.msra.mxu0 0.0
    %1138 = vmatprep.subr.mxu0 0.0
    %1139 = vmatpush1.msra.mxu0 0.0
    %1140 = vmatprep.subr.mxu0 0.0
    %1141 = vmatpush1.msra.mxu0 0.0
    %1142 = vmatprep.subr.mxu0 0.0
    %1143 = vmatpush1.msra.mxu0 0.0
    %1144 = vmatprep.subr.mxu0 0.0
    %1145 = vmatpush1.msra.mxu0 0.0
    %1146 = vmatprep.subr.mxu0 0.0
    %1147 = vmatpush1.msra.mxu0 0.0
    %1148 = vmatprep.subr.mxu0 0.0
    %1149 = vmatpush1.msra.mxu0 0.0
    %1150 = vmatprep.subr.mxu0 0.0
    %1151 = vmatpush1.msra.mxu0 0.0
    %1152 = vmatprep.subr.mxu0 0.0
    %1153 = vmatpush1.msra.mxu0 0.0
    %1154 = vmatprep.subr.mxu0 0.0
    %1155 = vmatpush1.msra.mxu0 0.0
    %1156 = vmatprep.subr.mxu0 0.0
    %1157 = vmatpush1.msra.mxu0 0.0
    %1158 = vmatprep.subr.mxu0 0.0
    %1159 = vmatpush1.msra.mxu0 0.0
    %1160 = vmatprep.subr.mxu0 0.0
    %1161 = vmatpush1.msra.mxu0 0.0
    %1162 = vmatprep.subr.mxu0 0.0
    %1163 = vmatpush1.msra.mxu0 0.0
    %1164 = vmatprep.subr.mxu0 0.0
    %1165 = vmatpush1.msra.mxu0 0.0
    %1166 = vmatprep.subr.mxu0 0.0
    %1167 = vmatpush1.msra.mxu0 0.0
    %1168 = vmatprep.subr.mxu0 0.0
    %1169 = vmatpush1.msra.mxu0 0.0
    %1170 = vmatprep.subr.mxu0 0.0
    %1171 = vmatpush1.msra.mxu0 0.0
    %1172 = vmatprep.subr.mxu0 0.0
    %1173 = vmatpush1.msra.mxu0 0.0
    %1174 = vmatprep.subr.mxu0 0.0
    %1175 = vmatpush1.msra.mxu0 0.0
    %1176 = vmatprep.subr.mxu0 0.0
    %1177 = vmatpush1.msra.mxu0 0.0
    %1178 = vmatprep.subr.mxu0 0.0
    %1179 = vmatpush1.msra.mxu0 0.0
    %1180 = vmatprep.subr.mxu0 0.0
    %1181 = vmatpush1.msra.mxu0 0.0
    %1182 = vmatprep.mubr.f32.mxu0 0.0
    %1183 = vmatmul.mubr.f32.gmra.mrb[0].mxu0 %v1116
    %v1184 = vpop.f32.mrb[0].mxu0
    %v1185 = vadd.f32 0.0, %v1184
    %v1186 = vpop.f32.mrb[0].mxu0
    %1187 = vdwg.mxu0
    %1188 = vrot.lane.b32.xlu0 %v1027, 96
    %v1189 = vpop.permute.xlu0 %1188
    %1190 = vrot.lane.b32.xlu0 %v274, 96
    %v1191 = vpop.permute.xlu0 %1190
    %v1192 = vsel %vm352, %v1189, 0
    %v1194 = vsel %vm352, %v1191, 0
    %1196 = vmatprep.subr.mxu0 0.0
    %1197 = vmatpush1.xpose.msra.mxu0 %v1194
    %1198 = vmatprep.subr.mxu0 0.0
    %1199 = vmatpush1.xpose.msra.mxu0 0.0
    %1200 = vmatprep.subr.mxu0 0.0
    %1201 = vmatpush1.xpose.msra.mxu0 0.0
    %1202 = vmatprep.subr.mxu0 0.0
    %1203 = vmatpush1.xpose.msra.mxu0 0.0
    %1204 = vmatprep.subr.mxu0 0.0
    %1205 = vmatpush1.xpose.msra.mxu0 0.0
    %1206 = vmatprep.subr.mxu0 0.0
    %1207 = vmatpush1.xpose.msra.mxu0 0.0
    %1208 = vmatprep.subr.mxu0 0.0
    %1209 = vmatpush1.xpose.msra.mxu0 0.0
    %1210 = vmatprep.subr.mxu0 0.0
    %1211 = vmatpush1.xpose.msra.mxu0 0.0
    %1212 = vmatprep.subr.mxu0 0.0
    %1213 = vmatpush1.xpose.msra.mxu0 0.0
    %1214 = vmatprep.subr.mxu0 0.0
    %1215 = vmatpush1.xpose.msra.mxu0 0.0
    %1216 = vmatprep.subr.mxu0 0.0
    %1217 = vmatpush1.xpose.msra.mxu0 0.0
    %1218 = vmatprep.subr.mxu0 0.0
    %1219 = vmatpush1.xpose.msra.mxu0 0.0
    %1220 = vmatprep.subr.mxu0 0.0
    %1221 = vmatpush1.xpose.msra.mxu0 0.0
    %1222 = vmatprep.subr.mxu0 0.0
    %1223 = vmatpush1.xpose.msra.mxu0 0.0
    %1224 = vmatprep.subr.mxu0 0.0
    %1225 = vmatpush1.xpose.msra.mxu0 0.0
    %1226 = vmatprep.subr.mxu0 0.0
    %1227 = vmatpush1.xpose.msra.mxu0 0.0
    %1228 = vmatprep.subr.mxu0 0.0
    %1229 = vmatpush1.xpose.msra.mxu0 0.0
    %1230 = vmatprep.subr.mxu0 0.0
    %1231 = vmatpush1.xpose.msra.mxu0 0.0
    %1232 = vmatprep.subr.mxu0 0.0
    %1233 = vmatpush1.xpose.msra.mxu0 0.0
    %1234 = vmatprep.subr.mxu0 0.0
    %1235 = vmatpush1.xpose.msra.mxu0 0.0
    %1236 = vmatprep.subr.mxu0 0.0
    %1237 = vmatpush1.xpose.msra.mxu0 0.0
    %1238 = vmatprep.subr.mxu0 0.0
    %1239 = vmatpush1.xpose.msra.mxu0 0.0
    %1240 = vmatprep.subr.mxu0 0.0
    %1241 = vmatpush1.xpose.msra.mxu0 0.0
    %1242 = vmatprep.subr.mxu0 0.0
    %1243 = vmatpush1.xpose.msra.mxu0 0.0
    %1244 = vmatprep.subr.mxu0 0.0
    %1245 = vmatpush1.xpose.msra.mxu0 0.0
    %1246 = vmatprep.subr.mxu0 0.0
    %1247 = vmatpush1.xpose.msra.mxu0 0.0
    %1248 = vmatprep.subr.mxu0 0.0
    %1249 = vmatpush1.xpose.msra.mxu0 0.0
    %1250 = vmatprep.subr.mxu0 0.0
    %1251 = vmatpush1.xpose.msra.mxu0 0.0
    %1252 = vmatprep.subr.mxu0 0.0
    %1253 = vmatpush1.xpose.msra.mxu0 0.0
    %1254 = vmatprep.subr.mxu0 0.0
    %1255 = vmatpush1.xpose.msra.mxu0 0.0
    %1256 = vmatprep.subr.mxu0 0.0
    %1257 = vmatpush1.xpose.msra.mxu0 0.0
    %1258 = vmatprep.subr.mxu0 0.0
    %1259 = vmatpush1.xpose.msra.mxu0 0.0
    %1260 = vmatprep.mubr.f32.mxu0 0.0
    %1261 = vmatmul.mubr.f32.gmra.mrb[0].mxu0 %v1192
    %v1262 = vpop.f32.mrb[0].mxu0
    %v1263 = vadd.f32 0.0, %v1262
    %v1264 = vpop.f32.mrb[0].mxu0
    %1265 = vdwg.mxu0
    %v1266 = vsel %vm429, %v1263, -inf
    %1267 = vmax.xlane.f32.xlu0 %v1266
    %v1268 = vpop.xlane.xlu0 %1267
    %v1269 = vsub.f32 %v1263, %v1268
    %v1270 = vmul.f32 %v1269, 1.442695
    %v1271 = vpow.pop %v1270
    %v1272 = vsel %vm429, %v1271, 0.0
    %1273 = vadd.xlane.f32.xlu0 %v1272
    %v1274 = vpop.xlane.xlu0 %1273
    %v1275 = vrcp.pop %v1274
    %v1276 = vmul.f32 %v1271, %v1275
    %1278 = vrot.lane.b32.xlu0 %v348, 96
    %v1279 = vpop.permute.xlu0 %1278
    %v1282 = vsel %vm429, %v1276, 0
    %1284 = vmatprep.subr.mxu0 0.0
    %1285 = vmatpush1.msra.mxu0 %v1279
    %1286 = vmatprep.subr.mxu0 0.0
    %1287 = vmatpush1.msra.mxu0 0.0
    %1288 = vmatprep.subr.mxu0 0.0
    %1289 = vmatpush1.msra.mxu0 0.0
    %1290 = vmatprep.subr.mxu0 0.0
    %1291 = vmatpush1.msra.mxu0 0.0
    %1292 = vmatprep.subr.mxu0 0.0
    %1293 = vmatpush1.msra.mxu0 0.0
    %1294 = vmatprep.subr.mxu0 0.0
    %1295 = vmatpush1.msra.mxu0 0.0
    %1296 = vmatprep.subr.mxu0 0.0
    %1297 = vmatpush1.msra.mxu0 0.0
    %1298 = vmatprep.subr.mxu0 0.0
    %1299 = vmatpush1.msra.mxu0 0.0
    %1300 = vmatprep.subr.mxu0 0.0
    %1301 = vmatpush1.msra.mxu0 0.0
    %1302 = vmatprep.subr.mxu0 0.0
    %1303 = vmatpush1.msra.mxu0 0.0
    %1304 = vmatprep.subr.mxu0 0.0
    %1305 = vmatpush1.msra.mxu0 0.0
    %1306 = vmatprep.subr.mxu0 0.0
    %1307 = vmatpush1.msra.mxu0 0.0
    %1308 = vmatprep.subr.mxu0 0.0
    %1309 = vmatpush1.msra.mxu0 0.0
    %1310 = vmatprep.subr.mxu0 0.0
    %1311 = vmatpush1.msra.mxu0 0.0
    %1312 = vmatprep.subr.mxu0 0.0
    %1313 = vmatpush1.msra.mxu0 0.0
    %1314 = vmatprep.subr.mxu0 0.0
    %1315 = vmatpush1.msra.mxu0 0.0
    %1316 = vmatprep.subr.mxu0 0.0
    %1317 = vmatpush1.msra.mxu0 0.0
    %1318 = vmatprep.subr.mxu0 0.0
    %1319 = vmatpush1.msra.mxu0 0.0
    %1320 = vmatprep.subr.mxu0 0.0
    %1321 = vmatpush1.msra.mxu0 0.0
    %1322 = vmatprep.subr.mxu0 0.0
    %1323 = vmatpush1.msra.mxu0 0.0
    %1324 = vmatprep.subr.mxu0 0.0
    %1325 = vmatpush1.msra.mxu0 0.0
    %1326 = vmatprep.subr.mxu0 0.0
    %1327 = vmatpush1.msra.mxu0 0.0
    %1328 = vmatprep.subr.mxu0 0.0
    %1329 = vmatpush1.msra.mxu0 0.0
    %1330 = vmatprep.subr.mxu0 0.0
    %1331 = vmatpush1.msra.mxu0 0.0
    %1332 = vmatprep.subr.mxu0 0.0
    %1333 = vmatpush1.msra.mxu0 0.0
    %1334 = vmatprep.subr.mxu0 0.0
    %1335 = vmatpush1.msra.mxu0 0.0
    %1336 = vmatprep.subr.mxu0 0.0
    %1337 = vmatpush1.msra.mxu0 0.0
    %1338 = vmatprep.subr.mxu0 0.0
    %1339 = vmatpush1.msra.mxu0 0.0
    %1340 = vmatprep.subr.mxu0 0.0
    %1341 = vmatpush1.msra.mxu0 0.0
    %1342 = vmatprep.subr.mxu0 0.0
    %1343 = vmatpush1.msra.mxu0 0.0
    %1344 = vmatprep.subr.mxu0 0.0
    %1345 = vmatpush1.msra.mxu0 0.0
    %1346 = vmatprep.subr.mxu0 0.0
    %1347 = vmatpush1.msra.mxu0 0.0
    %1348 = vmatprep.mubr.f32.mxu0 0.0
    %1349 = vmatmul.mubr.f32.gmra.mrb[0].mxu0 %v1282
    %v1350 = vpop.f32.mrb[0].mxu0
    %v1351 = vadd.f32 0.0, %v1350
    %v1352 = vpop.f32.mrb[0].mxu0
    %1353 = vdwg.mxu0
    %1354 = vrot.lane.b32.xlu0 %v1027, 64
    %v1355 = vpop.permute.xlu0 %1354
    %1356 = vrot.lane.b32.xlu0 %v274, 64
    %v1357 = vpop.permute.xlu0 %1356
    %v1358 = vsel %vm352, %v1355, 0
    %v1360 = vsel %vm352, %v1357, 0
    %1362 = vmatprep.subr.mxu0 0.0
    %1363 = vmatpush1.xpose.msra.mxu0 %v1360
    %1364 = vmatprep.subr.mxu0 0.0
    %1365 = vmatpush1.xpose.msra.mxu0 0.0
    %1366 = vmatprep.subr.mxu0 0.0
    %1367 = vmatpush1.xpose.msra.mxu0 0.0
    %1368 = vmatprep.subr.mxu0 0.0
    %1369 = vmatpush1.xpose.msra.mxu0 0.0
    %1370 = vmatprep.subr.mxu0 0.0
    %1371 = vmatpush1.xpose.msra.mxu0 0.0
    %1372 = vmatprep.subr.mxu0 0.0
    %1373 = vmatpush1.xpose.msra.mxu0 0.0
    %1374 = vmatprep.subr.mxu0 0.0
    %1375 = vmatpush1.xpose.msra.mxu0 0.0
    %1376 = vmatprep.subr.mxu0 0.0
    %1377 = vmatpush1.xpose.msra.mxu0 0.0
    %1378 = vmatprep.subr.mxu0 0.0
    %1379 = vmatpush1.xpose.msra.mxu0 0.0
    %1380 = vmatprep.subr.mxu0 0.0
    %1381 = vmatpush1.xpose.msra.mxu0 0.0
    %1382 = vmatprep.subr.mxu0 0.0
    %1383 = vmatpush1.xpose.msra.mxu0 0.0
    %1384 = vmatprep.subr.mxu0 0.0
    %1385 = vmatpush1.xpose.msra.mxu0 0.0
    %1386 = vmatprep.subr.mxu0 0.0
    %1387 = vmatpush1.xpose.msra.mxu0 0.0
    %1388 = vmatprep.subr.mxu0 0.0
    %1389 = vmatpush1.xpose.msra.mxu0 0.0
    %1390 = vmatprep.subr.mxu0 0.0
    %1391 = vmatpush1.xpose.msra.mxu0 0.0
    %1392 = vmatprep.subr.mxu0 0.0
    %1393 = vmatpush1.xpose.msra.mxu0 0.0
    %1394 = vmatprep.subr.mxu0 0.0
    %1395 = vmatpush1.xpose.msra.mxu0 0.0
    %1396 = vmatprep.subr.mxu0 0.0
    %1397 = vmatpush1.xpose.msra.mxu0 0.0
    %1398 = vmatprep.subr.mxu0 0.0
    %1399 = vmatpush1.xpose.msra.mxu0 0.0
    %1400 = vmatprep.subr.mxu0 0.0
    %1401 = vmatpush1.xpose.msra.mxu0 0.0
    %1402 = vmatprep.subr.mxu0 0.0
    %1403 = vmatpush1.xpose.msra.mxu0 0.0
    %1404 = vmatprep.subr.mxu0 0.0
    %1405 = vmatpush1.xpose.msra.mxu0 0.0
    %1406 = vmatprep.subr.mxu0 0.0
    %1407 = vmatpush1.xpose.msra.mxu0 0.0
    %1408 = vmatprep.subr.mxu0 0.0
    %1409 = vmatpush1.xpose.msra.mxu0 0.0
    %1410 = vmatprep.subr.mxu0 0.0
    %1411 = vmatpush1.xpose.msra.mxu0 0.0
    %1412 = vmatprep.subr.mxu0 0.0
    %1413 = vmatpush1.xpose.msra.mxu0 0.0
    %1414 = vmatprep.subr.mxu0 0.0
    %1415 = vmatpush1.xpose.msra.mxu0 0.0
    %1416 = vmatprep.subr.mxu0 0.0
    %1417 = vmatpush1.xpose.msra.mxu0 0.0
    %1418 = vmatprep.subr.mxu0 0.0
    %1419 = vmatpush1.xpose.msra.mxu0 0.0
    %1420 = vmatprep.subr.mxu0 0.0
    %1421 = vmatpush1.xpose.msra.mxu0 0.0
    %1422 = vmatprep.subr.mxu0 0.0
    %1423 = vmatpush1.xpose.msra.mxu0 0.0
    %1424 = vmatprep.subr.mxu0 0.0
    %1425 = vmatpush1.xpose.msra.mxu0 0.0
    %1426 = vmatprep.mubr.f32.mxu0 0.0
    %1427 = vmatmul.mubr.f32.gmra.mrb[0].mxu0 %v1358
    %v1428 = vpop.f32.mrb[0].mxu0
    %v1429 = vadd.f32 0.0, %v1428
    %v1430 = vpop.f32.mrb[0].mxu0
    %1431 = vdwg.mxu0
    %v1432 = vsel %vm429, %v1429, -inf
    %1433 = vmax.xlane.f32.xlu0 %v1432
    %v1434 = vpop.xlane.xlu0 %1433
    %v1435 = vsub.f32 %v1429, %v1434
    %v1436 = vmul.f32 %v1435, 1.442695
    %v1437 = vpow.pop %v1436
    %v1438 = vsel %vm429, %v1437, 0.0
    %1439 = vadd.xlane.f32.xlu0 %v1438
    %v1440 = vpop.xlane.xlu0 %1439
    %v1441 = vrcp.pop %v1440
    %v1442 = vmul.f32 %v1437, %v1441
    %1443 = vrot.lane.b32.xlu0 %v348, 64
    %v1444 = vpop.permute.xlu0 %1443
    %v1447 = vsel %vm429, %v1442, 0
    %1449 = vmatprep.subr.mxu0 0.0
    %1450 = vmatpush1.msra.mxu0 %v1444
    %1451 = vmatprep.subr.mxu0 0.0
    %1452 = vmatpush1.msra.mxu0 0.0
    %1453 = vmatprep.subr.mxu0 0.0
    %1454 = vmatpush1.msra.mxu0 0.0
    %1455 = vmatprep.subr.mxu0 0.0
    %1456 = vmatpush1.msra.mxu0 0.0
    %1457 = vmatprep.subr.mxu0 0.0
    %1458 = vmatpush1.msra.mxu0 0.0
    %1459 = vmatprep.subr.mxu0 0.0
    %1460 = vmatpush1.msra.mxu0 0.0
    %1461 = vmatprep.subr.mxu0 0.0
    %1462 = vmatpush1.msra.mxu0 0.0
    %1463 = vmatprep.subr.mxu0 0.0
    %1464 = vmatpush1.msra.mxu0 0.0
    %1465 = vmatprep.subr.mxu0 0.0
    %1466 = vmatpush1.msra.mxu0 0.0
    %1467 = vmatprep.subr.mxu0 0.0
    %1468 = vmatpush1.msra.mxu0 0.0
    %1469 = vmatprep.subr.mxu0 0.0
    %1470 = vmatpush1.msra.mxu0 0.0
    %1471 = vmatprep.subr.mxu0 0.0
    %1472 = vmatpush1.msra.mxu0 0.0
    %1473 = vmatprep.subr.mxu0 0.0
    %1474 = vmatpush1.msra.mxu0 0.0
    %1475 = vmatprep.subr.mxu0 0.0
    %1476 = vmatpush1.msra.mxu0 0.0
    %1477 = vmatprep.subr.mxu0 0.0
    %1478 = vmatpush1.msra.mxu0 0.0
    %1479 = vmatprep.subr.mxu0 0.0
    %1480 = vmatpush1.msra.mxu0 0.0
    %1481 = vmatprep.subr.mxu0 0.0
    %1482 = vmatpush1.msra.mxu0 0.0
    %1483 = vmatprep.subr.mxu0 0.0
    %1484 = vmatpush1.msra.mxu0 0.0
    %1485 = vmatprep.subr.mxu0 0.0
    %1486 = vmatpush1.msra.mxu0 0.0
    %1487 = vmatprep.subr.mxu0 0.0
    %1488 = vmatpush1.msra.mxu0 0.0
    %1489 = vmatprep.subr.mxu0 0.0
    %1490 = vmatpush1.msra.mxu0 0.0
    %1491 = vmatprep.subr.mxu0 0.0
    %1492 = vmatpush1.msra.mxu0 0.0
    %1493 = vmatprep.subr.mxu0 0.0
    %1494 = vmatpush1.msra.mxu0 0.0
    %1495 = vmatprep.subr.mxu0 0.0
    %1496 = vmatpush1.msra.mxu0 0.0
    %1497 = vmatprep.subr.mxu0 0.0
    %1498 = vmatpush1.msra.mxu0 0.0
    %1499 = vmatprep.subr.mxu0 0.0
    %1500 = vmatpush1.msra.mxu0 0.0
    %1501 = vmatprep.subr.mxu0 0.0
    %1502 = vmatpush1.msra.mxu0 0.0
    %1503 = vmatprep.subr.mxu0 0.0
    %1504 = vmatpush1.msra.mxu0 0.0
    %1505 = vmatprep.subr.mxu0 0.0
    %1506 = vmatpush1.msra.mxu0 0.0
    %1507 = vmatprep.subr.mxu0 0.0
    %1508 = vmatpush1.msra.mxu0 0.0
    %1509 = vmatprep.subr.mxu0 0.0
    %1510 = vmatpush1.msra.mxu0 0.0
    %1511 = vmatprep.subr.mxu0 0.0
    %1512 = vmatpush1.msra.mxu0 0.0
    %1513 = vmatprep.mubr.f32.mxu0 0.0
    %1514 = vmatmul.mubr.f32.gmra.mrb[0].mxu0 %v1447
    %v1515 = vpop.f32.mrb[0].mxu0
    %v1516 = vadd.f32 0.0, %v1515
    %v1517 = vpop.f32.mrb[0].mxu0
    %1518 = vdwg.mxu0
    %1519 = vrot.lane.b32.xlu0 %v1027, 32
    %v1520 = vpop.permute.xlu0 %1519
    %1521 = vrot.lane.b32.xlu0 %v274, 32
    %v1522 = vpop.permute.xlu0 %1521
    %v1523 = vsel %vm352, %v1520, 0
    %v1525 = vsel %vm352, %v1522, 0
    %1527 = vmatprep.subr.mxu0 0.0
    %1528 = vmatpush1.xpose.msra.mxu0 %v1525
    %1529 = vmatprep.subr.mxu0 0.0
    %1530 = vmatpush1.xpose.msra.mxu0 0.0
    %1531 = vmatprep.subr.mxu0 0.0
    %1532 = vmatpush1.xpose.msra.mxu0 0.0
    %1533 = vmatprep.subr.mxu0 0.0
    %1534 = vmatpush1.xpose.msra.mxu0 0.0
    %1535 = vmatprep.subr.mxu0 0.0
    %1536 = vmatpush1.xpose.msra.mxu0 0.0
    %1537 = vmatprep.subr.mxu0 0.0
    %1538 = vmatpush1.xpose.msra.mxu0 0.0
    %1539 = vmatprep.subr.mxu0 0.0
    %1540 = vmatpush1.xpose.msra.mxu0 0.0
    %1541 = vmatprep.subr.mxu0 0.0
    %1542 = vmatpush1.xpose.msra.mxu0 0.0
    %1543 = vmatprep.subr.mxu0 0.0
    %1544 = vmatpush1.xpose.msra.mxu0 0.0
    %1545 = vmatprep.subr.mxu0 0.0
    %1546 = vmatpush1.xpose.msra.mxu0 0.0
    %1547 = vmatprep.subr.mxu0 0.0
    %1548 = vmatpush1.xpose.msra.mxu0 0.0
    %1549 = vmatprep.subr.mxu0 0.0
    %1550 = vmatpush1.xpose.msra.mxu0 0.0
    %1551 = vmatprep.subr.mxu0 0.0
    %1552 = vmatpush1.xpose.msra.mxu0 0.0
    %1553 = vmatprep.subr.mxu0 0.0
    %1554 = vmatpush1.xpose.msra.mxu0 0.0
    %1555 = vmatprep.subr.mxu0 0.0
    %1556 = vmatpush1.xpose.msra.mxu0 0.0
    %1557 = vmatprep.subr.mxu0 0.0
    %1558 = vmatpush1.xpose.msra.mxu0 0.0
    %1559 = vmatprep.subr.mxu0 0.0
    %1560 = vmatpush1.xpose.msra.mxu0 0.0
    %1561 = vmatprep.subr.mxu0 0.0
    %1562 = vmatpush1.xpose.msra.mxu0 0.0
    %1563 = vmatprep.subr.mxu0 0.0
    %1564 = vmatpush1.xpose.msra.mxu0 0.0
    %1565 = vmatprep.subr.mxu0 0.0
    %1566 = vmatpush1.xpose.msra.mxu0 0.0
    %1567 = vmatprep.subr.mxu0 0.0
    %1568 = vmatpush1.xpose.msra.mxu0 0.0
    %1569 = vmatprep.subr.mxu0 0.0
    %1570 = vmatpush1.xpose.msra.mxu0 0.0
    %1571 = vmatprep.subr.mxu0 0.0
    %1572 = vmatpush1.xpose.msra.mxu0 0.0
    %1573 = vmatprep.subr.mxu0 0.0
    %1574 = vmatpush1.xpose.msra.mxu0 0.0
    %1575 = vmatprep.subr.mxu0 0.0
    %1576 = vmatpush1.xpose.msra.mxu0 0.0
    %1577 = vmatprep.subr.mxu0 0.0
    %1578 = vmatpush1.xpose.msra.mxu0 0.0
    %1579 = vmatprep.subr.mxu0 0.0
    %1580 = vmatpush1.xpose.msra.mxu0 0.0
    %1581 = vmatprep.subr.mxu0 0.0
    %1582 = vmatpush1.xpose.msra.mxu0 0.0
    %1583 = vmatprep.subr.mxu0 0.0
    %1584 = vmatpush1.xpose.msra.mxu0 0.0
    %1585 = vmatprep.subr.mxu0 0.0
    %1586 = vmatpush1.xpose.msra.mxu0 0.0
    %1587 = vmatprep.subr.mxu0 0.0
    %1588 = vmatpush1.xpose.msra.mxu0 0.0
    %1589 = vmatprep.subr.mxu0 0.0
    %1590 = vmatpush1.xpose.msra.mxu0 0.0
    %1591 = vmatprep.mubr.f32.mxu0 0.0
    %1592 = vmatmul.mubr.f32.gmra.mrb[0].mxu0 %v1523
    %v1593 = vpop.f32.mrb[0].mxu0
    %v1594 = vadd.f32 0.0, %v1593
    %v1595 = vpop.f32.mrb[0].mxu0
    %1596 = vdwg.mxu0
    %v1597 = vsel %vm429, %v1594, -inf
    %1598 = vmax.xlane.f32.xlu0 %v1597
    %v1599 = vpop.xlane.xlu0 %1598
    %v1600 = vsub.f32 %v1594, %v1599
    %v1601 = vmul.f32 %v1600, 1.442695
    %v1602 = vpow.pop %v1601
    %v1603 = vsel %vm429, %v1602, 0.0
    %1604 = vadd.xlane.f32.xlu0 %v1603
    %v1605 = vpop.xlane.xlu0 %1604
    %v1606 = vrcp.pop %v1605
    %v1607 = vmul.f32 %v1602, %v1606
    %1608 = vrot.lane.b32.xlu0 %v348, 32
    %v1609 = vpop.permute.xlu0 %1608
    %v1612 = vsel %vm429, %v1607, 0
    %1614 = vmatprep.subr.mxu0 0.0
    %1615 = vmatpush1.msra.mxu0 %v1609
    %1616 = vmatprep.subr.mxu0 0.0
    %1617 = vmatpush1.msra.mxu0 0.0
    %1618 = vmatprep.subr.mxu0 0.0
    %1619 = vmatpush1.msra.mxu0 0.0
    %1620 = vmatprep.subr.mxu0 0.0
    %1621 = vmatpush1.msra.mxu0 0.0
    %1622 = vmatprep.subr.mxu0 0.0
    %1623 = vmatpush1.msra.mxu0 0.0
    %1624 = vmatprep.subr.mxu0 0.0
    %1625 = vmatpush1.msra.mxu0 0.0
    %1626 = vmatprep.subr.mxu0 0.0
    %1627 = vmatpush1.msra.mxu0 0.0
    %1628 = vmatprep.subr.mxu0 0.0
    %1629 = vmatpush1.msra.mxu0 0.0
    %1630 = vmatprep.subr.mxu0 0.0
    %1631 = vmatpush1.msra.mxu0 0.0
    %1632 = vmatprep.subr.mxu0 0.0
    %1633 = vmatpush1.msra.mxu0 0.0
    %1634 = vmatprep.subr.mxu0 0.0
    %1635 = vmatpush1.msra.mxu0 0.0
    %1636 = vmatprep.subr.mxu0 0.0
    %1637 = vmatpush1.msra.mxu0 0.0
    %1638 = vmatprep.subr.mxu0 0.0
    %1639 = vmatpush1.msra.mxu0 0.0
    %1640 = vmatprep.subr.mxu0 0.0
    %1641 = vmatpush1.msra.mxu0 0.0
    %1642 = vmatprep.subr.mxu0 0.0
    %1643 = vmatpush1.msra.mxu0 0.0
    %1644 = vmatprep.subr.mxu0 0.0
    %1645 = vmatpush1.msra.mxu0 0.0
    %1646 = vmatprep.subr.mxu0 0.0
    %1647 = vmatpush1.msra.mxu0 0.0
    %1648 = vmatprep.subr.mxu0 0.0
    %1649 = vmatpush1.msra.mxu0 0.0
    %1650 = vmatprep.subr.mxu0 0.0
    %1651 = vmatpush1.msra.mxu0 0.0
    %1652 = vmatprep.subr.mxu0 0.0
    %1653 = vmatpush1.msra.mxu0 0.0
    %1654 = vmatprep.subr.mxu0 0.0
    %1655 = vmatpush1.msra.mxu0 0.0
    %1656 = vmatprep.subr.mxu0 0.0
    %1657 = vmatpush1.msra.mxu0 0.0
    %1658 = vmatprep.subr.mxu0 0.0
    %1659 = vmatpush1.msra.mxu0 0.0
    %1660 = vmatprep.subr.mxu0 0.0
    %1661 = vmatpush1.msra.mxu0 0.0
    %1662 = vmatprep.subr.mxu0 0.0
    %1663 = vmatpush1.msra.mxu0 0.0
    %1664 = vmatprep.subr.mxu0 0.0
    %1665 = vmatpush1.msra.mxu0 0.0
    %1666 = vmatprep.subr.mxu0 0.0
    %1667 = vmatpush1.msra.mxu0 0.0
    %1668 = vmatprep.subr.mxu0 0.0
    %1669 = vmatpush1.msra.mxu0 0.0
    %1670 = vmatprep.subr.mxu0 0.0
    %1671 = vmatpush1.msra.mxu0 0.0
    %1672 = vmatprep.subr.mxu0 0.0
    %1673 = vmatpush1.msra.mxu0 0.0
    %1674 = vmatprep.subr.mxu0 0.0
    %1675 = vmatpush1.msra.mxu0 0.0
    %1676 = vmatprep.subr.mxu0 0.0
    %1677 = vmatpush1.msra.mxu0 0.0
    %1678 = vmatprep.mubr.f32.mxu0 0.0
    %1679 = vmatmul.mubr.f32.gmra.mrb[0].mxu0 %v1612
    %v1680 = vpop.f32.mrb[0].mxu0
    %v1681 = vadd.f32 0.0, %v1680
    %v1682 = vpop.f32.mrb[0].mxu0
    %1683 = vdwg.mxu0
    %1685 = vrot.lane.b32.xlu0 %v1351, 32
    %v1686 = vpop.permute.xlu0 %1685
    %1689 = vrot.lane.b32.xlu0 %v1516, 64
    %v1690 = vpop.permute.xlu0 %1689
    %1693 = vrot.lane.b32.xlu0 %v1681, 96
    %v1694 = vpop.permute.xlu0 %1693
    %v1696 = vsel %vm352, %v1185, %v1686
    %v1697 = vsel %vm1023, %v1696, %v1690
    %v1698 = vsel %vm1025, %v1697, %v1694
    %v1699 = vld [vmem:[#allocation2] sm:$0xff]
    %v1700 = vld [vmem:[#allocation2 + $0x8] sm:$0xff]
    %v1701 = vld [vmem:[#allocation2 + $0x10] sm:$0xff]
    %v1702 = vld [vmem:[#allocation2 + $0x18] sm:$0xff]
    %v1703 = vld [vmem:[#allocation2 + $0x20] sm:$0xff]
    %v1704 = vld [vmem:[#allocation2 + $0x28] sm:$0xff]
    %v1705 = vld [vmem:[#allocation2 + $0x30] sm:$0xff]
    %v1706 = vld [vmem:[#allocation2 + $0x38] sm:$0xff]
    %v1707 = vld [vmem:[#allocation2 + $0x40] sm:$0xff]
    %v1708 = vld [vmem:[#allocation2 + $0x48] sm:$0xff]
    %v1709 = vld [vmem:[#allocation2 + $0x50] sm:$0xff]
    %v1710 = vld [vmem:[#allocation2 + $0x58] sm:$0xff]
    %v1711 = vld [vmem:[#allocation2 + $0x60] sm:$0xff]
    %v1712 = vld [vmem:[#allocation2 + $0x68] sm:$0xff]
    %v1713 = vld [vmem:[#allocation2 + $0x70] sm:$0xff]
    %v1714 = vld [vmem:[#allocation2 + $0x78] sm:$0xff]
    %v1715 = vld [vmem:[%s6] sm:$0x1]
    %v1717 = vlaneseq
    %v1718 = vshrl.u32 %v1717, 7
    %v1719 = vsub.s32 0, %v1718
    %v1720 = vrot.slane %v1715, %v1719
    %1722 = vmatprep.subr.mxu0 0.0
    %1723 = vmatpush1.msra.mxu0 %v1699
    %1724 = vmatprep.subr.mxu0 0.0
    %1725 = vmatpush1.msra.mxu0 %v1700
    %1726 = vmatprep.subr.mxu0 0.0
    %1727 = vmatpush1.msra.mxu0 %v1701
    %1728 = vmatprep.subr.mxu0 0.0
    %1729 = vmatpush1.msra.mxu0 %v1702
    %1730 = vmatprep.subr.mxu0 0.0
    %1731 = vmatpush1.msra.mxu0 %v1703
    %1732 = vmatprep.subr.mxu0 0.0
    %1733 = vmatpush1.msra.mxu0 %v1704
    %1734 = vmatprep.subr.mxu0 0.0
    %1735 = vmatpush1.msra.mxu0 %v1705
    %1736 = vmatprep.subr.mxu0 0.0
    %1737 = vmatpush1.msra.mxu0 %v1706
    %1738 = vmatprep.subr.mxu0 0.0
    %1739 = vmatpush1.msra.mxu0 %v1707
    %1740 = vmatprep.subr.mxu0 0.0
    %1741 = vmatpush1.msra.mxu0 %v1708
    %1742 = vmatprep.subr.mxu0 0.0
    %1743 = vmatpush1.msra.mxu0 %v1709
    %1744 = vmatprep.subr.mxu0 0.0
    %1745 = vmatpush1.msra.mxu0 %v1710
    %1746 = vmatprep.subr.mxu0 0.0
    %1747 = vmatpush1.msra.mxu0 %v1711
    %1748 = vmatprep.subr.mxu0 0.0
    %1749 = vmatpush1.msra.mxu0 %v1712
    %1750 = vmatprep.subr.mxu0 0.0
    %1751 = vmatpush1.msra.mxu0 %v1713
    %1752 = vmatprep.subr.mxu0 0.0
    %1753 = vmatpush1.msra.mxu0 %v1714
    %1754 = vmatprep.subr.mxu0 0.0
    %1755 = vmatpush1.msra.mxu0 0.0
    %1756 = vmatprep.subr.mxu0 0.0
    %1757 = vmatpush1.msra.mxu0 0.0
    %1758 = vmatprep.subr.mxu0 0.0
    %1759 = vmatpush1.msra.mxu0 0.0
    %1760 = vmatprep.subr.mxu0 0.0
    %1761 = vmatpush1.msra.mxu0 0.0
    %1762 = vmatprep.subr.mxu0 0.0
    %1763 = vmatpush1.msra.mxu0 0.0
    %1764 = vmatprep.subr.mxu0 0.0
    %1765 = vmatpush1.msra.mxu0 0.0
    %1766 = vmatprep.subr.mxu0 0.0
    %1767 = vmatpush1.msra.mxu0 0.0
    %1768 = vmatprep.subr.mxu0 0.0
    %1769 = vmatpush1.msra.mxu0 0.0
    %1770 = vmatprep.subr.mxu0 0.0
    %1771 = vmatpush1.msra.mxu0 0.0
    %1772 = vmatprep.subr.mxu0 0.0
    %1773 = vmatpush1.msra.mxu0 0.0
    %1774 = vmatprep.subr.mxu0 0.0
    %1775 = vmatpush1.msra.mxu0 0.0
    %1776 = vmatprep.subr.mxu0 0.0
    %1777 = vmatpush1.msra.mxu0 0.0
    %1778 = vmatprep.subr.mxu0 0.0
    %1779 = vmatpush1.msra.mxu0 0.0
    %1780 = vmatprep.subr.mxu0 0.0
    %1781 = vmatpush1.msra.mxu0 0.0
    %1782 = vmatprep.subr.mxu0 0.0
    %1783 = vmatpush1.msra.mxu0 0.0
    %1784 = vmatprep.subr.mxu0 0.0
    %1785 = vmatpush1.msra.mxu0 0.0
    %1786 = vmatprep.mubr.f32.mxu0 0.0
    %1787 = vmatmul.mubr.f32.gmra.mrb[0].mxu0 %v1026
    %v1788 = vpop.f32.mrb[0].mxu0
    %v1789 = vadd.f32 %v1720, %v1788
    %v1790 = vpop.f32.mrb[0].mxu0
    %1791 = vmatprep.mubr.f32.mxu0 0.0
    %1792 = vmatmul.mubr.f32.gmra.mrb[0].mxu0 %v1698
    %v1793 = vpop.f32.mrb[0].mxu0
    %v1794 = vadd.f32 %v1720, %v1793
    %v1795 = vpop.f32.mrb[0].mxu0
    %1796 = vdwg.mxu0
    %v1797 = vadd.f32 %v132, %v1789
    %v1798 = vadd.f32 %v133, %v1794
    %v1799 = vld [vmem:[%s7] sm:$0x1]
    %v1800 = vld [vmem:[%s8] sm:$0x1]
    %1801 = vadd.xlane.f32.xlu0 %v1797
    %v1802 = vpop.xlane.xlu0 %1801
    %1803 = vadd.xlane.f32.xlu0 %v1798
    %v1804 = vpop.xlane.xlu0 %1803
    %v1805 = vmul.f32 %v1802, %v99
    %v1806 = vmul.f32 %v1804, %v99
    %v1807 = vsub.f32 %v1797, %v1805
    %v1808 = vsub.f32 %v1798, %v1806
    %v1809 = vmul.f32 %v1807, %v1807
    %v1810 = vmul.f32 %v1808, %v1808
    %1811 = vadd.xlane.f32.xlu0 %v1809
    %v1812 = vpop.xlane.xlu0 %1811
    %1813 = vadd.xlane.f32.xlu0 %v1810
    %v1814 = vpop.xlane.xlu0 %1813
    %v1815 = vmul.f32 %v1812, %v99
    %v1816 = vmul.f32 %v1814, %v99
    %v1817 = vadd.f32 %v1815, 1e-05
    %v1818 = vadd.f32 %v1816, 1e-05
    %v1819 = vrsqrt.pop %v1817
    %v1820 = vrsqrt.pop %v1818
    %v1821 = vmul.f32 %v1807, %v1819
    %v1822 = vmul.f32 %v1808, %v1820
    %v1824 = vlaneseq
    %v1825 = vshrl.u32 %v1824, 7
    %v1826 = vsub.s32 0, %v1825
    %v1827 = vrot.slane %v1799, %v1826
    %v1829 = vmul.f32 %v1821, %v1827
    %v1830 = vmul.f32 %v1822, %v1827
    %v1832 = vlaneseq
    %v1833 = vshrl.u32 %v1832, 7
    %v1834 = vsub.s32 0, %v1833
    %v1835 = vrot.slane %v1800, %v1834
    %v1837 = vadd.f32 %v1829, %v1835
    %v1838 = vadd.f32 %v1830, %v1835
    %v1839 = vld [vmem:[#allocation4] sm:$0xff]
    %v1840 = vld [vmem:[#allocation4 + $0x8] sm:$0xff]
    %v1841 = vld [vmem:[#allocation4 + $0x10] sm:$0xff]
    %v1842 = vld [vmem:[#allocation4 + $0x18] sm:$0xff]
    %v1843 = vld [vmem:[#allocation4 + $0x20] sm:$0xff]
    %v1844 = vld [vmem:[#allocation4 + $0x28] sm:$0xff]
    %v1845 = vld [vmem:[#allocation4 + $0x30] sm:$0xff]
    %v1846 = vld [vmem:[#allocation4 + $0x38] sm:$0xff]
    %v1847 = vld [vmem:[#allocation4 + $0x40] sm:$0xff]
    %v1848 = vld [vmem:[#allocation4 + $0x48] sm:$0xff]
    %v1849 = vld [vmem:[#allocation4 + $0x50] sm:$0xff]
    %v1850 = vld [vmem:[#allocation4 + $0x58] sm:$0xff]
    %v1851 = vld [vmem:[#allocation4 + $0x60] sm:$0xff]
    %v1852 = vld [vmem:[#allocation4 + $0x68] sm:$0xff]
    %v1853 = vld [vmem:[#allocation4 + $0x70] sm:$0xff]
    %v1854 = vld [vmem:[#allocation4 + $0x78] sm:$0xff]
    %v1855 = vld [vmem:[#allocation4 + $0x80] sm:$0xff]
    %v1856 = vld [vmem:[#allocation4 + $0x88] sm:$0xff]
    %v1857 = vld [vmem:[#allocation4 + $0x90] sm:$0xff]
    %v1858 = vld [vmem:[#allocation4 + $0x98] sm:$0xff]
    %v1859 = vld [vmem:[#allocation4 + $0xa0] sm:$0xff]
    %v1860 = vld [vmem:[#allocation4 + $0xa8] sm:$0xff]
    %v1861 = vld [vmem:[#allocation4 + $0xb0] sm:$0xff]
    %v1862 = vld [vmem:[#allocation4 + $0xb8] sm:$0xff]
    %v1863 = vld [vmem:[#allocation4 + $0xc0] sm:$0xff]
    %v1864 = vld [vmem:[#allocation4 + $0xc8] sm:$0xff]
    %v1865 = vld [vmem:[#allocation4 + $0xd0] sm:$0xff]
    %v1866 = vld [vmem:[#allocation4 + $0xd8] sm:$0xff]
    %v1867 = vld [vmem:[#allocation4 + $0xe0] sm:$0xff]
    %v1868 = vld [vmem:[#allocation4 + $0xe8] sm:$0xff]
    %v1869 = vld [vmem:[#allocation4 + $0xf0] sm:$0xff]
    %v1870 = vld [vmem:[#allocation4 + $0xf8] sm:$0xff]
    %v1871 = vld [vmem:[%s10] sm:$0x3]
    %v1873 = vlaneseq
    %v1874 = vshrl.u32 %v1873, 7
    %v1875 = vsub.s32 0, %v1874
    %v1876 = vrot.slane %v1871, %v1875
    %v1877 = vlaneseq
    %v1878 = vshrl.u32 %v1877, 7
    %v1879 = vsub.s32 1, %v1878
    %v1880 = vrot.slane %v1871, %v1879
    %1883 = vmatprep.subr.mxu0 %v1840
    %1884 = vmatpush1.msra.mxu0 %v1839
    %1885 = vmatprep.subr.mxu0 %v1842
    %1886 = vmatpush1.msra.mxu0 %v1841
    %1887 = vmatprep.subr.mxu0 %v1844
    %1888 = vmatpush1.msra.mxu0 %v1843
    %1889 = vmatprep.subr.mxu0 %v1846
    %1890 = vmatpush1.msra.mxu0 %v1845
    %1891 = vmatprep.subr.mxu0 %v1848
    %1892 = vmatpush1.msra.mxu0 %v1847
    %1893 = vmatprep.subr.mxu0 %v1850
    %1894 = vmatpush1.msra.mxu0 %v1849
    %1895 = vmatprep.subr.mxu0 %v1852
    %1896 = vmatpush1.msra.mxu0 %v1851
    %1897 = vmatprep.subr.mxu0 %v1854
    %1898 = vmatpush1.msra.mxu0 %v1853
    %1899 = vmatprep.subr.mxu0 %v1856
    %1900 = vmatpush1.msra.mxu0 %v1855
    %1901 = vmatprep.subr.mxu0 %v1858
    %1902 = vmatpush1.msra.mxu0 %v1857
    %1903 = vmatprep.subr.mxu0 %v1860
    %1904 = vmatpush1.msra.mxu0 %v1859
    %1905 = vmatprep.subr.mxu0 %v1862
    %1906 = vmatpush1.msra.mxu0 %v1861
    %1907 = vmatprep.subr.mxu0 %v1864
    %1908 = vmatpush1.msra.mxu0 %v1863
    %1909 = vmatprep.subr.mxu0 %v1866
    %1910 = vmatpush1.msra.mxu0 %v1865
    %1911 = vmatprep.subr.mxu0 %v1868
    %1912 = vmatpush1.msra.mxu0 %v1867
    %1913 = vmatprep.subr.mxu0 %v1870
    %1914 = vmatpush1.msra.mxu0 %v1869
    %1915 = vmatprep.subr.mxu0 0.0
    %1916 = vmatpush1.msra.mxu0 0.0
    %1917 = vmatprep.subr.mxu0 0.0
    %1918 = vmatpush1.msra.mxu0 0.0
    %1919 = vmatprep.subr.mxu0 0.0
    %1920 = vmatpush1.msra.mxu0 0.0
    %1921 = vmatprep.subr.mxu0 0.0
    %1922 = vmatpush1.msra.mxu0 0.0
    %1923 = vmatprep.subr.mxu0 0.0
    %1924 = vmatpush1.msra.mxu0 0.0
    %1925 = vmatprep.subr.mxu0 0.0
    %1926 = vmatpush1.msra.mxu0 0.0
    %1927 = vmatprep.subr.mxu0 0.0
    %1928 = vmatpush1.msra.mxu0 0.0
    %1929 = vmatprep.subr.mxu0 0.0
    %1930 = vmatpush1.msra.mxu0 0.0
    %1931 = vmatprep.subr.mxu0 0.0
    %1932 = vmatpush1.msra.mxu0 0.0
    %1933 = vmatprep.subr.mxu0 0.0
    %1934 = vmatpush1.msra.mxu0 0.0
    %1935 = vmatprep.subr.mxu0 0.0
    %1936 = vmatpush1.msra.mxu0 0.0
    %1937 = vmatprep.subr.mxu0 0.0
    %1938 = vmatpush1.msra.mxu0 0.0
    %1939 = vmatprep.subr.mxu0 0.0
    %1940 = vmatpush1.msra.mxu0 0.0
    %1941 = vmatprep.subr.mxu0 0.0
    %1942 = vmatpush1.msra.mxu0 0.0
    %1943 = vmatprep.subr.mxu0 0.0
    %1944 = vmatpush1.msra.mxu0 0.0
    %1945 = vmatprep.subr.mxu0 0.0
    %1946 = vmatpush1.msra.mxu0 0.0
    %1947 = vmatprep.mubr.f32.mxu0 0.0
    %1948 = vmatmul.mubr.f32.gmra.mrb[0].mxu0 %v1837
    %v1949 = vpop.f32.mrb[0].mxu0
    %v1950 = vadd.f32 %v1876, %v1949
    %v1951 = vpop.f32.mrb[0].mxu0
    %v1952 = vadd.f32 %v1880, %v1951
    %1953 = vmatprep.mubr.f32.mxu0 0.0
    %1954 = vmatmul.mubr.f32.gmra.mrb[0].mxu0 %v1838
    %v1955 = vpop.f32.mrb[0].mxu0
    %v1956 = vadd.f32 %v1876, %v1955
    %v1957 = vpop.f32.mrb[0].mxu0
    %v1958 = vadd.f32 %v1880, %v1957
    %1959 = vdwg.mxu0
    %v1960 = vmul.f32 %v1950, %v1950
    %v1961 = vmul.f32 %v1952, %v1952
    %v1962 = vmul.f32 %v1956, %v1956
    %v1963 = vmul.f32 %v1958, %v1958
    %v1964 = vmul.f32 %v1950, %v1960
    %v1965 = vmul.f32 %v1952, %v1961
    %v1966 = vmul.f32 %v1956, %v1962
    %v1967 = vmul.f32 %v1958, %v1963
    %v1968 = vmul.f32 %v1964, 0.044715
    %v1969 = vmul.f32 %v1965, 0.044715
    %v1970 = vmul.f32 %v1966, 0.044715
    %v1971 = vmul.f32 %v1967, 0.044715
    %v1972 = vadd.f32 %v1950, %v1968
    %v1973 = vadd.f32 %v1952, %v1969
    %v1974 = vadd.f32 %v1956, %v1970
    %v1975 = vadd.f32 %v1958, %v1971
    %v1976 = vmul.f32 %v1972, 0.7978846
    %v1977 = vmul.f32 %v1973, 0.7978846
    %v1978 = vmul.f32 %v1974, 0.7978846
    %v1979 = vmul.f32 %v1975, 0.7978846
    %v1980 = vtanh.pop %v1976
    %v1981 = vtanh.pop %v1977
    %v1982 = vtanh.pop %v1978
    %v1983 = vtanh.pop %v1979
    %v1984 = vadd.f32 %v1980, 1.0
    %v1985 = vadd.f32 %v1981, 1.0
    %v1986 = vadd.f32 %v1982, 1.0
    %v1987 = vadd.f32 %v1983, 1.0
    %v1988 = vmul.f32 %v1984, 0.5
    %v1989 = vmul.f32 %v1985, 0.5
    %v1990 = vmul.f32 %v1986, 0.5
    %v1991 = vmul.f32 %v1987, 0.5
    %v1992 = vmul.f32 %v1950, %v1988
    %v1993 = vmul.f32 %v1952, %v1989
    %v1994 = vmul.f32 %v1956, %v1990
    %v1995 = vmul.f32 %v1958, %v1991
    %v1996 = vld [vmem:[#allocation6] sm:$0xff]
    %v1997 = vld [vmem:[#allocation6 + $0x8] sm:$0xff]
    %v1998 = vld [vmem:[#allocation6 + $0x10] sm:$0xff]
    %v1999 = vld [vmem:[#allocation6 + $0x18] sm:$0xff]
    %v2000 = vld [vmem:[#allocation6 + $0x20] sm:$0xff]
    %v2001 = vld [vmem:[#allocation6 + $0x28] sm:$0xff]
    %v2002 = vld [vmem:[#allocation6 + $0x30] sm:$0xff]
    %v2003 = vld [vmem:[#allocation6 + $0x38] sm:$0xff]
    %v2004 = vld [vmem:[#allocation6 + $0x40] sm:$0xff]
    %v2005 = vld [vmem:[#allocation6 + $0x48] sm:$0xff]
    %v2006 = vld [vmem:[#allocation6 + $0x50] sm:$0xff]
    %v2007 = vld [vmem:[#allocation6 + $0x58] sm:$0xff]
    %v2008 = vld [vmem:[#allocation6 + $0x60] sm:$0xff]
    %v2009 = vld [vmem:[#allocation6 + $0x68] sm:$0xff]
    %v2010 = vld [vmem:[#allocation6 + $0x70] sm:$0xff]
    %v2011 = vld [vmem:[#allocation6 + $0x78] sm:$0xff]
    %v2012 = vld [vmem:[#allocation6 + $0x80] sm:$0xff]
    %v2013 = vld [vmem:[#allocation6 + $0x88] sm:$0xff]
    %v2014 = vld [vmem:[#allocation6 + $0x90] sm:$0xff]
    %v2015 = vld [vmem:[#allocation6 + $0x98] sm:$0xff]
    %v2016 = vld [vmem:[#allocation6 + $0xa0] sm:$0xff]
    %v2017 = vld [vmem:[#allocation6 + $0xa8] sm:$0xff]
    %v2018 = vld [vmem:[#allocation6 + $0xb0] sm:$0xff]
    %v2019 = vld [vmem:[#allocation6 + $0xb8] sm:$0xff]
    %v2020 = vld [vmem:[#allocation6 + $0xc0] sm:$0xff]
    %v2021 = vld [vmem:[#allocation6 + $0xc8] sm:$0xff]
    %v2022 = vld [vmem:[#allocation6 + $0xd0] sm:$0xff]
    %v2023 = vld [vmem:[#allocation6 + $0xd8] sm:$0xff]
    %v2024 = vld [vmem:[#allocation6 + $0xe0] sm:$0xff]
    %v2025 = vld [vmem:[#allocation6 + $0xe8] sm:$0xff]
    %v2026 = vld [vmem:[#allocation6 + $0xf0] sm:$0xff]
    %v2027 = vld [vmem:[#allocation6 + $0xf8] sm:$0xff]
    %v2028 = vld [vmem:[%s12] sm:$0x1]
    %v2030 = vlaneseq
    %v2031 = vshrl.u32 %v2030, 7
    %v2032 = vsub.s32 0, %v2031
    %v2033 = vrot.slane %v2028, %v2032
    %2035 = vmatprep.subr.mxu0 0.0
    %2036 = vmatpush1.msra.mxu0 %v1996
    %2037 = vmatprep.subr.mxu0 0.0
    %2038 = vmatpush1.msra.mxu0 %v1997
    %2039 = vmatprep.subr.mxu0 0.0
    %2040 = vmatpush1.msra.mxu0 %v1998
    %2041 = vmatprep.subr.mxu0 0.0
    %2042 = vmatpush1.msra.mxu0 %v1999
    %2043 = vmatprep.subr.mxu0 0.0
    %2044 = vmatpush1.msra.mxu0 %v2000
    %2045 = vmatprep.subr.mxu0 0.0
    %2046 = vmatpush1.msra.mxu0 %v2001
    %2047 = vmatprep.subr.mxu0 0.0
    %2048 = vmatpush1.msra.mxu0 %v2002
    %2049 = vmatprep.subr.mxu0 0.0
    %2050 = vmatpush1.msra.mxu0 %v2003
    %2051 = vmatprep.subr.mxu0 0.0
    %2052 = vmatpush1.msra.mxu0 %v2004
    %2053 = vmatprep.subr.mxu0 0.0
    %2054 = vmatpush1.msra.mxu0 %v2005
    %2055 = vmatprep.subr.mxu0 0.0
    %2056 = vmatpush1.msra.mxu0 %v2006
    %2057 = vmatprep.subr.mxu0 0.0
    %2058 = vmatpush1.msra.mxu0 %v2007
    %2059 = vmatprep.subr.mxu0 0.0
    %2060 = vmatpush1.msra.mxu0 %v2008
    %2061 = vmatprep.subr.mxu0 0.0
    %2062 = vmatpush1.msra.mxu0 %v2009
    %2063 = vmatprep.subr.mxu0 0.0
    %2064 = vmatpush1.msra.mxu0 %v2010
    %2065 = vmatprep.subr.mxu0 0.0
    %2066 = vmatpush1.msra.mxu0 %v2011
    %2067 = vmatprep.subr.mxu0 0.0
    %2068 = vmatpush1.msra.mxu0 %v2012
    %2069 = vmatprep.subr.mxu0 0.0
    %2070 = vmatpush1.msra.mxu0 %v2013
    %2071 = vmatprep.subr.mxu0 0.0
    %2072 = vmatpush1.msra.mxu0 %v2014
    %2073 = vmatprep.subr.mxu0 0.0
    %2074 = vmatpush1.msra.mxu0 %v2015
    %2075 = vmatprep.subr.mxu0 0.0
    %2076 = vmatpush1.msra.mxu0 %v2016
    %2077 = vmatprep.subr.mxu0 0.0
    %2078 = vmatpush1.msra.mxu0 %v2017
    %2079 = vmatprep.subr.mxu0 0.0
    %2080 = vmatpush1.msra.mxu0 %v2018
    %2081 = vmatprep.subr.mxu0 0.0
    %2082 = vmatpush1.msra.mxu0 %v2019
    %2083 = vmatprep.subr.mxu0 0.0
    %2084 = vmatpush1.msra.mxu0 %v2020
    %2085 = vmatprep.subr.mxu0 0.0
    %2086 = vmatpush1.msra.mxu0 %v2021
    %2087 = vmatprep.subr.mxu0 0.0
    %2088 = vmatpush1.msra.mxu0 %v2022
    %2089 = vmatprep.subr.mxu0 0.0
    %2090 = vmatpush1.msra.mxu0 %v2023
    %2091 = vmatprep.subr.mxu0 0.0
    %2092 = vmatpush1.msra.mxu0 %v2024
    %2093 = vmatprep.subr.mxu0 0.0
    %2094 = vmatpush1.msra.mxu0 %v2025
    %2095 = vmatprep.subr.mxu0 0.0
    %2096 = vmatpush1.msra.mxu0 %v2026
    %2097 = vmatprep.subr.mxu0 0.0
    %2098 = vmatpush1.msra.mxu0 %v2027
    %2099 = vmatprep.mubr.f32.mxu0 %v1993
    %2100 = vmatmul.mubr.f32.gmra.mrb[0].mxu0 %v1992
    %v2101 = vpop.f32.mrb[0].mxu0
    %v2102 = vadd.f32 %v2033, %v2101
    %v2103 = vpop.f32.mrb[0].mxu0
    %2104 = vmatprep.mubr.f32.mxu0 %v1995
    %2105 = vmatmul.mubr.f32.gmra.mrb[0].mxu0 %v1994
    %v2106 = vpop.f32.mrb[0].mxu0
    %v2107 = vadd.f32 %v2033, %v2106
    %v2108 = vpop.f32.mrb[0].mxu0
    %2109 = vdwg.mxu0
    %v2110 = vadd.f32 %v1837, %v2102
    %v2111 = vadd.f32 %v1838, %v2107
    %v2112 = vld [vmem:[%s13] sm:$0x1]
    %v2113 = vld [vmem:[%s14] sm:$0x1]
    %2114 = vadd.xlane.f32.xlu0 %v2110
    %v2115 = vpop.xlane.xlu0 %2114
    %2116 = vadd.xlane.f32.xlu0 %v2111
    %v2117 = vpop.xlane.xlu0 %2116
    %v2118 = vmul.f32 %v2115, %v99
    %v2119 = vmul.f32 %v2117, %v99
    %v2120 = vsub.f32 %v2110, %v2118
    %v2121 = vsub.f32 %v2111, %v2119
    %v2122 = vmul.f32 %v2120, %v2120
    %v2123 = vmul.f32 %v2121, %v2121
    %2124 = vadd.xlane.f32.xlu0 %v2122
    %v2125 = vpop.xlane.xlu0 %2124
    %2126 = vadd.xlane.f32.xlu0 %v2123
    %v2127 = vpop.xlane.xlu0 %2126
    %v2128 = vmul.f32 %v2125, %v99
    %v2129 = vmul.f32 %v2127, %v99
    %v2130 = vadd.f32 %v2128, 1e-05
    %v2131 = vadd.f32 %v2129, 1e-05
    %v2132 = vrsqrt.pop %v2130
    %v2133 = vrsqrt.pop %v2131
    %v2134 = vmul.f32 %v2120, %v2132
    %v2135 = vmul.f32 %v2121, %v2133
    %v2137 = vlaneseq
    %v2138 = vshrl.u32 %v2137, 7
    %v2139 = vsub.s32 0, %v2138
    %v2140 = vrot.slane %v2112, %v2139
    %v2142 = vmul.f32 %v2134, %v2140
    %v2143 = vmul.f32 %v2135, %v2140
    %v2145 = vlaneseq
    %v2146 = vshrl.u32 %v2145, 7
    %v2147 = vsub.s32 0, %v2146
    %v2148 = vrot.slane %v2113, %v2147
    %v2150 = vadd.f32 %v2142, %v2148
    %v2151 = vadd.f32 %v2143, %v2148
    %2152 = vst [vmem:[%s15] sm:$0xff] %v2150
    %2153 = vst [vmem:[%s15 + $0x8] sm:$0xff] %v2151
    // Predicated region
    $region74: #{verbalization_forward.2} parent=1 // pred_check
      _
    $region75: #{verbalization_forward.2} parent=1 // pred_check_branch
      %2155 = sbr.rel (0) target = $region77
    $region76: #{verbalization_forward.2} parent=1 // pred_region
      _
    $region77: #{verbalization_forward.2} parent=1 // pred_fallthru
      _
    // Predicated region
    $region78: #{verbalization_forward.2} parent=1 // pred_check
      _
    $region79: #{verbalization_forward.2} parent=1 // pred_check_branch
      %2157 = sbr.rel (0) target = $region81
    $region80: #{verbalization_forward.2} parent=1 // pred_region
      _
    $region81: #{verbalization_forward.2} parent=1 // pred_fallthru
      _
    %2158 = vsyncpa [#allocation3], 1
    %2159 = vsyncpa [#allocation5], 1

// kernel: verbalization_forward.3
$region0: #{verbalization_forward.3}
  #allocation0 [shape = 'u32[]', space=smem, size = 0x4, offset = 0x4, fixed_abs, tag = 'smem constant byte address 0x4 - core index']
  #allocation1 [shape = 'u32[144,128]{1,0:T(1,128)}', space=vmem, size = 0x12000, scoped, tag = 'internal scratch']
  %s0 = inlined_call_operand.vmem [shape: f32[16,128], index: 0, kind: input, shape index: {}]
  %s1 = inlined_call_operand.vmem [shape: f32[16,128], index: 1, kind: input, shape index: {}]
  %s2 = inlined_call_operand.vmem [shape: f32[1,128], index: 2, kind: input, shape index: {}]
  %s3 = inlined_call_operand.vmem [shape: f32[1,128], index: 3, kind: input, shape index: {}]
  %s4 = inlined_call_operand.vmem [shape: f32[128,384], index: 4, kind: input, shape index: {}]
  %s5 = inlined_call_operand.vmem [shape: f32[1,384], index: 5, kind: input, shape index: {}]
  %s6 = inlined_call_operand.hbm [shape: f32[128,128], index: 6, kind: input, shape index: {}]
  %s7 = inlined_call_operand.vmem [shape: f32[1,128], index: 7, kind: input, shape index: {}]
  %s8 = inlined_call_operand.vmem [shape: f32[1,128], index: 8, kind: input, shape index: {}]
  %s9 = inlined_call_operand.vmem [shape: f32[1,128], index: 9, kind: input, shape index: {}]
  %s10 = inlined_call_operand.hbm [shape: f32[128,128], index: 10, kind: input, shape index: {}]
  %s11 = inlined_call_operand.vmem [shape: f32[1,128], index: 11, kind: input, shape index: {}]
  %s12 = inlined_call_operand.vmem [shape: f32[128,256], index: 12, kind: input, shape index: {}]
  %s13 = inlined_call_operand.vmem [shape: f32[1,256], index: 13, kind: input, shape index: {}]
  %s14 = inlined_call_operand.hbm [shape: f32[128,128], index: 14, kind: input, shape index: {}]
  %s15 = inlined_call_operand.vmem [shape: f32[1,128], index: 15, kind: input, shape index: {}]
  %s16 = inlined_call_operand.vmem [shape: f32[1,128], index: 16, kind: input, shape index: {}]
  %s17 = inlined_call_operand.vmem [shape: f32[1,128], index: 17, kind: input, shape index: {}]
  %s18 = inlined_call_operand.vmem [shape: f32[128,256], index: 18, kind: input, shape index: {}]
  %s19 = inlined_call_operand.vmem [shape: f32[1,256], index: 19, kind: input, shape index: {}]
  %s20 = inlined_call_operand.vmem [shape: f32[256,128], index: 20, kind: input, shape index: {}]
  %s21 = inlined_call_operand.vmem [shape: f32[1,128], index: 21, kind: input, shape index: {}]
  %s22 = inlined_call_operand.vmem [shape: f32[1,128], index: 22, kind: input, shape index: {}]
  %s23 = inlined_call_operand.vmem [shape: f32[1,128], index: 23, kind: input, shape index: {}]
  %s24 = inlined_call_operand.vmem [shape: f32[128,128], index: 24, kind: input, shape index: {}]
  %s25 = inlined_call_operand.vmem [shape: f32[1,128], index: 25, kind: input, shape index: {}]
  %s26 = inlined_call_operand.hbm [shape: f32[16,128], index: 26, kind: output, shape index: {}]
  %s27 = sld [smem:[#allocation0]]
  $region126: #{verbalization_forward.3} parent=0
    _
  %s29 = ssub.s32 1, %s27
  %s30 = scalar_select 0, %s29, %s27
  $region1: #{verbalization_forward.3} parent=0
    #allocation2 [shape = 'u8[65536]{0}', space=vmem, size = 0x10000, scoped, tag = 'input window, operand 6, single buffered']
    #allocation3 [shape = 's32[1]{0}', space=sflag, size = 0x4, scoped, tag = 'scoped memory for verbalization_forward.3']
    #allocation4 [shape = 's32[1]{0}', space=sflag, size = 0x4, scoped, tag = 'scoped memory for verbalization_forward.3']
    #allocation5 [shape = 'u8[65536]{0}', space=vmem, size = 0x10000, scoped, tag = 'input window, operand 10, single buffered']
    #allocation6 [shape = 's32[1]{0}', space=sflag, size = 0x4, scoped, tag = 'scoped memory for verbalization_forward.3']
    #allocation7 [shape = 'u8[65536]{0}', space=vmem, size = 0x10000, scoped, tag = 'input window, operand 14, single buffered']
    #allocation8 [shape = 'u8[8192]{0}', space=vmem, size = 0x2000, scoped, tag = 'output window, operand 0, single buffered']
    %31 = vsyncpa [#allocation3], 0
    %32 = vsyncpa [#allocation6], 0
    %33 = vsyncpa [#allocation4], 0
    // Predicated region
    $region2: #{verbalization_forward.3} parent=1 // pred_check
      _
    $region3: #{verbalization_forward.3} parent=1 // pred_check_branch
      %35 = sbr.rel (0) target = $region5
    $region4: #{verbalization_forward.3} parent=1 // pred_region
      _
    $region5: #{verbalization_forward.3} parent=1 // pred_fallthru
      _
    // Predicated region
    $region6: #{verbalization_forward.3} parent=1 // pred_check
      _
    $region7: #{verbalization_forward.3} parent=1 // pred_check_branch
      %37 = sbr.rel (0) target = $region9
    $region8: #{verbalization_forward.3} parent=1 // pred_region
      _
    $region9: #{verbalization_forward.3} parent=1 // pred_fallthru
      _
    // Predicated region
    $region10: #{verbalization_forward.3} parent=1 // pred_check
      _
    $region11: #{verbalization_forward.3} parent=1 // pred_check_branch
      %39 = sbr.rel (0) target = $region13
    $region12: #{verbalization_forward.3} parent=1 // pred_region
      _
    $region13: #{verbalization_forward.3} parent=1 // pred_fallthru
      _
    // Predicated region
    $region14: #{verbalization_forward.3} parent=1 // pred_check
      _
    $region15: #{verbalization_forward.3} parent=1 // pred_check_branch
      %41 = sbr.rel (0) target = $region17
    $region16: #{verbalization_forward.3} parent=1 // pred_region
      _
    $region17: #{verbalization_forward.3} parent=1 // pred_fallthru
      _
    // Predicated region
    $region18: #{verbalization_forward.3} parent=1 // pred_check
      _
    $region19: #{verbalization_forward.3} parent=1 // pred_check_branch
      %43 = sbr.rel (0) target = $region21
    $region20: #{verbalization_forward.3} parent=1 // pred_region
      _
    $region21: #{verbalization_forward.3} parent=1 // pred_fallthru
      _
    // Predicated region
    $region22: #{verbalization_forward.3} parent=1 // pred_check
      _
    $region23: #{verbalization_forward.3} parent=1 // pred_check_branch
      %45 = sbr.rel (0) target = $region25
    $region24: #{verbalization_forward.3} parent=1 // pred_region
      _
    $region25: #{verbalization_forward.3} parent=1 // pred_fallthru
      _
    // Predicated region
    $region26: #{verbalization_forward.3} parent=1 // pred_check
      _
    $region27: #{verbalization_forward.3} parent=1 // pred_check_branch
      %47 = sbr.rel (0) target = $region29
    $region28: #{verbalization_forward.3} parent=1 // pred_region
      %s49 = ssub.s32 2048, 2048
      %50 = vsyncadd [#allocation3], %s49
      %s51 = sshll.u32 [#allocation2], 4
      %s52 = int_to_ptr.vmem [resolvable:$true] %s51
      %57 = dma.hbm_to_vmem [thread:$0]  %s6, 2048, %s52, [#allocation3], 128, 128, 8
    $region29: #{verbalization_forward.3} parent=1 // pred_fallthru
      _
    // Predicated region
    $region30: #{verbalization_forward.3} parent=1 // pred_check
      _
    $region31: #{verbalization_forward.3} parent=1 // pred_check_branch
      %59 = sbr.rel (0) target = $region33
    $region32: #{verbalization_forward.3} parent=1 // pred_region
      _
    $region33: #{verbalization_forward.3} parent=1 // pred_fallthru
      _
    // Predicated region
    $region34: #{verbalization_forward.3} parent=1 // pred_check
      _
    $region35: #{verbalization_forward.3} parent=1 // pred_check_branch
      %61 = sbr.rel (0) target = $region37
    $region36: #{verbalization_forward.3} parent=1 // pred_region
      _
    $region37: #{verbalization_forward.3} parent=1 // pred_fallthru
      _
    // Predicated region
    $region38: #{verbalization_forward.3} parent=1 // pred_check
      _
    $region39: #{verbalization_forward.3} parent=1 // pred_check_branch
      %63 = sbr.rel (0) target = $region41
    $region40: #{verbalization_forward.3} parent=1 // pred_region
      _
    $region41: #{verbalization_forward.3} parent=1 // pred_fallthru
      _
    // Predicated region
    $region42: #{verbalization_forward.3} parent=1 // pred_check
      _
    $region43: #{verbalization_forward.3} parent=1 // pred_check_branch
      %65 = sbr.rel (0) target = $region45
    $region44: #{verbalization_forward.3} parent=1 // pred_region
      %s67 = ssub.s32 2048, 2048
      %68 = vsyncadd [#allocation6], %s67
      %s69 = sshll.u32 [#allocation5], 4
      %s70 = int_to_ptr.vmem [resolvable:$true] %s69
      %75 = dma.hbm_to_vmem [thread:$0]  %s10, 2048, %s70, [#allocation6], 128, 128, 8
    $region45: #{verbalization_forward.3} parent=1 // pred_fallthru
      _
    // Predicated region
    $region46: #{verbalization_forward.3} parent=1 // pred_check
      _
    $region47: #{verbalization_forward.3} parent=1 // pred_check_branch
      %77 = sbr.rel (0) target = $region49
    $region48: #{verbalization_forward.3} parent=1 // pred_region
      _
    $region49: #{verbalization_forward.3} parent=1 // pred_fallthru
      _
    // Predicated region
    $region50: #{verbalization_forward.3} parent=1 // pred_check
      _
    $region51: #{verbalization_forward.3} parent=1 // pred_check_branch
      %79 = sbr.rel (0) target = $region53
    $region52: #{verbalization_forward.3} parent=1 // pred_region
      _
    $region53: #{verbalization_forward.3} parent=1 // pred_fallthru
      _
    // Predicated region
    $region54: #{verbalization_forward.3} parent=1 // pred_check
      _
    $region55: #{verbalization_forward.3} parent=1 // pred_check_branch
      %81 = sbr.rel (0) target = $region57
    $region56: #{verbalization_forward.3} parent=1 // pred_region
      _
    $region57: #{verbalization_forward.3} parent=1 // pred_fallthru
      _
    // Predicated region
    $region58: #{verbalization_forward.3} parent=1 // pred_check
      _
    $region59: #{verbalization_forward.3} parent=1 // pred_check_branch
      %83 = sbr.rel (0) target = $region61
    $region60: #{verbalization_forward.3} parent=1 // pred_region
      %s85 = ssub.s32 2048, 2048
      %86 = vsyncadd [#allocation6], %s85
      %s87 = sshll.u32 [#allocation7], 4
      %s88 = int_to_ptr.vmem [resolvable:$true] %s87
      %93 = dma.hbm_to_vmem [thread:$0]  %s14, 2048, %s88, [#allocation6], 128, 128, 8
    $region61: #{verbalization_forward.3} parent=1 // pred_fallthru
      _
    // Predicated region
    $region62: #{verbalization_forward.3} parent=1 // pred_check
      _
    $region63: #{verbalization_forward.3} parent=1 // pred_check_branch
      %95 = sbr.rel (0) target = $region65
    $region64: #{verbalization_forward.3} parent=1 // pred_region
      _
    $region65: #{verbalization_forward.3} parent=1 // pred_fallthru
      _
    // Predicated region
    $region66: #{verbalization_forward.3} parent=1 // pred_check
      _
    $region67: #{verbalization_forward.3} parent=1 // pred_check_branch
      %97 = sbr.rel (0) target = $region69
    $region68: #{verbalization_forward.3} parent=1 // pred_region
      _
    $region69: #{verbalization_forward.3} parent=1 // pred_fallthru
      _
    // Predicated region
    $region70: #{verbalization_forward.3} parent=1 // pred_check
      _
    $region71: #{verbalization_forward.3} parent=1 // pred_check_branch
      %99 = sbr.rel (0) target = $region73
    $region72: #{verbalization_forward.3} parent=1 // pred_region
      _
    $region73: #{verbalization_forward.3} parent=1 // pred_fallthru
      _
    // Predicated region
    $region74: #{verbalization_forward.3} parent=1 // pred_check
      _
    $region75: #{verbalization_forward.3} parent=1 // pred_check_branch
      %101 = sbr.rel (0) target = $region77
    $region76: #{verbalization_forward.3} parent=1 // pred_region
      _
    $region77: #{verbalization_forward.3} parent=1 // pred_fallthru
      _
    // Predicated region
    $region78: #{verbalization_forward.3} parent=1 // pred_check
      _
    $region79: #{verbalization_forward.3} parent=1 // pred_check_branch
      %103 = sbr.rel (0) target = $region81
    $region80: #{verbalization_forward.3} parent=1 // pred_region
      _
    $region81: #{verbalization_forward.3} parent=1 // pred_fallthru
      _
    // Predicated region
    $region82: #{verbalization_forward.3} parent=1 // pred_check
      _
    $region83: #{verbalization_forward.3} parent=1 // pred_check_branch
      %105 = sbr.rel (0) target = $region85
    $region84: #{verbalization_forward.3} parent=1 // pred_region
      _
    $region85: #{verbalization_forward.3} parent=1 // pred_fallthru
      _
    // Predicated region
    $region86: #{verbalization_forward.3} parent=1 // pred_check
      _
    $region87: #{verbalization_forward.3} parent=1 // pred_check_branch
      %107 = sbr.rel (0) target = $region89
    $region88: #{verbalization_forward.3} parent=1 // pred_region
      _
    $region89: #{verbalization_forward.3} parent=1 // pred_fallthru
      _
    // Predicated region
    $region90: #{verbalization_forward.3} parent=1 // pred_check
      _
    $region91: #{verbalization_forward.3} parent=1 // pred_check_branch
      %109 = sbr.rel (0) target = $region93
    $region92: #{verbalization_forward.3} parent=1 // pred_region
      _
    $region93: #{verbalization_forward.3} parent=1 // pred_fallthru
      _
    // Predicated region
    $region94: #{verbalization_forward.3} parent=1 // pred_check
      _
    $region95: #{verbalization_forward.3} parent=1 // pred_check_branch
      %111 = sbr.rel (0) target = $region97
    $region96: #{verbalization_forward.3} parent=1 // pred_region
      _
    $region97: #{verbalization_forward.3} parent=1 // pred_fallthru
      _
    // Predicated region
    $region98: #{verbalization_forward.3} parent=1 // pred_check
      _
    $region99: #{verbalization_forward.3} parent=1 // pred_check_branch
      %113 = sbr.rel (0) target = $region101
    $region100: #{verbalization_forward.3} parent=1 // pred_region
      _
    $region101: #{verbalization_forward.3} parent=1 // pred_fallthru
      _
    // Predicated region
    $region102: #{verbalization_forward.3} parent=1 // pred_check
      _
    $region103: #{verbalization_forward.3} parent=1 // pred_check_branch
      %115 = sbr.rel (0) target = $region105
    $region104: #{verbalization_forward.3} parent=1 // pred_region
      _
    $region105: #{verbalization_forward.3} parent=1 // pred_fallthru
      _
    // Predicated region
    $region106: #{verbalization_forward.3} parent=1 // pred_check
      _
    $region107: #{verbalization_forward.3} parent=1 // pred_check_branch
      %117 = sbr.rel (0) target = $region109
    $region108: #{verbalization_forward.3} parent=1 // pred_region
      %118 = dma.done [#allocation3], 2048
    $region109: #{verbalization_forward.3} parent=1 // pred_fallthru
      _
    // Predicated region
    $region110: #{verbalization_forward.3} parent=1 // pred_check
      _
    $region111: #{verbalization_forward.3} parent=1 // pred_check_branch
      %120 = sbr.rel (0) target = $region113
    $region112: #{verbalization_forward.3} parent=1 // pred_region
      %121 = dma.done [#allocation6], 2048
    $region113: #{verbalization_forward.3} parent=1 // pred_fallthru
      _
    // Predicated region
    $region114: #{verbalization_forward.3} parent=1 // pred_check
      _
    $region115: #{verbalization_forward.3} parent=1 // pred_check_branch
      %123 = sbr.rel (0) target = $region117
    $region116: #{verbalization_forward.3} parent=1 // pred_region
      %124 = dma.done [#allocation6], 2048
    $region117: #{verbalization_forward.3} parent=1 // pred_fallthru
      _
    %v125 = vld [vmem:[%s0] sm:$0xff]
    %v126 = vld [vmem:[%s0 + $0x8] sm:$0xff]
    %v127 = vld [vmem:[%s2] sm:$0x1]
    %v128 = vld [vmem:[%s3] sm:$0x1]
    %129 = vadd.xlane.f32.xlu0 %v125
    %v130 = vpop.xlane.xlu0 %129
    %131 = vadd.xlane.f32.xlu0 %v126
    %v132 = vpop.xlane.xlu0 %131
    %v133 = vrcp.pop 128.0
    %v134 = vmul.f32 %v130, %v133
    %v135 = vmul.f32 %v132, %v133
    %v136 = vsub.f32 %v125, %v134
    %v137 = vsub.f32 %v126, %v135
    %v138 = vmul.f32 %v136, %v136
    %v139 = vmul.f32 %v137, %v137
    %140 = vadd.xlane.f32.xlu0 %v138
    %v141 = vpop.xlane.xlu0 %140
    %142 = vadd.xlane.f32.xlu0 %v139
    %v143 = vpop.xlane.xlu0 %142
    %v144 = vmul.f32 %v141, %v133
    %v145 = vmul.f32 %v143, %v133
    %v146 = vadd.f32 %v144, 1e-05
    %v147 = vadd.f32 %v145, 1e-05
    %v148 = vrsqrt.pop %v146
    %v149 = vrsqrt.pop %v147
    %v150 = vmul.f32 %v136, %v148
    %v151 = vmul.f32 %v137, %v149
    %v153 = vlaneseq
    %v154 = vshrl.u32 %v153, 7
    %v155 = vsub.s32 0, %v154
    %v156 = vrot.slane %v127, %v155
    %v158 = vmul.f32 %v150, %v156
    %v159 = vmul.f32 %v151, %v156
    %v161 = vlaneseq
    %v162 = vshrl.u32 %v161, 7
    %v163 = vsub.s32 0, %v162
    %v164 = vrot.slane %v128, %v163
    %v166 = vadd.f32 %v158, %v164
    %v167 = vadd.f32 %v159, %v164
    %v168 = vld [vmem:[%s1] sm:$0xff]
    %v169 = vld [vmem:[%s1 + $0x8] sm:$0xff]
    %v170 = vld [vmem:[%s4] sm:$0xff]
    %v171 = vld [vmem:[%s4 + $0x8] sm:$0xff]
    %v172 = vld [vmem:[%s4 + $0x10] sm:$0xff]
    %v173 = vld [vmem:[%s4 + $0x18] sm:$0xff]
    %v174 = vld [vmem:[%s4 + $0x20] sm:$0xff]
    %v175 = vld [vmem:[%s4 + $0x28] sm:$0xff]
    %v176 = vld [vmem:[%s4 + $0x30] sm:$0xff]
    %v177 = vld [vmem:[%s4 + $0x38] sm:$0xff]
    %v178 = vld [vmem:[%s4 + $0x40] sm:$0xff]
    %v179 = vld [vmem:[%s4 + $0x48] sm:$0xff]
    %v180 = vld [vmem:[%s4 + $0x50] sm:$0xff]
    %v181 = vld [vmem:[%s4 + $0x58] sm:$0xff]
    %v182 = vld [vmem:[%s4 + $0x60] sm:$0xff]
    %v183 = vld [vmem:[%s4 + $0x68] sm:$0xff]
    %v184 = vld [vmem:[%s4 + $0x70] sm:$0xff]
    %v185 = vld [vmem:[%s4 + $0x78] sm:$0xff]
    %v186 = vld [vmem:[%s4 + $0x80] sm:$0xff]
    %v187 = vld [vmem:[%s4 + $0x88] sm:$0xff]
    %v188 = vld [vmem:[%s4 + $0x90] sm:$0xff]
    %v189 = vld [vmem:[%s4 + $0x98] sm:$0xff]
    %v190 = vld [vmem:[%s4 + $0xa0] sm:$0xff]
    %v191 = vld [vmem:[%s4 + $0xa8] sm:$0xff]
    %v192 = vld [vmem:[%s4 + $0xb0] sm:$0xff]
    %v193 = vld [vmem:[%s4 + $0xb8] sm:$0xff]
    %v194 = vld [vmem:[%s4 + $0xc0] sm:$0xff]
    %v195 = vld [vmem:[%s4 + $0xc8] sm:$0xff]
    %v196 = vld [vmem:[%s4 + $0xd0] sm:$0xff]
    %v197 = vld [vmem:[%s4 + $0xd8] sm:$0xff]
    %v198 = vld [vmem:[%s4 + $0xe0] sm:$0xff]
    %v199 = vld [vmem:[%s4 + $0xe8] sm:$0xff]
    %v200 = vld [vmem:[%s4 + $0xf0] sm:$0xff]
    %v201 = vld [vmem:[%s4 + $0xf8] sm:$0xff]
    %v202 = vld [vmem:[%s4 + $0x100] sm:$0xff]
    %v203 = vld [vmem:[%s4 + $0x108] sm:$0xff]
    %v204 = vld [vmem:[%s4 + $0x110] sm:$0xff]
    %v205 = vld [vmem:[%s4 + $0x118] sm:$0xff]
    %v206 = vld [vmem:[%s4 + $0x120] sm:$0xff]
    %v207 = vld [vmem:[%s4 + $0x128] sm:$0xff]
    %v208 = vld [vmem:[%s4 + $0x130] sm:$0xff]
    %v209 = vld [vmem:[%s4 + $0x138] sm:$0xff]
    %v210 = vld [vmem:[%s4 + $0x140] sm:$0xff]
    %v211 = vld [vmem:[%s4 + $0x148] sm:$0xff]
    %v212 = vld [vmem:[%s4 + $0x150] sm:$0xff]
    %v213 = vld [vmem:[%s4 + $0x158] sm:$0xff]
    %v214 = vld [vmem:[%s4 + $0x160] sm:$0xff]
    %v215 = vld [vmem:[%s4 + $0x168] sm:$0xff]
    %v216 = vld [vmem:[%s4 + $0x170] sm:$0xff]
    %v217 = vld [vmem:[%s4 + $0x178] sm:$0xff]
    %v218 = vld [vmem:[%s5] sm:$0x7]
    %v220 = vlaneseq
    %v221 = vshrl.u32 %v220, 7
    %v222 = vsub.s32 0, %v221
    %v223 = vrot.slane %v218, %v222
    %v224 = vlaneseq
    %v225 = vshrl.u32 %v224, 7
    %v226 = vsub.s32 1, %v225
    %v227 = vrot.slane %v218, %v226
    %v228 = vlaneseq
    %v229 = vshrl.u32 %v228, 7
    %v230 = vsub.s32 2, %v229
    %v231 = vrot.slane %v218, %v230
    %235 = vmatprep.subr.mxu0 %v171
    %236 = vmatpush1.msra.mxu0 %v170
    %237 = vmatprep.subr.mxu0 %v174
    %238 = vmatpush1.msra.mxu0 %v173
    %239 = vmatprep.subr.mxu0 %v177
    %240 = vmatpush1.msra.mxu0 %v176
    %241 = vmatprep.subr.mxu0 %v180
    %242 = vmatpush1.msra.mxu0 %v179
    %243 = vmatprep.subr.mxu0 %v183
    %244 = vmatpush1.msra.mxu0 %v182
    %245 = vmatprep.subr.mxu0 %v186
    %246 = vmatpush1.msra.mxu0 %v185
    %247 = vmatprep.subr.mxu0 %v189
    %248 = vmatpush1.msra.mxu0 %v188
    %249 = vmatprep.subr.mxu0 %v192
    %250 = vmatpush1.msra.mxu0 %v191
    %251 = vmatprep.subr.mxu0 %v195
    %252 = vmatpush1.msra.mxu0 %v194
    %253 = vmatprep.subr.mxu0 %v198
    %254 = vmatpush1.msra.mxu0 %v197
    %255 = vmatprep.subr.mxu0 %v201
    %256 = vmatpush1.msra.mxu0 %v200
    %257 = vmatprep.subr.mxu0 %v204
    %258 = vmatpush1.msra.mxu0 %v203
    %259 = vmatprep.subr.mxu0 %v207
    %260 = vmatpush1.msra.mxu0 %v206
    %261 = vmatprep.subr.mxu0 %v210
    %262 = vmatpush1.msra.mxu0 %v209
    %263 = vmatprep.subr.mxu0 %v213
    %264 = vmatpush1.msra.mxu0 %v212
    %265 = vmatprep.subr.mxu0 %v216
    %266 = vmatpush1.msra.mxu0 %v215
    %267 = vmatprep.subr.mxu0 0.0
    %268 = vmatpush1.msra.mxu0 0.0
    %269 = vmatprep.subr.mxu0 0.0
    %270 = vmatpush1.msra.mxu0 0.0
    %271 = vmatprep.subr.mxu0 0.0
    %272 = vmatpush1.msra.mxu0 0.0
    %273 = vmatprep.subr.mxu0 0.0
    %274 = vmatpush1.msra.mxu0 0.0
    %275 = vmatprep.subr.mxu0 0.0
    %276 = vmatpush1.msra.mxu0 0.0
    %277 = vmatprep.subr.mxu0 0.0
    %278 = vmatpush1.msra.mxu0 0.0
    %279 = vmatprep.subr.mxu0 0.0
    %280 = vmatpush1.msra.mxu0 0.0
    %281 = vmatprep.subr.mxu0 0.0
    %282 = vmatpush1.msra.mxu0 0.0
    %283 = vmatprep.subr.mxu0 0.0
    %284 = vmatpush1.msra.mxu0 0.0
    %285 = vmatprep.subr.mxu0 0.0
    %286 = vmatpush1.msra.mxu0 0.0
    %287 = vmatprep.subr.mxu0 0.0
    %288 = vmatpush1.msra.mxu0 0.0
    %289 = vmatprep.subr.mxu0 0.0
    %290 = vmatpush1.msra.mxu0 0.0
    %291 = vmatprep.subr.mxu0 0.0
    %292 = vmatpush1.msra.mxu0 0.0
    %293 = vmatprep.subr.mxu0 0.0
    %294 = vmatpush1.msra.mxu0 0.0
    %295 = vmatprep.subr.mxu0 0.0
    %296 = vmatpush1.msra.mxu0 0.0
    %297 = vmatprep.subr.mxu0 0.0
    %298 = vmatpush1.msra.mxu0 0.0
    %299 = vmatprep.mubr.f32.mxu0 0.0
    %300 = vmatmul.mubr.f32.gmra.mrb[0].mxu0 %v166
    %v301 = vpop.f32.mrb[0].mxu0
    %v302 = vadd.f32 %v223, %v301
    %v303 = vpop.f32.mrb[0].mxu0
    %v304 = vadd.f32 %v227, %v303
    %305 = vmatprep.mubr.f32.mxu0 0.0
    %306 = vmatmul.mubr.f32.gmra.mrb[0].mxu0 %v167
    %v307 = vpop.f32.mrb[0].mxu0
    %v308 = vadd.f32 %v223, %v307
    %v309 = vpop.f32.mrb[0].mxu0
    %v310 = vadd.f32 %v227, %v309
    %311 = vdwg.mxu0
    %312 = vmatprep.subr.mxu0 0.0
    %313 = vmatpush1.msra.mxu0 %v172
    %314 = vmatprep.subr.mxu0 0.0
    %315 = vmatpush1.msra.mxu0 %v175
    %316 = vmatprep.subr.mxu0 0.0
    %317 = vmatpush1.msra.mxu0 %v178
    %318 = vmatprep.subr.mxu0 0.0
    %319 = vmatpush1.msra.mxu0 %v181
    %320 = vmatprep.subr.mxu0 0.0
    %321 = vmatpush1.msra.mxu0 %v184
    %322 = vmatprep.subr.mxu0 0.0
    %323 = vmatpush1.msra.mxu0 %v187
    %324 = vmatprep.subr.mxu0 0.0
    %325 = vmatpush1.msra.mxu0 %v190
    %326 = vmatprep.subr.mxu0 0.0
    %327 = vmatpush1.msra.mxu0 %v193
    %328 = vmatprep.subr.mxu0 0.0
    %329 = vmatpush1.msra.mxu0 %v196
    %330 = vmatprep.subr.mxu0 0.0
    %331 = vmatpush1.msra.mxu0 %v199
    %332 = vmatprep.subr.mxu0 0.0
    %333 = vmatpush1.msra.mxu0 %v202
    %334 = vmatprep.subr.mxu0 0.0
    %335 = vmatpush1.msra.mxu0 %v205
    %336 = vmatprep.subr.mxu0 0.0
    %337 = vmatpush1.msra.mxu0 %v208
    %338 = vmatprep.subr.mxu0 0.0
    %339 = vmatpush1.msra.mxu0 %v211
    %340 = vmatprep.subr.mxu0 0.0
    %341 = vmatpush1.msra.mxu0 %v214
    %342 = vmatprep.subr.mxu0 0.0
    %343 = vmatpush1.msra.mxu0 %v217
    %344 = vmatprep.subr.mxu0 0.0
    %345 = vmatpush1.msra.mxu0 0.0
    %346 = vmatprep.subr.mxu0 0.0
    %347 = vmatpush1.msra.mxu0 0.0
    %348 = vmatprep.subr.mxu0 0.0
    %349 = vmatpush1.msra.mxu0 0.0
    %350 = vmatprep.subr.mxu0 0.0
    %351 = vmatpush1.msra.mxu0 0.0
    %352 = vmatprep.subr.mxu0 0.0
    %353 = vmatpush1.msra.mxu0 0.0
    %354 = vmatprep.subr.mxu0 0.0
    %355 = vmatpush1.msra.mxu0 0.0
    %356 = vmatprep.subr.mxu0 0.0
    %357 = vmatpush1.msra.mxu0 0.0
    %358 = vmatprep.subr.mxu0 0.0
    %359 = vmatpush1.msra.mxu0 0.0
    %360 = vmatprep.subr.mxu0 0.0
    %361 = vmatpush1.msra.mxu0 0.0
    %362 = vmatprep.subr.mxu0 0.0
    %363 = vmatpush1.msra.mxu0 0.0
    %364 = vmatprep.subr.mxu0 0.0
    %365 = vmatpush1.msra.mxu0 0.0
    %366 = vmatprep.subr.mxu0 0.0
    %367 = vmatpush1.msra.mxu0 0.0
    %368 = vmatprep.subr.mxu0 0.0
    %369 = vmatpush1.msra.mxu0 0.0
    %370 = vmatprep.subr.mxu0 0.0
    %371 = vmatpush1.msra.mxu0 0.0
    %372 = vmatprep.subr.mxu0 0.0
    %373 = vmatpush1.msra.mxu0 0.0
    %374 = vmatprep.subr.mxu0 0.0
    %375 = vmatpush1.msra.mxu0 0.0
    %376 = vmatprep.mubr.f32.mxu0 0.0
    %377 = vmatmul.mubr.f32.gmra.mrb[0].mxu0 %v166
    %v378 = vpop.f32.mrb[0].mxu0
    %v379 = vadd.f32 %v231, %v378
    %v380 = vpop.f32.mrb[0].mxu0
    %381 = vmatprep.mubr.f32.mxu0 0.0
    %382 = vmatmul.mubr.f32.gmra.mrb[0].mxu0 %v167
    %v383 = vpop.f32.mrb[0].mxu0
    %v384 = vadd.f32 %v231, %v383
    %v385 = vpop.f32.mrb[0].mxu0
    %386 = vdwg.mxu0
    %v387 = vlaneseq
    %v388 = vshrl.u32 %v387, 7
    %v389 = vlaneseq
    %v390 = vand.u32 %v389, 127
    %vm391 = vcmp.ge.s32.totalorder %v388, %v390
    %v392 = vsel %vm391, 0.0, -1e+09
    %v393 = vmul.f32 %v302, 0.17677669
    %vm394 = vcmask 261120
    %v396 = vsel %vm394, %v393, 0
    %v399 = vsel %vm394, %v304, 0
    %401 = vmatprep.subr.mxu0 0.0
    %402 = vmatpush1.xpose.msra.mxu0 %v399
    %403 = vmatprep.subr.mxu0 0.0
    %404 = vmatpush1.xpose.msra.mxu0 0.0
    %405 = vmatprep.subr.mxu0 0.0
    %406 = vmatpush1.xpose.msra.mxu0 0.0
    %407 = vmatprep.subr.mxu0 0.0
    %408 = vmatpush1.xpose.msra.mxu0 0.0
    %409 = vmatprep.subr.mxu0 0.0
    %410 = vmatpush1.xpose.msra.mxu0 0.0
    %411 = vmatprep.subr.mxu0 0.0
    %412 = vmatpush1.xpose.msra.mxu0 0.0
    %413 = vmatprep.subr.mxu0 0.0
    %414 = vmatpush1.xpose.msra.mxu0 0.0
    %415 = vmatprep.subr.mxu0 0.0
    %416 = vmatpush1.xpose.msra.mxu0 0.0
    %417 = vmatprep.subr.mxu0 0.0
    %418 = vmatpush1.xpose.msra.mxu0 0.0
    %419 = vmatprep.subr.mxu0 0.0
    %420 = vmatpush1.xpose.msra.mxu0 0.0
    %421 = vmatprep.subr.mxu0 0.0
    %422 = vmatpush1.xpose.msra.mxu0 0.0
    %423 = vmatprep.subr.mxu0 0.0
    %424 = vmatpush1.xpose.msra.mxu0 0.0
    %425 = vmatprep.subr.mxu0 0.0
    %426 = vmatpush1.xpose.msra.mxu0 0.0
    %427 = vmatprep.subr.mxu0 0.0
    %428 = vmatpush1.xpose.msra.mxu0 0.0
    %429 = vmatprep.subr.mxu0 0.0
    %430 = vmatpush1.xpose.msra.mxu0 0.0
    %431 = vmatprep.subr.mxu0 0.0
    %432 = vmatpush1.xpose.msra.mxu0 0.0
    %433 = vmatprep.subr.mxu0 0.0
    %434 = vmatpush1.xpose.msra.mxu0 0.0
    %435 = vmatprep.subr.mxu0 0.0
    %436 = vmatpush1.xpose.msra.mxu0 0.0
    %437 = vmatprep.subr.mxu0 0.0
    %438 = vmatpush1.xpose.msra.mxu0 0.0
    %439 = vmatprep.subr.mxu0 0.0
    %440 = vmatpush1.xpose.msra.mxu0 0.0
    %441 = vmatprep.subr.mxu0 0.0
    %442 = vmatpush1.xpose.msra.mxu0 0.0
    %443 = vmatprep.subr.mxu0 0.0
    %444 = vmatpush1.xpose.msra.mxu0 0.0
    %445 = vmatprep.subr.mxu0 0.0
    %446 = vmatpush1.xpose.msra.mxu0 0.0
    %447 = vmatprep.subr.mxu0 0.0
    %448 = vmatpush1.xpose.msra.mxu0 0.0
    %449 = vmatprep.subr.mxu0 0.0
    %450 = vmatpush1.xpose.msra.mxu0 0.0
    %451 = vmatprep.subr.mxu0 0.0
    %452 = vmatpush1.xpose.msra.mxu0 0.0
    %453 = vmatprep.subr.mxu0 0.0
    %454 = vmatpush1.xpose.msra.mxu0 0.0
    %455 = vmatprep.subr.mxu0 0.0
    %456 = vmatpush1.xpose.msra.mxu0 0.0
    %457 = vmatprep.subr.mxu0 0.0
    %458 = vmatpush1.xpose.msra.mxu0 0.0
    %459 = vmatprep.subr.mxu0 0.0
    %460 = vmatpush1.xpose.msra.mxu0 0.0
    %461 = vmatprep.subr.mxu0 0.0
    %462 = vmatpush1.xpose.msra.mxu0 0.0
    %463 = vmatprep.subr.mxu0 0.0
    %464 = vmatpush1.xpose.msra.mxu0 0.0
    %465 = vmatprep.mubr.f32.mxu0 0.0
    %466 = vmatmul.mubr.f32.gmra.mrb[0].mxu0 %v396
    %v467 = vpop.f32.mrb[0].mxu0
    %v468 = vadd.f32 %v392, %v467
    %v469 = vpop.f32.mrb[0].mxu0
    %470 = vdwg.mxu0
    %vm471 = vcmask 64512
    %v472 = vsel %vm471, %v468, -inf
    %473 = vmax.xlane.f32.xlu0 %v472
    %v474 = vpop.xlane.xlu0 %473
    %v475 = vsub.f32 %v468, %v474
    %v476 = vmul.f32 %v475, 1.442695
    %v477 = vpow.pop %v476
    %v478 = vsel %vm471, %v477, 0.0
    %479 = vadd.xlane.f32.xlu0 %v478
    %v480 = vpop.xlane.xlu0 %479
    %v481 = vrcp.pop %v480
    %v482 = vmul.f32 %v477, %v481
    %v484 = vsel %vm471, %v482, 0
    %486 = vmatprep.subr.mxu0 0.0
    %487 = vmatpush1.msra.mxu0 %v379
    %488 = vmatprep.subr.mxu0 0.0
    %489 = vmatpush1.msra.mxu0 0.0
    %490 = vmatprep.subr.mxu0 0.0
    %491 = vmatpush1.msra.mxu0 0.0
    %492 = vmatprep.subr.mxu0 0.0
    %493 = vmatpush1.msra.mxu0 0.0
    %494 = vmatprep.subr.mxu0 0.0
    %495 = vmatpush1.msra.mxu0 0.0
    %496 = vmatprep.subr.mxu0 0.0
    %497 = vmatpush1.msra.mxu0 0.0
    %498 = vmatprep.subr.mxu0 0.0
    %499 = vmatpush1.msra.mxu0 0.0
    %500 = vmatprep.subr.mxu0 0.0
    %501 = vmatpush1.msra.mxu0 0.0
    %502 = vmatprep.subr.mxu0 0.0
    %503 = vmatpush1.msra.mxu0 0.0
    %504 = vmatprep.subr.mxu0 0.0
    %505 = vmatpush1.msra.mxu0 0.0
    %506 = vmatprep.subr.mxu0 0.0
    %507 = vmatpush1.msra.mxu0 0.0
    %508 = vmatprep.subr.mxu0 0.0
    %509 = vmatpush1.msra.mxu0 0.0
    %510 = vmatprep.subr.mxu0 0.0
    %511 = vmatpush1.msra.mxu0 0.0
    %512 = vmatprep.subr.mxu0 0.0
    %513 = vmatpush1.msra.mxu0 0.0
    %514 = vmatprep.subr.mxu0 0.0
    %515 = vmatpush1.msra.mxu0 0.0
    %516 = vmatprep.subr.mxu0 0.0
    %517 = vmatpush1.msra.mxu0 0.0
    %518 = vmatprep.subr.mxu0 0.0
    %519 = vmatpush1.msra.mxu0 0.0
    %520 = vmatprep.subr.mxu0 0.0
    %521 = vmatpush1.msra.mxu0 0.0
    %522 = vmatprep.subr.mxu0 0.0
    %523 = vmatpush1.msra.mxu0 0.0
    %524 = vmatprep.subr.mxu0 0.0
    %525 = vmatpush1.msra.mxu0 0.0
    %526 = vmatprep.subr.mxu0 0.0
    %527 = vmatpush1.msra.mxu0 0.0
    %528 = vmatprep.subr.mxu0 0.0
    %529 = vmatpush1.msra.mxu0 0.0
    %530 = vmatprep.subr.mxu0 0.0
    %531 = vmatpush1.msra.mxu0 0.0
    %532 = vmatprep.subr.mxu0 0.0
    %533 = vmatpush1.msra.mxu0 0.0
    %534 = vmatprep.subr.mxu0 0.0
    %535 = vmatpush1.msra.mxu0 0.0
    %536 = vmatprep.subr.mxu0 0.0
    %537 = vmatpush1.msra.mxu0 0.0
    %538 = vmatprep.subr.mxu0 0.0
    %539 = vmatpush1.msra.mxu0 0.0
    %540 = vmatprep.subr.mxu0 0.0
    %541 = vmatpush1.msra.mxu0 0.0
    %542 = vmatprep.subr.mxu0 0.0
    %543 = vmatpush1.msra.mxu0 0.0
    %544 = vmatprep.subr.mxu0 0.0
    %545 = vmatpush1.msra.mxu0 0.0
    %546 = vmatprep.subr.mxu0 0.0
    %547 = vmatpush1.msra.mxu0 0.0
    %548 = vmatprep.subr.mxu0 0.0
    %549 = vmatpush1.msra.mxu0 0.0
    %550 = vmatprep.mubr.f32.mxu0 0.0
    %551 = vmatmul.mubr.f32.gmra.mrb[0].mxu0 %v484
    %v552 = vpop.f32.mrb[0].mxu0
    %v553 = vadd.f32 0.0, %v552
    %v554 = vpop.f32.mrb[0].mxu0
    %555 = vdwg.mxu0
    %556 = vrot.lane.b32.xlu0 %v393, 96
    %v557 = vpop.permute.xlu0 %556
    %558 = vrot.lane.b32.xlu0 %v304, 96
    %v559 = vpop.permute.xlu0 %558
    %v560 = vsel %vm394, %v557, 0
    %v562 = vsel %vm394, %v559, 0
    %564 = vmatprep.subr.mxu0 0.0
    %565 = vmatpush1.xpose.msra.mxu0 %v562
    %566 = vmatprep.subr.mxu0 0.0
    %567 = vmatpush1.xpose.msra.mxu0 0.0
    %568 = vmatprep.subr.mxu0 0.0
    %569 = vmatpush1.xpose.msra.mxu0 0.0
    %570 = vmatprep.subr.mxu0 0.0
    %571 = vmatpush1.xpose.msra.mxu0 0.0
    %572 = vmatprep.subr.mxu0 0.0
    %573 = vmatpush1.xpose.msra.mxu0 0.0
    %574 = vmatprep.subr.mxu0 0.0
    %575 = vmatpush1.xpose.msra.mxu0 0.0
    %576 = vmatprep.subr.mxu0 0.0
    %577 = vmatpush1.xpose.msra.mxu0 0.0
    %578 = vmatprep.subr.mxu0 0.0
    %579 = vmatpush1.xpose.msra.mxu0 0.0
    %580 = vmatprep.subr.mxu0 0.0
    %581 = vmatpush1.xpose.msra.mxu0 0.0
    %582 = vmatprep.subr.mxu0 0.0
    %583 = vmatpush1.xpose.msra.mxu0 0.0
    %584 = vmatprep.subr.mxu0 0.0
    %585 = vmatpush1.xpose.msra.mxu0 0.0
    %586 = vmatprep.subr.mxu0 0.0
    %587 = vmatpush1.xpose.msra.mxu0 0.0
    %588 = vmatprep.subr.mxu0 0.0
    %589 = vmatpush1.xpose.msra.mxu0 0.0
    %590 = vmatprep.subr.mxu0 0.0
    %591 = vmatpush1.xpose.msra.mxu0 0.0
    %592 = vmatprep.subr.mxu0 0.0
    %593 = vmatpush1.xpose.msra.mxu0 0.0
    %594 = vmatprep.subr.mxu0 0.0
    %595 = vmatpush1.xpose.msra.mxu0 0.0
    %596 = vmatprep.subr.mxu0 0.0
    %597 = vmatpush1.xpose.msra.mxu0 0.0
    %598 = vmatprep.subr.mxu0 0.0
    %599 = vmatpush1.xpose.msra.mxu0 0.0
    %600 = vmatprep.subr.mxu0 0.0
    %601 = vmatpush1.xpose.msra.mxu0 0.0
    %602 = vmatprep.subr.mxu0 0.0
    %603 = vmatpush1.xpose.msra.mxu0 0.0
    %604 = vmatprep.subr.mxu0 0.0
    %605 = vmatpush1.xpose.msra.mxu0 0.0
    %606 = vmatprep.subr.mxu0 0.0
    %607 = vmatpush1.xpose.msra.mxu0 0.0
    %608 = vmatprep.subr.mxu0 0.0
    %609 = vmatpush1.xpose.msra.mxu0 0.0
    %610 = vmatprep.subr.mxu0 0.0
    %611 = vmatpush1.xpose.msra.mxu0 0.0
    %612 = vmatprep.subr.mxu0 0.0
    %613 = vmatpush1.xpose.msra.mxu0 0.0
    %614 = vmatprep.subr.mxu0 0.0
    %615 = vmatpush1.xpose.msra.mxu0 0.0
    %616 = vmatprep.subr.mxu0 0.0
    %617 = vmatpush1.xpose.msra.mxu0 0.0
    %618 = vmatprep.subr.mxu0 0.0
    %619 = vmatpush1.xpose.msra.mxu0 0.0
    %620 = vmatprep.subr.mxu0 0.0
    %621 = vmatpush1.xpose.msra.mxu0 0.0
    %622 = vmatprep.subr.mxu0 0.0
    %623 = vmatpush1.xpose.msra.mxu0 0.0
    %624 = vmatprep.subr.mxu0 0.0
    %625 = vmatpush1.xpose.msra.mxu0 0.0
    %626 = vmatprep.subr.mxu0 0.0
    %627 = vmatpush1.xpose.msra.mxu0 0.0
    %628 = vmatprep.mubr.f32.mxu0 0.0
    %629 = vmatmul.mubr.f32.gmra.mrb[0].mxu0 %v560
    %v630 = vpop.f32.mrb[0].mxu0
    %v631 = vadd.f32 %v392, %v630
    %v632 = vpop.f32.mrb[0].mxu0
    %633 = vdwg.mxu0
    %v634 = vsel %vm471, %v631, -inf
    %635 = vmax.xlane.f32.xlu0 %v634
    %v636 = vpop.xlane.xlu0 %635
    %v637 = vsub.f32 %v631, %v636
    %v638 = vmul.f32 %v637, 1.442695
    %v639 = vpow.pop %v638
    %v640 = vsel %vm471, %v639, 0.0
    %641 = vadd.xlane.f32.xlu0 %v640
    %v642 = vpop.xlane.xlu0 %641
    %v643 = vrcp.pop %v642
    %v644 = vmul.f32 %v639, %v643
    %646 = vrot.lane.b32.xlu0 %v379, 96
    %v647 = vpop.permute.xlu0 %646
    %v650 = vsel %vm471, %v644, 0
    %652 = vmatprep.subr.mxu0 0.0
    %653 = vmatpush1.msra.mxu0 %v647
    %654 = vmatprep.subr.mxu0 0.0
    %655 = vmatpush1.msra.mxu0 0.0
    %656 = vmatprep.subr.mxu0 0.0
    %657 = vmatpush1.msra.mxu0 0.0
    %658 = vmatprep.subr.mxu0 0.0
    %659 = vmatpush1.msra.mxu0 0.0
    %660 = vmatprep.subr.mxu0 0.0
    %661 = vmatpush1.msra.mxu0 0.0
    %662 = vmatprep.subr.mxu0 0.0
    %663 = vmatpush1.msra.mxu0 0.0
    %664 = vmatprep.subr.mxu0 0.0
    %665 = vmatpush1.msra.mxu0 0.0
    %666 = vmatprep.subr.mxu0 0.0
    %667 = vmatpush1.msra.mxu0 0.0
    %668 = vmatprep.subr.mxu0 0.0
    %669 = vmatpush1.msra.mxu0 0.0
    %670 = vmatprep.subr.mxu0 0.0
    %671 = vmatpush1.msra.mxu0 0.0
    %672 = vmatprep.subr.mxu0 0.0
    %673 = vmatpush1.msra.mxu0 0.0
    %674 = vmatprep.subr.mxu0 0.0
    %675 = vmatpush1.msra.mxu0 0.0
    %676 = vmatprep.subr.mxu0 0.0
    %677 = vmatpush1.msra.mxu0 0.0
    %678 = vmatprep.subr.mxu0 0.0
    %679 = vmatpush1.msra.mxu0 0.0
    %680 = vmatprep.subr.mxu0 0.0
    %681 = vmatpush1.msra.mxu0 0.0
    %682 = vmatprep.subr.mxu0 0.0
    %683 = vmatpush1.msra.mxu0 0.0
    %684 = vmatprep.subr.mxu0 0.0
    %685 = vmatpush1.msra.mxu0 0.0
    %686 = vmatprep.subr.mxu0 0.0
    %687 = vmatpush1.msra.mxu0 0.0
    %688 = vmatprep.subr.mxu0 0.0
    %689 = vmatpush1.msra.mxu0 0.0
    %690 = vmatprep.subr.mxu0 0.0
    %691 = vmatpush1.msra.mxu0 0.0
    %692 = vmatprep.subr.mxu0 0.0
    %693 = vmatpush1.msra.mxu0 0.0
    %694 = vmatprep.subr.mxu0 0.0
    %695 = vmatpush1.msra.mxu0 0.0
    %696 = vmatprep.subr.mxu0 0.0
    %697 = vmatpush1.msra.mxu0 0.0
    %698 = vmatprep.subr.mxu0 0.0
    %699 = vmatpush1.msra.mxu0 0.0
    %700 = vmatprep.subr.mxu0 0.0
    %701 = vmatpush1.msra.mxu0 0.0
    %702 = vmatprep.subr.mxu0 0.0
    %703 = vmatpush1.msra.mxu0 0.0
    %704 = vmatprep.subr.mxu0 0.0
    %705 = vmatpush1.msra.mxu0 0.0
    %706 = vmatprep.subr.mxu0 0.0
    %707 = vmatpush1.msra.mxu0 0.0
    %708 = vmatprep.subr.mxu0 0.0
    %709 = vmatpush1.msra.mxu0 0.0
    %710 = vmatprep.subr.mxu0 0.0
    %711 = vmatpush1.msra.mxu0 0.0
    %712 = vmatprep.subr.mxu0 0.0
    %713 = vmatpush1.msra.mxu0 0.0
    %714 = vmatprep.subr.mxu0 0.0
    %715 = vmatpush1.msra.mxu0 0.0
    %716 = vmatprep.mubr.f32.mxu0 0.0
    %717 = vmatmul.mubr.f32.gmra.mrb[0].mxu0 %v650
    %v718 = vpop.f32.mrb[0].mxu0
    %v719 = vadd.f32 0.0, %v718
    %v720 = vpop.f32.mrb[0].mxu0
    %721 = vdwg.mxu0
    %722 = vrot.lane.b32.xlu0 %v393, 64
    %v723 = vpop.permute.xlu0 %722
    %724 = vrot.lane.b32.xlu0 %v304, 64
    %v725 = vpop.permute.xlu0 %724
    %v726 = vsel %vm394, %v723, 0
    %v728 = vsel %vm394, %v725, 0
    %730 = vmatprep.subr.mxu0 0.0
    %731 = vmatpush1.xpose.msra.mxu0 %v728
    %732 = vmatprep.subr.mxu0 0.0
    %733 = vmatpush1.xpose.msra.mxu0 0.0
    %734 = vmatprep.subr.mxu0 0.0
    %735 = vmatpush1.xpose.msra.mxu0 0.0
    %736 = vmatprep.subr.mxu0 0.0
    %737 = vmatpush1.xpose.msra.mxu0 0.0
    %738 = vmatprep.subr.mxu0 0.0
    %739 = vmatpush1.xpose.msra.mxu0 0.0
    %740 = vmatprep.subr.mxu0 0.0
    %741 = vmatpush1.xpose.msra.mxu0 0.0
    %742 = vmatprep.subr.mxu0 0.0
    %743 = vmatpush1.xpose.msra.mxu0 0.0
    %744 = vmatprep.subr.mxu0 0.0
    %745 = vmatpush1.xpose.msra.mxu0 0.0
    %746 = vmatprep.subr.mxu0 0.0
    %747 = vmatpush1.xpose.msra.mxu0 0.0
    %748 = vmatprep.subr.mxu0 0.0
    %749 = vmatpush1.xpose.msra.mxu0 0.0
    %750 = vmatprep.subr.mxu0 0.0
    %751 = vmatpush1.xpose.msra.mxu0 0.0
    %752 = vmatprep.subr.mxu0 0.0
    %753 = vmatpush1.xpose.msra.mxu0 0.0
    %754 = vmatprep.subr.mxu0 0.0
    %755 = vmatpush1.xpose.msra.mxu0 0.0
    %756 = vmatprep.subr.mxu0 0.0
    %757 = vmatpush1.xpose.msra.mxu0 0.0
    %758 = vmatprep.subr.mxu0 0.0
    %759 = vmatpush1.xpose.msra.mxu0 0.0
    %760 = vmatprep.subr.mxu0 0.0
    %761 = vmatpush1.xpose.msra.mxu0 0.0
    %762 = vmatprep.subr.mxu0 0.0
    %763 = vmatpush1.xpose.msra.mxu0 0.0
    %764 = vmatprep.subr.mxu0 0.0
    %765 = vmatpush1.xpose.msra.mxu0 0.0
    %766 = vmatprep.subr.mxu0 0.0
    %767 = vmatpush1.xpose.msra.mxu0 0.0
    %768 = vmatprep.subr.mxu0 0.0
    %769 = vmatpush1.xpose.msra.mxu0 0.0
    %770 = vmatprep.subr.mxu0 0.0
    %771 = vmatpush1.xpose.msra.mxu0 0.0
    %772 = vmatprep.subr.mxu0 0.0
    %773 = vmatpush1.xpose.msra.mxu0 0.0
    %774 = vmatprep.subr.mxu0 0.0
    %775 = vmatpush1.xpose.msra.mxu0 0.0
    %776 = vmatprep.subr.mxu0 0.0
    %777 = vmatpush1.xpose.msra.mxu0 0.0
    %778 = vmatprep.subr.mxu0 0.0
    %779 = vmatpush1.xpose.msra.mxu0 0.0
    %780 = vmatprep.subr.mxu0 0.0
    %781 = vmatpush1.xpose.msra.mxu0 0.0
    %782 = vmatprep.subr.mxu0 0.0
    %783 = vmatpush1.xpose.msra.mxu0 0.0
    %784 = vmatprep.subr.mxu0 0.0
    %785 = vmatpush1.xpose.msra.mxu0 0.0
    %786 = vmatprep.subr.mxu0 0.0
    %787 = vmatpush1.xpose.msra.mxu0 0.0
    %788 = vmatprep.subr.mxu0 0.0
    %789 = vmatpush1.xpose.msra.mxu0 0.0
    %790 = vmatprep.subr.mxu0 0.0
    %791 = vmatpush1.xpose.msra.mxu0 0.0
    %792 = vmatprep.subr.mxu0 0.0
    %793 = vmatpush1.xpose.msra.mxu0 0.0
    %794 = vmatprep.mubr.f32.mxu0 0.0
    %795 = vmatmul.mubr.f32.gmra.mrb[0].mxu0 %v726
    %v796 = vpop.f32.mrb[0].mxu0
    %v797 = vadd.f32 %v392, %v796
    %v798 = vpop.f32.mrb[0].mxu0
    %799 = vdwg.mxu0
    %v800 = vsel %vm471, %v797, -inf
    %801 = vmax.xlane.f32.xlu0 %v800
    %v802 = vpop.xlane.xlu0 %801
    %v803 = vsub.f32 %v797, %v802
    %v804 = vmul.f32 %v803, 1.442695
    %v805 = vpow.pop %v804
    %v806 = vsel %vm471, %v805, 0.0
    %807 = vadd.xlane.f32.xlu0 %v806
    %v808 = vpop.xlane.xlu0 %807
    %v809 = vrcp.pop %v808
    %v810 = vmul.f32 %v805, %v809
    %811 = vrot.lane.b32.xlu0 %v379, 64
    %v812 = vpop.permute.xlu0 %811
    %v815 = vsel %vm471, %v810, 0
    %817 = vmatprep.subr.mxu0 0.0
    %818 = vmatpush1.msra.mxu0 %v812
    %819 = vmatprep.subr.mxu0 0.0
    %820 = vmatpush1.msra.mxu0 0.0
    %821 = vmatprep.subr.mxu0 0.0
    %822 = vmatpush1.msra.mxu0 0.0
    %823 = vmatprep.subr.mxu0 0.0
    %824 = vmatpush1.msra.mxu0 0.0
    %825 = vmatprep.subr.mxu0 0.0
    %826 = vmatpush1.msra.mxu0 0.0
    %827 = vmatprep.subr.mxu0 0.0
    %828 = vmatpush1.msra.mxu0 0.0
    %829 = vmatprep.subr.mxu0 0.0
    %830 = vmatpush1.msra.mxu0 0.0
    %831 = vmatprep.subr.mxu0 0.0
    %832 = vmatpush1.msra.mxu0 0.0
    %833 = vmatprep.subr.mxu0 0.0
    %834 = vmatpush1.msra.mxu0 0.0
    %835 = vmatprep.subr.mxu0 0.0
    %836 = vmatpush1.msra.mxu0 0.0
    %837 = vmatprep.subr.mxu0 0.0
    %838 = vmatpush1.msra.mxu0 0.0
    %839 = vmatprep.subr.mxu0 0.0
    %840 = vmatpush1.msra.mxu0 0.0
    %841 = vmatprep.subr.mxu0 0.0
    %842 = vmatpush1.msra.mxu0 0.0
    %843 = vmatprep.subr.mxu0 0.0
    %844 = vmatpush1.msra.mxu0 0.0
    %845 = vmatprep.subr.mxu0 0.0
    %846 = vmatpush1.msra.mxu0 0.0
    %847 = vmatprep.subr.mxu0 0.0
    %848 = vmatpush1.msra.mxu0 0.0
    %849 = vmatprep.subr.mxu0 0.0
    %850 = vmatpush1.msra.mxu0 0.0
    %851 = vmatprep.subr.mxu0 0.0
    %852 = vmatpush1.msra.mxu0 0.0
    %853 = vmatprep.subr.mxu0 0.0
    %854 = vmatpush1.msra.mxu0 0.0
    %855 = vmatprep.subr.mxu0 0.0
    %856 = vmatpush1.msra.mxu0 0.0
    %857 = vmatprep.subr.mxu0 0.0
    %858 = vmatpush1.msra.mxu0 0.0
    %859 = vmatprep.subr.mxu0 0.0
    %860 = vmatpush1.msra.mxu0 0.0
    %861 = vmatprep.subr.mxu0 0.0
    %862 = vmatpush1.msra.mxu0 0.0
    %863 = vmatprep.subr.mxu0 0.0
    %864 = vmatpush1.msra.mxu0 0.0
    %865 = vmatprep.subr.mxu0 0.0
    %866 = vmatpush1.msra.mxu0 0.0
    %867 = vmatprep.subr.mxu0 0.0
    %868 = vmatpush1.msra.mxu0 0.0
    %869 = vmatprep.subr.mxu0 0.0
    %870 = vmatpush1.msra.mxu0 0.0
    %871 = vmatprep.subr.mxu0 0.0
    %872 = vmatpush1.msra.mxu0 0.0
    %873 = vmatprep.subr.mxu0 0.0
    %874 = vmatpush1.msra.mxu0 0.0
    %875 = vmatprep.subr.mxu0 0.0
    %876 = vmatpush1.msra.mxu0 0.0
    %877 = vmatprep.subr.mxu0 0.0
    %878 = vmatpush1.msra.mxu0 0.0
    %879 = vmatprep.subr.mxu0 0.0
    %880 = vmatpush1.msra.mxu0 0.0
    %881 = vmatprep.mubr.f32.mxu0 0.0
    %882 = vmatmul.mubr.f32.gmra.mrb[0].mxu0 %v815
    %v883 = vpop.f32.mrb[0].mxu0
    %v884 = vadd.f32 0.0, %v883
    %v885 = vpop.f32.mrb[0].mxu0
    %886 = vdwg.mxu0
    %887 = vrot.lane.b32.xlu0 %v393, 32
    %v888 = vpop.permute.xlu0 %887
    %889 = vrot.lane.b32.xlu0 %v304, 32
    %v890 = vpop.permute.xlu0 %889
    %v891 = vsel %vm394, %v888, 0
    %v893 = vsel %vm394, %v890, 0
    %895 = vmatprep.subr.mxu0 0.0
    %896 = vmatpush1.xpose.msra.mxu0 %v893
    %897 = vmatprep.subr.mxu0 0.0
    %898 = vmatpush1.xpose.msra.mxu0 0.0
    %899 = vmatprep.subr.mxu0 0.0
    %900 = vmatpush1.xpose.msra.mxu0 0.0
    %901 = vmatprep.subr.mxu0 0.0
    %902 = vmatpush1.xpose.msra.mxu0 0.0
    %903 = vmatprep.subr.mxu0 0.0
    %904 = vmatpush1.xpose.msra.mxu0 0.0
    %905 = vmatprep.subr.mxu0 0.0
    %906 = vmatpush1.xpose.msra.mxu0 0.0
    %907 = vmatprep.subr.mxu0 0.0
    %908 = vmatpush1.xpose.msra.mxu0 0.0
    %909 = vmatprep.subr.mxu0 0.0
    %910 = vmatpush1.xpose.msra.mxu0 0.0
    %911 = vmatprep.subr.mxu0 0.0
    %912 = vmatpush1.xpose.msra.mxu0 0.0
    %913 = vmatprep.subr.mxu0 0.0
    %914 = vmatpush1.xpose.msra.mxu0 0.0
    %915 = vmatprep.subr.mxu0 0.0
    %916 = vmatpush1.xpose.msra.mxu0 0.0
    %917 = vmatprep.subr.mxu0 0.0
    %918 = vmatpush1.xpose.msra.mxu0 0.0
    %919 = vmatprep.subr.mxu0 0.0
    %920 = vmatpush1.xpose.msra.mxu0 0.0
    %921 = vmatprep.subr.mxu0 0.0
    %922 = vmatpush1.xpose.msra.mxu0 0.0
    %923 = vmatprep.subr.mxu0 0.0
    %924 = vmatpush1.xpose.msra.mxu0 0.0
    %925 = vmatprep.subr.mxu0 0.0
    %926 = vmatpush1.xpose.msra.mxu0 0.0
    %927 = vmatprep.subr.mxu0 0.0
    %928 = vmatpush1.xpose.msra.mxu0 0.0
    %929 = vmatprep.subr.mxu0 0.0
    %930 = vmatpush1.xpose.msra.mxu0 0.0
    %931 = vmatprep.subr.mxu0 0.0
    %932 = vmatpush1.xpose.msra.mxu0 0.0
    %933 = vmatprep.subr.mxu0 0.0
    %934 = vmatpush1.xpose.msra.mxu0 0.0
    %935 = vmatprep.subr.mxu0 0.0
    %936 = vmatpush1.xpose.msra.mxu0 0.0
    %937 = vmatprep.subr.mxu0 0.0
    %938 = vmatpush1.xpose.msra.mxu0 0.0
    %939 = vmatprep.subr.mxu0 0.0
    %940 = vmatpush1.xpose.msra.mxu0 0.0
    %941 = vmatprep.subr.mxu0 0.0
    %942 = vmatpush1.xpose.msra.mxu0 0.0
    %943 = vmatprep.subr.mxu0 0.0
    %944 = vmatpush1.xpose.msra.mxu0 0.0
    %945 = vmatprep.subr.mxu0 0.0
    %946 = vmatpush1.xpose.msra.mxu0 0.0
    %947 = vmatprep.subr.mxu0 0.0
    %948 = vmatpush1.xpose.msra.mxu0 0.0
    %949 = vmatprep.subr.mxu0 0.0
    %950 = vmatpush1.xpose.msra.mxu0 0.0
    %951 = vmatprep.subr.mxu0 0.0
    %952 = vmatpush1.xpose.msra.mxu0 0.0
    %953 = vmatprep.subr.mxu0 0.0
    %954 = vmatpush1.xpose.msra.mxu0 0.0
    %955 = vmatprep.subr.mxu0 0.0
    %956 = vmatpush1.xpose.msra.mxu0 0.0
    %957 = vmatprep.subr.mxu0 0.0
    %958 = vmatpush1.xpose.msra.mxu0 0.0
    %959 = vmatprep.mubr.f32.mxu0 0.0
    %960 = vmatmul.mubr.f32.gmra.mrb[0].mxu0 %v891
    %v961 = vpop.f32.mrb[0].mxu0
    %v962 = vadd.f32 %v392, %v961
    %v963 = vpop.f32.mrb[0].mxu0
    %964 = vdwg.mxu0
    %v965 = vsel %vm471, %v962, -inf
    %966 = vmax.xlane.f32.xlu0 %v965
    %v967 = vpop.xlane.xlu0 %966
    %v968 = vsub.f32 %v962, %v967
    %v969 = vmul.f32 %v968, 1.442695
    %v970 = vpow.pop %v969
    %v971 = vsel %vm471, %v970, 0.0
    %972 = vadd.xlane.f32.xlu0 %v971
    %v973 = vpop.xlane.xlu0 %972
    %v974 = vrcp.pop %v973
    %v975 = vmul.f32 %v970, %v974
    %976 = vrot.lane.b32.xlu0 %v379, 32
    %v977 = vpop.permute.xlu0 %976
    %v980 = vsel %vm471, %v975, 0
    %982 = vmatprep.subr.mxu0 0.0
    %983 = vmatpush1.msra.mxu0 %v977
    %984 = vmatprep.subr.mxu0 0.0
    %985 = vmatpush1.msra.mxu0 0.0
    %986 = vmatprep.subr.mxu0 0.0
    %987 = vmatpush1.msra.mxu0 0.0
    %988 = vmatprep.subr.mxu0 0.0
    %989 = vmatpush1.msra.mxu0 0.0
    %990 = vmatprep.subr.mxu0 0.0
    %991 = vmatpush1.msra.mxu0 0.0
    %992 = vmatprep.subr.mxu0 0.0
    %993 = vmatpush1.msra.mxu0 0.0
    %994 = vmatprep.subr.mxu0 0.0
    %995 = vmatpush1.msra.mxu0 0.0
    %996 = vmatprep.subr.mxu0 0.0
    %997 = vmatpush1.msra.mxu0 0.0
    %998 = vmatprep.subr.mxu0 0.0
    %999 = vmatpush1.msra.mxu0 0.0
    %1000 = vmatprep.subr.mxu0 0.0
    %1001 = vmatpush1.msra.mxu0 0.0
    %1002 = vmatprep.subr.mxu0 0.0
    %1003 = vmatpush1.msra.mxu0 0.0
    %1004 = vmatprep.subr.mxu0 0.0
    %1005 = vmatpush1.msra.mxu0 0.0
    %1006 = vmatprep.subr.mxu0 0.0
    %1007 = vmatpush1.msra.mxu0 0.0
    %1008 = vmatprep.subr.mxu0 0.0
    %1009 = vmatpush1.msra.mxu0 0.0
    %1010 = vmatprep.subr.mxu0 0.0
    %1011 = vmatpush1.msra.mxu0 0.0
    %1012 = vmatprep.subr.mxu0 0.0
    %1013 = vmatpush1.msra.mxu0 0.0
    %1014 = vmatprep.subr.mxu0 0.0
    %1015 = vmatpush1.msra.mxu0 0.0
    %1016 = vmatprep.subr.mxu0 0.0
    %1017 = vmatpush1.msra.mxu0 0.0
    %1018 = vmatprep.subr.mxu0 0.0
    %1019 = vmatpush1.msra.mxu0 0.0
    %1020 = vmatprep.subr.mxu0 0.0
    %1021 = vmatpush1.msra.mxu0 0.0
    %1022 = vmatprep.subr.mxu0 0.0
    %1023 = vmatpush1.msra.mxu0 0.0
    %1024 = vmatprep.subr.mxu0 0.0
    %1025 = vmatpush1.msra.mxu0 0.0
    %1026 = vmatprep.subr.mxu0 0.0
    %1027 = vmatpush1.msra.mxu0 0.0
    %1028 = vmatprep.subr.mxu0 0.0
    %1029 = vmatpush1.msra.mxu0 0.0
    %1030 = vmatprep.subr.mxu0 0.0
    %1031 = vmatpush1.msra.mxu0 0.0
    %1032 = vmatprep.subr.mxu0 0.0
    %1033 = vmatpush1.msra.mxu0 0.0
    %1034 = vmatprep.subr.mxu0 0.0
    %1035 = vmatpush1.msra.mxu0 0.0
    %1036 = vmatprep.subr.mxu0 0.0
    %1037 = vmatpush1.msra.mxu0 0.0
    %1038 = vmatprep.subr.mxu0 0.0
    %1039 = vmatpush1.msra.mxu0 0.0
    %1040 = vmatprep.subr.mxu0 0.0
    %1041 = vmatpush1.msra.mxu0 0.0
    %1042 = vmatprep.subr.mxu0 0.0
    %1043 = vmatpush1.msra.mxu0 0.0
    %1044 = vmatprep.subr.mxu0 0.0
    %1045 = vmatpush1.msra.mxu0 0.0
    %1046 = vmatprep.mubr.f32.mxu0 0.0
    %1047 = vmatmul.mubr.f32.gmra.mrb[0].mxu0 %v980
    %v1048 = vpop.f32.mrb[0].mxu0
    %v1049 = vadd.f32 0.0, %v1048
    %v1050 = vpop.f32.mrb[0].mxu0
    %1051 = vdwg.mxu0
    %1053 = vrot.lane.b32.xlu0 %v719, 32
    %v1054 = vpop.permute.xlu0 %1053
    %1057 = vrot.lane.b32.xlu0 %v884, 64
    %v1058 = vpop.permute.xlu0 %1057
    %1061 = vrot.lane.b32.xlu0 %v1049, 96
    %v1062 = vpop.permute.xlu0 %1061
    %v1064 = vsel %vm394, %v553, %v1054
    %vm1065 = vcmask 523264
    %v1066 = vsel %vm1065, %v1064, %v1058
    %vm1067 = vcmask 785408
    %v1068 = vsel %vm1067, %v1066, %v1062
    %v1069 = vmul.f32 %v308, 0.17677669
    %v1071 = vsel %vm394, %v1069, 0
    %v1074 = vsel %vm394, %v310, 0
    %1076 = vmatprep.subr.mxu0 0.0
    %1077 = vmatpush1.xpose.msra.mxu0 %v1074
    %1078 = vmatprep.subr.mxu0 0.0
    %1079 = vmatpush1.xpose.msra.mxu0 0.0
    %1080 = vmatprep.subr.mxu0 0.0
    %1081 = vmatpush1.xpose.msra.mxu0 0.0
    %1082 = vmatprep.subr.mxu0 0.0
    %1083 = vmatpush1.xpose.msra.mxu0 0.0
    %1084 = vmatprep.subr.mxu0 0.0
    %1085 = vmatpush1.xpose.msra.mxu0 0.0
    %1086 = vmatprep.subr.mxu0 0.0
    %1087 = vmatpush1.xpose.msra.mxu0 0.0
    %1088 = vmatprep.subr.mxu0 0.0
    %1089 = vmatpush1.xpose.msra.mxu0 0.0
    %1090 = vmatprep.subr.mxu0 0.0
    %1091 = vmatpush1.xpose.msra.mxu0 0.0
    %1092 = vmatprep.subr.mxu0 0.0
    %1093 = vmatpush1.xpose.msra.mxu0 0.0
    %1094 = vmatprep.subr.mxu0 0.0
    %1095 = vmatpush1.xpose.msra.mxu0 0.0
    %1096 = vmatprep.subr.mxu0 0.0
    %1097 = vmatpush1.xpose.msra.mxu0 0.0
    %1098 = vmatprep.subr.mxu0 0.0
    %1099 = vmatpush1.xpose.msra.mxu0 0.0
    %1100 = vmatprep.subr.mxu0 0.0
    %1101 = vmatpush1.xpose.msra.mxu0 0.0
    %1102 = vmatprep.subr.mxu0 0.0
    %1103 = vmatpush1.xpose.msra.mxu0 0.0
    %1104 = vmatprep.subr.mxu0 0.0
    %1105 = vmatpush1.xpose.msra.mxu0 0.0
    %1106 = vmatprep.subr.mxu0 0.0
    %1107 = vmatpush1.xpose.msra.mxu0 0.0
    %1108 = vmatprep.subr.mxu0 0.0
    %1109 = vmatpush1.xpose.msra.mxu0 0.0
    %1110 = vmatprep.subr.mxu0 0.0
    %1111 = vmatpush1.xpose.msra.mxu0 0.0
    %1112 = vmatprep.subr.mxu0 0.0
    %1113 = vmatpush1.xpose.msra.mxu0 0.0
    %1114 = vmatprep.subr.mxu0 0.0
    %1115 = vmatpush1.xpose.msra.mxu0 0.0
    %1116 = vmatprep.subr.mxu0 0.0
    %1117 = vmatpush1.xpose.msra.mxu0 0.0
    %1118 = vmatprep.subr.mxu0 0.0
    %1119 = vmatpush1.xpose.msra.mxu0 0.0
    %1120 = vmatprep.subr.mxu0 0.0
    %1121 = vmatpush1.xpose.msra.mxu0 0.0
    %1122 = vmatprep.subr.mxu0 0.0
    %1123 = vmatpush1.xpose.msra.mxu0 0.0
    %1124 = vmatprep.subr.mxu0 0.0
    %1125 = vmatpush1.xpose.msra.mxu0 0.0
    %1126 = vmatprep.subr.mxu0 0.0
    %1127 = vmatpush1.xpose.msra.mxu0 0.0
    %1128 = vmatprep.subr.mxu0 0.0
    %1129 = vmatpush1.xpose.msra.mxu0 0.0
    %1130 = vmatprep.subr.mxu0 0.0
    %1131 = vmatpush1.xpose.msra.mxu0 0.0
    %1132 = vmatprep.subr.mxu0 0.0
    %1133 = vmatpush1.xpose.msra.mxu0 0.0
    %1134 = vmatprep.subr.mxu0 0.0
    %1135 = vmatpush1.xpose.msra.mxu0 0.0
    %1136 = vmatprep.subr.mxu0 0.0
    %1137 = vmatpush1.xpose.msra.mxu0 0.0
    %1138 = vmatprep.subr.mxu0 0.0
    %1139 = vmatpush1.xpose.msra.mxu0 0.0
    %1140 = vmatprep.mubr.f32.mxu0 0.0
    %1141 = vmatmul.mubr.f32.gmra.mrb[0].mxu0 %v1071
    %v1142 = vpop.f32.mrb[0].mxu0
    %v1143 = vadd.f32 %v392, %v1142
    %v1144 = vpop.f32.mrb[0].mxu0
    %1145 = vdwg.mxu0
    %v1146 = vsel %vm471, %v1143, -inf
    %1147 = vmax.xlane.f32.xlu0 %v1146
    %v1148 = vpop.xlane.xlu0 %1147
    %v1149 = vsub.f32 %v1143, %v1148
    %v1150 = vmul.f32 %v1149, 1.442695
    %v1151 = vpow.pop %v1150
    %v1152 = vsel %vm471, %v1151, 0.0
    %1153 = vadd.xlane.f32.xlu0 %v1152
    %v1154 = vpop.xlane.xlu0 %1153
    %v1155 = vrcp.pop %v1154
    %v1156 = vmul.f32 %v1151, %v1155
    %v1158 = vsel %vm471, %v1156, 0
    %1160 = vmatprep.subr.mxu0 0.0
    %1161 = vmatpush1.msra.mxu0 %v384
    %1162 = vmatprep.subr.mxu0 0.0
    %1163 = vmatpush1.msra.mxu0 0.0
    %1164 = vmatprep.subr.mxu0 0.0
    %1165 = vmatpush1.msra.mxu0 0.0
    %1166 = vmatprep.subr.mxu0 0.0
    %1167 = vmatpush1.msra.mxu0 0.0
    %1168 = vmatprep.subr.mxu0 0.0
    %1169 = vmatpush1.msra.mxu0 0.0
    %1170 = vmatprep.subr.mxu0 0.0
    %1171 = vmatpush1.msra.mxu0 0.0
    %1172 = vmatprep.subr.mxu0 0.0
    %1173 = vmatpush1.msra.mxu0 0.0
    %1174 = vmatprep.subr.mxu0 0.0
    %1175 = vmatpush1.msra.mxu0 0.0
    %1176 = vmatprep.subr.mxu0 0.0
    %1177 = vmatpush1.msra.mxu0 0.0
    %1178 = vmatprep.subr.mxu0 0.0
    %1179 = vmatpush1.msra.mxu0 0.0
    %1180 = vmatprep.subr.mxu0 0.0
    %1181 = vmatpush1.msra.mxu0 0.0
    %1182 = vmatprep.subr.mxu0 0.0
    %1183 = vmatpush1.msra.mxu0 0.0
    %1184 = vmatprep.subr.mxu0 0.0
    %1185 = vmatpush1.msra.mxu0 0.0
    %1186 = vmatprep.subr.mxu0 0.0
    %1187 = vmatpush1.msra.mxu0 0.0
    %1188 = vmatprep.subr.mxu0 0.0
    %1189 = vmatpush1.msra.mxu0 0.0
    %1190 = vmatprep.subr.mxu0 0.0
    %1191 = vmatpush1.msra.mxu0 0.0
    %1192 = vmatprep.subr.mxu0 0.0
    %1193 = vmatpush1.msra.mxu0 0.0
    %1194 = vmatprep.subr.mxu0 0.0
    %1195 = vmatpush1.msra.mxu0 0.0
    %1196 = vmatprep.subr.mxu0 0.0
    %1197 = vmatpush1.msra.mxu0 0.0
    %1198 = vmatprep.subr.mxu0 0.0
    %1199 = vmatpush1.msra.mxu0 0.0
    %1200 = vmatprep.subr.mxu0 0.0
    %1201 = vmatpush1.msra.mxu0 0.0
    %1202 = vmatprep.subr.mxu0 0.0
    %1203 = vmatpush1.msra.mxu0 0.0
    %1204 = vmatprep.subr.mxu0 0.0
    %1205 = vmatpush1.msra.mxu0 0.0
    %1206 = vmatprep.subr.mxu0 0.0
    %1207 = vmatpush1.msra.mxu0 0.0
    %1208 = vmatprep.subr.mxu0 0.0
    %1209 = vmatpush1.msra.mxu0 0.0
    %1210 = vmatprep.subr.mxu0 0.0
    %1211 = vmatpush1.msra.mxu0 0.0
    %1212 = vmatprep.subr.mxu0 0.0
    %1213 = vmatpush1.msra.mxu0 0.0
    %1214 = vmatprep.subr.mxu0 0.0
    %1215 = vmatpush1.msra.mxu0 0.0
    %1216 = vmatprep.subr.mxu0 0.0
    %1217 = vmatpush1.msra.mxu0 0.0
    %1218 = vmatprep.subr.mxu0 0.0
    %1219 = vmatpush1.msra.mxu0 0.0
    %1220 = vmatprep.subr.mxu0 0.0
    %1221 = vmatpush1.msra.mxu0 0.0
    %1222 = vmatprep.subr.mxu0 0.0
    %1223 = vmatpush1.msra.mxu0 0.0
    %1224 = vmatprep.mubr.f32.mxu0 0.0
    %1225 = vmatmul.mubr.f32.gmra.mrb[0].mxu0 %v1158
    %v1226 = vpop.f32.mrb[0].mxu0
    %v1227 = vadd.f32 0.0, %v1226
    %v1228 = vpop.f32.mrb[0].mxu0
    %1229 = vdwg.mxu0
    %1230 = vrot.lane.b32.xlu0 %v1069, 96
    %v1231 = vpop.permute.xlu0 %1230
    %1232 = vrot.lane.b32.xlu0 %v310, 96
    %v1233 = vpop.permute.xlu0 %1232
    %v1234 = vsel %vm394, %v1231, 0
    %v1236 = vsel %vm394, %v1233, 0
    %1238 = vmatprep.subr.mxu0 0.0
    %1239 = vmatpush1.xpose.msra.mxu0 %v1236
    %1240 = vmatprep.subr.mxu0 0.0
    %1241 = vmatpush1.xpose.msra.mxu0 0.0
    %1242 = vmatprep.subr.mxu0 0.0
    %1243 = vmatpush1.xpose.msra.mxu0 0.0
    %1244 = vmatprep.subr.mxu0 0.0
    %1245 = vmatpush1.xpose.msra.mxu0 0.0
    %1246 = vmatprep.subr.mxu0 0.0
    %1247 = vmatpush1.xpose.msra.mxu0 0.0
    %1248 = vmatprep.subr.mxu0 0.0
    %1249 = vmatpush1.xpose.msra.mxu0 0.0
    %1250 = vmatprep.subr.mxu0 0.0
    %1251 = vmatpush1.xpose.msra.mxu0 0.0
    %1252 = vmatprep.subr.mxu0 0.0
    %1253 = vmatpush1.xpose.msra.mxu0 0.0
    %1254 = vmatprep.subr.mxu0 0.0
    %1255 = vmatpush1.xpose.msra.mxu0 0.0
    %1256 = vmatprep.subr.mxu0 0.0
    %1257 = vmatpush1.xpose.msra.mxu0 0.0
    %1258 = vmatprep.subr.mxu0 0.0
    %1259 = vmatpush1.xpose.msra.mxu0 0.0
    %1260 = vmatprep.subr.mxu0 0.0
    %1261 = vmatpush1.xpose.msra.mxu0 0.0
    %1262 = vmatprep.subr.mxu0 0.0
    %1263 = vmatpush1.xpose.msra.mxu0 0.0
    %1264 = vmatprep.subr.mxu0 0.0
    %1265 = vmatpush1.xpose.msra.mxu0 0.0
    %1266 = vmatprep.subr.mxu0 0.0
    %1267 = vmatpush1.xpose.msra.mxu0 0.0
    %1268 = vmatprep.subr.mxu0 0.0
    %1269 = vmatpush1.xpose.msra.mxu0 0.0
    %1270 = vmatprep.subr.mxu0 0.0
    %1271 = vmatpush1.xpose.msra.mxu0 0.0
    %1272 = vmatprep.subr.mxu0 0.0
    %1273 = vmatpush1.xpose.msra.mxu0 0.0
    %1274 = vmatprep.subr.mxu0 0.0
    %1275 = vmatpush1.xpose.msra.mxu0 0.0
    %1276 = vmatprep.subr.mxu0 0.0
    %1277 = vmatpush1.xpose.msra.mxu0 0.0
    %1278 = vmatprep.subr.mxu0 0.0
    %1279 = vmatpush1.xpose.msra.mxu0 0.0
    %1280 = vmatprep.subr.mxu0 0.0
    %1281 = vmatpush1.xpose.msra.mxu0 0.0
    %1282 = vmatprep.subr.mxu0 0.0
    %1283 = vmatpush1.xpose.msra.mxu0 0.0
    %1284 = vmatprep.subr.mxu0 0.0
    %1285 = vmatpush1.xpose.msra.mxu0 0.0
    %1286 = vmatprep.subr.mxu0 0.0
    %1287 = vmatpush1.xpose.msra.mxu0 0.0
    %1288 = vmatprep.subr.mxu0 0.0
    %1289 = vmatpush1.xpose.msra.mxu0 0.0
    %1290 = vmatprep.subr.mxu0 0.0
    %1291 = vmatpush1.xpose.msra.mxu0 0.0
    %1292 = vmatprep.subr.mxu0 0.0
    %1293 = vmatpush1.xpose.msra.mxu0 0.0
    %1294 = vmatprep.subr.mxu0 0.0
    %1295 = vmatpush1.xpose.msra.mxu0 0.0
    %1296 = vmatprep.subr.mxu0 0.0
    %1297 = vmatpush1.xpose.msra.mxu0 0.0
    %1298 = vmatprep.subr.mxu0 0.0
    %1299 = vmatpush1.xpose.msra.mxu0 0.0
    %1300 = vmatprep.subr.mxu0 0.0
    %1301 = vmatpush1.xpose.msra.mxu0 0.0
    %1302 = vmatprep.mubr.f32.mxu0 0.0
    %1303 = vmatmul.mubr.f32.gmra.mrb[0].mxu0 %v1234
    %v1304 = vpop.f32.mrb[0].mxu0
    %v1305 = vadd.f32 %v392, %v1304
    %v1306 = vpop.f32.mrb[0].mxu0
    %1307 = vdwg.mxu0
    %v1308 = vsel %vm471, %v1305, -inf
    %1309 = vmax.xlane.f32.xlu0 %v1308
    %v1310 = vpop.xlane.xlu0 %1309
    %v1311 = vsub.f32 %v1305, %v1310
    %v1312 = vmul.f32 %v1311, 1.442695
    %v1313 = vpow.pop %v1312
    %v1314 = vsel %vm471, %v1313, 0.0
    %1315 = vadd.xlane.f32.xlu0 %v1314
    %v1316 = vpop.xlane.xlu0 %1315
    %v1317 = vrcp.pop %v1316
    %v1318 = vmul.f32 %v1313, %v1317
    %1320 = vrot.lane.b32.xlu0 %v384, 96
    %v1321 = vpop.permute.xlu0 %1320
    %v1324 = vsel %vm471, %v1318, 0
    %1326 = vmatprep.subr.mxu0 0.0
    %1327 = vmatpush1.msra.mxu0 %v1321
    %1328 = vmatprep.subr.mxu0 0.0
    %1329 = vmatpush1.msra.mxu0 0.0
    %1330 = vmatprep.subr.mxu0 0.0
    %1331 = vmatpush1.msra.mxu0 0.0
    %1332 = vmatprep.subr.mxu0 0.0
    %1333 = vmatpush1.msra.mxu0 0.0
    %1334 = vmatprep.subr.mxu0 0.0
    %1335 = vmatpush1.msra.mxu0 0.0
    %1336 = vmatprep.subr.mxu0 0.0
    %1337 = vmatpush1.msra.mxu0 0.0
    %1338 = vmatprep.subr.mxu0 0.0
    %1339 = vmatpush1.msra.mxu0 0.0
    %1340 = vmatprep.subr.mxu0 0.0
    %1341 = vmatpush1.msra.mxu0 0.0
    %1342 = vmatprep.subr.mxu0 0.0
    %1343 = vmatpush1.msra.mxu0 0.0
    %1344 = vmatprep.subr.mxu0 0.0
    %1345 = vmatpush1.msra.mxu0 0.0
    %1346 = vmatprep.subr.mxu0 0.0
    %1347 = vmatpush1.msra.mxu0 0.0
    %1348 = vmatprep.subr.mxu0 0.0
    %1349 = vmatpush1.msra.mxu0 0.0
    %1350 = vmatprep.subr.mxu0 0.0
    %1351 = vmatpush1.msra.mxu0 0.0
    %1352 = vmatprep.subr.mxu0 0.0
    %1353 = vmatpush1.msra.mxu0 0.0
    %1354 = vmatprep.subr.mxu0 0.0
    %1355 = vmatpush1.msra.mxu0 0.0
    %1356 = vmatprep.subr.mxu0 0.0
    %1357 = vmatpush1.msra.mxu0 0.0
    %1358 = vmatprep.subr.mxu0 0.0
    %1359 = vmatpush1.msra.mxu0 0.0
    %1360 = vmatprep.subr.mxu0 0.0
    %1361 = vmatpush1.msra.mxu0 0.0
    %1362 = vmatprep.subr.mxu0 0.0
    %1363 = vmatpush1.msra.mxu0 0.0
    %1364 = vmatprep.subr.mxu0 0.0
    %1365 = vmatpush1.msra.mxu0 0.0
    %1366 = vmatprep.subr.mxu0 0.0
    %1367 = vmatpush1.msra.mxu0 0.0
    %1368 = vmatprep.subr.mxu0 0.0
    %1369 = vmatpush1.msra.mxu0 0.0
    %1370 = vmatprep.subr.mxu0 0.0
    %1371 = vmatpush1.msra.mxu0 0.0
    %1372 = vmatprep.subr.mxu0 0.0
    %1373 = vmatpush1.msra.mxu0 0.0
    %1374 = vmatprep.subr.mxu0 0.0
    %1375 = vmatpush1.msra.mxu0 0.0
    %1376 = vmatprep.subr.mxu0 0.0
    %1377 = vmatpush1.msra.mxu0 0.0
    %1378 = vmatprep.subr.mxu0 0.0
    %1379 = vmatpush1.msra.mxu0 0.0
    %1380 = vmatprep.subr.mxu0 0.0
    %1381 = vmatpush1.msra.mxu0 0.0
    %1382 = vmatprep.subr.mxu0 0.0
    %1383 = vmatpush1.msra.mxu0 0.0
    %1384 = vmatprep.subr.mxu0 0.0
    %1385 = vmatpush1.msra.mxu0 0.0
    %1386 = vmatprep.subr.mxu0 0.0
    %1387 = vmatpush1.msra.mxu0 0.0
    %1388 = vmatprep.subr.mxu0 0.0
    %1389 = vmatpush1.msra.mxu0 0.0
    %1390 = vmatprep.mubr.f32.mxu0 0.0
    %1391 = vmatmul.mubr.f32.gmra.mrb[0].mxu0 %v1324
    %v1392 = vpop.f32.mrb[0].mxu0
    %v1393 = vadd.f32 0.0, %v1392
    %v1394 = vpop.f32.mrb[0].mxu0
    %1395 = vdwg.mxu0
    %1396 = vrot.lane.b32.xlu0 %v1069, 64
    %v1397 = vpop.permute.xlu0 %1396
    %1398 = vrot.lane.b32.xlu0 %v310, 64
    %v1399 = vpop.permute.xlu0 %1398
    %v1400 = vsel %vm394, %v1397, 0
    %v1402 = vsel %vm394, %v1399, 0
    %1404 = vmatprep.subr.mxu0 0.0
    %1405 = vmatpush1.xpose.msra.mxu0 %v1402
    %1406 = vmatprep.subr.mxu0 0.0
    %1407 = vmatpush1.xpose.msra.mxu0 0.0
    %1408 = vmatprep.subr.mxu0 0.0
    %1409 = vmatpush1.xpose.msra.mxu0 0.0
    %1410 = vmatprep.subr.mxu0 0.0
    %1411 = vmatpush1.xpose.msra.mxu0 0.0
    %1412 = vmatprep.subr.mxu0 0.0
    %1413 = vmatpush1.xpose.msra.mxu0 0.0
    %1414 = vmatprep.subr.mxu0 0.0
    %1415 = vmatpush1.xpose.msra.mxu0 0.0
    %1416 = vmatprep.subr.mxu0 0.0
    %1417 = vmatpush1.xpose.msra.mxu0 0.0
    %1418 = vmatprep.subr.mxu0 0.0
    %1419 = vmatpush1.xpose.msra.mxu0 0.0
    %1420 = vmatprep.subr.mxu0 0.0
    %1421 = vmatpush1.xpose.msra.mxu0 0.0
    %1422 = vmatprep.subr.mxu0 0.0
    %1423 = vmatpush1.xpose.msra.mxu0 0.0
    %1424 = vmatprep.subr.mxu0 0.0
    %1425 = vmatpush1.xpose.msra.mxu0 0.0
    %1426 = vmatprep.subr.mxu0 0.0
    %1427 = vmatpush1.xpose.msra.mxu0 0.0
    %1428 = vmatprep.subr.mxu0 0.0
    %1429 = vmatpush1.xpose.msra.mxu0 0.0
    %1430 = vmatprep.subr.mxu0 0.0
    %1431 = vmatpush1.xpose.msra.mxu0 0.0
    %1432 = vmatprep.subr.mxu0 0.0
    %1433 = vmatpush1.xpose.msra.mxu0 0.0
    %1434 = vmatprep.subr.mxu0 0.0
    %1435 = vmatpush1.xpose.msra.mxu0 0.0
    %1436 = vmatprep.subr.mxu0 0.0
    %1437 = vmatpush1.xpose.msra.mxu0 0.0
    %1438 = vmatprep.subr.mxu0 0.0
    %1439 = vmatpush1.xpose.msra.mxu0 0.0
    %1440 = vmatprep.subr.mxu0 0.0
    %1441 = vmatpush1.xpose.msra.mxu0 0.0
    %1442 = vmatprep.subr.mxu0 0.0
    %1443 = vmatpush1.xpose.msra.mxu0 0.0
    %1444 = vmatprep.subr.mxu0 0.0
    %1445 = vmatpush1.xpose.msra.mxu0 0.0
    %1446 = vmatprep.subr.mxu0 0.0
    %1447 = vmatpush1.xpose.msra.mxu0 0.0
    %1448 = vmatprep.subr.mxu0 0.0
    %1449 = vmatpush1.xpose.msra.mxu0 0.0
    %1450 = vmatprep.subr.mxu0 0.0
    %1451 = vmatpush1.xpose.msra.mxu0 0.0
    %1452 = vmatprep.subr.mxu0 0.0
    %1453 = vmatpush1.xpose.msra.mxu0 0.0
    %1454 = vmatprep.subr.mxu0 0.0
    %1455 = vmatpush1.xpose.msra.mxu0 0.0
    %1456 = vmatprep.subr.mxu0 0.0
    %1457 = vmatpush1.xpose.msra.mxu0 0.0
    %1458 = vmatprep.subr.mxu0 0.0
    %1459 = vmatpush1.xpose.msra.mxu0 0.0
    %1460 = vmatprep.subr.mxu0 0.0
    %1461 = vmatpush1.xpose.msra.mxu0 0.0
    %1462 = vmatprep.subr.mxu0 0.0
    %1463 = vmatpush1.xpose.msra.mxu0 0.0
    %1464 = vmatprep.subr.mxu0 0.0
    %1465 = vmatpush1.xpose.msra.mxu0 0.0
    %1466 = vmatprep.subr.mxu0 0.0
    %1467 = vmatpush1.xpose.msra.mxu0 0.0
    %1468 = vmatprep.mubr.f32.mxu0 0.0
    %1469 = vmatmul.mubr.f32.gmra.mrb[0].mxu0 %v1400
    %v1470 = vpop.f32.mrb[0].mxu0
    %v1471 = vadd.f32 %v392, %v1470
    %v1472 = vpop.f32.mrb[0].mxu0
    %1473 = vdwg.mxu0
    %v1474 = vsel %vm471, %v1471, -inf
    %1475 = vmax.xlane.f32.xlu0 %v1474
    %v1476 = vpop.xlane.xlu0 %1475
    %v1477 = vsub.f32 %v1471, %v1476
    %v1478 = vmul.f32 %v1477, 1.442695
    %v1479 = vpow.pop %v1478
    %v1480 = vsel %vm471, %v1479, 0.0
    %1481 = vadd.xlane.f32.xlu0 %v1480
    %v1482 = vpop.xlane.xlu0 %1481
    %v1483 = vrcp.pop %v1482
    %v1484 = vmul.f32 %v1479, %v1483
    %1485 = vrot.lane.b32.xlu0 %v384, 64
    %v1486 = vpop.permute.xlu0 %1485
    %v1489 = vsel %vm471, %v1484, 0
    %1491 = vmatprep.subr.mxu0 0.0
    %1492 = vmatpush1.msra.mxu0 %v1486
    %1493 = vmatprep.subr.mxu0 0.0
    %1494 = vmatpush1.msra.mxu0 0.0
    %1495 = vmatprep.subr.mxu0 0.0
    %1496 = vmatpush1.msra.mxu0 0.0
    %1497 = vmatprep.subr.mxu0 0.0
    %1498 = vmatpush1.msra.mxu0 0.0
    %1499 = vmatprep.subr.mxu0 0.0
    %1500 = vmatpush1.msra.mxu0 0.0
    %1501 = vmatprep.subr.mxu0 0.0
    %1502 = vmatpush1.msra.mxu0 0.0
    %1503 = vmatprep.subr.mxu0 0.0
    %1504 = vmatpush1.msra.mxu0 0.0
    %1505 = vmatprep.subr.mxu0 0.0
    %1506 = vmatpush1.msra.mxu0 0.0
    %1507 = vmatprep.subr.mxu0 0.0
    %1508 = vmatpush1.msra.mxu0 0.0
    %1509 = vmatprep.subr.mxu0 0.0
    %1510 = vmatpush1.msra.mxu0 0.0
    %1511 = vmatprep.subr.mxu0 0.0
    %1512 = vmatpush1.msra.mxu0 0.0
    %1513 = vmatprep.subr.mxu0 0.0
    %1514 = vmatpush1.msra.mxu0 0.0
    %1515 = vmatprep.subr.mxu0 0.0
    %1516 = vmatpush1.msra.mxu0 0.0
    %1517 = vmatprep.subr.mxu0 0.0
    %1518 = vmatpush1.msra.mxu0 0.0
    %1519 = vmatprep.subr.mxu0 0.0
    %1520 = vmatpush1.msra.mxu0 0.0
    %1521 = vmatprep.subr.mxu0 0.0
    %1522 = vmatpush1.msra.mxu0 0.0
    %1523 = vmatprep.subr.mxu0 0.0
    %1524 = vmatpush1.msra.mxu0 0.0
    %1525 = vmatprep.subr.mxu0 0.0
    %1526 = vmatpush1.msra.mxu0 0.0
    %1527 = vmatprep.subr.mxu0 0.0
    %1528 = vmatpush1.msra.mxu0 0.0
    %1529 = vmatprep.subr.mxu0 0.0
    %1530 = vmatpush1.msra.mxu0 0.0
    %1531 = vmatprep.subr.mxu0 0.0
    %1532 = vmatpush1.msra.mxu0 0.0
    %1533 = vmatprep.subr.mxu0 0.0
    %1534 = vmatpush1.msra.mxu0 0.0
    %1535 = vmatprep.subr.mxu0 0.0
    %1536 = vmatpush1.msra.mxu0 0.0
    %1537 = vmatprep.subr.mxu0 0.0
    %1538 = vmatpush1.msra.mxu0 0.0
    %1539 = vmatprep.subr.mxu0 0.0
    %1540 = vmatpush1.msra.mxu0 0.0
    %1541 = vmatprep.subr.mxu0 0.0
    %1542 = vmatpush1.msra.mxu0 0.0
    %1543 = vmatprep.subr.mxu0 0.0
    %1544 = vmatpush1.msra.mxu0 0.0
    %1545 = vmatprep.subr.mxu0 0.0
    %1546 = vmatpush1.msra.mxu0 0.0
    %1547 = vmatprep.subr.mxu0 0.0
    %1548 = vmatpush1.msra.mxu0 0.0
    %1549 = vmatprep.subr.mxu0 0.0
    %1550 = vmatpush1.msra.mxu0 0.0
    %1551 = vmatprep.subr.mxu0 0.0
    %1552 = vmatpush1.msra.mxu0 0.0
    %1553 = vmatprep.subr.mxu0 0.0
    %1554 = vmatpush1.msra.mxu0 0.0
    %1555 = vmatprep.mubr.f32.mxu0 0.0
    %1556 = vmatmul.mubr.f32.gmra.mrb[0].mxu0 %v1489
    %v1557 = vpop.f32.mrb[0].mxu0
    %v1558 = vadd.f32 0.0, %v1557
    %v1559 = vpop.f32.mrb[0].mxu0
    %1560 = vdwg.mxu0
    %1561 = vrot.lane.b32.xlu0 %v1069, 32
    %v1562 = vpop.permute.xlu0 %1561
    %1563 = vrot.lane.b32.xlu0 %v310, 32
    %v1564 = vpop.permute.xlu0 %1563
    %v1565 = vsel %vm394, %v1562, 0
    %v1567 = vsel %vm394, %v1564, 0
    %1569 = vmatprep.subr.mxu0 0.0
    %1570 = vmatpush1.xpose.msra.mxu0 %v1567
    %1571 = vmatprep.subr.mxu0 0.0
    %1572 = vmatpush1.xpose.msra.mxu0 0.0
    %1573 = vmatprep.subr.mxu0 0.0
    %1574 = vmatpush1.xpose.msra.mxu0 0.0
    %1575 = vmatprep.subr.mxu0 0.0
    %1576 = vmatpush1.xpose.msra.mxu0 0.0
    %1577 = vmatprep.subr.mxu0 0.0
    %1578 = vmatpush1.xpose.msra.mxu0 0.0
    %1579 = vmatprep.subr.mxu0 0.0
    %1580 = vmatpush1.xpose.msra.mxu0 0.0
    %1581 = vmatprep.subr.mxu0 0.0
    %1582 = vmatpush1.xpose.msra.mxu0 0.0
    %1583 = vmatprep.subr.mxu0 0.0
    %1584 = vmatpush1.xpose.msra.mxu0 0.0
    %1585 = vmatprep.subr.mxu0 0.0
    %1586 = vmatpush1.xpose.msra.mxu0 0.0
    %1587 = vmatprep.subr.mxu0 0.0
    %1588 = vmatpush1.xpose.msra.mxu0 0.0
    %1589 = vmatprep.subr.mxu0 0.0
    %1590 = vmatpush1.xpose.msra.mxu0 0.0
    %1591 = vmatprep.subr.mxu0 0.0
    %1592 = vmatpush1.xpose.msra.mxu0 0.0
    %1593 = vmatprep.subr.mxu0 0.0
    %1594 = vmatpush1.xpose.msra.mxu0 0.0
    %1595 = vmatprep.subr.mxu0 0.0
    %1596 = vmatpush1.xpose.msra.mxu0 0.0
    %1597 = vmatprep.subr.mxu0 0.0
    %1598 = vmatpush1.xpose.msra.mxu0 0.0
    %1599 = vmatprep.subr.mxu0 0.0
    %1600 = vmatpush1.xpose.msra.mxu0 0.0
    %1601 = vmatprep.subr.mxu0 0.0
    %1602 = vmatpush1.xpose.msra.mxu0 0.0
    %1603 = vmatprep.subr.mxu0 0.0
    %1604 = vmatpush1.xpose.msra.mxu0 0.0
    %1605 = vmatprep.subr.mxu0 0.0
    %1606 = vmatpush1.xpose.msra.mxu0 0.0
    %1607 = vmatprep.subr.mxu0 0.0
    %1608 = vmatpush1.xpose.msra.mxu0 0.0
    %1609 = vmatprep.subr.mxu0 0.0
    %1610 = vmatpush1.xpose.msra.mxu0 0.0
    %1611 = vmatprep.subr.mxu0 0.0
    %1612 = vmatpush1.xpose.msra.mxu0 0.0
    %1613 = vmatprep.subr.mxu0 0.0
    %1614 = vmatpush1.xpose.msra.mxu0 0.0
    %1615 = vmatprep.subr.mxu0 0.0
    %1616 = vmatpush1.xpose.msra.mxu0 0.0
    %1617 = vmatprep.subr.mxu0 0.0
    %1618 = vmatpush1.xpose.msra.mxu0 0.0
    %1619 = vmatprep.subr.mxu0 0.0
    %1620 = vmatpush1.xpose.msra.mxu0 0.0
    %1621 = vmatprep.subr.mxu0 0.0
    %1622 = vmatpush1.xpose.msra.mxu0 0.0
    %1623 = vmatprep.subr.mxu0 0.0
    %1624 = vmatpush1.xpose.msra.mxu0 0.0
    %1625 = vmatprep.subr.mxu0 0.0
    %1626 = vmatpush1.xpose.msra.mxu0 0.0
    %1627 = vmatprep.subr.mxu0 0.0
    %1628 = vmatpush1.xpose.msra.mxu0 0.0
    %1629 = vmatprep.subr.mxu0 0.0
    %1630 = vmatpush1.xpose.msra.mxu0 0.0
    %1631 = vmatprep.subr.mxu0 0.0
    %1632 = vmatpush1.xpose.msra.mxu0 0.0
    %1633 = vmatprep.mubr.f32.mxu0 0.0
    %1634 = vmatmul.mubr.f32.gmra.mrb[0].mxu0 %v1565
    %v1635 = vpop.f32.mrb[0].mxu0
    %v1636 = vadd.f32 %v392, %v1635
    %v1637 = vpop.f32.mrb[0].mxu0
    %1638 = vdwg.mxu0
    %v1639 = vsel %vm471, %v1636, -inf
    %1640 = vmax.xlane.f32.xlu0 %v1639
    %v1641 = vpop.xlane.xlu0 %1640
    %v1642 = vsub.f32 %v1636, %v1641
    %v1643 = vmul.f32 %v1642, 1.442695
    %v1644 = vpow.pop %v1643
    %v1645 = vsel %vm471, %v1644, 0.0
    %1646 = vadd.xlane.f32.xlu0 %v1645
    %v1647 = vpop.xlane.xlu0 %1646
    %v1648 = vrcp.pop %v1647
    %v1649 = vmul.f32 %v1644, %v1648
    %1650 = vrot.lane.b32.xlu0 %v384, 32
    %v1651 = vpop.permute.xlu0 %1650
    %v1654 = vsel %vm471, %v1649, 0
    %1656 = vmatprep.subr.mxu0 0.0
    %1657 = vmatpush1.msra.mxu0 %v1651
    %1658 = vmatprep.subr.mxu0 0.0
    %1659 = vmatpush1.msra.mxu0 0.0
    %1660 = vmatprep.subr.mxu0 0.0
    %1661 = vmatpush1.msra.mxu0 0.0
    %1662 = vmatprep.subr.mxu0 0.0
    %1663 = vmatpush1.msra.mxu0 0.0
    %1664 = vmatprep.subr.mxu0 0.0
    %1665 = vmatpush1.msra.mxu0 0.0
    %1666 = vmatprep.subr.mxu0 0.0
    %1667 = vmatpush1.msra.mxu0 0.0
    %1668 = vmatprep.subr.mxu0 0.0
    %1669 = vmatpush1.msra.mxu0 0.0
    %1670 = vmatprep.subr.mxu0 0.0
    %1671 = vmatpush1.msra.mxu0 0.0
    %1672 = vmatprep.subr.mxu0 0.0
    %1673 = vmatpush1.msra.mxu0 0.0
    %1674 = vmatprep.subr.mxu0 0.0
    %1675 = vmatpush1.msra.mxu0 0.0
    %1676 = vmatprep.subr.mxu0 0.0
    %1677 = vmatpush1.msra.mxu0 0.0
    %1678 = vmatprep.subr.mxu0 0.0
    %1679 = vmatpush1.msra.mxu0 0.0
    %1680 = vmatprep.subr.mxu0 0.0
    %1681 = vmatpush1.msra.mxu0 0.0
    %1682 = vmatprep.subr.mxu0 0.0
    %1683 = vmatpush1.msra.mxu0 0.0
    %1684 = vmatprep.subr.mxu0 0.0
    %1685 = vmatpush1.msra.mxu0 0.0
    %1686 = vmatprep.subr.mxu0 0.0
    %1687 = vmatpush1.msra.mxu0 0.0
    %1688 = vmatprep.subr.mxu0 0.0
    %1689 = vmatpush1.msra.mxu0 0.0
    %1690 = vmatprep.subr.mxu0 0.0
    %1691 = vmatpush1.msra.mxu0 0.0
    %1692 = vmatprep.subr.mxu0 0.0
    %1693 = vmatpush1.msra.mxu0 0.0
    %1694 = vmatprep.subr.mxu0 0.0
    %1695 = vmatpush1.msra.mxu0 0.0
    %1696 = vmatprep.subr.mxu0 0.0
    %1697 = vmatpush1.msra.mxu0 0.0
    %1698 = vmatprep.subr.mxu0 0.0
    %1699 = vmatpush1.msra.mxu0 0.0
    %1700 = vmatprep.subr.mxu0 0.0
    %1701 = vmatpush1.msra.mxu0 0.0
    %1702 = vmatprep.subr.mxu0 0.0
    %1703 = vmatpush1.msra.mxu0 0.0
    %1704 = vmatprep.subr.mxu0 0.0
    %1705 = vmatpush1.msra.mxu0 0.0
    %1706 = vmatprep.subr.mxu0 0.0
    %1707 = vmatpush1.msra.mxu0 0.0
    %1708 = vmatprep.subr.mxu0 0.0
    %1709 = vmatpush1.msra.mxu0 0.0
    %1710 = vmatprep.subr.mxu0 0.0
    %1711 = vmatpush1.msra.mxu0 0.0
    %1712 = vmatprep.subr.mxu0 0.0
    %1713 = vmatpush1.msra.mxu0 0.0
    %1714 = vmatprep.subr.mxu0 0.0
    %1715 = vmatpush1.msra.mxu0 0.0
    %1716 = vmatprep.subr.mxu0 0.0
    %1717 = vmatpush1.msra.mxu0 0.0
    %1718 = vmatprep.subr.mxu0 0.0
    %1719 = vmatpush1.msra.mxu0 0.0
    %1720 = vmatprep.mubr.f32.mxu0 0.0
    %1721 = vmatmul.mubr.f32.gmra.mrb[0].mxu0 %v1654
    %v1722 = vpop.f32.mrb[0].mxu0
    %v1723 = vadd.f32 0.0, %v1722
    %v1724 = vpop.f32.mrb[0].mxu0
    %1725 = vdwg.mxu0
    %1727 = vrot.lane.b32.xlu0 %v1393, 32
    %v1728 = vpop.permute.xlu0 %1727
    %1731 = vrot.lane.b32.xlu0 %v1558, 64
    %v1732 = vpop.permute.xlu0 %1731
    %1735 = vrot.lane.b32.xlu0 %v1723, 96
    %v1736 = vpop.permute.xlu0 %1735
    %v1738 = vsel %vm394, %v1227, %v1728
    %v1739 = vsel %vm1065, %v1738, %v1732
    %v1740 = vsel %vm1067, %v1739, %v1736
    %v1741 = vld [vmem:[#allocation2] sm:$0xff]
    %v1742 = vld [vmem:[#allocation2 + $0x8] sm:$0xff]
    %v1743 = vld [vmem:[#allocation2 + $0x10] sm:$0xff]
    %v1744 = vld [vmem:[#allocation2 + $0x18] sm:$0xff]
    %v1745 = vld [vmem:[#allocation2 + $0x20] sm:$0xff]
    %v1746 = vld [vmem:[#allocation2 + $0x28] sm:$0xff]
    %v1747 = vld [vmem:[#allocation2 + $0x30] sm:$0xff]
    %v1748 = vld [vmem:[#allocation2 + $0x38] sm:$0xff]
    %v1749 = vld [vmem:[#allocation2 + $0x40] sm:$0xff]
    %v1750 = vld [vmem:[#allocation2 + $0x48] sm:$0xff]
    %v1751 = vld [vmem:[#allocation2 + $0x50] sm:$0xff]
    %v1752 = vld [vmem:[#allocation2 + $0x58] sm:$0xff]
    %v1753 = vld [vmem:[#allocation2 + $0x60] sm:$0xff]
    %v1754 = vld [vmem:[#allocation2 + $0x68] sm:$0xff]
    %v1755 = vld [vmem:[#allocation2 + $0x70] sm:$0xff]
    %v1756 = vld [vmem:[#allocation2 + $0x78] sm:$0xff]
    %v1757 = vld [vmem:[%s7] sm:$0x1]
    %v1759 = vlaneseq
    %v1760 = vshrl.u32 %v1759, 7
    %v1761 = vsub.s32 0, %v1760
    %v1762 = vrot.slane %v1757, %v1761
    %1764 = vmatprep.subr.mxu0 0.0
    %1765 = vmatpush1.msra.mxu0 %v1741
    %1766 = vmatprep.subr.mxu0 0.0
    %1767 = vmatpush1.msra.mxu0 %v1742
    %1768 = vmatprep.subr.mxu0 0.0
    %1769 = vmatpush1.msra.mxu0 %v1743
    %1770 = vmatprep.subr.mxu0 0.0
    %1771 = vmatpush1.msra.mxu0 %v1744
    %1772 = vmatprep.subr.mxu0 0.0
    %1773 = vmatpush1.msra.mxu0 %v1745
    %1774 = vmatprep.subr.mxu0 0.0
    %1775 = vmatpush1.msra.mxu0 %v1746
    %1776 = vmatprep.subr.mxu0 0.0
    %1777 = vmatpush1.msra.mxu0 %v1747
    %1778 = vmatprep.subr.mxu0 0.0
    %1779 = vmatpush1.msra.mxu0 %v1748
    %1780 = vmatprep.subr.mxu0 0.0
    %1781 = vmatpush1.msra.mxu0 %v1749
    %1782 = vmatprep.subr.mxu0 0.0
    %1783 = vmatpush1.msra.mxu0 %v1750
    %1784 = vmatprep.subr.mxu0 0.0
    %1785 = vmatpush1.msra.mxu0 %v1751
    %1786 = vmatprep.subr.mxu0 0.0
    %1787 = vmatpush1.msra.mxu0 %v1752
    %1788 = vmatprep.subr.mxu0 0.0
    %1789 = vmatpush1.msra.mxu0 %v1753
    %1790 = vmatprep.subr.mxu0 0.0
    %1791 = vmatpush1.msra.mxu0 %v1754
    %1792 = vmatprep.subr.mxu0 0.0
    %1793 = vmatpush1.msra.mxu0 %v1755
    %1794 = vmatprep.subr.mxu0 0.0
    %1795 = vmatpush1.msra.mxu0 %v1756
    %1796 = vmatprep.subr.mxu0 0.0
    %1797 = vmatpush1.msra.mxu0 0.0
    %1798 = vmatprep.subr.mxu0 0.0
    %1799 = vmatpush1.msra.mxu0 0.0
    %1800 = vmatprep.subr.mxu0 0.0
    %1801 = vmatpush1.msra.mxu0 0.0
    %1802 = vmatprep.subr.mxu0 0.0
    %1803 = vmatpush1.msra.mxu0 0.0
    %1804 = vmatprep.subr.mxu0 0.0
    %1805 = vmatpush1.msra.mxu0 0.0
    %1806 = vmatprep.subr.mxu0 0.0
    %1807 = vmatpush1.msra.mxu0 0.0
    %1808 = vmatprep.subr.mxu0 0.0
    %1809 = vmatpush1.msra.mxu0 0.0
    %1810 = vmatprep.subr.mxu0 0.0
    %1811 = vmatpush1.msra.mxu0 0.0
    %1812 = vmatprep.subr.mxu0 0.0
    %1813 = vmatpush1.msra.mxu0 0.0
    %1814 = vmatprep.subr.mxu0 0.0
    %1815 = vmatpush1.msra.mxu0 0.0
    %1816 = vmatprep.subr.mxu0 0.0
    %1817 = vmatpush1.msra.mxu0 0.0
    %1818 = vmatprep.subr.mxu0 0.0
    %1819 = vmatpush1.msra.mxu0 0.0
    %1820 = vmatprep.subr.mxu0 0.0
    %1821 = vmatpush1.msra.mxu0 0.0
    %1822 = vmatprep.subr.mxu0 0.0
    %1823 = vmatpush1.msra.mxu0 0.0
    %1824 = vmatprep.subr.mxu0 0.0
    %1825 = vmatpush1.msra.mxu0 0.0
    %1826 = vmatprep.subr.mxu0 0.0
    %1827 = vmatpush1.msra.mxu0 0.0
    %1828 = vmatprep.mubr.f32.mxu0 0.0
    %1829 = vmatmul.mubr.f32.gmra.mrb[0].mxu0 %v1068
    %v1830 = vpop.f32.mrb[0].mxu0
    %v1831 = vadd.f32 %v1762, %v1830
    %v1832 = vpop.f32.mrb[0].mxu0
    %1833 = vmatprep.mubr.f32.mxu0 0.0
    %1834 = vmatmul.mubr.f32.gmra.mrb[0].mxu0 %v1740
    %v1835 = vpop.f32.mrb[0].mxu0
    %v1836 = vadd.f32 %v1762, %v1835
    %v1837 = vpop.f32.mrb[0].mxu0
    %1838 = vdwg.mxu0
    %v1839 = vadd.f32 %v166, %v1831
    %v1840 = vadd.f32 %v167, %v1836
    %v1841 = vld [vmem:[%s8] sm:$0x1]
    %v1842 = vld [vmem:[%s9] sm:$0x1]
    %1843 = vadd.xlane.f32.xlu0 %v1839
    %v1844 = vpop.xlane.xlu0 %1843
    %1845 = vadd.xlane.f32.xlu0 %v1840
    %v1846 = vpop.xlane.xlu0 %1845
    %v1847 = vmul.f32 %v1844, %v133
    %v1848 = vmul.f32 %v1846, %v133
    %v1849 = vsub.f32 %v1839, %v1847
    %v1850 = vsub.f32 %v1840, %v1848
    %v1851 = vmul.f32 %v1849, %v1849
    %v1852 = vmul.f32 %v1850, %v1850
    %1853 = vadd.xlane.f32.xlu0 %v1851
    %v1854 = vpop.xlane.xlu0 %1853
    %1855 = vadd.xlane.f32.xlu0 %v1852
    %v1856 = vpop.xlane.xlu0 %1855
    %v1857 = vmul.f32 %v1854, %v133
    %v1858 = vmul.f32 %v1856, %v133
    %v1859 = vadd.f32 %v1857, 1e-05
    %v1860 = vadd.f32 %v1858, 1e-05
    %v1861 = vrsqrt.pop %v1859
    %v1862 = vrsqrt.pop %v1860
    %v1863 = vmul.f32 %v1849, %v1861
    %v1864 = vmul.f32 %v1850, %v1862
    %v1866 = vlaneseq
    %v1867 = vshrl.u32 %v1866, 7
    %v1868 = vsub.s32 0, %v1867
    %v1869 = vrot.slane %v1841, %v1868
    %v1871 = vmul.f32 %v1863, %v1869
    %v1872 = vmul.f32 %v1864, %v1869
    %v1874 = vlaneseq
    %v1875 = vshrl.u32 %v1874, 7
    %v1876 = vsub.s32 0, %v1875
    %v1877 = vrot.slane %v1842, %v1876
    %v1879 = vadd.f32 %v1871, %v1877
    %v1880 = vadd.f32 %v1872, %v1877
    %v1881 = vld [vmem:[#allocation5] sm:$0xff]
    %v1882 = vld [vmem:[#allocation5 + $0x8] sm:$0xff]
    %v1883 = vld [vmem:[#allocation5 + $0x10] sm:$0xff]
    %v1884 = vld [vmem:[#allocation5 + $0x18] sm:$0xff]
    %v1885 = vld [vmem:[#allocation5 + $0x20] sm:$0xff]
    %v1886 = vld [vmem:[#allocation5 + $0x28] sm:$0xff]
    %v1887 = vld [vmem:[#allocation5 + $0x30] sm:$0xff]
    %v1888 = vld [vmem:[#allocation5 + $0x38] sm:$0xff]
    %v1889 = vld [vmem:[#allocation5 + $0x40] sm:$0xff]
    %v1890 = vld [vmem:[#allocation5 + $0x48] sm:$0xff]
    %v1891 = vld [vmem:[#allocation5 + $0x50] sm:$0xff]
    %v1892 = vld [vmem:[#allocation5 + $0x58] sm:$0xff]
    %v1893 = vld [vmem:[#allocation5 + $0x60] sm:$0xff]
    %v1894 = vld [vmem:[#allocation5 + $0x68] sm:$0xff]
    %v1895 = vld [vmem:[#allocation5 + $0x70] sm:$0xff]
    %v1896 = vld [vmem:[#allocation5 + $0x78] sm:$0xff]
    %v1897 = vld [vmem:[%s11] sm:$0x1]
    %v1899 = vlaneseq
    %v1900 = vshrl.u32 %v1899, 7
    %v1901 = vsub.s32 0, %v1900
    %v1902 = vrot.slane %v1897, %v1901
    %1904 = vmatprep.subr.mxu0 0.0
    %1905 = vmatpush1.msra.mxu0 %v1881
    %1906 = vmatprep.subr.mxu0 0.0
    %1907 = vmatpush1.msra.mxu0 %v1882
    %1908 = vmatprep.subr.mxu0 0.0
    %1909 = vmatpush1.msra.mxu0 %v1883
    %1910 = vmatprep.subr.mxu0 0.0
    %1911 = vmatpush1.msra.mxu0 %v1884
    %1912 = vmatprep.subr.mxu0 0.0
    %1913 = vmatpush1.msra.mxu0 %v1885
    %1914 = vmatprep.subr.mxu0 0.0
    %1915 = vmatpush1.msra.mxu0 %v1886
    %1916 = vmatprep.subr.mxu0 0.0
    %1917 = vmatpush1.msra.mxu0 %v1887
    %1918 = vmatprep.subr.mxu0 0.0
    %1919 = vmatpush1.msra.mxu0 %v1888
    %1920 = vmatprep.subr.mxu0 0.0
    %1921 = vmatpush1.msra.mxu0 %v1889
    %1922 = vmatprep.subr.mxu0 0.0
    %1923 = vmatpush1.msra.mxu0 %v1890
    %1924 = vmatprep.subr.mxu0 0.0
    %1925 = vmatpush1.msra.mxu0 %v1891
    %1926 = vmatprep.subr.mxu0 0.0
    %1927 = vmatpush1.msra.mxu0 %v1892
    %1928 = vmatprep.subr.mxu0 0.0
    %1929 = vmatpush1.msra.mxu0 %v1893
    %1930 = vmatprep.subr.mxu0 0.0
    %1931 = vmatpush1.msra.mxu0 %v1894
    %1932 = vmatprep.subr.mxu0 0.0
    %1933 = vmatpush1.msra.mxu0 %v1895
    %1934 = vmatprep.subr.mxu0 0.0
    %1935 = vmatpush1.msra.mxu0 %v1896
    %1936 = vmatprep.subr.mxu0 0.0
    %1937 = vmatpush1.msra.mxu0 0.0
    %1938 = vmatprep.subr.mxu0 0.0
    %1939 = vmatpush1.msra.mxu0 0.0
    %1940 = vmatprep.subr.mxu0 0.0
    %1941 = vmatpush1.msra.mxu0 0.0
    %1942 = vmatprep.subr.mxu0 0.0
    %1943 = vmatpush1.msra.mxu0 0.0
    %1944 = vmatprep.subr.mxu0 0.0
    %1945 = vmatpush1.msra.mxu0 0.0
    %1946 = vmatprep.subr.mxu0 0.0
    %1947 = vmatpush1.msra.mxu0 0.0
    %1948 = vmatprep.subr.mxu0 0.0
    %1949 = vmatpush1.msra.mxu0 0.0
    %1950 = vmatprep.subr.mxu0 0.0
    %1951 = vmatpush1.msra.mxu0 0.0
    %1952 = vmatprep.subr.mxu0 0.0
    %1953 = vmatpush1.msra.mxu0 0.0
    %1954 = vmatprep.subr.mxu0 0.0
    %1955 = vmatpush1.msra.mxu0 0.0
    %1956 = vmatprep.subr.mxu0 0.0
    %1957 = vmatpush1.msra.mxu0 0.0
    %1958 = vmatprep.subr.mxu0 0.0
    %1959 = vmatpush1.msra.mxu0 0.0
    %1960 = vmatprep.subr.mxu0 0.0
    %1961 = vmatpush1.msra.mxu0 0.0
    %1962 = vmatprep.subr.mxu0 0.0
    %1963 = vmatpush1.msra.mxu0 0.0
    %1964 = vmatprep.subr.mxu0 0.0
    %1965 = vmatpush1.msra.mxu0 0.0
    %1966 = vmatprep.subr.mxu0 0.0
    %1967 = vmatpush1.msra.mxu0 0.0
    %1968 = vmatprep.mubr.f32.mxu0 0.0
    %1969 = vmatmul.mubr.f32.gmra.mrb[0].mxu0 %v1879
    %v1970 = vpop.f32.mrb[0].mxu0
    %v1971 = vadd.f32 %v1902, %v1970
    %v1972 = vpop.f32.mrb[0].mxu0
    %1973 = vmatprep.mubr.f32.mxu0 0.0
    %1974 = vmatmul.mubr.f32.gmra.mrb[0].mxu0 %v1880
    %v1975 = vpop.f32.mrb[0].mxu0
    %v1976 = vadd.f32 %v1902, %v1975
    %v1977 = vpop.f32.mrb[0].mxu0
    %1978 = vdwg.mxu0
    %v1979 = vld [vmem:[%s12] sm:$0xff]
    %v1980 = vld [vmem:[%s12 + $0x8] sm:$0xff]
    %v1981 = vld [vmem:[%s12 + $0x10] sm:$0xff]
    %v1982 = vld [vmem:[%s12 + $0x18] sm:$0xff]
    %v1983 = vld [vmem:[%s12 + $0x20] sm:$0xff]
    %v1984 = vld [vmem:[%s12 + $0x28] sm:$0xff]
    %v1985 = vld [vmem:[%s12 + $0x30] sm:$0xff]
    %v1986 = vld [vmem:[%s12 + $0x38] sm:$0xff]
    %v1987 = vld [vmem:[%s12 + $0x40] sm:$0xff]
    %v1988 = vld [vmem:[%s12 + $0x48] sm:$0xff]
    %v1989 = vld [vmem:[%s12 + $0x50] sm:$0xff]
    %v1990 = vld [vmem:[%s12 + $0x58] sm:$0xff]
    %v1991 = vld [vmem:[%s12 + $0x60] sm:$0xff]
    %v1992 = vld [vmem:[%s12 + $0x68] sm:$0xff]
    %v1993 = vld [vmem:[%s12 + $0x70] sm:$0xff]
    %v1994 = vld [vmem:[%s12 + $0x78] sm:$0xff]
    %v1995 = vld [vmem:[%s12 + $0x80] sm:$0xff]
    %v1996 = vld [vmem:[%s12 + $0x88] sm:$0xff]
    %v1997 = vld [vmem:[%s12 + $0x90] sm:$0xff]
    %v1998 = vld [vmem:[%s12 + $0x98] sm:$0xff]
    %v1999 = vld [vmem:[%s12 + $0xa0] sm:$0xff]
    %v2000 = vld [vmem:[%s12 + $0xa8] sm:$0xff]
    %v2001 = vld [vmem:[%s12 + $0xb0] sm:$0xff]
    %v2002 = vld [vmem:[%s12 + $0xb8] sm:$0xff]
    %v2003 = vld [vmem:[%s12 + $0xc0] sm:$0xff]
    %v2004 = vld [vmem:[%s12 + $0xc8] sm:$0xff]
    %v2005 = vld [vmem:[%s12 + $0xd0] sm:$0xff]
    %v2006 = vld [vmem:[%s12 + $0xd8] sm:$0xff]
    %v2007 = vld [vmem:[%s12 + $0xe0] sm:$0xff]
    %v2008 = vld [vmem:[%s12 + $0xe8] sm:$0xff]
    %v2009 = vld [vmem:[%s12 + $0xf0] sm:$0xff]
    %v2010 = vld [vmem:[%s12 + $0xf8] sm:$0xff]
    %v2011 = vld [vmem:[%s13] sm:$0x3]
    %v2013 = vlaneseq
    %v2014 = vshrl.u32 %v2013, 7
    %v2015 = vsub.s32 0, %v2014
    %v2016 = vrot.slane %v2011, %v2015
    %v2017 = vlaneseq
    %v2018 = vshrl.u32 %v2017, 7
    %v2019 = vsub.s32 1, %v2018
    %v2020 = vrot.slane %v2011, %v2019
    %2023 = vmatprep.subr.mxu0 %v1980
    %2024 = vmatpush1.msra.mxu0 %v1979
    %2025 = vmatprep.subr.mxu0 %v1982
    %2026 = vmatpush1.msra.mxu0 %v1981
    %2027 = vmatprep.subr.mxu0 %v1984
    %2028 = vmatpush1.msra.mxu0 %v1983
    %2029 = vmatprep.subr.mxu0 %v1986
    %2030 = vmatpush1.msra.mxu0 %v1985
    %2031 = vmatprep.subr.mxu0 %v1988
    %2032 = vmatpush1.msra.mxu0 %v1987
    %2033 = vmatprep.subr.mxu0 %v1990
    %2034 = vmatpush1.msra.mxu0 %v1989
    %2035 = vmatprep.subr.mxu0 %v1992
    %2036 = vmatpush1.msra.mxu0 %v1991
    %2037 = vmatprep.subr.mxu0 %v1994
    %2038 = vmatpush1.msra.mxu0 %v1993
    %2039 = vmatprep.subr.mxu0 %v1996
    %2040 = vmatpush1.msra.mxu0 %v1995
    %2041 = vmatprep.subr.mxu0 %v1998
    %2042 = vmatpush1.msra.mxu0 %v1997
    %2043 = vmatprep.subr.mxu0 %v2000
    %2044 = vmatpush1.msra.mxu0 %v1999
    %2045 = vmatprep.subr.mxu0 %v2002
    %2046 = vmatpush1.msra.mxu0 %v2001
    %2047 = vmatprep.subr.mxu0 %v2004
    %2048 = vmatpush1.msra.mxu0 %v2003
    %2049 = vmatprep.subr.mxu0 %v2006
    %2050 = vmatpush1.msra.mxu0 %v2005
    %2051 = vmatprep.subr.mxu0 %v2008
    %2052 = vmatpush1.msra.mxu0 %v2007
    %2053 = vmatprep.subr.mxu0 %v2010
    %2054 = vmatpush1.msra.mxu0 %v2009
    %2055 = vmatprep.subr.mxu0 0.0
    %2056 = vmatpush1.msra.mxu0 0.0
    %2057 = vmatprep.subr.mxu0 0.0
    %2058 = vmatpush1.msra.mxu0 0.0
    %2059 = vmatprep.subr.mxu0 0.0
    %2060 = vmatpush1.msra.mxu0 0.0
    %2061 = vmatprep.subr.mxu0 0.0
    %2062 = vmatpush1.msra.mxu0 0.0
    %2063 = vmatprep.subr.mxu0 0.0
    %2064 = vmatpush1.msra.mxu0 0.0
    %2065 = vmatprep.subr.mxu0 0.0
    %2066 = vmatpush1.msra.mxu0 0.0
    %2067 = vmatprep.subr.mxu0 0.0
    %2068 = vmatpush1.msra.mxu0 0.0
    %2069 = vmatprep.subr.mxu0 0.0
    %2070 = vmatpush1.msra.mxu0 0.0
    %2071 = vmatprep.subr.mxu0 0.0
    %2072 = vmatpush1.msra.mxu0 0.0
    %2073 = vmatprep.subr.mxu0 0.0
    %2074 = vmatpush1.msra.mxu0 0.0
    %2075 = vmatprep.subr.mxu0 0.0
    %2076 = vmatpush1.msra.mxu0 0.0
    %2077 = vmatprep.subr.mxu0 0.0
    %2078 = vmatpush1.msra.mxu0 0.0
    %2079 = vmatprep.subr.mxu0 0.0
    %2080 = vmatpush1.msra.mxu0 0.0
    %2081 = vmatprep.subr.mxu0 0.0
    %2082 = vmatpush1.msra.mxu0 0.0
    %2083 = vmatprep.subr.mxu0 0.0
    %2084 = vmatpush1.msra.mxu0 0.0
    %2085 = vmatprep.subr.mxu0 0.0
    %2086 = vmatpush1.msra.mxu0 0.0
    %2087 = vmatprep.mubr.f32.mxu0 0.0
    %2088 = vmatmul.mubr.f32.gmra.mrb[0].mxu0 %v168
    %v2089 = vpop.f32.mrb[0].mxu0
    %v2090 = vadd.f32 %v2016, %v2089
    %v2091 = vpop.f32.mrb[0].mxu0
    %v2092 = vadd.f32 %v2020, %v2091
    %2093 = vmatprep.mubr.f32.mxu0 0.0
    %2094 = vmatmul.mubr.f32.gmra.mrb[0].mxu0 %v169
    %v2095 = vpop.f32.mrb[0].mxu0
    %v2096 = vadd.f32 %v2016, %v2095
    %v2097 = vpop.f32.mrb[0].mxu0
    %v2098 = vadd.f32 %v2020, %v2097
    %2099 = vdwg.mxu0
    %v2100 = vmul.f32 %v1971, 0.17677669
    %v2102 = vsel %vm394, %v2100, 0
    %v2105 = vsel %vm394, %v2090, 0
    %2107 = vmatprep.subr.mxu0 0.0
    %2108 = vmatpush1.xpose.msra.mxu0 %v2105
    %2109 = vmatprep.subr.mxu0 0.0
    %2110 = vmatpush1.xpose.msra.mxu0 0.0
    %2111 = vmatprep.subr.mxu0 0.0
    %2112 = vmatpush1.xpose.msra.mxu0 0.0
    %2113 = vmatprep.subr.mxu0 0.0
    %2114 = vmatpush1.xpose.msra.mxu0 0.0
    %2115 = vmatprep.subr.mxu0 0.0
    %2116 = vmatpush1.xpose.msra.mxu0 0.0
    %2117 = vmatprep.subr.mxu0 0.0
    %2118 = vmatpush1.xpose.msra.mxu0 0.0
    %2119 = vmatprep.subr.mxu0 0.0
    %2120 = vmatpush1.xpose.msra.mxu0 0.0
    %2121 = vmatprep.subr.mxu0 0.0
    %2122 = vmatpush1.xpose.msra.mxu0 0.0
    %2123 = vmatprep.subr.mxu0 0.0
    %2124 = vmatpush1.xpose.msra.mxu0 0.0
    %2125 = vmatprep.subr.mxu0 0.0
    %2126 = vmatpush1.xpose.msra.mxu0 0.0
    %2127 = vmatprep.subr.mxu0 0.0
    %2128 = vmatpush1.xpose.msra.mxu0 0.0
    %2129 = vmatprep.subr.mxu0 0.0
    %2130 = vmatpush1.xpose.msra.mxu0 0.0
    %2131 = vmatprep.subr.mxu0 0.0
    %2132 = vmatpush1.xpose.msra.mxu0 0.0
    %2133 = vmatprep.subr.mxu0 0.0
    %2134 = vmatpush1.xpose.msra.mxu0 0.0
    %2135 = vmatprep.subr.mxu0 0.0
    %2136 = vmatpush1.xpose.msra.mxu0 0.0
    %2137 = vmatprep.subr.mxu0 0.0
    %2138 = vmatpush1.xpose.msra.mxu0 0.0
    %2139 = vmatprep.subr.mxu0 0.0
    %2140 = vmatpush1.xpose.msra.mxu0 0.0
    %2141 = vmatprep.subr.mxu0 0.0
    %2142 = vmatpush1.xpose.msra.mxu0 0.0
    %2143 = vmatprep.subr.mxu0 0.0
    %2144 = vmatpush1.xpose.msra.mxu0 0.0
    %2145 = vmatprep.subr.mxu0 0.0
    %2146 = vmatpush1.xpose.msra.mxu0 0.0
    %2147 = vmatprep.subr.mxu0 0.0
    %2148 = vmatpush1.xpose.msra.mxu0 0.0
    %2149 = vmatprep.subr.mxu0 0.0
    %2150 = vmatpush1.xpose.msra.mxu0 0.0
    %2151 = vmatprep.subr.mxu0 0.0
    %2152 = vmatpush1.xpose.msra.mxu0 0.0
    %2153 = vmatprep.subr.mxu0 0.0
    %2154 = vmatpush1.xpose.msra.mxu0 0.0
    %2155 = vmatprep.subr.mxu0 0.0
    %2156 = vmatpush1.xpose.msra.mxu0 0.0
    %2157 = vmatprep.subr.mxu0 0.0
    %2158 = vmatpush1.xpose.msra.mxu0 0.0
    %2159 = vmatprep.subr.mxu0 0.0
    %2160 = vmatpush1.xpose.msra.mxu0 0.0
    %2161 = vmatprep.subr.mxu0 0.0
    %2162 = vmatpush1.xpose.msra.mxu0 0.0
    %2163 = vmatprep.subr.mxu0 0.0
    %2164 = vmatpush1.xpose.msra.mxu0 0.0
    %2165 = vmatprep.subr.mxu0 0.0
    %2166 = vmatpush1.xpose.msra.mxu0 0.0
    %2167 = vmatprep.subr.mxu0 0.0
    %2168 = vmatpush1.xpose.msra.mxu0 0.0
    %2169 = vmatprep.subr.mxu0 0.0
    %2170 = vmatpush1.xpose.msra.mxu0 0.0
    %2171 = vmatprep.mubr.f32.mxu0 0.0
    %2172 = vmatmul.mubr.f32.gmra.mrb[0].mxu0 %v2102
    %v2173 = vpop.f32.mrb[0].mxu0
    %v2174 = vadd.f32 0.0, %v2173
    %v2175 = vpop.f32.mrb[0].mxu0
    %2176 = vdwg.mxu0
    %v2177 = vsel %vm471, %v2174, -inf
    %2178 = vmax.xlane.f32.xlu0 %v2177
    %v2179 = vpop.xlane.xlu0 %2178
    %v2180 = vsub.f32 %v2174, %v2179
    %v2181 = vmul.f32 %v2180, 1.442695
    %v2182 = vpow.pop %v2181
    %v2183 = vsel %vm471, %v2182, 0.0
    %2184 = vadd.xlane.f32.xlu0 %v2183
    %v2185 = vpop.xlane.xlu0 %2184
    %v2186 = vrcp.pop %v2185
    %v2187 = vmul.f32 %v2182, %v2186
    %v2189 = vsel %vm471, %v2187, 0
    %2191 = vmatprep.subr.mxu0 0.0
    %2192 = vmatpush1.msra.mxu0 %v2092
    %2193 = vmatprep.subr.mxu0 0.0
    %2194 = vmatpush1.msra.mxu0 0.0
    %2195 = vmatprep.subr.mxu0 0.0
    %2196 = vmatpush1.msra.mxu0 0.0
    %2197 = vmatprep.subr.mxu0 0.0
    %2198 = vmatpush1.msra.mxu0 0.0
    %2199 = vmatprep.subr.mxu0 0.0
    %2200 = vmatpush1.msra.mxu0 0.0
    %2201 = vmatprep.subr.mxu0 0.0
    %2202 = vmatpush1.msra.mxu0 0.0
    %2203 = vmatprep.subr.mxu0 0.0
    %2204 = vmatpush1.msra.mxu0 0.0
    %2205 = vmatprep.subr.mxu0 0.0
    %2206 = vmatpush1.msra.mxu0 0.0
    %2207 = vmatprep.subr.mxu0 0.0
    %2208 = vmatpush1.msra.mxu0 0.0
    %2209 = vmatprep.subr.mxu0 0.0
    %2210 = vmatpush1.msra.mxu0 0.0
    %2211 = vmatprep.subr.mxu0 0.0
    %2212 = vmatpush1.msra.mxu0 0.0
    %2213 = vmatprep.subr.mxu0 0.0
    %2214 = vmatpush1.msra.mxu0 0.0
    %2215 = vmatprep.subr.mxu0 0.0
    %2216 = vmatpush1.msra.mxu0 0.0
    %2217 = vmatprep.subr.mxu0 0.0
    %2218 = vmatpush1.msra.mxu0 0.0
    %2219 = vmatprep.subr.mxu0 0.0
    %2220 = vmatpush1.msra.mxu0 0.0
    %2221 = vmatprep.subr.mxu0 0.0
    %2222 = vmatpush1.msra.mxu0 0.0
    %2223 = vmatprep.subr.mxu0 0.0
    %2224 = vmatpush1.msra.mxu0 0.0
    %2225 = vmatprep.subr.mxu0 0.0
    %2226 = vmatpush1.msra.mxu0 0.0
    %2227 = vmatprep.subr.mxu0 0.0
    %2228 = vmatpush1.msra.mxu0 0.0
    %2229 = vmatprep.subr.mxu0 0.0
    %2230 = vmatpush1.msra.mxu0 0.0
    %2231 = vmatprep.subr.mxu0 0.0
    %2232 = vmatpush1.msra.mxu0 0.0
    %2233 = vmatprep.subr.mxu0 0.0
    %2234 = vmatpush1.msra.mxu0 0.0
    %2235 = vmatprep.subr.mxu0 0.0
    %2236 = vmatpush1.msra.mxu0 0.0
    %2237 = vmatprep.subr.mxu0 0.0
    %2238 = vmatpush1.msra.mxu0 0.0
    %2239 = vmatprep.subr.mxu0 0.0
    %2240 = vmatpush1.msra.mxu0 0.0
    %2241 = vmatprep.subr.mxu0 0.0
    %2242 = vmatpush1.msra.mxu0 0.0
    %2243 = vmatprep.subr.mxu0 0.0
    %2244 = vmatpush1.msra.mxu0 0.0
    %2245 = vmatprep.subr.mxu0 0.0
    %2246 = vmatpush1.msra.mxu0 0.0
    %2247 = vmatprep.subr.mxu0 0.0
    %2248 = vmatpush1.msra.mxu0 0.0
    %2249 = vmatprep.subr.mxu0 0.0
    %2250 = vmatpush1.msra.mxu0 0.0
    %2251 = vmatprep.subr.mxu0 0.0
    %2252 = vmatpush1.msra.mxu0 0.0
    %2253 = vmatprep.subr.mxu0 0.0
    %2254 = vmatpush1.msra.mxu0 0.0
    %2255 = vmatprep.mubr.f32.mxu0 0.0
    %2256 = vmatmul.mubr.f32.gmra.mrb[0].mxu0 %v2189
    %v2257 = vpop.f32.mrb[0].mxu0
    %v2258 = vadd.f32 0.0, %v2257
    %v2259 = vpop.f32.mrb[0].mxu0
    %2260 = vdwg.mxu0
    %2261 = vrot.lane.b32.xlu0 %v2100, 96
    %v2262 = vpop.permute.xlu0 %2261
    %2263 = vrot.lane.b32.xlu0 %v2090, 96
    %v2264 = vpop.permute.xlu0 %2263
    %v2265 = vsel %vm394, %v2262, 0
    %v2267 = vsel %vm394, %v2264, 0
    %2269 = vmatprep.subr.mxu0 0.0
    %2270 = vmatpush1.xpose.msra.mxu0 %v2267
    %2271 = vmatprep.subr.mxu0 0.0
    %2272 = vmatpush1.xpose.msra.mxu0 0.0
    %2273 = vmatprep.subr.mxu0 0.0
    %2274 = vmatpush1.xpose.msra.mxu0 0.0
    %2275 = vmatprep.subr.mxu0 0.0
    %2276 = vmatpush1.xpose.msra.mxu0 0.0
    %2277 = vmatprep.subr.mxu0 0.0
    %2278 = vmatpush1.xpose.msra.mxu0 0.0
    %2279 = vmatprep.subr.mxu0 0.0
    %2280 = vmatpush1.xpose.msra.mxu0 0.0
    %2281 = vmatprep.subr.mxu0 0.0
    %2282 = vmatpush1.xpose.msra.mxu0 0.0
    %2283 = vmatprep.subr.mxu0 0.0
    %2284 = vmatpush1.xpose.msra.mxu0 0.0
    %2285 = vmatprep.subr.mxu0 0.0
    %2286 = vmatpush1.xpose.msra.mxu0 0.0
    %2287 = vmatprep.subr.mxu0 0.0
    %2288 = vmatpush1.xpose.msra.mxu0 0.0
    %2289 = vmatprep.subr.mxu0 0.0
    %2290 = vmatpush1.xpose.msra.mxu0 0.0
    %2291 = vmatprep.subr.mxu0 0.0
    %2292 = vmatpush1.xpose.msra.mxu0 0.0
    %2293 = vmatprep.subr.mxu0 0.0
    %2294 = vmatpush1.xpose.msra.mxu0 0.0
    %2295 = vmatprep.subr.mxu0 0.0
    %2296 = vmatpush1.xpose.msra.mxu0 0.0
    %2297 = vmatprep.subr.mxu0 0.0
    %2298 = vmatpush1.xpose.msra.mxu0 0.0
    %2299 = vmatprep.subr.mxu0 0.0
    %2300 = vmatpush1.xpose.msra.mxu0 0.0
    %2301 = vmatprep.subr.mxu0 0.0
    %2302 = vmatpush1.xpose.msra.mxu0 0.0
    %2303 = vmatprep.subr.mxu0 0.0
    %2304 = vmatpush1.xpose.msra.mxu0 0.0
    %2305 = vmatprep.subr.mxu0 0.0
    %2306 = vmatpush1.xpose.msra.mxu0 0.0
    %2307 = vmatprep.subr.mxu0 0.0
    %2308 = vmatpush1.xpose.msra.mxu0 0.0
    %2309 = vmatprep.subr.mxu0 0.0
    %2310 = vmatpush1.xpose.msra.mxu0 0.0
    %2311 = vmatprep.subr.mxu0 0.0
    %2312 = vmatpush1.xpose.msra.mxu0 0.0
    %2313 = vmatprep.subr.mxu0 0.0
    %2314 = vmatpush1.xpose.msra.mxu0 0.0
    %2315 = vmatprep.subr.mxu0 0.0
    %2316 = vmatpush1.xpose.msra.mxu0 0.0
    %2317 = vmatprep.subr.mxu0 0.0
    %2318 = vmatpush1.xpose.msra.mxu0 0.0
    %2319 = vmatprep.subr.mxu0 0.0
    %2320 = vmatpush1.xpose.msra.mxu0 0.0
    %2321 = vmatprep.subr.mxu0 0.0
    %2322 = vmatpush1.xpose.msra.mxu0 0.0
    %2323 = vmatprep.subr.mxu0 0.0
    %2324 = vmatpush1.xpose.msra.mxu0 0.0
    %2325 = vmatprep.subr.mxu0 0.0
    %2326 = vmatpush1.xpose.msra.mxu0 0.0
    %2327 = vmatprep.subr.mxu0 0.0
    %2328 = vmatpush1.xpose.msra.mxu0 0.0
    %2329 = vmatprep.subr.mxu0 0.0
    %2330 = vmatpush1.xpose.msra.mxu0 0.0
    %2331 = vmatprep.subr.mxu0 0.0
    %2332 = vmatpush1.xpose.msra.mxu0 0.0
    %2333 = vmatprep.mubr.f32.mxu0 0.0
    %2334 = vmatmul.mubr.f32.gmra.mrb[0].mxu0 %v2265
    %v2335 = vpop.f32.mrb[0].mxu0
    %v2336 = vadd.f32 0.0, %v2335
    %v2337 = vpop.f32.mrb[0].mxu0
    %2338 = vdwg.mxu0
    %v2339 = vsel %vm471, %v2336, -inf
    %2340 = vmax.xlane.f32.xlu0 %v2339
    %v2341 = vpop.xlane.xlu0 %2340
    %v2342 = vsub.f32 %v2336, %v2341
    %v2343 = vmul.f32 %v2342, 1.442695
    %v2344 = vpow.pop %v2343
    %v2345 = vsel %vm471, %v2344, 0.0
    %2346 = vadd.xlane.f32.xlu0 %v2345
    %v2347 = vpop.xlane.xlu0 %2346
    %v2348 = vrcp.pop %v2347
    %v2349 = vmul.f32 %v2344, %v2348
    %2351 = vrot.lane.b32.xlu0 %v2092, 96
    %v2352 = vpop.permute.xlu0 %2351
    %v2355 = vsel %vm471, %v2349, 0
    %2357 = vmatprep.subr.mxu0 0.0
    %2358 = vmatpush1.msra.mxu0 %v2352
    %2359 = vmatprep.subr.mxu0 0.0
    %2360 = vmatpush1.msra.mxu0 0.0
    %2361 = vmatprep.subr.mxu0 0.0
    %2362 = vmatpush1.msra.mxu0 0.0
    %2363 = vmatprep.subr.mxu0 0.0
    %2364 = vmatpush1.msra.mxu0 0.0
    %2365 = vmatprep.subr.mxu0 0.0
    %2366 = vmatpush1.msra.mxu0 0.0
    %2367 = vmatprep.subr.mxu0 0.0
    %2368 = vmatpush1.msra.mxu0 0.0
    %2369 = vmatprep.subr.mxu0 0.0
    %2370 = vmatpush1.msra.mxu0 0.0
    %2371 = vmatprep.subr.mxu0 0.0
    %2372 = vmatpush1.msra.mxu0 0.0
    %2373 = vmatprep.subr.mxu0 0.0
    %2374 = vmatpush1.msra.mxu0 0.0
    %2375 = vmatprep.subr.mxu0 0.0
    %2376 = vmatpush1.msra.mxu0 0.0
    %2377 = vmatprep.subr.mxu0 0.0
    %2378 = vmatpush1.msra.mxu0 0.0
    %2379 = vmatprep.subr.mxu0 0.0
    %2380 = vmatpush1.msra.mxu0 0.0
    %2381 = vmatprep.subr.mxu0 0.0
    %2382 = vmatpush1.msra.mxu0 0.0
    %2383 = vmatprep.subr.mxu0 0.0
    %2384 = vmatpush1.msra.mxu0 0.0
    %2385 = vmatprep.subr.mxu0 0.0
    %2386 = vmatpush1.msra.mxu0 0.0
    %2387 = vmatprep.subr.mxu0 0.0
    %2388 = vmatpush1.msra.mxu0 0.0
    %2389 = vmatprep.subr.mxu0 0.0
    %2390 = vmatpush1.msra.mxu0 0.0
    %2391 = vmatprep.subr.mxu0 0.0
    %2392 = vmatpush1.msra.mxu0 0.0
    %2393 = vmatprep.subr.mxu0 0.0
    %2394 = vmatpush1.msra.mxu0 0.0
    %2395 = vmatprep.subr.mxu0 0.0
    %2396 = vmatpush1.msra.mxu0 0.0
    %2397 = vmatprep.subr.mxu0 0.0
    %2398 = vmatpush1.msra.mxu0 0.0
    %2399 = vmatprep.subr.mxu0 0.0
    %2400 = vmatpush1.msra.mxu0 0.0
    %2401 = vmatprep.subr.mxu0 0.0
    %2402 = vmatpush1.msra.mxu0 0.0
    %2403 = vmatprep.subr.mxu0 0.0
    %2404 = vmatpush1.msra.mxu0 0.0
    %2405 = vmatprep.subr.mxu0 0.0
    %2406 = vmatpush1.msra.mxu0 0.0
    %2407 = vmatprep.subr.mxu0 0.0
    %2408 = vmatpush1.msra.mxu0 0.0
    %2409 = vmatprep.subr.mxu0 0.0
    %2410 = vmatpush1.msra.mxu0 0.0
    %2411 = vmatprep.subr.mxu0 0.0
    %2412 = vmatpush1.msra.mxu0 0.0
    %2413 = vmatprep.subr.mxu0 0.0
    %2414 = vmatpush1.msra.mxu0 0.0
    %2415 = vmatprep.subr.mxu0 0.0
    %2416 = vmatpush1.msra.mxu0 0.0
    %2417 = vmatprep.subr.mxu0 0.0
    %2418 = vmatpush1.msra.mxu0 0.0
    %2419 = vmatprep.subr.mxu0 0.0
    %2420 = vmatpush1.msra.mxu0 0.0
    %2421 = vmatprep.mubr.f32.mxu0 0.0
    %2422 = vmatmul.mubr.f32.gmra.mrb[0].mxu0 %v2355
    %v2423 = vpop.f32.mrb[0].mxu0
    %v2424 = vadd.f32 0.0, %v2423
    %v2425 = vpop.f32.mrb[0].mxu0
    %2426 = vdwg.mxu0
    %2427 = vrot.lane.b32.xlu0 %v2100, 64
    %v2428 = vpop.permute.xlu0 %2427
    %2429 = vrot.lane.b32.xlu0 %v2090, 64
    %v2430 = vpop.permute.xlu0 %2429
    %v2431 = vsel %vm394, %v2428, 0
    %v2433 = vsel %vm394, %v2430, 0
    %2435 = vmatprep.subr.mxu0 0.0
    %2436 = vmatpush1.xpose.msra.mxu0 %v2433
    %2437 = vmatprep.subr.mxu0 0.0
    %2438 = vmatpush1.xpose.msra.mxu0 0.0
    %2439 = vmatprep.subr.mxu0 0.0
    %2440 = vmatpush1.xpose.msra.mxu0 0.0
    %2441 = vmatprep.subr.mxu0 0.0
    %2442 = vmatpush1.xpose.msra.mxu0 0.0
    %2443 = vmatprep.subr.mxu0 0.0
    %2444 = vmatpush1.xpose.msra.mxu0 0.0
    %2445 = vmatprep.subr.mxu0 0.0
    %2446 = vmatpush1.xpose.msra.mxu0 0.0
    %2447 = vmatprep.subr.mxu0 0.0
    %2448 = vmatpush1.xpose.msra.mxu0 0.0
    %2449 = vmatprep.subr.mxu0 0.0
    %2450 = vmatpush1.xpose.msra.mxu0 0.0
    %2451 = vmatprep.subr.mxu0 0.0
    %2452 = vmatpush1.xpose.msra.mxu0 0.0
    %2453 = vmatprep.subr.mxu0 0.0
    %2454 = vmatpush1.xpose.msra.mxu0 0.0
    %2455 = vmatprep.subr.mxu0 0.0
    %2456 = vmatpush1.xpose.msra.mxu0 0.0
    %2457 = vmatprep.subr.mxu0 0.0
    %2458 = vmatpush1.xpose.msra.mxu0 0.0
    %2459 = vmatprep.subr.mxu0 0.0
    %2460 = vmatpush1.xpose.msra.mxu0 0.0
    %2461 = vmatprep.subr.mxu0 0.0
    %2462 = vmatpush1.xpose.msra.mxu0 0.0
    %2463 = vmatprep.subr.mxu0 0.0
    %2464 = vmatpush1.xpose.msra.mxu0 0.0
    %2465 = vmatprep.subr.mxu0 0.0
    %2466 = vmatpush1.xpose.msra.mxu0 0.0
    %2467 = vmatprep.subr.mxu0 0.0
    %2468 = vmatpush1.xpose.msra.mxu0 0.0
    %2469 = vmatprep.subr.mxu0 0.0
    %2470 = vmatpush1.xpose.msra.mxu0 0.0
    %2471 = vmatprep.subr.mxu0 0.0
    %2472 = vmatpush1.xpose.msra.mxu0 0.0
    %2473 = vmatprep.subr.mxu0 0.0
    %2474 = vmatpush1.xpose.msra.mxu0 0.0
    %2475 = vmatprep.subr.mxu0 0.0
    %2476 = vmatpush1.xpose.msra.mxu0 0.0
    %2477 = vmatprep.subr.mxu0 0.0
    %2478 = vmatpush1.xpose.msra.mxu0 0.0
    %2479 = vmatprep.subr.mxu0 0.0
    %2480 = vmatpush1.xpose.msra.mxu0 0.0
    %2481 = vmatprep.subr.mxu0 0.0
    %2482 = vmatpush1.xpose.msra.mxu0 0.0
    %2483 = vmatprep.subr.mxu0 0.0
    %2484 = vmatpush1.xpose.msra.mxu0 0.0
    %2485 = vmatprep.subr.mxu0 0.0
    %2486 = vmatpush1.xpose.msra.mxu0 0.0
    %2487 = vmatprep.subr.mxu0 0.0
    %2488 = vmatpush1.xpose.msra.mxu0 0.0
    %2489 = vmatprep.subr.mxu0 0.0
    %2490 = vmatpush1.xpose.msra.mxu0 0.0
    %2491 = vmatprep.subr.mxu0 0.0
    %2492 = vmatpush1.xpose.msra.mxu0 0.0
    %2493 = vmatprep.subr.mxu0 0.0
    %2494 = vmatpush1.xpose.msra.mxu0 0.0
    %2495 = vmatprep.subr.mxu0 0.0
    %2496 = vmatpush1.xpose.msra.mxu0 0.0
    %2497 = vmatprep.subr.mxu0 0.0
    %2498 = vmatpush1.xpose.msra.mxu0 0.0
    %2499 = vmatprep.mubr.f32.mxu0 0.0
    %2500 = vmatmul.mubr.f32.gmra.mrb[0].mxu0 %v2431
    %v2501 = vpop.f32.mrb[0].mxu0
    %v2502 = vadd.f32 0.0, %v2501
    %v2503 = vpop.f32.mrb[0].mxu0
    %2504 = vdwg.mxu0
    %v2505 = vsel %vm471, %v2502, -inf
    %2506 = vmax.xlane.f32.xlu0 %v2505
    %v2507 = vpop.xlane.xlu0 %2506
    %v2508 = vsub.f32 %v2502, %v2507
    %v2509 = vmul.f32 %v2508, 1.442695
    %v2510 = vpow.pop %v2509
    %v2511 = vsel %vm471, %v2510, 0.0
    %2512 = vadd.xlane.f32.xlu0 %v2511
    %v2513 = vpop.xlane.xlu0 %2512
    %v2514 = vrcp.pop %v2513
    %v2515 = vmul.f32 %v2510, %v2514
    %2516 = vrot.lane.b32.xlu0 %v2092, 64
    %v2517 = vpop.permute.xlu0 %2516
    %v2520 = vsel %vm471, %v2515, 0
    %2522 = vmatprep.subr.mxu0 0.0
    %2523 = vmatpush1.msra.mxu0 %v2517
    %2524 = vmatprep.subr.mxu0 0.0
    %2525 = vmatpush1.msra.mxu0 0.0
    %2526 = vmatprep.subr.mxu0 0.0
    %2527 = vmatpush1.msra.mxu0 0.0
    %2528 = vmatprep.subr.mxu0 0.0
    %2529 = vmatpush1.msra.mxu0 0.0
    %2530 = vmatprep.subr.mxu0 0.0
    %2531 = vmatpush1.msra.mxu0 0.0
    %2532 = vmatprep.subr.mxu0 0.0
    %2533 = vmatpush1.msra.mxu0 0.0
    %2534 = vmatprep.subr.mxu0 0.0
    %2535 = vmatpush1.msra.mxu0 0.0
    %2536 = vmatprep.subr.mxu0 0.0
    %2537 = vmatpush1.msra.mxu0 0.0
    %2538 = vmatprep.subr.mxu0 0.0
    %2539 = vmatpush1.msra.mxu0 0.0
    %2540 = vmatprep.subr.mxu0 0.0
    %2541 = vmatpush1.msra.mxu0 0.0
    %2542 = vmatprep.subr.mxu0 0.0
    %2543 = vmatpush1.msra.mxu0 0.0
    %2544 = vmatprep.subr.mxu0 0.0
    %2545 = vmatpush1.msra.mxu0 0.0
    %2546 = vmatprep.subr.mxu0 0.0
    %2547 = vmatpush1.msra.mxu0 0.0
    %2548 = vmatprep.subr.mxu0 0.0
    %2549 = vmatpush1.msra.mxu0 0.0
    %2550 = vmatprep.subr.mxu0 0.0
    %2551 = vmatpush1.msra.mxu0 0.0
    %2552 = vmatprep.subr.mxu0 0.0
    %2553 = vmatpush1.msra.mxu0 0.0
    %2554 = vmatprep.subr.mxu0 0.0
    %2555 = vmatpush1.msra.mxu0 0.0
    %2556 = vmatprep.subr.mxu0 0.0
    %2557 = vmatpush1.msra.mxu0 0.0
    %2558 = vmatprep.subr.mxu0 0.0
    %2559 = vmatpush1.msra.mxu0 0.0
    %2560 = vmatprep.subr.mxu0 0.0
    %2561 = vmatpush1.msra.mxu0 0.0
    %2562 = vmatprep.subr.mxu0 0.0
    %2563 = vmatpush1.msra.mxu0 0.0
    %2564 = vmatprep.subr.mxu0 0.0
    %2565 = vmatpush1.msra.mxu0 0.0
    %2566 = vmatprep.subr.mxu0 0.0
    %2567 = vmatpush1.msra.mxu0 0.0
    %2568 = vmatprep.subr.mxu0 0.0
    %2569 = vmatpush1.msra.mxu0 0.0
    %2570 = vmatprep.subr.mxu0 0.0
    %2571 = vmatpush1.msra.mxu0 0.0
    %2572 = vmatprep.subr.mxu0 0.0
    %2573 = vmatpush1.msra.mxu0 0.0
    %2574 = vmatprep.subr.mxu0 0.0
    %2575 = vmatpush1.msra.mxu0 0.0
    %2576 = vmatprep.subr.mxu0 0.0
    %2577 = vmatpush1.msra.mxu0 0.0
    %2578 = vmatprep.subr.mxu0 0.0
    %2579 = vmatpush1.msra.mxu0 0.0
    %2580 = vmatprep.subr.mxu0 0.0
    %2581 = vmatpush1.msra.mxu0 0.0
    %2582 = vmatprep.subr.mxu0 0.0
    %2583 = vmatpush1.msra.mxu0 0.0
    %2584 = vmatprep.subr.mxu0 0.0
    %2585 = vmatpush1.msra.mxu0 0.0
    %2586 = vmatprep.mubr.f32.mxu0 0.0
    %2587 = vmatmul.mubr.f32.gmra.mrb[0].mxu0 %v2520
    %v2588 = vpop.f32.mrb[0].mxu0
    %v2589 = vadd.f32 0.0, %v2588
    %v2590 = vpop.f32.mrb[0].mxu0
    %2591 = vdwg.mxu0
    %2592 = vrot.lane.b32.xlu0 %v2100, 32
    %v2593 = vpop.permute.xlu0 %2592
    %2594 = vrot.lane.b32.xlu0 %v2090, 32
    %v2595 = vpop.permute.xlu0 %2594
    %v2596 = vsel %vm394, %v2593, 0
    %v2598 = vsel %vm394, %v2595, 0
    %2600 = vmatprep.subr.mxu0 0.0
    %2601 = vmatpush1.xpose.msra.mxu0 %v2598
    %2602 = vmatprep.subr.mxu0 0.0
    %2603 = vmatpush1.xpose.msra.mxu0 0.0
    %2604 = vmatprep.subr.mxu0 0.0
    %2605 = vmatpush1.xpose.msra.mxu0 0.0
    %2606 = vmatprep.subr.mxu0 0.0
    %2607 = vmatpush1.xpose.msra.mxu0 0.0
    %2608 = vmatprep.subr.mxu0 0.0
    %2609 = vmatpush1.xpose.msra.mxu0 0.0
    %2610 = vmatprep.subr.mxu0 0.0
    %2611 = vmatpush1.xpose.msra.mxu0 0.0
    %2612 = vmatprep.subr.mxu0 0.0
    %2613 = vmatpush1.xpose.msra.mxu0 0.0
    %2614 = vmatprep.subr.mxu0 0.0
    %2615 = vmatpush1.xpose.msra.mxu0 0.0
    %2616 = vmatprep.subr.mxu0 0.0
    %2617 = vmatpush1.xpose.msra.mxu0 0.0
    %2618 = vmatprep.subr.mxu0 0.0
    %2619 = vmatpush1.xpose.msra.mxu0 0.0
    %2620 = vmatprep.subr.mxu0 0.0
    %2621 = vmatpush1.xpose.msra.mxu0 0.0
    %2622 = vmatprep.subr.mxu0 0.0
    %2623 = vmatpush1.xpose.msra.mxu0 0.0
    %2624 = vmatprep.subr.mxu0 0.0
    %2625 = vmatpush1.xpose.msra.mxu0 0.0
    %2626 = vmatprep.subr.mxu0 0.0
    %2627 = vmatpush1.xpose.msra.mxu0 0.0
    %2628 = vmatprep.subr.mxu0 0.0
    %2629 = vmatpush1.xpose.msra.mxu0 0.0
    %2630 = vmatprep.subr.mxu0 0.0
    %2631 = vmatpush1.xpose.msra.mxu0 0.0
    %2632 = vmatprep.subr.mxu0 0.0
    %2633 = vmatpush1.xpose.msra.mxu0 0.0
    %2634 = vmatprep.subr.mxu0 0.0
    %2635 = vmatpush1.xpose.msra.mxu0 0.0
    %2636 = vmatprep.subr.mxu0 0.0
    %2637 = vmatpush1.xpose.msra.mxu0 0.0
    %2638 = vmatprep.subr.mxu0 0.0
    %2639 = vmatpush1.xpose.msra.mxu0 0.0
    %2640 = vmatprep.subr.mxu0 0.0
    %2641 = vmatpush1.xpose.msra.mxu0 0.0
    %2642 = vmatprep.subr.mxu0 0.0
    %2643 = vmatpush1.xpose.msra.mxu0 0.0
    %2644 = vmatprep.subr.mxu0 0.0
    %2645 = vmatpush1.xpose.msra.mxu0 0.0
    %2646 = vmatprep.subr.mxu0 0.0
    %2647 = vmatpush1.xpose.msra.mxu0 0.0
    %2648 = vmatprep.subr.mxu0 0.0
    %2649 = vmatpush1.xpose.msra.mxu0 0.0
    %2650 = vmatprep.subr.mxu0 0.0
    %2651 = vmatpush1.xpose.msra.mxu0 0.0
    %2652 = vmatprep.subr.mxu0 0.0
    %2653 = vmatpush1.xpose.msra.mxu0 0.0
    %2654 = vmatprep.subr.mxu0 0.0
    %2655 = vmatpush1.xpose.msra.mxu0 0.0
    %2656 = vmatprep.subr.mxu0 0.0
    %2657 = vmatpush1.xpose.msra.mxu0 0.0
    %2658 = vmatprep.subr.mxu0 0.0
    %2659 = vmatpush1.xpose.msra.mxu0 0.0
    %2660 = vmatprep.subr.mxu0 0.0
    %2661 = vmatpush1.xpose.msra.mxu0 0.0
    %2662 = vmatprep.subr.mxu0 0.0
    %2663 = vmatpush1.xpose.msra.mxu0 0.0
    %2664 = vmatprep.mubr.f32.mxu0 0.0
    %2665 = vmatmul.mubr.f32.gmra.mrb[0].mxu0 %v2596
    %v2666 = vpop.f32.mrb[0].mxu0
    %v2667 = vadd.f32 0.0, %v2666
    %v2668 = vpop.f32.mrb[0].mxu0
    %2669 = vdwg.mxu0
    %v2670 = vsel %vm471, %v2667, -inf
    %2671 = vmax.xlane.f32.xlu0 %v2670
    %v2672 = vpop.xlane.xlu0 %2671
    %v2673 = vsub.f32 %v2667, %v2672
    %v2674 = vmul.f32 %v2673, 1.442695
    %v2675 = vpow.pop %v2674
    %v2676 = vsel %vm471, %v2675, 0.0
    %2677 = vadd.xlane.f32.xlu0 %v2676
    %v2678 = vpop.xlane.xlu0 %2677
    %v2679 = vrcp.pop %v2678
    %v2680 = vmul.f32 %v2675, %v2679
    %2681 = vrot.lane.b32.xlu0 %v2092, 32
    %v2682 = vpop.permute.xlu0 %2681
    %v2685 = vsel %vm471, %v2680, 0
    %2687 = vmatprep.subr.mxu0 0.0
    %2688 = vmatpush1.msra.mxu0 %v2682
    %2689 = vmatprep.subr.mxu0 0.0
    %2690 = vmatpush1.msra.mxu0 0.0
    %2691 = vmatprep.subr.mxu0 0.0
    %2692 = vmatpush1.msra.mxu0 0.0
    %2693 = vmatprep.subr.mxu0 0.0
    %2694 = vmatpush1.msra.mxu0 0.0
    %2695 = vmatprep.subr.mxu0 0.0
    %2696 = vmatpush1.msra.mxu0 0.0
    %2697 = vmatprep.subr.mxu0 0.0
    %2698 = vmatpush1.msra.mxu0 0.0
    %2699 = vmatprep.subr.mxu0 0.0
    %2700 = vmatpush1.msra.mxu0 0.0
    %2701 = vmatprep.subr.mxu0 0.0
    %2702 = vmatpush1.msra.mxu0 0.0
    %2703 = vmatprep.subr.mxu0 0.0
    %2704 = vmatpush1.msra.mxu0 0.0
    %2705 = vmatprep.subr.mxu0 0.0
    %2706 = vmatpush1.msra.mxu0 0.0
    %2707 = vmatprep.subr.mxu0 0.0
    %2708 = vmatpush1.msra.mxu0 0.0
    %2709 = vmatprep.subr.mxu0 0.0
    %2710 = vmatpush1.msra.mxu0 0.0
    %2711 = vmatprep.subr.mxu0 0.0
    %2712 = vmatpush1.msra.mxu0 0.0
    %2713 = vmatprep.subr.mxu0 0.0
    %2714 = vmatpush1.msra.mxu0 0.0
    %2715 = vmatprep.subr.mxu0 0.0
    %2716 = vmatpush1.msra.mxu0 0.0
    %2717 = vmatprep.subr.mxu0 0.0
    %2718 = vmatpush1.msra.mxu0 0.0
    %2719 = vmatprep.subr.mxu0 0.0
    %2720 = vmatpush1.msra.mxu0 0.0
    %2721 = vmatprep.subr.mxu0 0.0
    %2722 = vmatpush1.msra.mxu0 0.0
    %2723 = vmatprep.subr.mxu0 0.0
    %2724 = vmatpush1.msra.mxu0 0.0
    %2725 = vmatprep.subr.mxu0 0.0
    %2726 = vmatpush1.msra.mxu0 0.0
    %2727 = vmatprep.subr.mxu0 0.0
    %2728 = vmatpush1.msra.mxu0 0.0
    %2729 = vmatprep.subr.mxu0 0.0
    %2730 = vmatpush1.msra.mxu0 0.0
    %2731 = vmatprep.subr.mxu0 0.0
    %2732 = vmatpush1.msra.mxu0 0.0
    %2733 = vmatprep.subr.mxu0 0.0
    %2734 = vmatpush1.msra.mxu0 0.0
    %2735 = vmatprep.subr.mxu0 0.0
    %2736 = vmatpush1.msra.mxu0 0.0
    %2737 = vmatprep.subr.mxu0 0.0
    %2738 = vmatpush1.msra.mxu0 0.0
    %2739 = vmatprep.subr.mxu0 0.0
    %2740 = vmatpush1.msra.mxu0 0.0
    %2741 = vmatprep.subr.mxu0 0.0
    %2742 = vmatpush1.msra.mxu0 0.0
    %2743 = vmatprep.subr.mxu0 0.0
    %2744 = vmatpush1.msra.mxu0 0.0
    %2745 = vmatprep.subr.mxu0 0.0
    %2746 = vmatpush1.msra.mxu0 0.0
    %2747 = vmatprep.subr.mxu0 0.0
    %2748 = vmatpush1.msra.mxu0 0.0
    %2749 = vmatprep.subr.mxu0 0.0
    %2750 = vmatpush1.msra.mxu0 0.0
    %2751 = vmatprep.mubr.f32.mxu0 0.0
    %2752 = vmatmul.mubr.f32.gmra.mrb[0].mxu0 %v2685
    %v2753 = vpop.f32.mrb[0].mxu0
    %v2754 = vadd.f32 0.0, %v2753
    %v2755 = vpop.f32.mrb[0].mxu0
    %2756 = vdwg.mxu0
    %2758 = vrot.lane.b32.xlu0 %v2424, 32
    %v2759 = vpop.permute.xlu0 %2758
    %2762 = vrot.lane.b32.xlu0 %v2589, 64
    %v2763 = vpop.permute.xlu0 %2762
    %2766 = vrot.lane.b32.xlu0 %v2754, 96
    %v2767 = vpop.permute.xlu0 %2766
    %v2769 = vsel %vm394, %v2258, %v2759
    %v2770 = vsel %vm1065, %v2769, %v2763
    %v2771 = vsel %vm1067, %v2770, %v2767
    %v2772 = vmul.f32 %v1976, 0.17677669
    %v2774 = vsel %vm394, %v2772, 0
    %v2777 = vsel %vm394, %v2096, 0
    %2779 = vmatprep.subr.mxu0 0.0
    %2780 = vmatpush1.xpose.msra.mxu0 %v2777
    %2781 = vmatprep.subr.mxu0 0.0
    %2782 = vmatpush1.xpose.msra.mxu0 0.0
    %2783 = vmatprep.subr.mxu0 0.0
    %2784 = vmatpush1.xpose.msra.mxu0 0.0
    %2785 = vmatprep.subr.mxu0 0.0
    %2786 = vmatpush1.xpose.msra.mxu0 0.0
    %2787 = vmatprep.subr.mxu0 0.0
    %2788 = vmatpush1.xpose.msra.mxu0 0.0
    %2789 = vmatprep.subr.mxu0 0.0
    %2790 = vmatpush1.xpose.msra.mxu0 0.0
    %2791 = vmatprep.subr.mxu0 0.0
    %2792 = vmatpush1.xpose.msra.mxu0 0.0
    %2793 = vmatprep.subr.mxu0 0.0
    %2794 = vmatpush1.xpose.msra.mxu0 0.0
    %2795 = vmatprep.subr.mxu0 0.0
    %2796 = vmatpush1.xpose.msra.mxu0 0.0
    %2797 = vmatprep.subr.mxu0 0.0
    %2798 = vmatpush1.xpose.msra.mxu0 0.0
    %2799 = vmatprep.subr.mxu0 0.0
    %2800 = vmatpush1.xpose.msra.mxu0 0.0
    %2801 = vmatprep.subr.mxu0 0.0
    %2802 = vmatpush1.xpose.msra.mxu0 0.0
    %2803 = vmatprep.subr.mxu0 0.0
    %2804 = vmatpush1.xpose.msra.mxu0 0.0
    %2805 = vmatprep.subr.mxu0 0.0
    %2806 = vmatpush1.xpose.msra.mxu0 0.0
    %2807 = vmatprep.subr.mxu0 0.0
    %2808 = vmatpush1.xpose.msra.mxu0 0.0
    %2809 = vmatprep.subr.mxu0 0.0
    %2810 = vmatpush1.xpose.msra.mxu0 0.0
    %2811 = vmatprep.subr.mxu0 0.0
    %2812 = vmatpush1.xpose.msra.mxu0 0.0
    %2813 = vmatprep.subr.mxu0 0.0
    %2814 = vmatpush1.xpose.msra.mxu0 0.0
    %2815 = vmatprep.subr.mxu0 0.0
    %2816 = vmatpush1.xpose.msra.mxu0 0.0
    %2817 = vmatprep.subr.mxu0 0.0
    %2818 = vmatpush1.xpose.msra.mxu0 0.0
    %2819 = vmatprep.subr.mxu0 0.0
    %2820 = vmatpush1.xpose.msra.mxu0 0.0
    %2821 = vmatprep.subr.mxu0 0.0
    %2822 = vmatpush1.xpose.msra.mxu0 0.0
    %2823 = vmatprep.subr.mxu0 0.0
    %2824 = vmatpush1.xpose.msra.mxu0 0.0
    %2825 = vmatprep.subr.mxu0 0.0
    %2826 = vmatpush1.xpose.msra.mxu0 0.0
    %2827 = vmatprep.subr.mxu0 0.0
    %2828 = vmatpush1.xpose.msra.mxu0 0.0
    %2829 = vmatprep.subr.mxu0 0.0
    %2830 = vmatpush1.xpose.msra.mxu0 0.0
    %2831 = vmatprep.subr.mxu0 0.0
    %2832 = vmatpush1.xpose.msra.mxu0 0.0
    %2833 = vmatprep.subr.mxu0 0.0
    %2834 = vmatpush1.xpose.msra.mxu0 0.0
    %2835 = vmatprep.subr.mxu0 0.0
    %2836 = vmatpush1.xpose.msra.mxu0 0.0
    %2837 = vmatprep.subr.mxu0 0.0
    %2838 = vmatpush1.xpose.msra.mxu0 0.0
    %2839 = vmatprep.subr.mxu0 0.0
    %2840 = vmatpush1.xpose.msra.mxu0 0.0
    %2841 = vmatprep.subr.mxu0 0.0
    %2842 = vmatpush1.xpose.msra.mxu0 0.0
    %2843 = vmatprep.mubr.f32.mxu0 0.0
    %2844 = vmatmul.mubr.f32.gmra.mrb[0].mxu0 %v2774
    %v2845 = vpop.f32.mrb[0].mxu0
    %v2846 = vadd.f32 0.0, %v2845
    %v2847 = vpop.f32.mrb[0].mxu0
    %2848 = vdwg.mxu0
    %v2849 = vsel %vm471, %v2846, -inf
    %2850 = vmax.xlane.f32.xlu0 %v2849
    %v2851 = vpop.xlane.xlu0 %2850
    %v2852 = vsub.f32 %v2846, %v2851
    %v2853 = vmul.f32 %v2852, 1.442695
    %v2854 = vpow.pop %v2853
    %v2855 = vsel %vm471, %v2854, 0.0
    %2856 = vadd.xlane.f32.xlu0 %v2855
    %v2857 = vpop.xlane.xlu0 %2856
    %v2858 = vrcp.pop %v2857
    %v2859 = vmul.f32 %v2854, %v2858
    %v2861 = vsel %vm471, %v2859, 0
    %2863 = vmatprep.subr.mxu0 0.0
    %2864 = vmatpush1.msra.mxu0 %v2098
    %2865 = vmatprep.subr.mxu0 0.0
    %2866 = vmatpush1.msra.mxu0 0.0
    %2867 = vmatprep.subr.mxu0 0.0
    %2868 = vmatpush1.msra.mxu0 0.0
    %2869 = vmatprep.subr.mxu0 0.0
    %2870 = vmatpush1.msra.mxu0 0.0
    %2871 = vmatprep.subr.mxu0 0.0
    %2872 = vmatpush1.msra.mxu0 0.0
    %2873 = vmatprep.subr.mxu0 0.0
    %2874 = vmatpush1.msra.mxu0 0.0
    %2875 = vmatprep.subr.mxu0 0.0
    %2876 = vmatpush1.msra.mxu0 0.0
    %2877 = vmatprep.subr.mxu0 0.0
    %2878 = vmatpush1.msra.mxu0 0.0
    %2879 = vmatprep.subr.mxu0 0.0
    %2880 = vmatpush1.msra.mxu0 0.0
    %2881 = vmatprep.subr.mxu0 0.0
    %2882 = vmatpush1.msra.mxu0 0.0
    %2883 = vmatprep.subr.mxu0 0.0
    %2884 = vmatpush1.msra.mxu0 0.0
    %2885 = vmatprep.subr.mxu0 0.0
    %2886 = vmatpush1.msra.mxu0 0.0
    %2887 = vmatprep.subr.mxu0 0.0
    %2888 = vmatpush1.msra.mxu0 0.0
    %2889 = vmatprep.subr.mxu0 0.0
    %2890 = vmatpush1.msra.mxu0 0.0
    %2891 = vmatprep.subr.mxu0 0.0
    %2892 = vmatpush1.msra.mxu0 0.0
    %2893 = vmatprep.subr.mxu0 0.0
    %2894 = vmatpush1.msra.mxu0 0.0
    %2895 = vmatprep.subr.mxu0 0.0
    %2896 = vmatpush1.msra.mxu0 0.0
    %2897 = vmatprep.subr.mxu0 0.0
    %2898 = vmatpush1.msra.mxu0 0.0
    %2899 = vmatprep.subr.mxu0 0.0
    %2900 = vmatpush1.msra.mxu0 0.0
    %2901 = vmatprep.subr.mxu0 0.0
    %2902 = vmatpush1.msra.mxu0 0.0
    %2903 = vmatprep.subr.mxu0 0.0
    %2904 = vmatpush1.msra.mxu0 0.0
    %2905 = vmatprep.subr.mxu0 0.0
    %2906 = vmatpush1.msra.mxu0 0.0
    %2907 = vmatprep.subr.mxu0 0.0
    %2908 = vmatpush1.msra.mxu0 0.0
    %2909 = vmatprep.subr.mxu0 0.0
    %2910 = vmatpush1.msra.mxu0 0.0
    %2911 = vmatprep.subr.mxu0 0.0
    %2912 = vmatpush1.msra.mxu0 0.0
    %2913 = vmatprep.subr.mxu0 0.0
    %2914 = vmatpush1.msra.mxu0 0.0
    %2915 = vmatprep.subr.mxu0 0.0
    %2916 = vmatpush1.msra.mxu0 0.0
    %2917 = vmatprep.subr.mxu0 0.0
    %2918 = vmatpush1.msra.mxu0 0.0
    %2919 = vmatprep.subr.mxu0 0.0
    %2920 = vmatpush1.msra.mxu0 0.0
    %2921 = vmatprep.subr.mxu0 0.0
    %2922 = vmatpush1.msra.mxu0 0.0
    %2923 = vmatprep.subr.mxu0 0.0
    %2924 = vmatpush1.msra.mxu0 0.0
    %2925 = vmatprep.subr.mxu0 0.0
    %2926 = vmatpush1.msra.mxu0 0.0
    %2927 = vmatprep.mubr.f32.mxu0 0.0
    %2928 = vmatmul.mubr.f32.gmra.mrb[0].mxu0 %v2861
    %v2929 = vpop.f32.mrb[0].mxu0
    %v2930 = vadd.f32 0.0, %v2929
    %v2931 = vpop.f32.mrb[0].mxu0
    %2932 = vdwg.mxu0
    %2933 = vrot.lane.b32.xlu0 %v2772, 96
    %v2934 = vpop.permute.xlu0 %2933
    %2935 = vrot.lane.b32.xlu0 %v2096, 96
    %v2936 = vpop.permute.xlu0 %2935
    %v2937 = vsel %vm394, %v2934, 0
    %v2939 = vsel %vm394, %v2936, 0
    %2941 = vmatprep.subr.mxu0 0.0
    %2942 = vmatpush1.xpose.msra.mxu0 %v2939
    %2943 = vmatprep.subr.mxu0 0.0
    %2944 = vmatpush1.xpose.msra.mxu0 0.0
    %2945 = vmatprep.subr.mxu0 0.0
    %2946 = vmatpush1.xpose.msra.mxu0 0.0
    %2947 = vmatprep.subr.mxu0 0.0
    %2948 = vmatpush1.xpose.msra.mxu0 0.0
    %2949 = vmatprep.subr.mxu0 0.0
    %2950 = vmatpush1.xpose.msra.mxu0 0.0
    %2951 = vmatprep.subr.mxu0 0.0
    %2952 = vmatpush1.xpose.msra.mxu0 0.0
    %2953 = vmatprep.subr.mxu0 0.0
    %2954 = vmatpush1.xpose.msra.mxu0 0.0
    %2955 = vmatprep.subr.mxu0 0.0
    %2956 = vmatpush1.xpose.msra.mxu0 0.0
    %2957 = vmatprep.subr.mxu0 0.0
    %2958 = vmatpush1.xpose.msra.mxu0 0.0
    %2959 = vmatprep.subr.mxu0 0.0
    %2960 = vmatpush1.xpose.msra.mxu0 0.0
    %2961 = vmatprep.subr.mxu0 0.0
    %2962 = vmatpush1.xpose.msra.mxu0 0.0
    %2963 = vmatprep.subr.mxu0 0.0
    %2964 = vmatpush1.xpose.msra.mxu0 0.0
    %2965 = vmatprep.subr.mxu0 0.0
    %2966 = vmatpush1.xpose.msra.mxu0 0.0
    %2967 = vmatprep.subr.mxu0 0.0
    %2968 = vmatpush1.xpose.msra.mxu0 0.0
    %2969 = vmatprep.subr.mxu0 0.0
    %2970 = vmatpush1.xpose.msra.mxu0 0.0
    %2971 = vmatprep.subr.mxu0 0.0
    %2972 = vmatpush1.xpose.msra.mxu0 0.0
    %2973 = vmatprep.subr.mxu0 0.0
    %2974 = vmatpush1.xpose.msra.mxu0 0.0
    %2975 = vmatprep.subr.mxu0 0.0
    %2976 = vmatpush1.xpose.msra.mxu0 0.0
    %2977 = vmatprep.subr.mxu0 0.0
    %2978 = vmatpush1.xpose.msra.mxu0 0.0
    %2979 = vmatprep.subr.mxu0 0.0
    %2980 = vmatpush1.xpose.msra.mxu0 0.0
    %2981 = vmatprep.subr.mxu0 0.0
    %2982 = vmatpush1.xpose.msra.mxu0 0.0
    %2983 = vmatprep.subr.mxu0 0.0
    %2984 = vmatpush1.xpose.msra.mxu0 0.0
    %2985 = vmatprep.subr.mxu0 0.0
    %2986 = vmatpush1.xpose.msra.mxu0 0.0
    %2987 = vmatprep.subr.mxu0 0.0
    %2988 = vmatpush1.xpose.msra.mxu0 0.0
    %2989 = vmatprep.subr.mxu0 0.0
    %2990 = vmatpush1.xpose.msra.mxu0 0.0
    %2991 = vmatprep.subr.mxu0 0.0
    %2992 = vmatpush1.xpose.msra.mxu0 0.0
    %2993 = vmatprep.subr.mxu0 0.0
    %2994 = vmatpush1.xpose.msra.mxu0 0.0
    %2995 = vmatprep.subr.mxu0 0.0
    %2996 = vmatpush1.xpose.msra.mxu0 0.0
    %2997 = vmatprep.subr.mxu0 0.0
    %2998 = vmatpush1.xpose.msra.mxu0 0.0
    %2999 = vmatprep.subr.mxu0 0.0
    %3000 = vmatpush1.xpose.msra.mxu0 0.0
    %3001 = vmatprep.subr.mxu0 0.0
    %3002 = vmatpush1.xpose.msra.mxu0 0.0
    %3003 = vmatprep.subr.mxu0 0.0
    %3004 = vmatpush1.xpose.msra.mxu0 0.0
    %3005 = vmatprep.mubr.f32.mxu0 0.0
    %3006 = vmatmul.mubr.f32.gmra.mrb[0].mxu0 %v2937
    %v3007 = vpop.f32.mrb[0].mxu0
    %v3008 = vadd.f32 0.0, %v3007
    %v3009 = vpop.f32.mrb[0].mxu0
    %3010 = vdwg.mxu0
    %v3011 = vsel %vm471, %v3008, -inf
    %3012 = vmax.xlane.f32.xlu0 %v3011
    %v3013 = vpop.xlane.xlu0 %3012
    %v3014 = vsub.f32 %v3008, %v3013
    %v3015 = vmul.f32 %v3014, 1.442695
    %v3016 = vpow.pop %v3015
    %v3017 = vsel %vm471, %v3016, 0.0
    %3018 = vadd.xlane.f32.xlu0 %v3017
    %v3019 = vpop.xlane.xlu0 %3018
    %v3020 = vrcp.pop %v3019
    %v3021 = vmul.f32 %v3016, %v3020
    %3023 = vrot.lane.b32.xlu0 %v2098, 96
    %v3024 = vpop.permute.xlu0 %3023
    %v3027 = vsel %vm471, %v3021, 0
    %3029 = vmatprep.subr.mxu0 0.0
    %3030 = vmatpush1.msra.mxu0 %v3024
    %3031 = vmatprep.subr.mxu0 0.0
    %3032 = vmatpush1.msra.mxu0 0.0
    %3033 = vmatprep.subr.mxu0 0.0
    %3034 = vmatpush1.msra.mxu0 0.0
    %3035 = vmatprep.subr.mxu0 0.0
    %3036 = vmatpush1.msra.mxu0 0.0
    %3037 = vmatprep.subr.mxu0 0.0
    %3038 = vmatpush1.msra.mxu0 0.0
    %3039 = vmatprep.subr.mxu0 0.0
    %3040 = vmatpush1.msra.mxu0 0.0
    %3041 = vmatprep.subr.mxu0 0.0
    %3042 = vmatpush1.msra.mxu0 0.0
    %3043 = vmatprep.subr.mxu0 0.0
    %3044 = vmatpush1.msra.mxu0 0.0
    %3045 = vmatprep.subr.mxu0 0.0
    %3046 = vmatpush1.msra.mxu0 0.0
    %3047 = vmatprep.subr.mxu0 0.0
    %3048 = vmatpush1.msra.mxu0 0.0
    %3049 = vmatprep.subr.mxu0 0.0
    %3050 = vmatpush1.msra.mxu0 0.0
    %3051 = vmatprep.subr.mxu0 0.0
    %3052 = vmatpush1.msra.mxu0 0.0
    %3053 = vmatprep.subr.mxu0 0.0
    %3054 = vmatpush1.msra.mxu0 0.0
    %3055 = vmatprep.subr.mxu0 0.0
    %3056 = vmatpush1.msra.mxu0 0.0
    %3057 = vmatprep.subr.mxu0 0.0
    %3058 = vmatpush1.msra.mxu0 0.0
    %3059 = vmatprep.subr.mxu0 0.0
    %3060 = vmatpush1.msra.mxu0 0.0
    %3061 = vmatprep.subr.mxu0 0.0
    %3062 = vmatpush1.msra.mxu0 0.0
    %3063 = vmatprep.subr.mxu0 0.0
    %3064 = vmatpush1.msra.mxu0 0.0
    %3065 = vmatprep.subr.mxu0 0.0
    %3066 = vmatpush1.msra.mxu0 0.0
    %3067 = vmatprep.subr.mxu0 0.0
    %3068 = vmatpush1.msra.mxu0 0.0
    %3069 = vmatprep.subr.mxu0 0.0
    %3070 = vmatpush1.msra.mxu0 0.0
    %3071 = vmatprep.subr.mxu0 0.0
    %3072 = vmatpush1.msra.mxu0 0.0
    %3073 = vmatprep.subr.mxu0 0.0
    %3074 = vmatpush1.msra.mxu0 0.0
    %3075 = vmatprep.subr.mxu0 0.0
    %3076 = vmatpush1.msra.mxu0 0.0
    %3077 = vmatprep.subr.mxu0 0.0
    %3078 = vmatpush1.msra.mxu0 0.0
    %3079 = vmatprep.subr.mxu0 0.0
    %3080 = vmatpush1.msra.mxu0 0.0
    %3081 = vmatprep.subr.mxu0 0.0
    %3082 = vmatpush1.msra.mxu0 0.0
    %3083 = vmatprep.subr.mxu0 0.0
    %3084 = vmatpush1.msra.mxu0 0.0
    %3085 = vmatprep.subr.mxu0 0.0
    %3086 = vmatpush1.msra.mxu0 0.0
    %3087 = vmatprep.subr.mxu0 0.0
    %3088 = vmatpush1.msra.mxu0 0.0
    %3089 = vmatprep.subr.mxu0 0.0
    %3090 = vmatpush1.msra.mxu0 0.0
    %3091 = vmatprep.subr.mxu0 0.0
    %3092 = vmatpush1.msra.mxu0 0.0
    %3093 = vmatprep.mubr.f32.mxu0 0.0
    %3094 = vmatmul.mubr.f32.gmra.mrb[0].mxu0 %v3027
    %v3095 = vpop.f32.mrb[0].mxu0
    %v3096 = vadd.f32 0.0, %v3095
    %v3097 = vpop.f32.mrb[0].mxu0
    %3098 = vdwg.mxu0
    %3099 = vrot.lane.b32.xlu0 %v2772, 64
    %v3100 = vpop.permute.xlu0 %3099
    %3101 = vrot.lane.b32.xlu0 %v2096, 64
    %v3102 = vpop.permute.xlu0 %3101
    %v3103 = vsel %vm394, %v3100, 0
    %v3105 = vsel %vm394, %v3102, 0
    %3107 = vmatprep.subr.mxu0 0.0
    %3108 = vmatpush1.xpose.msra.mxu0 %v3105
    %3109 = vmatprep.subr.mxu0 0.0
    %3110 = vmatpush1.xpose.msra.mxu0 0.0
    %3111 = vmatprep.subr.mxu0 0.0
    %3112 = vmatpush1.xpose.msra.mxu0 0.0
    %3113 = vmatprep.subr.mxu0 0.0
    %3114 = vmatpush1.xpose.msra.mxu0 0.0
    %3115 = vmatprep.subr.mxu0 0.0
    %3116 = vmatpush1.xpose.msra.mxu0 0.0
    %3117 = vmatprep.subr.mxu0 0.0
    %3118 = vmatpush1.xpose.msra.mxu0 0.0
    %3119 = vmatprep.subr.mxu0 0.0
    %3120 = vmatpush1.xpose.msra.mxu0 0.0
    %3121 = vmatprep.subr.mxu0 0.0
    %3122 = vmatpush1.xpose.msra.mxu0 0.0
    %3123 = vmatprep.subr.mxu0 0.0
    %3124 = vmatpush1.xpose.msra.mxu0 0.0
    %3125 = vmatprep.subr.mxu0 0.0
    %3126 = vmatpush1.xpose.msra.mxu0 0.0
    %3127 = vmatprep.subr.mxu0 0.0
    %3128 = vmatpush1.xpose.msra.mxu0 0.0
    %3129 = vmatprep.subr.mxu0 0.0
    %3130 = vmatpush1.xpose.msra.mxu0 0.0
    %3131 = vmatprep.subr.mxu0 0.0
    %3132 = vmatpush1.xpose.msra.mxu0 0.0
    %3133 = vmatprep.subr.mxu0 0.0
    %3134 = vmatpush1.xpose.msra.mxu0 0.0
    %3135 = vmatprep.subr.mxu0 0.0
    %3136 = vmatpush1.xpose.msra.mxu0 0.0
    %3137 = vmatprep.subr.mxu0 0.0
    %3138 = vmatpush1.xpose.msra.mxu0 0.0
    %3139 = vmatprep.subr.mxu0 0.0
    %3140 = vmatpush1.xpose.msra.mxu0 0.0
    %3141 = vmatprep.subr.mxu0 0.0
    %3142 = vmatpush1.xpose.msra.mxu0 0.0
    %3143 = vmatprep.subr.mxu0 0.0
    %3144 = vmatpush1.xpose.msra.mxu0 0.0
    %3145 = vmatprep.subr.mxu0 0.0
    %3146 = vmatpush1.xpose.msra.mxu0 0.0
    %3147 = vmatprep.subr.mxu0 0.0
    %3148 = vmatpush1.xpose.msra.mxu0 0.0
    %3149 = vmatprep.subr.mxu0 0.0
    %3150 = vmatpush1.xpose.msra.mxu0 0.0
    %3151 = vmatprep.subr.mxu0 0.0
    %3152 = vmatpush1.xpose.msra.mxu0 0.0
    %3153 = vmatprep.subr.mxu0 0.0
    %3154 = vmatpush1.xpose.msra.mxu0 0.0
    %3155 = vmatprep.subr.mxu0 0.0
    %3156 = vmatpush1.xpose.msra.mxu0 0.0
    %3157 = vmatprep.subr.mxu0 0.0
    %3158 = vmatpush1.xpose.msra.mxu0 0.0
    %3159 = vmatprep.subr.mxu0 0.0
    %3160 = vmatpush1.xpose.msra.mxu0 0.0
    %3161 = vmatprep.subr.mxu0 0.0
    %3162 = vmatpush1.xpose.msra.mxu0 0.0
    %3163 = vmatprep.subr.mxu0 0.0
    %3164 = vmatpush1.xpose.msra.mxu0 0.0
    %3165 = vmatprep.subr.mxu0 0.0
    %3166 = vmatpush1.xpose.msra.mxu0 0.0
    %3167 = vmatprep.subr.mxu0 0.0
    %3168 = vmatpush1.xpose.msra.mxu0 0.0
    %3169 = vmatprep.subr.mxu0 0.0
    %3170 = vmatpush1.xpose.msra.mxu0 0.0
    %3171 = vmatprep.mubr.f32.mxu0 0.0
    %3172 = vmatmul.mubr.f32.gmra.mrb[0].mxu0 %v3103
    %v3173 = vpop.f32.mrb[0].mxu0
    %v3174 = vadd.f32 0.0, %v3173
    %v3175 = vpop.f32.mrb[0].mxu0
    %3176 = vdwg.mxu0
    %v3177 = vsel %vm471, %v3174, -inf
    %3178 = vmax.xlane.f32.xlu0 %v3177
    %v3179 = vpop.xlane.xlu0 %3178
    %v3180 = vsub.f32 %v3174, %v3179
    %v3181 = vmul.f32 %v3180, 1.442695
    %v3182 = vpow.pop %v3181
    %v3183 = vsel %vm471, %v3182, 0.0
    %3184 = vadd.xlane.f32.xlu0 %v3183
    %v3185 = vpop.xlane.xlu0 %3184
    %v3186 = vrcp.pop %v3185
    %v3187 = vmul.f32 %v3182, %v3186
    %3188 = vrot.lane.b32.xlu0 %v2098, 64
    %v3189 = vpop.permute.xlu0 %3188
    %v3192 = vsel %vm471, %v3187, 0
    %3194 = vmatprep.subr.mxu0 0.0
    %3195 = vmatpush1.msra.mxu0 %v3189
    %3196 = vmatprep.subr.mxu0 0.0
    %3197 = vmatpush1.msra.mxu0 0.0
    %3198 = vmatprep.subr.mxu0 0.0
    %3199 = vmatpush1.msra.mxu0 0.0
    %3200 = vmatprep.subr.mxu0 0.0
    %3201 = vmatpush1.msra.mxu0 0.0
    %3202 = vmatprep.subr.mxu0 0.0
    %3203 = vmatpush1.msra.mxu0 0.0
    %3204 = vmatprep.subr.mxu0 0.0
    %3205 = vmatpush1.msra.mxu0 0.0
    %3206 = vmatprep.subr.mxu0 0.0
    %3207 = vmatpush1.msra.mxu0 0.0
    %3208 = vmatprep.subr.mxu0 0.0
    %3209 = vmatpush1.msra.mxu0 0.0
    %3210 = vmatprep.subr.mxu0 0.0
    %3211 = vmatpush1.msra.mxu0 0.0
    %3212 = vmatprep.subr.mxu0 0.0
    %3213 = vmatpush1.msra.mxu0 0.0
    %3214 = vmatprep.subr.mxu0 0.0
    %3215 = vmatpush1.msra.mxu0 0.0
    %3216 = vmatprep.subr.mxu0 0.0
    %3217 = vmatpush1.msra.mxu0 0.0
    %3218 = vmatprep.subr.mxu0 0.0
    %3219 = vmatpush1.msra.mxu0 0.0
    %3220 = vmatprep.subr.mxu0 0.0
    %3221 = vmatpush1.msra.mxu0 0.0
    %3222 = vmatprep.subr.mxu0 0.0
    %3223 = vmatpush1.msra.mxu0 0.0
    %3224 = vmatprep.subr.mxu0 0.0
    %3225 = vmatpush1.msra.mxu0 0.0
    %3226 = vmatprep.subr.mxu0 0.0
    %3227 = vmatpush1.msra.mxu0 0.0
    %3228 = vmatprep.subr.mxu0 0.0
    %3229 = vmatpush1.msra.mxu0 0.0
    %3230 = vmatprep.subr.mxu0 0.0
    %3231 = vmatpush1.msra.mxu0 0.0
    %3232 = vmatprep.subr.mxu0 0.0
    %3233 = vmatpush1.msra.mxu0 0.0
    %3234 = vmatprep.subr.mxu0 0.0
    %3235 = vmatpush1.msra.mxu0 0.0
    %3236 = vmatprep.subr.mxu0 0.0
    %3237 = vmatpush1.msra.mxu0 0.0
    %3238 = vmatprep.subr.mxu0 0.0
    %3239 = vmatpush1.msra.mxu0 0.0
    %3240 = vmatprep.subr.mxu0 0.0
    %3241 = vmatpush1.msra.mxu0 0.0
    %3242 = vmatprep.subr.mxu0 0.0
    %3243 = vmatpush1.msra.mxu0 0.0
    %3244 = vmatprep.subr.mxu0 0.0
    %3245 = vmatpush1.msra.mxu0 0.0
    %3246 = vmatprep.subr.mxu0 0.0
    %3247 = vmatpush1.msra.mxu0 0.0
    %3248 = vmatprep.subr.mxu0 0.0
    %3249 = vmatpush1.msra.mxu0 0.0
    %3250 = vmatprep.subr.mxu0 0.0
    %3251 = vmatpush1.msra.mxu0 0.0
    %3252 = vmatprep.subr.mxu0 0.0
    %3253 = vmatpush1.msra.mxu0 0.0
    %3254 = vmatprep.subr.mxu0 0.0
    %3255 = vmatpush1.msra.mxu0 0.0
    %3256 = vmatprep.subr.mxu0 0.0
    %3257 = vmatpush1.msra.mxu0 0.0
    %3258 = vmatprep.mubr.f32.mxu0 0.0
    %3259 = vmatmul.mubr.f32.gmra.mrb[0].mxu0 %v3192
    %v3260 = vpop.f32.mrb[0].mxu0
    %v3261 = vadd.f32 0.0, %v3260
    %v3262 = vpop.f32.mrb[0].mxu0
    %3263 = vdwg.mxu0
    %3264 = vrot.lane.b32.xlu0 %v2772, 32
    %v3265 = vpop.permute.xlu0 %3264
    %3266 = vrot.lane.b32.xlu0 %v2096, 32
    %v3267 = vpop.permute.xlu0 %3266
    %v3268 = vsel %vm394, %v3265, 0
    %v3270 = vsel %vm394, %v3267, 0
    %3272 = vmatprep.subr.mxu0 0.0
    %3273 = vmatpush1.xpose.msra.mxu0 %v3270
    %3274 = vmatprep.subr.mxu0 0.0
    %3275 = vmatpush1.xpose.msra.mxu0 0.0
    %3276 = vmatprep.subr.mxu0 0.0
    %3277 = vmatpush1.xpose.msra.mxu0 0.0
    %3278 = vmatprep.subr.mxu0 0.0
    %3279 = vmatpush1.xpose.msra.mxu0 0.0
    %3280 = vmatprep.subr.mxu0 0.0
    %3281 = vmatpush1.xpose.msra.mxu0 0.0
    %3282 = vmatprep.subr.mxu0 0.0
    %3283 = vmatpush1.xpose.msra.mxu0 0.0
    %3284 = vmatprep.subr.mxu0 0.0
    %3285 = vmatpush1.xpose.msra.mxu0 0.0
    %3286 = vmatprep.subr.mxu0 0.0
    %3287 = vmatpush1.xpose.msra.mxu0 0.0
    %3288 = vmatprep.subr.mxu0 0.0
    %3289 = vmatpush1.xpose.msra.mxu0 0.0
    %3290 = vmatprep.subr.mxu0 0.0
    %3291 = vmatpush1.xpose.msra.mxu0 0.0
    %3292 = vmatprep.subr.mxu0 0.0
    %3293 = vmatpush1.xpose.msra.mxu0 0.0
    %3294 = vmatprep.subr.mxu0 0.0
    %3295 = vmatpush1.xpose.msra.mxu0 0.0
    %3296 = vmatprep.subr.mxu0 0.0
    %3297 = vmatpush1.xpose.msra.mxu0 0.0
    %3298 = vmatprep.subr.mxu0 0.0
    %3299 = vmatpush1.xpose.msra.mxu0 0.0
    %3300 = vmatprep.subr.mxu0 0.0
    %3301 = vmatpush1.xpose.msra.mxu0 0.0
    %3302 = vmatprep.subr.mxu0 0.0
    %3303 = vmatpush1.xpose.msra.mxu0 0.0
    %3304 = vmatprep.subr.mxu0 0.0
    %3305 = vmatpush1.xpose.msra.mxu0 0.0
    %3306 = vmatprep.subr.mxu0 0.0
    %3307 = vmatpush1.xpose.msra.mxu0 0.0
    %3308 = vmatprep.subr.mxu0 0.0
    %3309 = vmatpush1.xpose.msra.mxu0 0.0
    %3310 = vmatprep.subr.mxu0 0.0
    %3311 = vmatpush1.xpose.msra.mxu0 0.0
    %3312 = vmatprep.subr.mxu0 0.0
    %3313 = vmatpush1.xpose.msra.mxu0 0.0
    %3314 = vmatprep.subr.mxu0 0.0
    %3315 = vmatpush1.xpose.msra.mxu0 0.0
    %3316 = vmatprep.subr.mxu0 0.0
    %3317 = vmatpush1.xpose.msra.mxu0 0.0
    %3318 = vmatprep.subr.mxu0 0.0
    %3319 = vmatpush1.xpose.msra.mxu0 0.0
    %3320 = vmatprep.subr.mxu0 0.0
    %3321 = vmatpush1.xpose.msra.mxu0 0.0
    %3322 = vmatprep.subr.mxu0 0.0
    %3323 = vmatpush1.xpose.msra.mxu0 0.0
    %3324 = vmatprep.subr.mxu0 0.0
    %3325 = vmatpush1.xpose.msra.mxu0 0.0
    %3326 = vmatprep.subr.mxu0 0.0
    %3327 = vmatpush1.xpose.msra.mxu0 0.0
    %3328 = vmatprep.subr.mxu0 0.0
    %3329 = vmatpush1.xpose.msra.mxu0 0.0
    %3330 = vmatprep.subr.mxu0 0.0
    %3331 = vmatpush1.xpose.msra.mxu0 0.0
    %3332 = vmatprep.subr.mxu0 0.0
    %3333 = vmatpush1.xpose.msra.mxu0 0.0
    %3334 = vmatprep.subr.mxu0 0.0
    %3335 = vmatpush1.xpose.msra.mxu0 0.0
    %3336 = vmatprep.mubr.f32.mxu0 0.0
    %3337 = vmatmul.mubr.f32.gmra.mrb[0].mxu0 %v3268
    %v3338 = vpop.f32.mrb[0].mxu0
    %v3339 = vadd.f32 0.0, %v3338
    %v3340 = vpop.f32.mrb[0].mxu0
    %3341 = vdwg.mxu0
    %v3342 = vsel %vm471, %v3339, -inf
    %3343 = vmax.xlane.f32.xlu0 %v3342
    %v3344 = vpop.xlane.xlu0 %3343
    %v3345 = vsub.f32 %v3339, %v3344
    %v3346 = vmul.f32 %v3345, 1.442695
    %v3347 = vpow.pop %v3346
    %v3348 = vsel %vm471, %v3347, 0.0
    %3349 = vadd.xlane.f32.xlu0 %v3348
    %v3350 = vpop.xlane.xlu0 %3349
    %v3351 = vrcp.pop %v3350
    %v3352 = vmul.f32 %v3347, %v3351
    %3353 = vrot.lane.b32.xlu0 %v2098, 32
    %v3354 = vpop.permute.xlu0 %3353
    %v3357 = vsel %vm471, %v3352, 0
    %3359 = vmatprep.subr.mxu0 0.0
    %3360 = vmatpush1.msra.mxu0 %v3354
    %3361 = vmatprep.subr.mxu0 0.0
    %3362 = vmatpush1.msra.mxu0 0.0
    %3363 = vmatprep.subr.mxu0 0.0
    %3364 = vmatpush1.msra.mxu0 0.0
    %3365 = vmatprep.subr.mxu0 0.0
    %3366 = vmatpush1.msra.mxu0 0.0
    %3367 = vmatprep.subr.mxu0 0.0
    %3368 = vmatpush1.msra.mxu0 0.0
    %3369 = vmatprep.subr.mxu0 0.0
    %3370 = vmatpush1.msra.mxu0 0.0
    %3371 = vmatprep.subr.mxu0 0.0
    %3372 = vmatpush1.msra.mxu0 0.0
    %3373 = vmatprep.subr.mxu0 0.0
    %3374 = vmatpush1.msra.mxu0 0.0
    %3375 = vmatprep.subr.mxu0 0.0
    %3376 = vmatpush1.msra.mxu0 0.0
    %3377 = vmatprep.subr.mxu0 0.0
    %3378 = vmatpush1.msra.mxu0 0.0
    %3379 = vmatprep.subr.mxu0 0.0
    %3380 = vmatpush1.msra.mxu0 0.0
    %3381 = vmatprep.subr.mxu0 0.0
    %3382 = vmatpush1.msra.mxu0 0.0
    %3383 = vmatprep.subr.mxu0 0.0
    %3384 = vmatpush1.msra.mxu0 0.0
    %3385 = vmatprep.subr.mxu0 0.0
    %3386 = vmatpush1.msra.mxu0 0.0
    %3387 = vmatprep.subr.mxu0 0.0
    %3388 = vmatpush1.msra.mxu0 0.0
    %3389 = vmatprep.subr.mxu0 0.0
    %3390 = vmatpush1.msra.mxu0 0.0
    %3391 = vmatprep.subr.mxu0 0.0
    %3392 = vmatpush1.msra.mxu0 0.0
    %3393 = vmatprep.subr.mxu0 0.0
    %3394 = vmatpush1.msra.mxu0 0.0
    %3395 = vmatprep.subr.mxu0 0.0
    %3396 = vmatpush1.msra.mxu0 0.0
    %3397 = vmatprep.subr.mxu0 0.0
    %3398 = vmatpush1.msra.mxu0 0.0
    %3399 = vmatprep.subr.mxu0 0.0
    %3400 = vmatpush1.msra.mxu0 0.0
    %3401 = vmatprep.subr.mxu0 0.0
    %3402 = vmatpush1.msra.mxu0 0.0
    %3403 = vmatprep.subr.mxu0 0.0
    %3404 = vmatpush1.msra.mxu0 0.0
    %3405 = vmatprep.subr.mxu0 0.0
    %3406 = vmatpush1.msra.mxu0 0.0
    %3407 = vmatprep.subr.mxu0 0.0
    %3408 = vmatpush1.msra.mxu0 0.0
    %3409 = vmatprep.subr.mxu0 0.0
    %3410 = vmatpush1.msra.mxu0 0.0
    %3411 = vmatprep.subr.mxu0 0.0
    %3412 = vmatpush1.msra.mxu0 0.0
    %3413 = vmatprep.subr.mxu0 0.0
    %3414 = vmatpush1.msra.mxu0 0.0
    %3415 = vmatprep.subr.mxu0 0.0
    %3416 = vmatpush1.msra.mxu0 0.0
    %3417 = vmatprep.subr.mxu0 0.0
    %3418 = vmatpush1.msra.mxu0 0.0
    %3419 = vmatprep.subr.mxu0 0.0
    %3420 = vmatpush1.msra.mxu0 0.0
    %3421 = vmatprep.subr.mxu0 0.0
    %3422 = vmatpush1.msra.mxu0 0.0
    %3423 = vmatprep.mubr.f32.mxu0 0.0
    %3424 = vmatmul.mubr.f32.gmra.mrb[0].mxu0 %v3357
    %v3425 = vpop.f32.mrb[0].mxu0
    %v3426 = vadd.f32 0.0, %v3425
    %v3427 = vpop.f32.mrb[0].mxu0
    %3428 = vdwg.mxu0
    %3430 = vrot.lane.b32.xlu0 %v3096, 32
    %v3431 = vpop.permute.xlu0 %3430
    %3434 = vrot.lane.b32.xlu0 %v3261, 64
    %v3435 = vpop.permute.xlu0 %3434
    %3438 = vrot.lane.b32.xlu0 %v3426, 96
    %v3439 = vpop.permute.xlu0 %3438
    %v3441 = vsel %vm394, %v2930, %v3431
    %v3442 = vsel %vm1065, %v3441, %v3435
    %v3443 = vsel %vm1067, %v3442, %v3439
    %v3444 = vld [vmem:[#allocation7] sm:$0xff]
    %v3445 = vld [vmem:[#allocation7 + $0x8] sm:$0xff]
    %v3446 = vld [vmem:[#allocation7 + $0x10] sm:$0xff]
    %v3447 = vld [vmem:[#allocation7 + $0x18] sm:$0xff]
    %v3448 = vld [vmem:[#allocation7 + $0x20] sm:$0xff]
    %v3449 = vld [vmem:[#allocation7 + $0x28] sm:$0xff]
    %v3450 = vld [vmem:[#allocation7 + $0x30] sm:$0xff]
    %v3451 = vld [vmem:[#allocation7 + $0x38] sm:$0xff]
    %v3452 = vld [vmem:[#allocation7 + $0x40] sm:$0xff]
    %v3453 = vld [vmem:[#allocation7 + $0x48] sm:$0xff]
    %v3454 = vld [vmem:[#allocation7 + $0x50] sm:$0xff]
    %v3455 = vld [vmem:[#allocation7 + $0x58] sm:$0xff]
    %v3456 = vld [vmem:[#allocation7 + $0x60] sm:$0xff]
    %v3457 = vld [vmem:[#allocation7 + $0x68] sm:$0xff]
    %v3458 = vld [vmem:[#allocation7 + $0x70] sm:$0xff]
    %v3459 = vld [vmem:[#allocation7 + $0x78] sm:$0xff]
    %v3460 = vld [vmem:[%s15] sm:$0x1]
    %v3462 = vlaneseq
    %v3463 = vshrl.u32 %v3462, 7
    %v3464 = vsub.s32 0, %v3463
    %v3465 = vrot.slane %v3460, %v3464
    %3467 = vmatprep.subr.mxu0 0.0
    %3468 = vmatpush1.msra.mxu0 %v3444
    %3469 = vmatprep.subr.mxu0 0.0
    %3470 = vmatpush1.msra.mxu0 %v3445
    %3471 = vmatprep.subr.mxu0 0.0
    %3472 = vmatpush1.msra.mxu0 %v3446
    %3473 = vmatprep.subr.mxu0 0.0
    %3474 = vmatpush1.msra.mxu0 %v3447
    %3475 = vmatprep.subr.mxu0 0.0
    %3476 = vmatpush1.msra.mxu0 %v3448
    %3477 = vmatprep.subr.mxu0 0.0
    %3478 = vmatpush1.msra.mxu0 %v3449
    %3479 = vmatprep.subr.mxu0 0.0
    %3480 = vmatpush1.msra.mxu0 %v3450
    %3481 = vmatprep.subr.mxu0 0.0
    %3482 = vmatpush1.msra.mxu0 %v3451
    %3483 = vmatprep.subr.mxu0 0.0
    %3484 = vmatpush1.msra.mxu0 %v3452
    %3485 = vmatprep.subr.mxu0 0.0
    %3486 = vmatpush1.msra.mxu0 %v3453
    %3487 = vmatprep.subr.mxu0 0.0
    %3488 = vmatpush1.msra.mxu0 %v3454
    %3489 = vmatprep.subr.mxu0 0.0
    %3490 = vmatpush1.msra.mxu0 %v3455
    %3491 = vmatprep.subr.mxu0 0.0
    %3492 = vmatpush1.msra.mxu0 %v3456
    %3493 = vmatprep.subr.mxu0 0.0
    %3494 = vmatpush1.msra.mxu0 %v3457
    %3495 = vmatprep.subr.mxu0 0.0
    %3496 = vmatpush1.msra.mxu0 %v3458
    %3497 = vmatprep.subr.mxu0 0.0
    %3498 = vmatpush1.msra.mxu0 %v3459
    %3499 = vmatprep.subr.mxu0 0.0
    %3500 = vmatpush1.msra.mxu0 0.0
    %3501 = vmatprep.subr.mxu0 0.0
    %3502 = vmatpush1.msra.mxu0 0.0
    %3503 = vmatprep.subr.mxu0 0.0
    %3504 = vmatpush1.msra.mxu0 0.0
    %3505 = vmatprep.subr.mxu0 0.0
    %3506 = vmatpush1.msra.mxu0 0.0
    %3507 = vmatprep.subr.mxu0 0.0
    %3508 = vmatpush1.msra.mxu0 0.0
    %3509 = vmatprep.subr.mxu0 0.0
    %3510 = vmatpush1.msra.mxu0 0.0
    %3511 = vmatprep.subr.mxu0 0.0
    %3512 = vmatpush1.msra.mxu0 0.0
    %3513 = vmatprep.subr.mxu0 0.0
    %3514 = vmatpush1.msra.mxu0 0.0
    %3515 = vmatprep.subr.mxu0 0.0
    %3516 = vmatpush1.msra.mxu0 0.0
    %3517 = vmatprep.subr.mxu0 0.0
    %3518 = vmatpush1.msra.mxu0 0.0
    %3519 = vmatprep.subr.mxu0 0.0
    %3520 = vmatpush1.msra.mxu0 0.0
    %3521 = vmatprep.subr.mxu0 0.0
    %3522 = vmatpush1.msra.mxu0 0.0
    %3523 = vmatprep.subr.mxu0 0.0
    %3524 = vmatpush1.msra.mxu0 0.0
    %3525 = vmatprep.subr.mxu0 0.0
    %3526 = vmatpush1.msra.mxu0 0.0
    %3527 = vmatprep.subr.mxu0 0.0
    %3528 = vmatpush1.msra.mxu0 0.0
    %3529 = vmatprep.subr.mxu0 0.0
    %3530 = vmatpush1.msra.mxu0 0.0
    %3531 = vmatprep.mubr.f32.mxu0 0.0
    %3532 = vmatmul.mubr.f32.gmra.mrb[0].mxu0 %v2771
    %v3533 = vpop.f32.mrb[0].mxu0
    %v3534 = vadd.f32 %v3465, %v3533
    %v3535 = vpop.f32.mrb[0].mxu0
    %3536 = vmatprep.mubr.f32.mxu0 0.0
    %3537 = vmatmul.mubr.f32.gmra.mrb[0].mxu0 %v3443
    %v3538 = vpop.f32.mrb[0].mxu0
    %v3539 = vadd.f32 %v3465, %v3538
    %v3540 = vpop.f32.mrb[0].mxu0
    %3541 = vdwg.mxu0
    %v3542 = vadd.f32 %v1879, %v3534
    %v3543 = vadd.f32 %v1880, %v3539
    %v3544 = vld [vmem:[%s16] sm:$0x1]
    %v3545 = vld [vmem:[%s17] sm:$0x1]
    %3546 = vadd.xlane.f32.xlu0 %v3542
    %v3547 = vpop.xlane.xlu0 %3546
    %3548 = vadd.xlane.f32.xlu0 %v3543
    %v3549 = vpop.xlane.xlu0 %3548
    %v3550 = vmul.f32 %v3547, %v133
    %v3551 = vmul.f32 %v3549, %v133
    %v3552 = vsub.f32 %v3542, %v3550
    %v3553 = vsub.f32 %v3543, %v3551
    %v3554 = vmul.f32 %v3552, %v3552
    %v3555 = vmul.f32 %v3553, %v3553
    %3556 = vadd.xlane.f32.xlu0 %v3554
    %v3557 = vpop.xlane.xlu0 %3556
    %3558 = vadd.xlane.f32.xlu0 %v3555
    %v3559 = vpop.xlane.xlu0 %3558
    %v3560 = vmul.f32 %v3557, %v133
    %v3561 = vmul.f32 %v3559, %v133
    %v3562 = vadd.f32 %v3560, 1e-05
    %v3563 = vadd.f32 %v3561, 1e-05
    %v3564 = vrsqrt.pop %v3562
    %v3565 = vrsqrt.pop %v3563
    %v3566 = vmul.f32 %v3552, %v3564
    %v3567 = vmul.f32 %v3553, %v3565
    %v3569 = vlaneseq
    %v3570 = vshrl.u32 %v3569, 7
    %v3571 = vsub.s32 0, %v3570
    %v3572 = vrot.slane %v3544, %v3571
    %v3574 = vmul.f32 %v3566, %v3572
    %v3575 = vmul.f32 %v3567, %v3572
    %v3577 = vlaneseq
    %v3578 = vshrl.u32 %v3577, 7
    %v3579 = vsub.s32 0, %v3578
    %v3580 = vrot.slane %v3545, %v3579
    %v3582 = vadd.f32 %v3574, %v3580
    %v3583 = vadd.f32 %v3575, %v3580
    %v3584 = vld [vmem:[%s18] sm:$0xff]
    %v3585 = vld [vmem:[%s18 + $0x8] sm:$0xff]
    %v3586 = vld [vmem:[%s18 + $0x10] sm:$0xff]
    %v3587 = vld [vmem:[%s18 + $0x18] sm:$0xff]
    %v3588 = vld [vmem:[%s18 + $0x20] sm:$0xff]
    %v3589 = vld [vmem:[%s18 + $0x28] sm:$0xff]
    %v3590 = vld [vmem:[%s18 + $0x30] sm:$0xff]
    %v3591 = vld [vmem:[%s18 + $0x38] sm:$0xff]
    %v3592 = vld [vmem:[%s18 + $0x40] sm:$0xff]
    %v3593 = vld [vmem:[%s18 + $0x48] sm:$0xff]
    %v3594 = vld [vmem:[%s18 + $0x50] sm:$0xff]
    %v3595 = vld [vmem:[%s18 + $0x58] sm:$0xff]
    %v3596 = vld [vmem:[%s18 + $0x60] sm:$0xff]
    %v3597 = vld [vmem:[%s18 + $0x68] sm:$0xff]
    %v3598 = vld [vmem:[%s18 + $0x70] sm:$0xff]
    %v3599 = vld [vmem:[%s18 + $0x78] sm:$0xff]
    %v3600 = vld [vmem:[%s18 + $0x80] sm:$0xff]
    %v3601 = vld [vmem:[%s18 + $0x88] sm:$0xff]
    %v3602 = vld [vmem:[%s18 + $0x90] sm:$0xff]
    %v3603 = vld [vmem:[%s18 + $0x98] sm:$0xff]
    %v3604 = vld [vmem:[%s18 + $0xa0] sm:$0xff]
    %v3605 = vld [vmem:[%s18 + $0xa8] sm:$0xff]
    %v3606 = vld [vmem:[%s18 + $0xb0] sm:$0xff]
    %v3607 = vld [vmem:[%s18 + $0xb8] sm:$0xff]
    %v3608 = vld [vmem:[%s18 + $0xc0] sm:$0xff]
    %v3609 = vld [vmem:[%s18 + $0xc8] sm:$0xff]
    %v3610 = vld [vmem:[%s18 + $0xd0] sm:$0xff]
    %v3611 = vld [vmem:[%s18 + $0xd8] sm:$0xff]
    %v3612 = vld [vmem:[%s18 + $0xe0] sm:$0xff]
    %v3613 = vld [vmem:[%s18 + $0xe8] sm:$0xff]
    %v3614 = vld [vmem:[%s18 + $0xf0] sm:$0xff]
    %v3615 = vld [vmem:[%s18 + $0xf8] sm:$0xff]
    %v3616 = vld [vmem:[%s19] sm:$0x3]
    %v3618 = vlaneseq
    %v3619 = vshrl.u32 %v3618, 7
    %v3620 = vsub.s32 0, %v3619
    %v3621 = vrot.slane %v3616, %v3620
    %v3622 = vlaneseq
    %v3623 = vshrl.u32 %v3622, 7
    %v3624 = vsub.s32 1, %v3623
    %v3625 = vrot.slane %v3616, %v3624
    %3628 = vmatprep.subr.mxu0 %v3585
    %3629 = vmatpush1.msra.mxu0 %v3584
    %3630 = vmatprep.subr.mxu0 %v3587
    %3631 = vmatpush1.msra.mxu0 %v3586
    %3632 = vmatprep.subr.mxu0 %v3589
    %3633 = vmatpush1.msra.mxu0 %v3588
    %3634 = vmatprep.subr.mxu0 %v3591
    %3635 = vmatpush1.msra.mxu0 %v3590
    %3636 = vmatprep.subr.mxu0 %v3593
    %3637 = vmatpush1.msra.mxu0 %v3592
    %3638 = vmatprep.subr.mxu0 %v3595
    %3639 = vmatpush1.msra.mxu0 %v3594
    %3640 = vmatprep.subr.mxu0 %v3597
    %3641 = vmatpush1.msra.mxu0 %v3596
    %3642 = vmatprep.subr.mxu0 %v3599
    %3643 = vmatpush1.msra.mxu0 %v3598
    %3644 = vmatprep.subr.mxu0 %v3601
    %3645 = vmatpush1.msra.mxu0 %v3600
    %3646 = vmatprep.subr.mxu0 %v3603
    %3647 = vmatpush1.msra.mxu0 %v3602
    %3648 = vmatprep.subr.mxu0 %v3605
    %3649 = vmatpush1.msra.mxu0 %v3604
    %3650 = vmatprep.subr.mxu0 %v3607
    %3651 = vmatpush1.msra.mxu0 %v3606
    %3652 = vmatprep.subr.mxu0 %v3609
    %3653 = vmatpush1.msra.mxu0 %v3608
    %3654 = vmatprep.subr.mxu0 %v3611
    %3655 = vmatpush1.msra.mxu0 %v3610
    %3656 = vmatprep.subr.mxu0 %v3613
    %3657 = vmatpush1.msra.mxu0 %v3612
    %3658 = vmatprep.subr.mxu0 %v3615
    %3659 = vmatpush1.msra.mxu0 %v3614
    %3660 = vmatprep.subr.mxu0 0.0
    %3661 = vmatpush1.msra.mxu0 0.0
    %3662 = vmatprep.subr.mxu0 0.0
    %3663 = vmatpush1.msra.mxu0 0.0
    %3664 = vmatprep.subr.mxu0 0.0
    %3665 = vmatpush1.msra.mxu0 0.0
    %3666 = vmatprep.subr.mxu0 0.0
    %3667 = vmatpush1.msra.mxu0 0.0
    %3668 = vmatprep.subr.mxu0 0.0
    %3669 = vmatpush1.msra.mxu0 0.0
    %3670 = vmatprep.subr.mxu0 0.0
    %3671 = vmatpush1.msra.mxu0 0.0
    %3672 = vmatprep.subr.mxu0 0.0
    %3673 = vmatpush1.msra.mxu0 0.0
    %3674 = vmatprep.subr.mxu0 0.0
    %3675 = vmatpush1.msra.mxu0 0.0
    %3676 = vmatprep.subr.mxu0 0.0
    %3677 = vmatpush1.msra.mxu0 0.0
    %3678 = vmatprep.subr.mxu0 0.0
    %3679 = vmatpush1.msra.mxu0 0.0
    %3680 = vmatprep.subr.mxu0 0.0
    %3681 = vmatpush1.msra.mxu0 0.0
    %3682 = vmatprep.subr.mxu0 0.0
    %3683 = vmatpush1.msra.mxu0 0.0
    %3684 = vmatprep.subr.mxu0 0.0
    %3685 = vmatpush1.msra.mxu0 0.0
    %3686 = vmatprep.subr.mxu0 0.0
    %3687 = vmatpush1.msra.mxu0 0.0
    %3688 = vmatprep.subr.mxu0 0.0
    %3689 = vmatpush1.msra.mxu0 0.0
    %3690 = vmatprep.subr.mxu0 0.0
    %3691 = vmatpush1.msra.mxu0 0.0
    %3692 = vmatprep.mubr.f32.mxu0 0.0
    %3693 = vmatmul.mubr.f32.gmra.mrb[0].mxu0 %v3582
    %v3694 = vpop.f32.mrb[0].mxu0
    %v3695 = vadd.f32 %v3621, %v3694
    %v3696 = vpop.f32.mrb[0].mxu0
    %v3697 = vadd.f32 %v3625, %v3696
    %3698 = vmatprep.mubr.f32.mxu0 0.0
    %3699 = vmatmul.mubr.f32.gmra.mrb[0].mxu0 %v3583
    %v3700 = vpop.f32.mrb[0].mxu0
    %v3701 = vadd.f32 %v3621, %v3700
    %v3702 = vpop.f32.mrb[0].mxu0
    %v3703 = vadd.f32 %v3625, %v3702
    %3704 = vdwg.mxu0
    %v3705 = vmul.f32 %v3695, %v3695
    %v3706 = vmul.f32 %v3697, %v3697
    %v3707 = vmul.f32 %v3701, %v3701
    %v3708 = vmul.f32 %v3703, %v3703
    %v3709 = vmul.f32 %v3695, %v3705
    %v3710 = vmul.f32 %v3697, %v3706
    %v3711 = vmul.f32 %v3701, %v3707
    %v3712 = vmul.f32 %v3703, %v3708
    %v3713 = vmul.f32 %v3709, 0.044715
    %v3714 = vmul.f32 %v3710, 0.044715
    %v3715 = vmul.f32 %v3711, 0.044715
    %v3716 = vmul.f32 %v3712, 0.044715
    %v3717 = vadd.f32 %v3695, %v3713
    %v3718 = vadd.f32 %v3697, %v3714
    %v3719 = vadd.f32 %v3701, %v3715
    %v3720 = vadd.f32 %v3703, %v3716
    %v3721 = vmul.f32 %v3717, 0.7978846
    %v3722 = vmul.f32 %v3718, 0.7978846
    %v3723 = vmul.f32 %v3719, 0.7978846
    %v3724 = vmul.f32 %v3720, 0.7978846
    %v3725 = vtanh.pop %v3721
    %v3726 = vtanh.pop %v3722
    %v3727 = vtanh.pop %v3723
    %v3728 = vtanh.pop %v3724
    %v3729 = vadd.f32 %v3725, 1.0
    %v3730 = vadd.f32 %v3726, 1.0
    %v3731 = vadd.f32 %v3727, 1.0
    %v3732 = vadd.f32 %v3728, 1.0
    %v3733 = vmul.f32 %v3729, 0.5
    %v3734 = vmul.f32 %v3730, 0.5
    %v3735 = vmul.f32 %v3731, 0.5
    %v3736 = vmul.f32 %v3732, 0.5
    %v3737 = vmul.f32 %v3695, %v3733
    %v3738 = vmul.f32 %v3697, %v3734
    %v3739 = vmul.f32 %v3701, %v3735
    %v3740 = vmul.f32 %v3703, %v3736
    %v3741 = vld [vmem:[%s20] sm:$0xff]
    %v3742 = vld [vmem:[%s20 + $0x8] sm:$0xff]
    %v3743 = vld [vmem:[%s20 + $0x10] sm:$0xff]
    %v3744 = vld [vmem:[%s20 + $0x18] sm:$0xff]
    %v3745 = vld [vmem:[%s20 + $0x20] sm:$0xff]
    %v3746 = vld [vmem:[%s20 + $0x28] sm:$0xff]
    %v3747 = vld [vmem:[%s20 + $0x30] sm:$0xff]
    %v3748 = vld [vmem:[%s20 + $0x38] sm:$0xff]
    %v3749 = vld [vmem:[%s20 + $0x40] sm:$0xff]
    %v3750 = vld [vmem:[%s20 + $0x48] sm:$0xff]
    %v3751 = vld [vmem:[%s20 + $0x50] sm:$0xff]
    %v3752 = vld [vmem:[%s20 + $0x58] sm:$0xff]
    %v3753 = vld [vmem:[%s20 + $0x60] sm:$0xff]
    %v3754 = vld [vmem:[%s20 + $0x68] sm:$0xff]
    %v3755 = vld [vmem:[%s20 + $0x70] sm:$0xff]
    %v3756 = vld [vmem:[%s20 + $0x78] sm:$0xff]
    %v3757 = vld [vmem:[%s20 + $0x80] sm:$0xff]
    %v3758 = vld [vmem:[%s20 + $0x88] sm:$0xff]
    %v3759 = vld [vmem:[%s20 + $0x90] sm:$0xff]
    %v3760 = vld [vmem:[%s20 + $0x98] sm:$0xff]
    %v3761 = vld [vmem:[%s20 + $0xa0] sm:$0xff]
    %v3762 = vld [vmem:[%s20 + $0xa8] sm:$0xff]
    %v3763 = vld [vmem:[%s20 + $0xb0] sm:$0xff]
    %v3764 = vld [vmem:[%s20 + $0xb8] sm:$0xff]
    %v3765 = vld [vmem:[%s20 + $0xc0] sm:$0xff]
    %v3766 = vld [vmem:[%s20 + $0xc8] sm:$0xff]
    %v3767 = vld [vmem:[%s20 + $0xd0] sm:$0xff]
    %v3768 = vld [vmem:[%s20 + $0xd8] sm:$0xff]
    %v3769 = vld [vmem:[%s20 + $0xe0] sm:$0xff]
    %v3770 = vld [vmem:[%s20 + $0xe8] sm:$0xff]
    %v3771 = vld [vmem:[%s20 + $0xf0] sm:$0xff]
    %v3772 = vld [vmem:[%s20 + $0xf8] sm:$0xff]
    %v3773 = vld [vmem:[%s21] sm:$0x1]
    %v3775 = vlaneseq
    %v3776 = vshrl.u32 %v3775, 7
    %v3777 = vsub.s32 0, %v3776
    %v3778 = vrot.slane %v3773, %v3777
    %3780 = vmatprep.subr.mxu0 0.0
    %3781 = vmatpush1.msra.mxu0 %v3741
    %3782 = vmatprep.subr.mxu0 0.0
    %3783 = vmatpush1.msra.mxu0 %v3742
    %3784 = vmatprep.subr.mxu0 0.0
    %3785 = vmatpush1.msra.mxu0 %v3743
    %3786 = vmatprep.subr.mxu0 0.0
    %3787 = vmatpush1.msra.mxu0 %v3744
    %3788 = vmatprep.subr.mxu0 0.0
    %3789 = vmatpush1.msra.mxu0 %v3745
    %3790 = vmatprep.subr.mxu0 0.0
    %3791 = vmatpush1.msra.mxu0 %v3746
    %3792 = vmatprep.subr.mxu0 0.0
    %3793 = vmatpush1.msra.mxu0 %v3747
    %3794 = vmatprep.subr.mxu0 0.0
    %3795 = vmatpush1.msra.mxu0 %v3748
    %3796 = vmatprep.subr.mxu0 0.0
    %3797 = vmatpush1.msra.mxu0 %v3749
    %3798 = vmatprep.subr.mxu0 0.0
    %3799 = vmatpush1.msra.mxu0 %v3750
    %3800 = vmatprep.subr.mxu0 0.0
    %3801 = vmatpush1.msra.mxu0 %v3751
    %3802 = vmatprep.subr.mxu0 0.0
    %3803 = vmatpush1.msra.mxu0 %v3752
    %3804 = vmatprep.subr.mxu0 0.0
    %3805 = vmatpush1.msra.mxu0 %v3753
    %3806 = vmatprep.subr.mxu0 0.0
    %3807 = vmatpush1.msra.mxu0 %v3754
    %3808 = vmatprep.subr.mxu0 0.0
    %3809 = vmatpush1.msra.mxu0 %v3755
    %3810 = vmatprep.subr.mxu0 0.0
    %3811 = vmatpush1.msra.mxu0 %v3756
    %3812 = vmatprep.subr.mxu0 0.0
    %3813 = vmatpush1.msra.mxu0 %v3757
    %3814 = vmatprep.subr.mxu0 0.0
    %3815 = vmatpush1.msra.mxu0 %v3758
    %3816 = vmatprep.subr.mxu0 0.0
    %3817 = vmatpush1.msra.mxu0 %v3759
    %3818 = vmatprep.subr.mxu0 0.0
    %3819 = vmatpush1.msra.mxu0 %v3760
    %3820 = vmatprep.subr.mxu0 0.0
    %3821 = vmatpush1.msra.mxu0 %v3761
    %3822 = vmatprep.subr.mxu0 0.0
    %3823 = vmatpush1.msra.mxu0 %v3762
    %3824 = vmatprep.subr.mxu0 0.0
    %3825 = vmatpush1.msra.mxu0 %v3763
    %3826 = vmatprep.subr.mxu0 0.0
    %3827 = vmatpush1.msra.mxu0 %v3764
    %3828 = vmatprep.subr.mxu0 0.0
    %3829 = vmatpush1.msra.mxu0 %v3765
    %3830 = vmatprep.subr.mxu0 0.0
    %3831 = vmatpush1.msra.mxu0 %v3766
    %3832 = vmatprep.subr.mxu0 0.0
    %3833 = vmatpush1.msra.mxu0 %v3767
    %3834 = vmatprep.subr.mxu0 0.0
    %3835 = vmatpush1.msra.mxu0 %v3768
    %3836 = vmatprep.subr.mxu0 0.0
    %3837 = vmatpush1.msra.mxu0 %v3769
    %3838 = vmatprep.subr.mxu0 0.0
    %3839 = vmatpush1.msra.mxu0 %v3770
    %3840 = vmatprep.subr.mxu0 0.0
    %3841 = vmatpush1.msra.mxu0 %v3771
    %3842 = vmatprep.subr.mxu0 0.0
    %3843 = vmatpush1.msra.mxu0 %v3772
    %3844 = vmatprep.mubr.f32.mxu0 %v3738
    %3845 = vmatmul.mubr.f32.gmra.mrb[0].mxu0 %v3737
    %v3846 = vpop.f32.mrb[0].mxu0
    %v3847 = vadd.f32 %v3778, %v3846
    %v3848 = vpop.f32.mrb[0].mxu0
    %3849 = vmatprep.mubr.f32.mxu0 %v3740
    %3850 = vmatmul.mubr.f32.gmra.mrb[0].mxu0 %v3739
    %v3851 = vpop.f32.mrb[0].mxu0
    %v3852 = vadd.f32 %v3778, %v3851
    %v3853 = vpop.f32.mrb[0].mxu0
    %3854 = vdwg.mxu0
    %v3855 = vadd.f32 %v3582, %v3847
    %v3856 = vadd.f32 %v3583, %v3852
    %v3857 = vld [vmem:[%s22] sm:$0x1]
    %v3858 = vld [vmem:[%s23] sm:$0x1]
    %3859 = vadd.xlane.f32.xlu0 %v3855
    %v3860 = vpop.xlane.xlu0 %3859
    %3861 = vadd.xlane.f32.xlu0 %v3856
    %v3862 = vpop.xlane.xlu0 %3861
    %v3863 = vmul.f32 %v3860, %v133
    %v3864 = vmul.f32 %v3862, %v133
    %v3865 = vsub.f32 %v3855, %v3863
    %v3866 = vsub.f32 %v3856, %v3864
    %v3867 = vmul.f32 %v3865, %v3865
    %v3868 = vmul.f32 %v3866, %v3866
    %3869 = vadd.xlane.f32.xlu0 %v3867
    %v3870 = vpop.xlane.xlu0 %3869
    %3871 = vadd.xlane.f32.xlu0 %v3868
    %v3872 = vpop.xlane.xlu0 %3871
    %v3873 = vmul.f32 %v3870, %v133
    %v3874 = vmul.f32 %v3872, %v133
    %v3875 = vadd.f32 %v3873, 1e-05
    %v3876 = vadd.f32 %v3874, 1e-05
    %v3877 = vrsqrt.pop %v3875
    %v3878 = vrsqrt.pop %v3876
    %v3879 = vmul.f32 %v3865, %v3877
    %v3880 = vmul.f32 %v3866, %v3878
    %v3882 = vlaneseq
    %v3883 = vshrl.u32 %v3882, 7
    %v3884 = vsub.s32 0, %v3883
    %v3885 = vrot.slane %v3857, %v3884
    %v3887 = vmul.f32 %v3879, %v3885
    %v3888 = vmul.f32 %v3880, %v3885
    %v3890 = vlaneseq
    %v3891 = vshrl.u32 %v3890, 7
    %v3892 = vsub.s32 0, %v3891
    %v3893 = vrot.slane %v3858, %v3892
    %v3895 = vadd.f32 %v3887, %v3893
    %v3896 = vadd.f32 %v3888, %v3893
    %v3897 = vld [vmem:[%s24] sm:$0xff]
    %v3898 = vld [vmem:[%s24 + $0x8] sm:$0xff]
    %v3899 = vld [vmem:[%s24 + $0x10] sm:$0xff]
    %v3900 = vld [vmem:[%s24 + $0x18] sm:$0xff]
    %v3901 = vld [vmem:[%s24 + $0x20] sm:$0xff]
    %v3902 = vld [vmem:[%s24 + $0x28] sm:$0xff]
    %v3903 = vld [vmem:[%s24 + $0x30] sm:$0xff]
    %v3904 = vld [vmem:[%s24 + $0x38] sm:$0xff]
    %v3905 = vld [vmem:[%s24 + $0x40] sm:$0xff]
    %v3906 = vld [vmem:[%s24 + $0x48] sm:$0xff]
    %v3907 = vld [vmem:[%s24 + $0x50] sm:$0xff]
    %v3908 = vld [vmem:[%s24 + $0x58] sm:$0xff]
    %v3909 = vld [vmem:[%s24 + $0x60] sm:$0xff]
    %v3910 = vld [vmem:[%s24 + $0x68] sm:$0xff]
    %v3911 = vld [vmem:[%s24 + $0x70] sm:$0xff]
    %v3912 = vld [vmem:[%s24 + $0x78] sm:$0xff]
    %v3913 = vld [vmem:[%s25] sm:$0x1]
    %v3915 = vlaneseq
    %v3916 = vshrl.u32 %v3915, 7
    %v3917 = vsub.s32 0, %v3916
    %v3918 = vrot.slane %v3913, %v3917
    %3920 = vmatprep.subr.mxu0 0.0
    %3921 = vmatpush1.xpose.msra.mxu0 %v3897
    %3922 = vmatprep.subr.mxu0 0.0
    %3923 = vmatpush1.xpose.msra.mxu0 %v3898
    %3924 = vmatprep.subr.mxu0 0.0
    %3925 = vmatpush1.xpose.msra.mxu0 %v3899
    %3926 = vmatprep.subr.mxu0 0.0
    %3927 = vmatpush1.xpose.msra.mxu0 %v3900
    %3928 = vmatprep.subr.mxu0 0.0
    %3929 = vmatpush1.xpose.msra.mxu0 %v3901
    %3930 = vmatprep.subr.mxu0 0.0
    %3931 = vmatpush1.xpose.msra.mxu0 %v3902
    %3932 = vmatprep.subr.mxu0 0.0
    %3933 = vmatpush1.xpose.msra.mxu0 %v3903
    %3934 = vmatprep.subr.mxu0 0.0
    %3935 = vmatpush1.xpose.msra.mxu0 %v3904
    %3936 = vmatprep.subr.mxu0 0.0
    %3937 = vmatpush1.xpose.msra.mxu0 %v3905
    %3938 = vmatprep.subr.mxu0 0.0
    %3939 = vmatpush1.xpose.msra.mxu0 %v3906
    %3940 = vmatprep.subr.mxu0 0.0
    %3941 = vmatpush1.xpose.msra.mxu0 %v3907
    %3942 = vmatprep.subr.mxu0 0.0
    %3943 = vmatpush1.xpose.msra.mxu0 %v3908
    %3944 = vmatprep.subr.mxu0 0.0
    %3945 = vmatpush1.xpose.msra.mxu0 %v3909
    %3946 = vmatprep.subr.mxu0 0.0
    %3947 = vmatpush1.xpose.msra.mxu0 %v3910
    %3948 = vmatprep.subr.mxu0 0.0
    %3949 = vmatpush1.xpose.msra.mxu0 %v3911
    %3950 = vmatprep.subr.mxu0 0.0
    %3951 = vmatpush1.xpose.msra.mxu0 %v3912
    %3952 = vmatprep.subr.mxu0 0.0
    %3953 = vmatpush1.xpose.msra.mxu0 0.0
    %3954 = vmatprep.subr.mxu0 0.0
    %3955 = vmatpush1.xpose.msra.mxu0 0.0
    %3956 = vmatprep.subr.mxu0 0.0
    %3957 = vmatpush1.xpose.msra.mxu0 0.0
    %3958 = vmatprep.subr.mxu0 0.0
    %3959 = vmatpush1.xpose.msra.mxu0 0.0
    %3960 = vmatprep.subr.mxu0 0.0
    %3961 = vmatpush1.xpose.msra.mxu0 0.0
    %3962 = vmatprep.subr.mxu0 0.0
    %3963 = vmatpush1.xpose.msra.mxu0 0.0
    %3964 = vmatprep.subr.mxu0 0.0
    %3965 = vmatpush1.xpose.msra.mxu0 0.0
    %3966 = vmatprep.subr.mxu0 0.0
    %3967 = vmatpush1.xpose.msra.mxu0 0.0
    %3968 = vmatprep.subr.mxu0 0.0
    %3969 = vmatpush1.xpose.msra.mxu0 0.0
    %3970 = vmatprep.subr.mxu0 0.0
    %3971 = vmatpush1.xpose.msra.mxu0 0.0
    %3972 = vmatprep.subr.mxu0 0.0
    %3973 = vmatpush1.xpose.msra.mxu0 0.0
    %3974 = vmatprep.subr.mxu0 0.0
    %3975 = vmatpush1.xpose.msra.mxu0 0.0
    %3976 = vmatprep.subr.mxu0 0.0
    %3977 = vmatpush1.xpose.msra.mxu0 0.0
    %3978 = vmatprep.subr.mxu0 0.0
    %3979 = vmatpush1.xpose.msra.mxu0 0.0
    %3980 = vmatprep.subr.mxu0 0.0
    %3981 = vmatpush1.xpose.msra.mxu0 0.0
    %3982 = vmatprep.subr.mxu0 0.0
    %3983 = vmatpush1.xpose.msra.mxu0 0.0
    %3984 = vmatprep.mubr.f32.mxu0 0.0
    %3985 = vmatmul.mubr.f32.gmra.mrb[0].mxu0 %v3895
    %v3986 = vpop.f32.mrb[0].mxu0
    %v3987 = vadd.f32 %v3918, %v3986
    %v3988 = vpop.f32.mrb[0].mxu0
    %3989 = vmatprep.mubr.f32.mxu0 0.0
    %3990 = vmatmul.mubr.f32.gmra.mrb[0].mxu0 %v3896
    %v3991 = vpop.f32.mrb[0].mxu0
    %v3992 = vadd.f32 %v3918, %v3991
    %v3993 = vpop.f32.mrb[0].mxu0
    %3994 = vdwg.mxu0
    %3995 = vst [vmem:[#allocation8] sm:$0xff] %v3987
    %3996 = vst [vmem:[#allocation8 + $0x8] sm:$0xff] %v3992
    // Predicated region
    $region118: #{verbalization_forward.3} parent=1 // pred_check
      _
    $region119: #{verbalization_forward.3} parent=1 // pred_check_branch
      %3998 = sbr.rel (0) target = $region121
    $region120: #{verbalization_forward.3} parent=1 // pred_region
      %s4000 = ssub.s32 256, 256
      %4001 = vsyncadd [#allocation4], %s4000
      %s4002 = sshll.u32 [#allocation8], 4
      %s4003 = int_to_ptr.vmem [resolvable:$true] %s4002
      %4008 = dma.vmem_to_hbm [thread:$0]  %s4003, 256, %s26, [#allocation4], 128, 128, 8
    $region121: #{verbalization_forward.3} parent=1 // pred_fallthru
      _
    // Predicated region
    $region122: #{verbalization_forward.3} parent=1 // pred_check
      _
    $region123: #{verbalization_forward.3} parent=1 // pred_check_branch
      %4010 = sbr.rel (0) target = $region125
    $region124: #{verbalization_forward.3} parent=1 // pred_region
      %4011 = dma.done [#allocation4], 256
    $region125: #{verbalization_forward.3} parent=1 // pred_fallthru
      _
    %4012 = vsyncpa [#allocation3], 1
    %4013 = vsyncpa [#allocation6], 1
    %4014 = vsyncpa [#allocation4], 1

</llo_original>
